<compile_context>
chip_gen: v7x
topology: tpu7x:2x2x1
jax: 0.10.0
libtpu: 0.0.40
codegen_flags: <defaults>
</compile_context>

<pallas_src>
from functools import partial

import jax
import jax.numpy as jnp
from jax.experimental import pallas as pl
from jax.experimental.pallas import tpu as pltpu


# --------------------------------------------------------------------------- #
# small helpers
# --------------------------------------------------------------------------- #
def _stats(z):
    """Per-channel (sum, sumsq) of an f32 tile (no masking needed)."""
    s = jnp.sum(z, axis=0, keepdims=True)
    ss = jnp.sum(z * z, axis=0, keepdims=True)
    return jnp.concatenate([s, ss], axis=0)          # (2, C)


def _masked_stats(z, m_real, tm):
    """Same, but zeroing contributions from padded rows (only used when Mp > M)."""
    row = jax.lax.broadcasted_iota(jnp.int32, z.shape, 0) + pl.program_id(0) * tm
    zm = jnp.where(row < m_real, z, 0.0)
    s = jnp.sum(zm, axis=0, keepdims=True)
    ss = jnp.sum(zm * z, axis=0, keepdims=True)
    return jnp.concatenate([s, ss], axis=0)


# --------------------------------------------------------------------------- #
# kernels
# --------------------------------------------------------------------------- #
def _conv1_proj_kernel(x_ref, w1_ref, wi_ref, bi_ref, z1_ref, y_ref, st_ref):
    # conv biases b1/b2/b3 are omitted: a per-channel constant added before
    # training-mode BN is exactly cancelled by the mean subtraction.
    x = x_ref[...]                                                    # (TM, Cin) bf16
    z1 = jnp.dot(x, w1_ref[...], preferred_element_type=jnp.float32)
    z1_ref[...] = z1.astype(z1_ref.dtype)                             # bf16 store
    y_ref[...] = (jnp.dot(x, wi_ref[...], preferred_element_type=jnp.float32)
                  + bi_ref[...]).astype(y_ref.dtype)                  # bf16 store
    # padded x rows are exactly zero -> z1 padded rows are zero -> no mask needed
    st_ref[0] = _stats(z1)


def _conv1_kernel(x_ref, w1_ref, z1_ref, st_ref):
    z1 = jnp.dot(x_ref[...], w1_ref[...], preferred_element_type=jnp.float32)
    z1_ref[...] = z1.astype(z1_ref.dtype)
    st_ref[0] = _stats(z1)


def _conv2_kernel(z1_ref, w2_ref, s1_ref, b1_ref, z2_ref, st_ref, scr_ref):
    hp, wo, cm3 = scr_ref.shape
    ho, cm = hp - 2, cm3 // 3
    f32, bf16 = jnp.float32, jnp.bfloat16

    # BN1 + ReLU in f32 on the bf16 conv1 output; down-cast only at the scratch store.
    h = jnp.maximum(z1_ref[0].astype(f32) * s1_ref[...] + b1_ref[...], 0.0)
    h3 = h.astype(bf16).reshape(ho, wo, cm)

    # Lane-concatenated dx-shifted copies:  scr[i, x, dx*cm + c] = h_padded[i, x+dx, c].
    # Every ref store is W-offset-0 / lane-tile aligned; the +-1 pixel shifts are done
    # value-side with slice+concat (no strided HBM traffic, no wrapper-side jnp.pad).
    zc = jnp.zeros((ho, 1, cm), bf16)
    scr_ref[1:1 + ho, :, 0 * cm:1 * cm] = jnp.concatenate(
        [zc, h3[:, 0:wo - 1, :]], axis=1)                             # dx = 0
    scr_ref[1:1 + ho, :, 1 * cm:2 * cm] = h3                          # dx = 1
    scr_ref[1:1 + ho, :, 2 * cm:3 * cm] = jnp.concatenate(
        [h3[:, 1:wo, :], zc], axis=1)                                 # dx = 2
    # Halo rows live only in VMEM; re-zeroed every step so the grid axis can be
    # split across TensorCores (megacore) safely.
    zrow = jnp.zeros((1, wo, cm3), bf16)
    scr_ref[0:1] = zrow
    scr_ref[hp - 1:hp] = zrow

    # 3x3 conv = 3 GEMMs with contraction depth 3*cm (fills the 256-deep MXU on
    # v6e/v7x; harmless on v5e), f32 accumulation, first tap assigned directly.
    acc = jnp.dot(scr_ref[0:ho].reshape(ho * wo, cm3), w2_ref[0],
                  preferred_element_type=f32)
    for dy in (1, 2):
        acc = acc + jnp.dot(scr_ref[dy:dy + ho].reshape(ho * wo, cm3), w2_ref[dy],
                            preferred_element_type=f32)
    z2_ref[0] = acc.astype(z2_ref.dtype)                              # bf16 store

    # Whole image per grid step -> no valid-row mask needed for the BN2 partials.
    s = jnp.sum(acc, axis=0, keepdims=True)
    ss = jnp.sum(acc * acc, axis=0, keepdims=True)
    st_ref[0] = jnp.concatenate([s, ss], axis=0)


def _conv3_kernel(z2_ref, w3_ref, s2_ref, b2_ref, z3_ref, st_ref, *, m_real, tm):
    h2 = jnp.maximum(z2_ref[...].astype(jnp.float32) * s2_ref[...] + b2_ref[...], 0.0)
    z3 = jnp.dot(h2.astype(jnp.bfloat16), w3_ref[...],
                 preferred_element_type=jnp.float32)
    z3_ref[...] = z3.astype(z3_ref.dtype)                             # bf16 store
    # padded rows of z2 are zero but relu(b2) != 0, so mask only when rows were padded
    st_ref[0] = _stats(z3) if m_real is None else _masked_stats(z3, m_real, tm)


def _final_kernel(z3_ref, y_ref, s3_ref, b3_ref, o_ref):
    z3 = z3_ref[...].astype(jnp.float32)
    y = y_ref[...].astype(jnp.float32)
    o_ref[...] = jnp.maximum(z3 * s3_ref[...] + b3_ref[...] + y, 0.0)


# --------------------------------------------------------------------------- #
# wrapper
# --------------------------------------------------------------------------- #
def _ceil_to(a, b):
    return (a + b - 1) // b * b


def _pad_to(x, axis, target):
    if x.shape[axis] == target:
        return x
    pad = [(0, 0)] * x.ndim
    pad[axis] = (0, target - x.shape[axis])
    return jnp.pad(x, pad)


def _pick_tm(m, target):
    """Largest row tile <= target that divides m (multiple of 16 preferred, then 8)
    so the wrapper never pays an HBM copy to pad / slice rows."""
    t = max(8, min(target, m))
    for align in (16, 8):
        start = t - t % align
        for cand in range(start, align - 1, -align):
            if cand > 0 and m % cand == 0:
                return cand, m
    tm = _ceil_to(t, 16)
    return tm, _ceil_to(m, tm)


def _bn_scale_shift(stats, gamma, beta, count, eps):
    """Fold per-tile (sum, sumsq) partials into training-mode BN's per-channel
    affine:  bn(z) = z * scale + shift  (biased variance, like PyTorch)."""
    s = jnp.sum(stats[:, 0, :], axis=0)
    ss = jnp.sum(stats[:, 1, :], axis=0)
    mean = s / count
    var = jnp.maximum(ss / count - mean * mean, 0.0)
    scale = gamma.reshape(-1) * jax.lax.rsqrt(var + eps)
    shift = beta.reshape(-1) - mean * scale
    return scale.reshape(1, -1), shift.reshape(1, -1)


@partial(jax.jit, static_argnames=("stride", "tm", "eps"))
def resblock_bottle(x_nchw, p, *, stride, tm=512, eps=1e-5):
    has_proj = 'wi' in p
    f32, bf16 = jnp.float32, jnp.bfloat16

    # NCHW -> NHWC; stride-2 handled here (1x1-conv stride == subsampling).
    x = jnp.transpose(x_nchw, (0, 2, 3, 1)).astype(f32)
    if stride > 1:
        x = x[:, ::stride, ::stride, :]
    N, Ho, Wo, Cin = x.shape
    Cmid = p['w1'].shape[1]
    Cout = p['w3'].shape[1]
    Cin_p, Cmid_p, Cout_p = (_ceil_to(c, 128) for c in (Cin, Cmid, Cout))

    M = N * Ho * Wo
    TM, Mp = _pick_tm(M, tm)
    G = Mp // TM

    # Lane-dense (channels padded to 128) bf16 activations; pads are zeros.
    xbf = _pad_to(_pad_to(x.reshape(M, Cin), 1, Cin_p), 0, Mp).astype(bf16)

    # bf16 matmul weights, zero-padded channels; w2 pre-fused to K = 3*Cmid per dy.
    w1 = _pad_to(_pad_to(p['w1'], 0, Cin_p), 1, Cmid_p).astype(bf16)
    w2f = _pad_to(_pad_to(p['w2'], 1, Cmid_p), 2, Cmid_p) \
        .reshape(3, 3 * Cmid_p, Cmid_p).astype(bf16)
    w3 = _pad_to(_pad_to(p['w3'], 0, Cmid_p), 1, Cout_p).astype(bf16)
    g1 = _pad_to(p['g1'], 1, Cmid_p).astype(f32)
    be1 = _pad_to(p['be1'], 1, Cmid_p).astype(f32)
    g2 = _pad_to(p['g2'], 1, Cmid_p).astype(f32)
    be2 = _pad_to(p['be2'], 1, Cmid_p).astype(f32)
    g3 = _pad_to(p['g3'], 1, Cout_p).astype(f32)
    be3 = _pad_to(p['be3'], 1, Cout_p).astype(f32)

    # 48 MiB stays inside v7x's 64 MiB/TC physical VMEM and is plenty on v5e/v6e.
    cp = pltpu.CompilerParams(dimension_semantics=("parallel",),
                              vmem_limit_bytes=48 * 1024 * 1024)

    row = lambda c: pl.BlockSpec((TM, c), lambda i: (i, 0))
    cst = lambda shp: pl.BlockSpec(shp, lambda i: (0,) * len(shp))
    stat = lambda c: pl.BlockSpec((1, 2, c), lambda i: (i, 0, 0))

    # ---- pass A: conv1 (+ projection) + BN1 partial stats -------------------
    if has_proj:
        wi = _pad_to(_pad_to(p['wi'], 0, Cin_p), 1, Cout_p).astype(bf16)
        bi = _pad_to(p['bi'], 1, Cout_p).astype(f32)
        z1, y, st1 = pl.pallas_call(
            _conv1_proj_kernel,
            grid=(G,),
            in_specs=[row(Cin_p), cst((Cin_p, Cmid_p)),
                      cst((Cin_p, Cout_p)), cst((1, Cout_p))],
            out_specs=[row(Cmid_p), row(Cout_p), stat(Cmid_p)],
            out_shape=(jax.ShapeDtypeStruct((Mp, Cmid_p), bf16),
                       jax.ShapeDtypeStruct((Mp, Cout_p), bf16),
                       jax.ShapeDtypeStruct((G, 2, Cmid_p), f32)),
            compiler_params=cp,
        )(xbf, w1, wi, bi)
    else:
        z1, st1 = pl.pallas_call(
            _conv1_kernel,
            grid=(G,),
            in_specs=[row(Cin_p), cst((Cin_p, Cmid_p))],
            out_specs=[row(Cmid_p), stat(Cmid_p)],
            out_shape=(jax.ShapeDtypeStruct((Mp, Cmid_p), bf16),
                       jax.ShapeDtypeStruct((G, 2, Cmid_p), f32)),
            compiler_params=cp,
        )(xbf, w1)
        y = xbf  # identity residual: reuse the bf16 input rows, no extra HBM buffer
    s1, b1s = _bn_scale_shift(st1, g1, be1, M, eps)

    # ---- pass B: BN1+ReLU -> 3x3 conv + BN2 partial stats (per image) -------
    Hp = Ho + 2
    z1r = (z1 if Mp == M else z1[:M]).reshape(N, Ho * Wo, Cmid_p)
    z2, st2 = pl.pallas_call(
        _conv2_kernel,
        grid=(N,),
        in_specs=[pl.BlockSpec((1, Ho * Wo, Cmid_p), lambda n: (n, 0, 0)),
                  pl.BlockSpec((3, 3 * Cmid_p, Cmid_p), lambda n: (0, 0, 0)),
                  pl.BlockSpec((1, Cmid_p), lambda n: (0, 0)),
                  pl.BlockSpec((1, Cmid_p), lambda n: (0, 0))],
        out_specs=[pl.BlockSpec((1, Ho * Wo, Cmid_p), lambda n: (n, 0, 0)),
                   pl.BlockSpec((1, 2, Cmid_p), lambda n: (n, 0, 0))],
        out_shape=(jax.ShapeDtypeStruct((N, Ho * Wo, Cmid_p), bf16),
                   jax.ShapeDtypeStruct((N, 2, Cmid_p), f32)),
        scratch_shapes=[pltpu.VMEM((Hp, Wo, 3 * Cmid_p), bf16)],
        compiler_params=cp,
    )(z1r, w2f, s1, b1s)
    s2, b2s = _bn_scale_shift(st2, g2, be2, M, eps)

    # ---- pass C: BN2+ReLU -> conv3 + BN3 partial stats -----------------------
    z2f = z2.reshape(M, Cmid_p)
    if Mp != M:
        z2f = _pad_to(z2f, 0, Mp)
    z3, st3 = pl.pallas_call(
        partial(_conv3_kernel, m_real=None if Mp == M else M, tm=TM),
        grid=(G,),
        in_specs=[row(Cmid_p), cst((Cmid_p, Cout_p)),
                  cst((1, Cmid_p)), cst((1, Cmid_p))],
        out_specs=[row(Cout_p), stat(Cout_p)],
        out_shape=(jax.ShapeDtypeStruct((Mp, Cout_p), bf16),
                   jax.ShapeDtypeStruct((G, 2, Cout_p), f32)),
        compiler_params=cp,
    )(z2f, w3, s2, b2s)
    s3, b3s = _bn_scale_shift(st3, g3, be3, M, eps)

    # ---- pass D: BN3 + residual add + ReLU -----------------------------------
    out = pl.pallas_call(
        _final_kernel,
        grid=(G,),
        in_specs=[row(Cout_p), row(Cout_p), cst((1, Cout_p)), cst((1, Cout_p))],
        out_specs=row(Cout_p),
        out_shape=jax.ShapeDtypeStruct((Mp, Cout_p), f32),
        compiler_params=cp,
    )(z3, y, s3, b3s)

    out = out[:M, :Cout].reshape(N, Ho, Wo, Cout)
    return jnp.transpose(out, (0, 3, 1, 2))               # back to NCHW


# --------------------------------------------------------------------------- #
# params + pure-JAX reference
# --------------------------------------------------------------------------- #
def init_params(key, c_in, c_out):
    cm = c_out // 4
    ks = jax.random.split(key, 14)
    f = lambda k, shape, s=0.1: (s * jax.random.normal(k, shape)).astype(jnp.float32)
    p = dict(
        w1=f(ks[0], (c_in, cm)),   b1=f(ks[1], (1, cm)),
        g1=1.0 + f(ks[2], (1, cm)), be1=f(ks[3], (1, cm)),
        w2=f(ks[4], (9, cm, cm)),  b2=f(ks[5], (1, cm)),
        g2=1.0 + f(ks[6], (1, cm)), be2=f(ks[7], (1, cm)),
        w3=f(ks[8], (cm, c_out)),  b3=f(ks[9], (1, c_out)),
        g3=1.0 + f(ks[10], (1, c_out)), be3=f(ks[11], (1, c_out)),
    )
    if c_in != c_out:
        p['wi'] = f(ks[12], (c_in, c_out))
        p['bi'] = f(ks[13], (1, c_out))
    return p


def ref_forward(x_nchw, p, stride, eps=1e-5):
    """Pure-JAX reference of the PyTorch module (training-mode BN); conv operands
    are cast to bf16 with f32 accumulation to match the kernel's matmul path."""
    x = jnp.transpose(x_nchw, (0, 2, 3, 1)).astype(jnp.float32)
    dn = ('NHWC', 'HWIO', 'NHWC')
    relu = lambda a: jnp.maximum(a, 0.0)

    def conv(h, w, strides, padding):
        return jax.lax.conv_general_dilated(
            h.astype(jnp.bfloat16), w.astype(jnp.bfloat16), strides, padding,
            dimension_numbers=dn, preferred_element_type=jnp.float32)

    def bn(z, g, be):
        mean = jnp.mean(z, axis=(0, 1, 2), keepdims=True)
        var = jnp.mean((z - mean) ** 2, axis=(0, 1, 2), keepdims=True)
        return (z - mean) * jax.lax.rsqrt(var + eps) * g.reshape(1, 1, 1, -1) \
            + be.reshape(1, 1, 1, -1)

    cin = x.shape[-1]
    cm = p['w1'].shape[1]
    cout = p['w3'].shape[1]

    h = conv(x, p['w1'].reshape(1, 1, cin, cm), (stride, stride), 'VALID')
    h = relu(bn(h + p['b1'].reshape(1, 1, 1, -1), p['g1'], p['be1']))
    h = conv(h, p['w2'].reshape(3, 3, cm, cm), (1, 1), ((1, 1), (1, 1)))
    h = relu(bn(h + p['b2'].reshape(1, 1, 1, -1), p['g2'], p['be2']))
    h = conv(h, p['w3'].reshape(1, 1, cm, cout), (1, 1), 'VALID')
    h = bn(h + p['b3'].reshape(1, 1, 1, -1), p['g3'], p['be3'])
    if 'wi' in p:
        y = conv(x, p['wi'].reshape(1, 1, cin, cout), (stride, stride), 'VALID') \
            + p['bi'].reshape(1, 1, 1, -1)
    else:
        y = x
    out = relu(h + y)
    return jnp.transpose(out, (0, 3, 1, 2))


# --------------------------------------------------------------------------- #
if __name__ == "__main__":
    key = jax.random.PRNGKey(0)

    def check(k, n, c_in, c_out, hw, bdown):
        stride = 2 if bdown else 1
        kx, kp = jax.random.split(k)
        x = jax.random.normal(kx, (n, c_in, hw, hw), dtype=jnp.float32)
        p = init_params(kp, c_in, c_out)
        out = jax.block_until_ready(resblock_bottle(x, p, stride=stride))
        ref = ref_forward(x, p, stride)
        assert out.shape == ref.shape, (out.shape, ref.shape)
        max_err = float(jnp.max(jnp.abs(out - ref)))
        mean_err = float(jnp.mean(jnp.abs(out - ref)))
        # bf16 matmul operands + bf16 inter-pass activations -> loose-ish tolerance
        assert max_err < 6e-2 and mean_err < 1e-2, (max_err, mean_err)

    k1, k2, k3 = jax.random.split(key, 3)
    check(k1, 2, 4, 16, 16, False)    # projection branch (c_in != c_out), stride 1
    check(k2, 2, 16, 16, 16, False)   # identity pass-through (projection GEMM skipped)
    check(k3, 2, 8, 32, 16, True)     # stride-2 downsample block
    print("KERNEL_OK")
</pallas_src>

<mosaic_0001>
module attributes {stable_mosaic.version = 11 : i64} {
  func.func @_conv1_proj_kernel(%arg0: i32, %arg1: memref<512x128xbf16, #tpu.memory_space<vmem>>, %arg2: memref<128x128xbf16, #tpu.memory_space<vmem>>, %arg3: memref<128x128xbf16, #tpu.memory_space<vmem>>, %arg4: memref<1x128xf32, #tpu.memory_space<vmem>>, %arg5: memref<512x128xbf16, #tpu.memory_space<vmem>>, %arg6: memref<512x128xbf16, #tpu.memory_space<vmem>>, %arg7: memref<1x2x128xf32, #tpu.memory_space<vmem>>) attributes {dimension_semantics = [#tpu.dimension_semantics<parallel>], iteration_bounds = array<i64: 1>, scalar_prefetch = 0 : i64, scratch_operands = 0 : i64, tpu.core_type = #tpu.core_type<tc>, window_params = [{transform_indices = @transform_0, window_bounds = array<i64: 512, 128>}, {pipeline_mode = #tpu.pipeline_mode<synchronous>, transform_indices = @transform_1, window_bounds = array<i64: 128, 128>}, {pipeline_mode = #tpu.pipeline_mode<synchronous>, transform_indices = @transform_2, window_bounds = array<i64: 128, 128>}, {pipeline_mode = #tpu.pipeline_mode<synchronous>, transform_indices = @transform_3, window_bounds = array<i64: 1, 128>}, {transform_indices = @transform_4, window_bounds = array<i64: 512, 128>}, {transform_indices = @transform_5, window_bounds = array<i64: 512, 128>}, {transform_indices = @transform_6, window_bounds = array<i64: 1, 2, 128>}]} {
    %c0 = arith.constant 0 : index
    %c0_0 = arith.constant 0 : index
    %0 = vector.load %arg1[%c0, %c0_0] : memref<512x128xbf16, #tpu.memory_space<vmem>>, vector<512x128xbf16>
    %c0_1 = arith.constant 0 : index
    %c0_2 = arith.constant 0 : index
    %1 = vector.load %arg2[%c0_1, %c0_2] : memref<128x128xbf16, #tpu.memory_space<vmem>>, vector<128x128xbf16>
    %cst = arith.constant dense<0.000000e+00> : vector<512x128xf32>
    %2 = tpu.matmul %0, %1, %cst {dimension_numbers = #tpu.dot_dimension_numbers<[1], [0], [0], [1], [0, 0, 1, 1], [], []>} : vector<512x128xbf16>, vector<128x128xbf16>, vector<512x128xf32> -> vector<512x128xf32>
    %3 = arith.truncf %2 : vector<512x128xf32> to vector<512x128xbf16>
    %c0_3 = arith.constant 0 : index
    %c0_4 = arith.constant 0 : index
    %4 = vector.load %arg5[%c0_3, %c0_4] : memref<512x128xbf16, #tpu.memory_space<vmem>>, vector<512x128xbf16>
    tpu.vector_store %arg5[%c0_3, %c0_4], %3 {strides = array<i32>} : memref<512x128xbf16, #tpu.memory_space<vmem>>, vector<512x128xbf16>,
    %c0_5 = arith.constant 0 : index
    %c0_6 = arith.constant 0 : index
    %5 = vector.load %arg3[%c0_5, %c0_6] : memref<128x128xbf16, #tpu.memory_space<vmem>>, vector<128x128xbf16>
    %cst_7 = arith.constant dense<0.000000e+00> : vector<512x128xf32>
    %6 = tpu.matmul %0, %5, %cst_7 {dimension_numbers = #tpu.dot_dimension_numbers<[1], [0], [0], [1], [0, 0, 1, 1], [], []>} : vector<512x128xbf16>, vector<128x128xbf16>, vector<512x128xf32> -> vector<512x128xf32>
    %c0_8 = arith.constant 0 : index
    %c0_9 = arith.constant 0 : index
    %7 = vector.load %arg4[%c0_8, %c0_9] : memref<1x128xf32, #tpu.memory_space<vmem>>, vector<1x128xf32>
    %8 = vector.broadcast %7 : vector<1x128xf32> to vector<512x128xf32>
    %9 = arith.addf %6, %8 : vector<512x128xf32>
    %10 = arith.truncf %9 : vector<512x128xf32> to vector<512x128xbf16>
    %c0_10 = arith.constant 0 : index
    %c0_11 = arith.constant 0 : index
    %11 = vector.load %arg6[%c0_10, %c0_11] : memref<512x128xbf16, #tpu.memory_space<vmem>>, vector<512x128xbf16>
    tpu.vector_store %arg6[%c0_10, %c0_11], %10 {strides = array<i32>} : memref<512x128xbf16, #tpu.memory_space<vmem>>, vector<512x128xbf16>,
    %cst_12 = arith.constant dense<0.000000e+00> : vector<128xf32>
    %12 = vector.multi_reduction <add>, %2, %cst_12 [0] : vector<512x128xf32> to vector<128xf32>
    %13 = vector.shape_cast %12 : vector<128xf32> to vector<1x128xf32>
    %14 = arith.mulf %2, %2 : vector<512x128xf32>
    %cst_13 = arith.constant dense<0.000000e+00> : vector<128xf32>
    %15 = vector.multi_reduction <add>, %14, %cst_13 [0] : vector<512x128xf32> to vector<128xf32>
    %16 = vector.shape_cast %15 : vector<128xf32> to vector<1x128xf32>
    %17 = tpu.concatenate %13, %16 in 0 : vector<1x128xf32>, vector<1x128xf32> -> vector<2x128xf32>
    %c0_14 = arith.constant 0 : index
    %c0_15 = arith.constant 0 : index
    %c0_16 = arith.constant 0 : index
    %18 = vector.load %arg7[%c0_14, %c0_15, %c0_16] : memref<1x2x128xf32, #tpu.memory_space<vmem>>, vector<1x2x128xf32>
    %19 = vector.shape_cast %18 : vector<1x2x128xf32> to vector<2x128xf32>
    %20 = vector.shape_cast %17 : vector<2x128xf32> to vector<1x2x128xf32>
    tpu.vector_store %arg7[%c0_14, %c0_15, %c0_16], %20 {strides = array<i32>} : memref<1x2x128xf32, #tpu.memory_space<vmem>>, vector<1x2x128xf32>,
    return
  }
  func.func @transform_0(%arg0: i32) -> (i32, i32) {
    %c0_i32 = arith.constant 0 : i32
    %c0_i32_0 = arith.constant 0 : i32
    return %arg0, %c0_i32 : i32, i32
  }
  func.func @transform_1(%arg0: i32) -> (i32, i32) {
    %c0_i32 = arith.constant 0 : i32
    %c0_i32_0 = arith.constant 0 : i32
    %c0_i32_1 = arith.constant 0 : i32
    return %c0_i32, %c0_i32_0 : i32, i32
  }
  func.func @transform_2(%arg0: i32) -> (i32, i32) {
    %c0_i32 = arith.constant 0 : i32
    %c0_i32_0 = arith.constant 0 : i32
    %c0_i32_1 = arith.constant 0 : i32
    return %c0_i32, %c0_i32_0 : i32, i32
  }
  func.func @transform_3(%arg0: i32) -> (i32, i32) {
    %c0_i32 = arith.constant 0 : i32
    %c0_i32_0 = arith.constant 0 : i32
    %c0_i32_1 = arith.constant 0 : i32
    return %c0_i32, %c0_i32_0 : i32, i32
  }
  func.func @transform_4(%arg0: i32) -> (i32, i32) {
    %c0_i32 = arith.constant 0 : i32
    %c0_i32_0 = arith.constant 0 : i32
    return %arg0, %c0_i32 : i32, i32
  }
  func.func @transform_5(%arg0: i32) -> (i32, i32) {
    %c0_i32 = arith.constant 0 : i32
    %c0_i32_0 = arith.constant 0 : i32
    return %arg0, %c0_i32 : i32, i32
  }
  func.func @transform_6(%arg0: i32) -> (i32, i32, i32) {
    %c0_i32 = arith.constant 0 : i32
    %c0_i32_0 = arith.constant 0 : i32
    %c0_i32_1 = arith.constant 0 : i32
    return %arg0, %c0_i32, %c0_i32_0 : i32, i32, i32
  }
}

module attributes {stable_mosaic.version = 11 : i64} {
  func.func @_conv2_kernel(%arg0: i32, %arg1: memref<1x256x128xbf16, #tpu.memory_space<vmem>>, %arg2: memref<3x384x128xbf16, #tpu.memory_space<vmem>>, %arg3: memref<1x128xf32, #tpu.memory_space<vmem>>, %arg4: memref<1x128xf32, #tpu.memory_space<vmem>>, %arg5: memref<1x256x128xbf16, #tpu.memory_space<vmem>>, %arg6: memref<1x2x128xf32, #tpu.memory_space<vmem>>, %arg7: memref<18x16x384xbf16, #tpu.memory_space<vmem>>) attributes {dimension_semantics = [#tpu.dimension_semantics<parallel>], iteration_bounds = array<i64: 2>, scalar_prefetch = 0 : i64, scratch_operands = 1 : i64, tpu.core_type = #tpu.core_type<tc>, window_params = [{transform_indices = @transform_0, window_bounds = array<i64: 1, 256, 128>}, {pipeline_mode = #tpu.pipeline_mode<synchronous>, transform_indices = @transform_1, window_bounds = array<i64: 3, 384, 128>}, {pipeline_mode = #tpu.pipeline_mode<synchronous>, transform_indices = @transform_2, window_bounds = array<i64: 1, 128>}, {pipeline_mode = #tpu.pipeline_mode<synchronous>, transform_indices = @transform_3, window_bounds = array<i64: 1, 128>}, {transform_indices = @transform_4, window_bounds = array<i64: 1, 256, 128>}, {transform_indices = @transform_5, window_bounds = array<i64: 1, 2, 128>}]} {
    %c0 = arith.constant 0 : index
    %c0_0 = arith.constant 0 : index
    %c0_1 = arith.constant 0 : index
    %0 = vector.load %arg1[%c0, %c0_0, %c0_1] : memref<1x256x128xbf16, #tpu.memory_space<vmem>>, vector<1x256x128xbf16>
    %1 = vector.shape_cast %0 : vector<1x256x128xbf16> to vector<256x128xbf16>
    %2 = arith.extf %1 : vector<256x128xbf16> to vector<256x128xf32>
    %c0_2 = arith.constant 0 : index
    %c0_3 = arith.constant 0 : index
    %3 = vector.load %arg3[%c0_2, %c0_3] : memref<1x128xf32, #tpu.memory_space<vmem>>, vector<1x128xf32>
    %4 = vector.broadcast %3 : vector<1x128xf32> to vector<256x128xf32>
    %5 = arith.mulf %2, %4 : vector<256x128xf32>
    %c0_4 = arith.constant 0 : index
    %c0_5 = arith.constant 0 : index
    %6 = vector.load %arg4[%c0_4, %c0_5] : memref<1x128xf32, #tpu.memory_space<vmem>>, vector<1x128xf32>
    %7 = vector.broadcast %6 : vector<1x128xf32> to vector<256x128xf32>
    %8 = arith.addf %5, %7 : vector<256x128xf32>
    %cst = arith.constant 0.000000e+00 : f32
    %9 = vector.broadcast %cst : f32 to vector<256x128xf32>
    %10 = arith.maximumf %8, %9 : vector<256x128xf32>
    %11 = arith.truncf %10 : vector<256x128xf32> to vector<256x128xbf16>
    %12 = vector.shape_cast %11 : vector<256x128xbf16> to vector<16x16x128xbf16>
    %cst_6 = arith.constant 0.000000e+00 : bf16
    %13 = vector.broadcast %cst_6 : bf16 to vector<16x1x128xbf16>
    %14 = vector.extract_strided_slice %12 {offsets = [0, 0, 0], sizes = [16, 15, 128], strides = [1, 1, 1]} : vector<16x16x128xbf16> to vector<16x15x128xbf16>
    %15 = tpu.concatenate %13, %14 in 1 : vector<16x1x128xbf16>, vector<16x15x128xbf16> -> vector<16x16x128xbf16>
    %c1 = arith.constant 1 : index
    %c0_7 = arith.constant 0 : index
    %c0_8 = arith.constant 0 : index
    %16 = vector.load %arg7[%c1, %c0_7, %c0_8] : memref<18x16x384xbf16, #tpu.memory_space<vmem>>, vector<16x16x128xbf16>
    tpu.vector_store %arg7[%c1, %c0_7, %c0_8], %15 {strides = array<i32>} : memref<18x16x384xbf16, #tpu.memory_space<vmem>>, vector<16x16x128xbf16>,
    %c1_9 = arith.constant 1 : index
    %c0_10 = arith.constant 0 : index
    %c128 = arith.constant 128 : index
    %17 = vector.load %arg7[%c1_9, %c0_10, %c128] : memref<18x16x384xbf16, #tpu.memory_space<vmem>>, vector<16x16x128xbf16>
    tpu.vector_store %arg7[%c1_9, %c0_10, %c128], %12 {strides = array<i32>} : memref<18x16x384xbf16, #tpu.memory_space<vmem>>, vector<16x16x128xbf16>,
    %18 = vector.extract_strided_slice %12 {offsets = [0, 1, 0], sizes = [16, 15, 128], strides = [1, 1, 1]} : vector<16x16x128xbf16> to vector<16x15x128xbf16>
    %19 = tpu.concatenate %18, %13 in 1 : vector<16x15x128xbf16>, vector<16x1x128xbf16> -> vector<16x16x128xbf16>
    %c1_11 = arith.constant 1 : index
    %c0_12 = arith.constant 0 : index
    %c256 = arith.constant 256 : index
    %20 = vector.load %arg7[%c1_11, %c0_12, %c256] : memref<18x16x384xbf16, #tpu.memory_space<vmem>>, vector<16x16x128xbf16>
    tpu.vector_store %arg7[%c1_11, %c0_12, %c256], %19 {strides = array<i32>} : memref<18x16x384xbf16, #tpu.memory_space<vmem>>, vector<16x16x128xbf16>,
    %cst_13 = arith.constant 0.000000e+00 : bf16
    %21 = vector.broadcast %cst_13 : bf16 to vector<1x16x384xbf16>
    %c0_14 = arith.constant 0 : index
    %c0_15 = arith.constant 0 : index
    %c0_16 = arith.constant 0 : index
    %22 = vector.load %arg7[%c0_14, %c0_15, %c0_16] : memref<18x16x384xbf16, #tpu.memory_space<vmem>>, vector<1x16x384xbf16>
    tpu.vector_store %arg7[%c0_14, %c0_15, %c0_16], %21 {strides = array<i32>} : memref<18x16x384xbf16, #tpu.memory_space<vmem>>, vector<1x16x384xbf16>,
    %c17 = arith.constant 17 : index
    %c0_17 = arith.constant 0 : index
    %c0_18 = arith.constant 0 : index
    %23 = vector.load %arg7[%c17, %c0_17, %c0_18] : memref<18x16x384xbf16, #tpu.memory_space<vmem>>, vector<1x16x384xbf16>
    tpu.vector_store %arg7[%c17, %c0_17, %c0_18], %21 {strides = array<i32>} : memref<18x16x384xbf16, #tpu.memory_space<vmem>>, vector<1x16x384xbf16>,
    %c0_19 = arith.constant 0 : index
    %c0_20 = arith.constant 0 : index
    %c0_21 = arith.constant 0 : index
    %24 = vector.load %arg7[%c0_19, %c0_20, %c0_21] : memref<18x16x384xbf16, #tpu.memory_space<vmem>>, vector<16x16x384xbf16>
    %25 = vector.shape_cast %24 : vector<16x16x384xbf16> to vector<256x384xbf16>
    %c0_22 = arith.constant 0 : index
    %c0_23 = arith.constant 0 : index
    %c0_24 = arith.constant 0 : index
    %26 = vector.load %arg2[%c0_22, %c0_23, %c0_24] : memref<3x384x128xbf16, #tpu.memory_space<vmem>>, vector<1x384x128xbf16>
    %27 = vector.shape_cast %26 : vector<1x384x128xbf16> to vector<384x128xbf16>
    %cst_25 = arith.constant dense<0.000000e+00> : vector<256x128xf32>
    %28 = tpu.matmul %25, %27, %cst_25 {dimension_numbers = #tpu.dot_dimension_numbers<[1], [0], [0], [1], [0, 0, 1, 1], [], []>} : vector<256x384xbf16>, vector<384x128xbf16>, vector<256x128xf32> -> vector<256x128xf32>
    %c1_26 = arith.constant 1 : index
    %c0_27 = arith.constant 0 : index
    %c0_28 = arith.constant 0 : index
    %29 = vector.load %arg7[%c1_26, %c0_27, %c0_28] : memref<18x16x384xbf16, #tpu.memory_space<vmem>>, vector<16x16x384xbf16>
    %30 = vector.shape_cast %29 : vector<16x16x384xbf16> to vector<256x384xbf16>
    %c1_29 = arith.constant 1 : index
    %c0_30 = arith.constant 0 : index
    %c0_31 = arith.constant 0 : index
    %31 = vector.load %arg2[%c1_29, %c0_30, %c0_31] : memref<3x384x128xbf16, #tpu.memory_space<vmem>>, vector<1x384x128xbf16>
    %32 = vector.shape_cast %31 : vector<1x384x128xbf16> to vector<384x128xbf16>
    %cst_32 = arith.constant dense<0.000000e+00> : vector<256x128xf32>
    %33 = tpu.matmul %30, %32, %cst_32 {dimension_numbers = #tpu.dot_dimension_numbers<[1], [0], [0], [1], [0, 0, 1, 1], [], []>} : vector<256x384xbf16>, vector<384x128xbf16>, vector<256x128xf32> -> vector<256x128xf32>
    %34 = arith.addf %28, %33 : vector<256x128xf32>
    %c2 = arith.constant 2 : index
    %c0_33 = arith.constant 0 : index
    %c0_34 = arith.constant 0 : index
    %35 = vector.load %arg7[%c2, %c0_33, %c0_34] : memref<18x16x384xbf16, #tpu.memory_space<vmem>>, vector<16x16x384xbf16>
    %36 = vector.shape_cast %35 : vector<16x16x384xbf16> to vector<256x384xbf16>
    %c2_35 = arith.constant 2 : index
    %c0_36 = arith.constant 0 : index
    %c0_37 = arith.constant 0 : index
    %37 = vector.load %arg2[%c2_35, %c0_36, %c0_37] : memref<3x384x128xbf16, #tpu.memory_space<vmem>>, vector<1x384x128xbf16>
    %38 = vector.shape_cast %37 : vector<1x384x128xbf16> to vector<384x128xbf16>
    %cst_38 = arith.constant dense<0.000000e+00> : vector<256x128xf32>
    %39 = tpu.matmul %36, %38, %cst_38 {dimension_numbers = #tpu.dot_dimension_numbers<[1], [0], [0], [1], [0, 0, 1, 1], [], []>} : vector<256x384xbf16>, vector<384x128xbf16>, vector<256x128xf32> -> vector<256x128xf32>
    %40 = arith.addf %34, %39 : vector<256x128xf32>
    %41 = arith.truncf %40 : vector<256x128xf32> to vector<256x128xbf16>
    %c0_39 = arith.constant 0 : index
    %c0_40 = arith.constant 0 : index
    %c0_41 = arith.constant 0 : index
    %42 = vector.load %arg5[%c0_39, %c0_40, %c0_41] : memref<1x256x128xbf16, #tpu.memory_space<vmem>>, vector<1x256x128xbf16>
    %43 = vector.shape_cast %42 : vector<1x256x128xbf16> to vector<256x128xbf16>
    %44 = vector.shape_cast %41 : vector<256x128xbf16> to vector<1x256x128xbf16>
    tpu.vector_store %arg5[%c0_39, %c0_40, %c0_41], %44 {strides = array<i32>} : memref<1x256x128xbf16, #tpu.memory_space<vmem>>, vector<1x256x128xbf16>,
    %cst_42 = arith.constant dense<0.000000e+00> : vector<128xf32>
    %45 = vector.multi_reduction <add>, %40, %cst_42 [0] : vector<256x128xf32> to vector<128xf32>
    %46 = vector.shape_cast %45 : vector<128xf32> to vector<1x128xf32>
    %47 = arith.mulf %40, %40 : vector<256x128xf32>
    %cst_43 = arith.constant dense<0.000000e+00> : vector<128xf32>
    %48 = vector.multi_reduction <add>, %47, %cst_43 [0] : vector<256x128xf32> to vector<128xf32>
    %49 = vector.shape_cast %48 : vector<128xf32> to vector<1x128xf32>
    %50 = tpu.concatenate %46, %49 in 0 : vector<1x128xf32>, vector<1x128xf32> -> vector<2x128xf32>
    %c0_44 = arith.constant 0 : index
    %c0_45 = arith.constant 0 : index
    %c0_46 = arith.constant 0 : index
    %51 = vector.load %arg6[%c0_44, %c0_45, %c0_46] : memref<1x2x128xf32, #tpu.memory_space<vmem>>, vector<1x2x128xf32>
    %52 = vector.shape_cast %51 : vector<1x2x128xf32> to vector<2x128xf32>
    %53 = vector.shape_cast %50 : vector<2x128xf32> to vector<1x2x128xf32>
    tpu.vector_store %arg6[%c0_44, %c0_45, %c0_46], %53 {strides = array<i32>} : memref<1x2x128xf32, #tpu.memory_space<vmem>>, vector<1x2x128xf32>,
    return
  }
  func.func @transform_0(%arg0: i32) -> (i32, i32, i32) {
    %c0_i32 = arith.constant 0 : i32
    %c0_i32_0 = arith.constant 0 : i32
    %c0_i32_1 = arith.constant 0 : i32
    return %arg0, %c0_i32, %c0_i32_0 : i32, i32, i32
  }
  func.func @transform_1(%arg0: i32) -> (i32, i32, i32) {
    %c0_i32 = arith.constant 0 : i32
    %c0_i32_0 = arith.constant 0 : i32
    %c0_i32_1 = arith.constant 0 : i32
    %c0_i32_2 = arith.constant 0 : i32
    return %c0_i32, %c0_i32_0, %c0_i32_1 : i32, i32, i32
  }
  func.func @transform_2(%arg0: i32) -> (i32, i32) {
    %c0_i32 = arith.constant 0 : i32
    %c0_i32_0 = arith.constant 0 : i32
    %c0_i32_1 = arith.constant 0 : i32
    return %c0_i32, %c0_i32_0 : i32, i32
  }
  func.func @transform_3(%arg0: i32) -> (i32, i32) {
    %c0_i32 = arith.constant 0 : i32
    %c0_i32_0 = arith.constant 0 : i32
    %c0_i32_1 = arith.constant 0 : i32
    return %c0_i32, %c0_i32_0 : i32, i32
  }
  func.func @transform_4(%arg0: i32) -> (i32, i32, i32) {
    %c0_i32 = arith.constant 0 : i32
    %c0_i32_0 = arith.constant 0 : i32
    %c0_i32_1 = arith.constant 0 : i32
    return %arg0, %c0_i32, %c0_i32_0 : i32, i32, i32
  }
  func.func @transform_5(%arg0: i32) -> (i32, i32, i32) {
    %c0_i32 = arith.constant 0 : i32
    %c0_i32_0 = arith.constant 0 : i32
    %c0_i32_1 = arith.constant 0 : i32
    return %arg0, %c0_i32, %c0_i32_0 : i32, i32, i32
  }
}

module attributes {stable_mosaic.version = 11 : i64} {
  func.func @_conv3_kernel(%arg0: i32, %arg1: memref<512x128xbf16, #tpu.memory_space<vmem>>, %arg2: memref<128x128xbf16, #tpu.memory_space<vmem>>, %arg3: memref<1x128xf32, #tpu.memory_space<vmem>>, %arg4: memref<1x128xf32, #tpu.memory_space<vmem>>, %arg5: memref<512x128xbf16, #tpu.memory_space<vmem>>, %arg6: memref<1x2x128xf32, #tpu.memory_space<vmem>>) attributes {dimension_semantics = [#tpu.dimension_semantics<parallel>], iteration_bounds = array<i64: 1>, scalar_prefetch = 0 : i64, scratch_operands = 0 : i64, tpu.core_type = #tpu.core_type<tc>, window_params = [{transform_indices = @transform_0, window_bounds = array<i64: 512, 128>}, {pipeline_mode = #tpu.pipeline_mode<synchronous>, transform_indices = @transform_1, window_bounds = array<i64: 128, 128>}, {pipeline_mode = #tpu.pipeline_mode<synchronous>, transform_indices = @transform_2, window_bounds = array<i64: 1, 128>}, {pipeline_mode = #tpu.pipeline_mode<synchronous>, transform_indices = @transform_3, window_bounds = array<i64: 1, 128>}, {transform_indices = @transform_4, window_bounds = array<i64: 512, 128>}, {transform_indices = @transform_5, window_bounds = array<i64: 1, 2, 128>}]} {
    %c0 = arith.constant 0 : index
    %c0_0 = arith.constant 0 : index
    %0 = vector.load %arg1[%c0, %c0_0] : memref<512x128xbf16, #tpu.memory_space<vmem>>, vector<512x128xbf16>
    %1 = arith.extf %0 : vector<512x128xbf16> to vector<512x128xf32>
    %c0_1 = arith.constant 0 : index
    %c0_2 = arith.constant 0 : index
    %2 = vector.load %arg3[%c0_1, %c0_2] : memref<1x128xf32, #tpu.memory_space<vmem>>, vector<1x128xf32>
    %3 = vector.broadcast %2 : vector<1x128xf32> to vector<512x128xf32>
    %4 = arith.mulf %1, %3 : vector<512x128xf32>
    %c0_3 = arith.constant 0 : index
    %c0_4 = arith.constant 0 : index
    %5 = vector.load %arg4[%c0_3, %c0_4] : memref<1x128xf32, #tpu.memory_space<vmem>>, vector<1x128xf32>
    %6 = vector.broadcast %5 : vector<1x128xf32> to vector<512x128xf32>
    %7 = arith.addf %4, %6 : vector<512x128xf32>
    %cst = arith.constant 0.000000e+00 : f32
    %8 = vector.broadcast %cst : f32 to vector<512x128xf32>
    %9 = arith.maximumf %7, %8 : vector<512x128xf32>
    %10 = arith.truncf %9 : vector<512x128xf32> to vector<512x128xbf16>
    %c0_5 = arith.constant 0 : index
    %c0_6 = arith.constant 0 : index
    %11 = vector.load %arg2[%c0_5, %c0_6] : memref<128x128xbf16, #tpu.memory_space<vmem>>, vector<128x128xbf16>
    %cst_7 = arith.constant dense<0.000000e+00> : vector<512x128xf32>
    %12 = tpu.matmul %10, %11, %cst_7 {dimension_numbers = #tpu.dot_dimension_numbers<[1], [0], [0], [1], [0, 0, 1, 1], [], []>} : vector<512x128xbf16>, vector<128x128xbf16>, vector<512x128xf32> -> vector<512x128xf32>
    %13 = arith.truncf %12 : vector<512x128xf32> to vector<512x128xbf16>
    %c0_8 = arith.constant 0 : index
    %c0_9 = arith.constant 0 : index
    %14 = vector.load %arg5[%c0_8, %c0_9] : memref<512x128xbf16, #tpu.memory_space<vmem>>, vector<512x128xbf16>
    tpu.vector_store %arg5[%c0_8, %c0_9], %13 {strides = array<i32>} : memref<512x128xbf16, #tpu.memory_space<vmem>>, vector<512x128xbf16>,
    %cst_10 = arith.constant dense<0.000000e+00> : vector<128xf32>
    %15 = vector.multi_reduction <add>, %12, %cst_10 [0] : vector<512x128xf32> to vector<128xf32>
    %16 = vector.shape_cast %15 : vector<128xf32> to vector<1x128xf32>
    %17 = arith.mulf %12, %12 : vector<512x128xf32>
    %cst_11 = arith.constant dense<0.000000e+00> : vector<128xf32>
    %18 = vector.multi_reduction <add>, %17, %cst_11 [0] : vector<512x128xf32> to vector<128xf32>
    %19 = vector.shape_cast %18 : vector<128xf32> to vector<1x128xf32>
    %20 = tpu.concatenate %16, %19 in 0 : vector<1x128xf32>, vector<1x128xf32> -> vector<2x128xf32>
    %c0_12 = arith.constant 0 : index
    %c0_13 = arith.constant 0 : index
    %c0_14 = arith.constant 0 : index
    %21 = vector.load %arg6[%c0_12, %c0_13, %c0_14] : memref<1x2x128xf32, #tpu.memory_space<vmem>>, vector<1x2x128xf32>
    %22 = vector.shape_cast %21 : vector<1x2x128xf32> to vector<2x128xf32>
    %23 = vector.shape_cast %20 : vector<2x128xf32> to vector<1x2x128xf32>
    tpu.vector_store %arg6[%c0_12, %c0_13, %c0_14], %23 {strides = array<i32>} : memref<1x2x128xf32, #tpu.memory_space<vmem>>, vector<1x2x128xf32>,
    return
  }
  func.func @transform_0(%arg0: i32) -> (i32, i32) {
    %c0_i32 = arith.constant 0 : i32
    %c0_i32_0 = arith.constant 0 : i32
    return %arg0, %c0_i32 : i32, i32
  }
  func.func @transform_1(%arg0: i32) -> (i32, i32) {
    %c0_i32 = arith.constant 0 : i32
    %c0_i32_0 = arith.constant 0 : i32
    %c0_i32_1 = arith.constant 0 : i32
    return %c0_i32, %c0_i32_0 : i32, i32
  }
  func.func @transform_2(%arg0: i32) -> (i32, i32) {
    %c0_i32 = arith.constant 0 : i32
    %c0_i32_0 = arith.constant 0 : i32
    %c0_i32_1 = arith.constant 0 : i32
    return %c0_i32, %c0_i32_0 : i32, i32
  }
  func.func @transform_3(%arg0: i32) -> (i32, i32) {
    %c0_i32 = arith.constant 0 : i32
    %c0_i32_0 = arith.constant 0 : i32
    %c0_i32_1 = arith.constant 0 : i32
    return %c0_i32, %c0_i32_0 : i32, i32
  }
  func.func @transform_4(%arg0: i32) -> (i32, i32) {
    %c0_i32 = arith.constant 0 : i32
    %c0_i32_0 = arith.constant 0 : i32
    return %arg0, %c0_i32 : i32, i32
  }
  func.func @transform_5(%arg0: i32) -> (i32, i32, i32) {
    %c0_i32 = arith.constant 0 : i32
    %c0_i32_0 = arith.constant 0 : i32
    %c0_i32_1 = arith.constant 0 : i32
    return %arg0, %c0_i32, %c0_i32_0 : i32, i32, i32
  }
}

module attributes {stable_mosaic.version = 11 : i64} {
  func.func @_final_kernel(%arg0: i32, %arg1: memref<512x128xbf16, #tpu.memory_space<vmem>>, %arg2: memref<512x128xbf16, #tpu.memory_space<vmem>>, %arg3: memref<1x128xf32, #tpu.memory_space<vmem>>, %arg4: memref<1x128xf32, #tpu.memory_space<vmem>>, %arg5: memref<512x128xf32, #tpu.memory_space<vmem>>) attributes {dimension_semantics = [#tpu.dimension_semantics<parallel>], iteration_bounds = array<i64: 1>, scalar_prefetch = 0 : i64, scratch_operands = 0 : i64, tpu.core_type = #tpu.core_type<tc>, window_params = [{transform_indices = @transform_0, window_bounds = array<i64: 512, 128>}, {transform_indices = @transform_1, window_bounds = array<i64: 512, 128>}, {pipeline_mode = #tpu.pipeline_mode<synchronous>, transform_indices = @transform_2, window_bounds = array<i64: 1, 128>}, {pipeline_mode = #tpu.pipeline_mode<synchronous>, transform_indices = @transform_3, window_bounds = array<i64: 1, 128>}, {transform_indices = @transform_4, window_bounds = array<i64: 512, 128>}]} {
    %c0 = arith.constant 0 : index
    %c0_0 = arith.constant 0 : index
    %0 = vector.load %arg1[%c0, %c0_0] : memref<512x128xbf16, #tpu.memory_space<vmem>>, vector<512x128xbf16>
    %1 = arith.extf %0 : vector<512x128xbf16> to vector<512x128xf32>
    %c0_1 = arith.constant 0 : index
    %c0_2 = arith.constant 0 : index
    %2 = vector.load %arg2[%c0_1, %c0_2] : memref<512x128xbf16, #tpu.memory_space<vmem>>, vector<512x128xbf16>
    %3 = arith.extf %2 : vector<512x128xbf16> to vector<512x128xf32>
    %c0_3 = arith.constant 0 : index
    %c0_4 = arith.constant 0 : index
    %4 = vector.load %arg3[%c0_3, %c0_4] : memref<1x128xf32, #tpu.memory_space<vmem>>, vector<1x128xf32>
    %5 = vector.broadcast %4 : vector<1x128xf32> to vector<512x128xf32>
    %6 = arith.mulf %1, %5 : vector<512x128xf32>
    %c0_5 = arith.constant 0 : index
    %c0_6 = arith.constant 0 : index
    %7 = vector.load %arg4[%c0_5, %c0_6] : memref<1x128xf32, #tpu.memory_space<vmem>>, vector<1x128xf32>
    %8 = vector.broadcast %7 : vector<1x128xf32> to vector<512x128xf32>
    %9 = arith.addf %6, %8 : vector<512x128xf32>
    %10 = arith.addf %9, %3 : vector<512x128xf32>
    %cst = arith.constant 0.000000e+00 : f32
    %11 = vector.broadcast %cst : f32 to vector<512x128xf32>
    %12 = arith.maximumf %10, %11 : vector<512x128xf32>
    %c0_7 = arith.constant 0 : index
    %c0_8 = arith.constant 0 : index
    %13 = vector.load %arg5[%c0_7, %c0_8] : memref<512x128xf32, #tpu.memory_space<vmem>>, vector<512x128xf32>
    tpu.vector_store %arg5[%c0_7, %c0_8], %12 {strides = array<i32>} : memref<512x128xf32, #tpu.memory_space<vmem>>, vector<512x128xf32>,
    return
  }
  func.func @transform_0(%arg0: i32) -> (i32, i32) {
    %c0_i32 = arith.constant 0 : i32
    %c0_i32_0 = arith.constant 0 : i32
    return %arg0, %c0_i32 : i32, i32
  }
  func.func @transform_1(%arg0: i32) -> (i32, i32) {
    %c0_i32 = arith.constant 0 : i32
    %c0_i32_0 = arith.constant 0 : i32
    return %arg0, %c0_i32 : i32, i32
  }
  func.func @transform_2(%arg0: i32) -> (i32, i32) {
    %c0_i32 = arith.constant 0 : i32
    %c0_i32_0 = arith.constant 0 : i32
    %c0_i32_1 = arith.constant 0 : i32
    return %c0_i32, %c0_i32_0 : i32, i32
  }
  func.func @transform_3(%arg0: i32) -> (i32, i32) {
    %c0_i32 = arith.constant 0 : i32
    %c0_i32_0 = arith.constant 0 : i32
    %c0_i32_1 = arith.constant 0 : i32
    return %c0_i32, %c0_i32_0 : i32, i32
  }
  func.func @transform_4(%arg0: i32) -> (i32, i32) {
    %c0_i32 = arith.constant 0 : i32
    %c0_i32_0 = arith.constant 0 : i32
    return %arg0, %c0_i32 : i32, i32
  }
}

</mosaic_0001>

<llo_original>
// kernel: resblock_bottle.7
$region0: #{resblock_bottle.7}
  #allocation0 [shape = 'u32[]', space=smem, size = 0x4, offset = 0x4, fixed_abs, tag = 'smem constant byte address 0x4 - core index']
  #allocation1 [shape = 'u32[144,128]{1,0:T(1,128)}', space=vmem, size = 0x12000, scoped, tag = 'internal scratch']
  %s0 = inlined_call_operand.vmem [shape: bf16[512,128], index: 0, kind: input, shape index: {}]
  %s1 = inlined_call_operand.vmem [shape: bf16[512,128], index: 1, kind: input, shape index: {}]
  %s2 = inlined_call_operand.vmem [shape: f32[1,128], index: 2, kind: input, shape index: {}]
  %s3 = inlined_call_operand.vmem [shape: f32[1,128], index: 3, kind: input, shape index: {}]
  %s4 = inlined_call_operand.vmem [shape: f32[512,128], index: 4, kind: output, shape index: {}]
  %s5 = sld [smem:[#allocation0]]
  $region26: #{resblock_bottle.7} parent=0
    _
  %s7 = ssub.s32 1, %s5
  %s8 = scalar_select 0, %s7, %s5
  // Predicated region
  $region2: #{resblock_bottle.7} parent=0 // pred_check
    _
  $region3: #{resblock_bottle.7} parent=0 // pred_check_branch
    %10 = sbr.rel (0) target = $region5
  $region4: #{resblock_bottle.7} parent=0 // pred_region
    _
  $region5: #{resblock_bottle.7} parent=0 // pred_fallthru
    _
  // Predicated region
  $region6: #{resblock_bottle.7} parent=0 // pred_check
    _
  $region7: #{resblock_bottle.7} parent=0 // pred_check_branch
    %12 = sbr.rel (0) target = $region9
  $region8: #{resblock_bottle.7} parent=0 // pred_region
    _
  $region9: #{resblock_bottle.7} parent=0 // pred_fallthru
    _
  // Predicated region
  $region10: #{resblock_bottle.7} parent=0 // pred_check
    _
  $region11: #{resblock_bottle.7} parent=0 // pred_check_branch
    %14 = sbr.rel (0) target = $region13
  $region12: #{resblock_bottle.7} parent=0 // pred_region
    _
  $region13: #{resblock_bottle.7} parent=0 // pred_fallthru
    _
  // Predicated region
  $region14: #{resblock_bottle.7} parent=0 // pred_check
    _
  $region15: #{resblock_bottle.7} parent=0 // pred_check_branch
    %16 = sbr.rel (0) target = $region17
  $region16: #{resblock_bottle.7} parent=0 // pred_region
    _
  $region17: #{resblock_bottle.7} parent=0 // pred_fallthru
    _
  %v17 = vld [vmem:[%s0] sm:$0xf]
  %v18 = vld [vmem:[%s0 + $0x4] sm:$0xf]
  %v19 = vld [vmem:[%s0 + $0x8] sm:$0xf]
  %v20 = vld [vmem:[%s0 + $0xc] sm:$0xf]
  %v21 = vld [vmem:[%s0 + $0x10] sm:$0xf]
  %v22 = vld [vmem:[%s0 + $0x14] sm:$0xf]
  %v23 = vld [vmem:[%s0 + $0x18] sm:$0xf]
  %v24 = vld [vmem:[%s0 + $0x1c] sm:$0xf]
  %v25 = vld [vmem:[%s0 + $0x20] sm:$0xf]
  %v26 = vld [vmem:[%s0 + $0x24] sm:$0xf]
  %v27 = vld [vmem:[%s0 + $0x28] sm:$0xf]
  %v28 = vld [vmem:[%s0 + $0x2c] sm:$0xf]
  %v29 = vld [vmem:[%s0 + $0x30] sm:$0xf]
  %v30 = vld [vmem:[%s0 + $0x34] sm:$0xf]
  %v31 = vld [vmem:[%s0 + $0x38] sm:$0xf]
  %v32 = vld [vmem:[%s0 + $0x3c] sm:$0xf]
  %v33 = vld [vmem:[%s0 + $0x40] sm:$0xf]
  %v34 = vld [vmem:[%s0 + $0x44] sm:$0xf]
  %v35 = vld [vmem:[%s0 + $0x48] sm:$0xf]
  %v36 = vld [vmem:[%s0 + $0x4c] sm:$0xf]
  %v37 = vld [vmem:[%s0 + $0x50] sm:$0xf]
  %v38 = vld [vmem:[%s0 + $0x54] sm:$0xf]
  %v39 = vld [vmem:[%s0 + $0x58] sm:$0xf]
  %v40 = vld [vmem:[%s0 + $0x5c] sm:$0xf]
  %v41 = vld [vmem:[%s0 + $0x60] sm:$0xf]
  %v42 = vld [vmem:[%s0 + $0x64] sm:$0xf]
  %v43 = vld [vmem:[%s0 + $0x68] sm:$0xf]
  %v44 = vld [vmem:[%s0 + $0x6c] sm:$0xf]
  %v45 = vld [vmem:[%s0 + $0x70] sm:$0xf]
  %v46 = vld [vmem:[%s0 + $0x74] sm:$0xf]
  %v47 = vld [vmem:[%s0 + $0x78] sm:$0xf]
  %v48 = vld [vmem:[%s0 + $0x7c] sm:$0xf]
  %v49 = vld [vmem:[%s0 + $0x80] sm:$0xf]
  %v50 = vld [vmem:[%s0 + $0x84] sm:$0xf]
  %v51 = vld [vmem:[%s0 + $0x88] sm:$0xf]
  %v52 = vld [vmem:[%s0 + $0x8c] sm:$0xf]
  %v53 = vld [vmem:[%s0 + $0x90] sm:$0xf]
  %v54 = vld [vmem:[%s0 + $0x94] sm:$0xf]
  %v55 = vld [vmem:[%s0 + $0x98] sm:$0xf]
  %v56 = vld [vmem:[%s0 + $0x9c] sm:$0xf]
  %v57 = vld [vmem:[%s0 + $0xa0] sm:$0xf]
  %v58 = vld [vmem:[%s0 + $0xa4] sm:$0xf]
  %v59 = vld [vmem:[%s0 + $0xa8] sm:$0xf]
  %v60 = vld [vmem:[%s0 + $0xac] sm:$0xf]
  %v61 = vld [vmem:[%s0 + $0xb0] sm:$0xf]
  %v62 = vld [vmem:[%s0 + $0xb4] sm:$0xf]
  %v63 = vld [vmem:[%s0 + $0xb8] sm:$0xf]
  %v64 = vld [vmem:[%s0 + $0xbc] sm:$0xf]
  %v65 = vld [vmem:[%s0 + $0xc0] sm:$0xf]
  %v66 = vld [vmem:[%s0 + $0xc4] sm:$0xf]
  %v67 = vld [vmem:[%s0 + $0xc8] sm:$0xf]
  %v68 = vld [vmem:[%s0 + $0xcc] sm:$0xf]
  %v69 = vld [vmem:[%s0 + $0xd0] sm:$0xf]
  %v70 = vld [vmem:[%s0 + $0xd4] sm:$0xf]
  %v71 = vld [vmem:[%s0 + $0xd8] sm:$0xf]
  %v72 = vld [vmem:[%s0 + $0xdc] sm:$0xf]
  %v73 = vld [vmem:[%s0 + $0xe0] sm:$0xf]
  %v74 = vld [vmem:[%s0 + $0xe4] sm:$0xf]
  %v75 = vld [vmem:[%s0 + $0xe8] sm:$0xf]
  %v76 = vld [vmem:[%s0 + $0xec] sm:$0xf]
  %v77 = vld [vmem:[%s0 + $0xf0] sm:$0xf]
  %v78 = vld [vmem:[%s0 + $0xf4] sm:$0xf]
  %v79 = vld [vmem:[%s0 + $0xf8] sm:$0xf]
  %v80 = vld [vmem:[%s0 + $0xfc] sm:$0xf]
  %v81 = vunpack.c.l.bf16 %v17
  %v82 = vunpack.c.l.bf16 %v18
  %v83 = vunpack.c.l.bf16 %v19
  %v84 = vunpack.c.l.bf16 %v20
  %v85 = vunpack.c.l.bf16 %v21
  %v86 = vunpack.c.l.bf16 %v22
  %v87 = vunpack.c.l.bf16 %v23
  %v88 = vunpack.c.l.bf16 %v24
  %v89 = vunpack.c.l.bf16 %v25
  %v90 = vunpack.c.l.bf16 %v26
  %v91 = vunpack.c.l.bf16 %v27
  %v92 = vunpack.c.l.bf16 %v28
  %v93 = vunpack.c.l.bf16 %v29
  %v94 = vunpack.c.l.bf16 %v30
  %v95 = vunpack.c.l.bf16 %v31
  %v96 = vunpack.c.l.bf16 %v32
  %v97 = vunpack.c.l.bf16 %v33
  %v98 = vunpack.c.l.bf16 %v34
  %v99 = vunpack.c.l.bf16 %v35
  %v100 = vunpack.c.l.bf16 %v36
  %v101 = vunpack.c.l.bf16 %v37
  %v102 = vunpack.c.l.bf16 %v38
  %v103 = vunpack.c.l.bf16 %v39
  %v104 = vunpack.c.l.bf16 %v40
  %v105 = vunpack.c.l.bf16 %v41
  %v106 = vunpack.c.l.bf16 %v42
  %v107 = vunpack.c.l.bf16 %v43
  %v108 = vunpack.c.l.bf16 %v44
  %v109 = vunpack.c.l.bf16 %v45
  %v110 = vunpack.c.l.bf16 %v46
  %v111 = vunpack.c.l.bf16 %v47
  %v112 = vunpack.c.l.bf16 %v48
  %v113 = vunpack.c.l.bf16 %v49
  %v114 = vunpack.c.l.bf16 %v50
  %v115 = vunpack.c.l.bf16 %v51
  %v116 = vunpack.c.l.bf16 %v52
  %v117 = vunpack.c.l.bf16 %v53
  %v118 = vunpack.c.l.bf16 %v54
  %v119 = vunpack.c.l.bf16 %v55
  %v120 = vunpack.c.l.bf16 %v56
  %v121 = vunpack.c.l.bf16 %v57
  %v122 = vunpack.c.l.bf16 %v58
  %v123 = vunpack.c.l.bf16 %v59
  %v124 = vunpack.c.l.bf16 %v60
  %v125 = vunpack.c.l.bf16 %v61
  %v126 = vunpack.c.l.bf16 %v62
  %v127 = vunpack.c.l.bf16 %v63
  %v128 = vunpack.c.l.bf16 %v64
  %v129 = vunpack.c.l.bf16 %v65
  %v130 = vunpack.c.l.bf16 %v66
  %v131 = vunpack.c.l.bf16 %v67
  %v132 = vunpack.c.l.bf16 %v68
  %v133 = vunpack.c.l.bf16 %v69
  %v134 = vunpack.c.l.bf16 %v70
  %v135 = vunpack.c.l.bf16 %v71
  %v136 = vunpack.c.l.bf16 %v72
  %v137 = vunpack.c.l.bf16 %v73
  %v138 = vunpack.c.l.bf16 %v74
  %v139 = vunpack.c.l.bf16 %v75
  %v140 = vunpack.c.l.bf16 %v76
  %v141 = vunpack.c.l.bf16 %v77
  %v142 = vunpack.c.l.bf16 %v78
  %v143 = vunpack.c.l.bf16 %v79
  %v144 = vunpack.c.l.bf16 %v80
  %v145 = vld [vmem:[%s1] sm:$0xf]
  %v146 = vld [vmem:[%s1 + $0x4] sm:$0xf]
  %v147 = vld [vmem:[%s1 + $0x8] sm:$0xf]
  %v148 = vld [vmem:[%s1 + $0xc] sm:$0xf]
  %v149 = vld [vmem:[%s1 + $0x10] sm:$0xf]
  %v150 = vld [vmem:[%s1 + $0x14] sm:$0xf]
  %v151 = vld [vmem:[%s1 + $0x18] sm:$0xf]
  %v152 = vld [vmem:[%s1 + $0x1c] sm:$0xf]
  %v153 = vld [vmem:[%s1 + $0x20] sm:$0xf]
  %v154 = vld [vmem:[%s1 + $0x24] sm:$0xf]
  %v155 = vld [vmem:[%s1 + $0x28] sm:$0xf]
  %v156 = vld [vmem:[%s1 + $0x2c] sm:$0xf]
  %v157 = vld [vmem:[%s1 + $0x30] sm:$0xf]
  %v158 = vld [vmem:[%s1 + $0x34] sm:$0xf]
  %v159 = vld [vmem:[%s1 + $0x38] sm:$0xf]
  %v160 = vld [vmem:[%s1 + $0x3c] sm:$0xf]
  %v161 = vld [vmem:[%s1 + $0x40] sm:$0xf]
  %v162 = vld [vmem:[%s1 + $0x44] sm:$0xf]
  %v163 = vld [vmem:[%s1 + $0x48] sm:$0xf]
  %v164 = vld [vmem:[%s1 + $0x4c] sm:$0xf]
  %v165 = vld [vmem:[%s1 + $0x50] sm:$0xf]
  %v166 = vld [vmem:[%s1 + $0x54] sm:$0xf]
  %v167 = vld [vmem:[%s1 + $0x58] sm:$0xf]
  %v168 = vld [vmem:[%s1 + $0x5c] sm:$0xf]
  %v169 = vld [vmem:[%s1 + $0x60] sm:$0xf]
  %v170 = vld [vmem:[%s1 + $0x64] sm:$0xf]
  %v171 = vld [vmem:[%s1 + $0x68] sm:$0xf]
  %v172 = vld [vmem:[%s1 + $0x6c] sm:$0xf]
  %v173 = vld [vmem:[%s1 + $0x70] sm:$0xf]
  %v174 = vld [vmem:[%s1 + $0x74] sm:$0xf]
  %v175 = vld [vmem:[%s1 + $0x78] sm:$0xf]
  %v176 = vld [vmem:[%s1 + $0x7c] sm:$0xf]
  %v177 = vld [vmem:[%s1 + $0x80] sm:$0xf]
  %v178 = vld [vmem:[%s1 + $0x84] sm:$0xf]
  %v179 = vld [vmem:[%s1 + $0x88] sm:$0xf]
  %v180 = vld [vmem:[%s1 + $0x8c] sm:$0xf]
  %v181 = vld [vmem:[%s1 + $0x90] sm:$0xf]
  %v182 = vld [vmem:[%s1 + $0x94] sm:$0xf]
  %v183 = vld [vmem:[%s1 + $0x98] sm:$0xf]
  %v184 = vld [vmem:[%s1 + $0x9c] sm:$0xf]
  %v185 = vld [vmem:[%s1 + $0xa0] sm:$0xf]
  %v186 = vld [vmem:[%s1 + $0xa4] sm:$0xf]
  %v187 = vld [vmem:[%s1 + $0xa8] sm:$0xf]
  %v188 = vld [vmem:[%s1 + $0xac] sm:$0xf]
  %v189 = vld [vmem:[%s1 + $0xb0] sm:$0xf]
  %v190 = vld [vmem:[%s1 + $0xb4] sm:$0xf]
  %v191 = vld [vmem:[%s1 + $0xb8] sm:$0xf]
  %v192 = vld [vmem:[%s1 + $0xbc] sm:$0xf]
  %v193 = vld [vmem:[%s1 + $0xc0] sm:$0xf]
  %v194 = vld [vmem:[%s1 + $0xc4] sm:$0xf]
  %v195 = vld [vmem:[%s1 + $0xc8] sm:$0xf]
  %v196 = vld [vmem:[%s1 + $0xcc] sm:$0xf]
  %v197 = vld [vmem:[%s1 + $0xd0] sm:$0xf]
  %v198 = vld [vmem:[%s1 + $0xd4] sm:$0xf]
  %v199 = vld [vmem:[%s1 + $0xd8] sm:$0xf]
  %v200 = vld [vmem:[%s1 + $0xdc] sm:$0xf]
  %v201 = vld [vmem:[%s1 + $0xe0] sm:$0xf]
  %v202 = vld [vmem:[%s1 + $0xe4] sm:$0xf]
  %v203 = vld [vmem:[%s1 + $0xe8] sm:$0xf]
  %v204 = vld [vmem:[%s1 + $0xec] sm:$0xf]
  %v205 = vld [vmem:[%s1 + $0xf0] sm:$0xf]
  %v206 = vld [vmem:[%s1 + $0xf4] sm:$0xf]
  %v207 = vld [vmem:[%s1 + $0xf8] sm:$0xf]
  %v208 = vld [vmem:[%s1 + $0xfc] sm:$0xf]
  %v209 = vunpack.c.l.bf16 %v145
  %v210 = vunpack.c.l.bf16 %v146
  %v211 = vunpack.c.l.bf16 %v147
  %v212 = vunpack.c.l.bf16 %v148
  %v213 = vunpack.c.l.bf16 %v149
  %v214 = vunpack.c.l.bf16 %v150
  %v215 = vunpack.c.l.bf16 %v151
  %v216 = vunpack.c.l.bf16 %v152
  %v217 = vunpack.c.l.bf16 %v153
  %v218 = vunpack.c.l.bf16 %v154
  %v219 = vunpack.c.l.bf16 %v155
  %v220 = vunpack.c.l.bf16 %v156
  %v221 = vunpack.c.l.bf16 %v157
  %v222 = vunpack.c.l.bf16 %v158
  %v223 = vunpack.c.l.bf16 %v159
  %v224 = vunpack.c.l.bf16 %v160
  %v225 = vunpack.c.l.bf16 %v161
  %v226 = vunpack.c.l.bf16 %v162
  %v227 = vunpack.c.l.bf16 %v163
  %v228 = vunpack.c.l.bf16 %v164
  %v229 = vunpack.c.l.bf16 %v165
  %v230 = vunpack.c.l.bf16 %v166
  %v231 = vunpack.c.l.bf16 %v167
  %v232 = vunpack.c.l.bf16 %v168
  %v233 = vunpack.c.l.bf16 %v169
  %v234 = vunpack.c.l.bf16 %v170
  %v235 = vunpack.c.l.bf16 %v171
  %v236 = vunpack.c.l.bf16 %v172
  %v237 = vunpack.c.l.bf16 %v173
  %v238 = vunpack.c.l.bf16 %v174
  %v239 = vunpack.c.l.bf16 %v175
  %v240 = vunpack.c.l.bf16 %v176
  %v241 = vunpack.c.l.bf16 %v177
  %v242 = vunpack.c.l.bf16 %v178
  %v243 = vunpack.c.l.bf16 %v179
  %v244 = vunpack.c.l.bf16 %v180
  %v245 = vunpack.c.l.bf16 %v181
  %v246 = vunpack.c.l.bf16 %v182
  %v247 = vunpack.c.l.bf16 %v183
  %v248 = vunpack.c.l.bf16 %v184
  %v249 = vunpack.c.l.bf16 %v185
  %v250 = vunpack.c.l.bf16 %v186
  %v251 = vunpack.c.l.bf16 %v187
  %v252 = vunpack.c.l.bf16 %v188
  %v253 = vunpack.c.l.bf16 %v189
  %v254 = vunpack.c.l.bf16 %v190
  %v255 = vunpack.c.l.bf16 %v191
  %v256 = vunpack.c.l.bf16 %v192
  %v257 = vunpack.c.l.bf16 %v193
  %v258 = vunpack.c.l.bf16 %v194
  %v259 = vunpack.c.l.bf16 %v195
  %v260 = vunpack.c.l.bf16 %v196
  %v261 = vunpack.c.l.bf16 %v197
  %v262 = vunpack.c.l.bf16 %v198
  %v263 = vunpack.c.l.bf16 %v199
  %v264 = vunpack.c.l.bf16 %v200
  %v265 = vunpack.c.l.bf16 %v201
  %v266 = vunpack.c.l.bf16 %v202
  %v267 = vunpack.c.l.bf16 %v203
  %v268 = vunpack.c.l.bf16 %v204
  %v269 = vunpack.c.l.bf16 %v205
  %v270 = vunpack.c.l.bf16 %v206
  %v271 = vunpack.c.l.bf16 %v207
  %v272 = vunpack.c.l.bf16 %v208
  %v273 = vld [vmem:[%s2] sm:$0x1]
  %v275 = vlaneseq
  %v276 = vshrl.u32 %v275, 7
  %v277 = vsub.s32 0, %v276
  %v278 = vrot.slane %v273, %v277
  %v280 = vmul.f32 %v81, %v278
  %v281 = vmul.f32 %v82, %v278
  %v282 = vmul.f32 %v83, %v278
  %v283 = vmul.f32 %v84, %v278
  %v284 = vmul.f32 %v85, %v278
  %v285 = vmul.f32 %v86, %v278
  %v286 = vmul.f32 %v87, %v278
  %v287 = vmul.f32 %v88, %v278
  %v288 = vmul.f32 %v89, %v278
  %v289 = vmul.f32 %v90, %v278
  %v290 = vmul.f32 %v91, %v278
  %v291 = vmul.f32 %v92, %v278
  %v292 = vmul.f32 %v93, %v278
  %v293 = vmul.f32 %v94, %v278
  %v294 = vmul.f32 %v95, %v278
  %v295 = vmul.f32 %v96, %v278
  %v296 = vmul.f32 %v97, %v278
  %v297 = vmul.f32 %v98, %v278
  %v298 = vmul.f32 %v99, %v278
  %v299 = vmul.f32 %v100, %v278
  %v300 = vmul.f32 %v101, %v278
  %v301 = vmul.f32 %v102, %v278
  %v302 = vmul.f32 %v103, %v278
  %v303 = vmul.f32 %v104, %v278
  %v304 = vmul.f32 %v105, %v278
  %v305 = vmul.f32 %v106, %v278
  %v306 = vmul.f32 %v107, %v278
  %v307 = vmul.f32 %v108, %v278
  %v308 = vmul.f32 %v109, %v278
  %v309 = vmul.f32 %v110, %v278
  %v310 = vmul.f32 %v111, %v278
  %v311 = vmul.f32 %v112, %v278
  %v312 = vmul.f32 %v113, %v278
  %v313 = vmul.f32 %v114, %v278
  %v314 = vmul.f32 %v115, %v278
  %v315 = vmul.f32 %v116, %v278
  %v316 = vmul.f32 %v117, %v278
  %v317 = vmul.f32 %v118, %v278
  %v318 = vmul.f32 %v119, %v278
  %v319 = vmul.f32 %v120, %v278
  %v320 = vmul.f32 %v121, %v278
  %v321 = vmul.f32 %v122, %v278
  %v322 = vmul.f32 %v123, %v278
  %v323 = vmul.f32 %v124, %v278
  %v324 = vmul.f32 %v125, %v278
  %v325 = vmul.f32 %v126, %v278
  %v326 = vmul.f32 %v127, %v278
  %v327 = vmul.f32 %v128, %v278
  %v328 = vmul.f32 %v129, %v278
  %v329 = vmul.f32 %v130, %v278
  %v330 = vmul.f32 %v131, %v278
  %v331 = vmul.f32 %v132, %v278
  %v332 = vmul.f32 %v133, %v278
  %v333 = vmul.f32 %v134, %v278
  %v334 = vmul.f32 %v135, %v278
  %v335 = vmul.f32 %v136, %v278
  %v336 = vmul.f32 %v137, %v278
  %v337 = vmul.f32 %v138, %v278
  %v338 = vmul.f32 %v139, %v278
  %v339 = vmul.f32 %v140, %v278
  %v340 = vmul.f32 %v141, %v278
  %v341 = vmul.f32 %v142, %v278
  %v342 = vmul.f32 %v143, %v278
  %v343 = vmul.f32 %v144, %v278
  %v344 = vld [vmem:[%s3] sm:$0x1]
  %v346 = vlaneseq
  %v347 = vshrl.u32 %v346, 7
  %v348 = vsub.s32 0, %v347
  %v349 = vrot.slane %v344, %v348
  %v351 = vadd.f32 %v280, %v349
  %v352 = vadd.f32 %v281, %v349
  %v353 = vadd.f32 %v282, %v349
  %v354 = vadd.f32 %v283, %v349
  %v355 = vadd.f32 %v284, %v349
  %v356 = vadd.f32 %v285, %v349
  %v357 = vadd.f32 %v286, %v349
  %v358 = vadd.f32 %v287, %v349
  %v359 = vadd.f32 %v288, %v349
  %v360 = vadd.f32 %v289, %v349
  %v361 = vadd.f32 %v290, %v349
  %v362 = vadd.f32 %v291, %v349
  %v363 = vadd.f32 %v292, %v349
  %v364 = vadd.f32 %v293, %v349
  %v365 = vadd.f32 %v294, %v349
  %v366 = vadd.f32 %v295, %v349
  %v367 = vadd.f32 %v296, %v349
  %v368 = vadd.f32 %v297, %v349
  %v369 = vadd.f32 %v298, %v349
  %v370 = vadd.f32 %v299, %v349
  %v371 = vadd.f32 %v300, %v349
  %v372 = vadd.f32 %v301, %v349
  %v373 = vadd.f32 %v302, %v349
  %v374 = vadd.f32 %v303, %v349
  %v375 = vadd.f32 %v304, %v349
  %v376 = vadd.f32 %v305, %v349
  %v377 = vadd.f32 %v306, %v349
  %v378 = vadd.f32 %v307, %v349
  %v379 = vadd.f32 %v308, %v349
  %v380 = vadd.f32 %v309, %v349
  %v381 = vadd.f32 %v310, %v349
  %v382 = vadd.f32 %v311, %v349
  %v383 = vadd.f32 %v312, %v349
  %v384 = vadd.f32 %v313, %v349
  %v385 = vadd.f32 %v314, %v349
  %v386 = vadd.f32 %v315, %v349
  %v387 = vadd.f32 %v316, %v349
  %v388 = vadd.f32 %v317, %v349
  %v389 = vadd.f32 %v318, %v349
  %v390 = vadd.f32 %v319, %v349
  %v391 = vadd.f32 %v320, %v349
  %v392 = vadd.f32 %v321, %v349
  %v393 = vadd.f32 %v322, %v349
  %v394 = vadd.f32 %v323, %v349
  %v395 = vadd.f32 %v324, %v349
  %v396 = vadd.f32 %v325, %v349
  %v397 = vadd.f32 %v326, %v349
  %v398 = vadd.f32 %v327, %v349
  %v399 = vadd.f32 %v328, %v349
  %v400 = vadd.f32 %v329, %v349
  %v401 = vadd.f32 %v330, %v349
  %v402 = vadd.f32 %v331, %v349
  %v403 = vadd.f32 %v332, %v349
  %v404 = vadd.f32 %v333, %v349
  %v405 = vadd.f32 %v334, %v349
  %v406 = vadd.f32 %v335, %v349
  %v407 = vadd.f32 %v336, %v349
  %v408 = vadd.f32 %v337, %v349
  %v409 = vadd.f32 %v338, %v349
  %v410 = vadd.f32 %v339, %v349
  %v411 = vadd.f32 %v340, %v349
  %v412 = vadd.f32 %v341, %v349
  %v413 = vadd.f32 %v342, %v349
  %v414 = vadd.f32 %v343, %v349
  %v415 = vadd.f32 %v351, %v209
  %v416 = vadd.f32 %v352, %v210
  %v417 = vadd.f32 %v353, %v211
  %v418 = vadd.f32 %v354, %v212
  %v419 = vadd.f32 %v355, %v213
  %v420 = vadd.f32 %v356, %v214
  %v421 = vadd.f32 %v357, %v215
  %v422 = vadd.f32 %v358, %v216
  %v423 = vadd.f32 %v359, %v217
  %v424 = vadd.f32 %v360, %v218
  %v425 = vadd.f32 %v361, %v219
  %v426 = vadd.f32 %v362, %v220
  %v427 = vadd.f32 %v363, %v221
  %v428 = vadd.f32 %v364, %v222
  %v429 = vadd.f32 %v365, %v223
  %v430 = vadd.f32 %v366, %v224
  %v431 = vadd.f32 %v367, %v225
  %v432 = vadd.f32 %v368, %v226
  %v433 = vadd.f32 %v369, %v227
  %v434 = vadd.f32 %v370, %v228
  %v435 = vadd.f32 %v371, %v229
  %v436 = vadd.f32 %v372, %v230
  %v437 = vadd.f32 %v373, %v231
  %v438 = vadd.f32 %v374, %v232
  %v439 = vadd.f32 %v375, %v233
  %v440 = vadd.f32 %v376, %v234
  %v441 = vadd.f32 %v377, %v235
  %v442 = vadd.f32 %v378, %v236
  %v443 = vadd.f32 %v379, %v237
  %v444 = vadd.f32 %v380, %v238
  %v445 = vadd.f32 %v381, %v239
  %v446 = vadd.f32 %v382, %v240
  %v447 = vadd.f32 %v383, %v241
  %v448 = vadd.f32 %v384, %v242
  %v449 = vadd.f32 %v385, %v243
  %v450 = vadd.f32 %v386, %v244
  %v451 = vadd.f32 %v387, %v245
  %v452 = vadd.f32 %v388, %v246
  %v453 = vadd.f32 %v389, %v247
  %v454 = vadd.f32 %v390, %v248
  %v455 = vadd.f32 %v391, %v249
  %v456 = vadd.f32 %v392, %v250
  %v457 = vadd.f32 %v393, %v251
  %v458 = vadd.f32 %v394, %v252
  %v459 = vadd.f32 %v395, %v253
  %v460 = vadd.f32 %v396, %v254
  %v461 = vadd.f32 %v397, %v255
  %v462 = vadd.f32 %v398, %v256
  %v463 = vadd.f32 %v399, %v257
  %v464 = vadd.f32 %v400, %v258
  %v465 = vadd.f32 %v401, %v259
  %v466 = vadd.f32 %v402, %v260
  %v467 = vadd.f32 %v403, %v261
  %v468 = vadd.f32 %v404, %v262
  %v469 = vadd.f32 %v405, %v263
  %v470 = vadd.f32 %v406, %v264
  %v471 = vadd.f32 %v407, %v265
  %v472 = vadd.f32 %v408, %v266
  %v473 = vadd.f32 %v409, %v267
  %v474 = vadd.f32 %v410, %v268
  %v475 = vadd.f32 %v411, %v269
  %v476 = vadd.f32 %v412, %v270
  %v477 = vadd.f32 %v413, %v271
  %v478 = vadd.f32 %v414, %v272
  %v479 = vmax.f32 %v415, 0.0
  %v480 = vmax.f32 %v416, 0.0
  %v481 = vmax.f32 %v417, 0.0
  %v482 = vmax.f32 %v418, 0.0
  %v483 = vmax.f32 %v419, 0.0
  %v484 = vmax.f32 %v420, 0.0
  %v485 = vmax.f32 %v421, 0.0
  %v486 = vmax.f32 %v422, 0.0
  %v487 = vmax.f32 %v423, 0.0
  %v488 = vmax.f32 %v424, 0.0
  %v489 = vmax.f32 %v425, 0.0
  %v490 = vmax.f32 %v426, 0.0
  %v491 = vmax.f32 %v427, 0.0
  %v492 = vmax.f32 %v428, 0.0
  %v493 = vmax.f32 %v429, 0.0
  %v494 = vmax.f32 %v430, 0.0
  %v495 = vmax.f32 %v431, 0.0
  %v496 = vmax.f32 %v432, 0.0
  %v497 = vmax.f32 %v433, 0.0
  %v498 = vmax.f32 %v434, 0.0
  %v499 = vmax.f32 %v435, 0.0
  %v500 = vmax.f32 %v436, 0.0
  %v501 = vmax.f32 %v437, 0.0
  %v502 = vmax.f32 %v438, 0.0
  %v503 = vmax.f32 %v439, 0.0
  %v504 = vmax.f32 %v440, 0.0
  %v505 = vmax.f32 %v441, 0.0
  %v506 = vmax.f32 %v442, 0.0
  %v507 = vmax.f32 %v443, 0.0
  %v508 = vmax.f32 %v444, 0.0
  %v509 = vmax.f32 %v445, 0.0
  %v510 = vmax.f32 %v446, 0.0
  %v511 = vmax.f32 %v447, 0.0
  %v512 = vmax.f32 %v448, 0.0
  %v513 = vmax.f32 %v449, 0.0
  %v514 = vmax.f32 %v450, 0.0
  %v515 = vmax.f32 %v451, 0.0
  %v516 = vmax.f32 %v452, 0.0
  %v517 = vmax.f32 %v453, 0.0
  %v518 = vmax.f32 %v454, 0.0
  %v519 = vmax.f32 %v455, 0.0
  %v520 = vmax.f32 %v456, 0.0
  %v521 = vmax.f32 %v457, 0.0
  %v522 = vmax.f32 %v458, 0.0
  %v523 = vmax.f32 %v459, 0.0
  %v524 = vmax.f32 %v460, 0.0
  %v525 = vmax.f32 %v461, 0.0
  %v526 = vmax.f32 %v462, 0.0
  %v527 = vmax.f32 %v463, 0.0
  %v528 = vmax.f32 %v464, 0.0
  %v529 = vmax.f32 %v465, 0.0
  %v530 = vmax.f32 %v466, 0.0
  %v531 = vmax.f32 %v467, 0.0
  %v532 = vmax.f32 %v468, 0.0
  %v533 = vmax.f32 %v469, 0.0
  %v534 = vmax.f32 %v470, 0.0
  %v535 = vmax.f32 %v471, 0.0
  %v536 = vmax.f32 %v472, 0.0
  %v537 = vmax.f32 %v473, 0.0
  %v538 = vmax.f32 %v474, 0.0
  %v539 = vmax.f32 %v475, 0.0
  %v540 = vmax.f32 %v476, 0.0
  %v541 = vmax.f32 %v477, 0.0
  %v542 = vmax.f32 %v478, 0.0
  %543 = vst [vmem:[%s4] sm:$0xff] %v479
  %544 = vst [vmem:[%s4 + $0x8] sm:$0xff] %v480
  %545 = vst [vmem:[%s4 + $0x10] sm:$0xff] %v481
  %546 = vst [vmem:[%s4 + $0x18] sm:$0xff] %v482
  %547 = vst [vmem:[%s4 + $0x20] sm:$0xff] %v483
  %548 = vst [vmem:[%s4 + $0x28] sm:$0xff] %v484
  %549 = vst [vmem:[%s4 + $0x30] sm:$0xff] %v485
  %550 = vst [vmem:[%s4 + $0x38] sm:$0xff] %v486
  %551 = vst [vmem:[%s4 + $0x40] sm:$0xff] %v487
  %552 = vst [vmem:[%s4 + $0x48] sm:$0xff] %v488
  %553 = vst [vmem:[%s4 + $0x50] sm:$0xff] %v489
  %554 = vst [vmem:[%s4 + $0x58] sm:$0xff] %v490
  %555 = vst [vmem:[%s4 + $0x60] sm:$0xff] %v491
  %556 = vst [vmem:[%s4 + $0x68] sm:$0xff] %v492
  %557 = vst [vmem:[%s4 + $0x70] sm:$0xff] %v493
  %558 = vst [vmem:[%s4 + $0x78] sm:$0xff] %v494
  %559 = vst [vmem:[%s4 + $0x80] sm:$0xff] %v495
  %560 = vst [vmem:[%s4 + $0x88] sm:$0xff] %v496
  %561 = vst [vmem:[%s4 + $0x90] sm:$0xff] %v497
  %562 = vst [vmem:[%s4 + $0x98] sm:$0xff] %v498
  %563 = vst [vmem:[%s4 + $0xa0] sm:$0xff] %v499
  %564 = vst [vmem:[%s4 + $0xa8] sm:$0xff] %v500
  %565 = vst [vmem:[%s4 + $0xb0] sm:$0xff] %v501
  %566 = vst [vmem:[%s4 + $0xb8] sm:$0xff] %v502
  %567 = vst [vmem:[%s4 + $0xc0] sm:$0xff] %v503
  %568 = vst [vmem:[%s4 + $0xc8] sm:$0xff] %v504
  %569 = vst [vmem:[%s4 + $0xd0] sm:$0xff] %v505
  %570 = vst [vmem:[%s4 + $0xd8] sm:$0xff] %v506
  %571 = vst [vmem:[%s4 + $0xe0] sm:$0xff] %v507
  %572 = vst [vmem:[%s4 + $0xe8] sm:$0xff] %v508
  %573 = vst [vmem:[%s4 + $0xf0] sm:$0xff] %v509
  %574 = vst [vmem:[%s4 + $0xf8] sm:$0xff] %v510
  %575 = vst [vmem:[%s4 + $0x100] sm:$0xff] %v511
  %576 = vst [vmem:[%s4 + $0x108] sm:$0xff] %v512
  %577 = vst [vmem:[%s4 + $0x110] sm:$0xff] %v513
  %578 = vst [vmem:[%s4 + $0x118] sm:$0xff] %v514
  %579 = vst [vmem:[%s4 + $0x120] sm:$0xff] %v515
  %580 = vst [vmem:[%s4 + $0x128] sm:$0xff] %v516
  %581 = vst [vmem:[%s4 + $0x130] sm:$0xff] %v517
  %582 = vst [vmem:[%s4 + $0x138] sm:$0xff] %v518
  %583 = vst [vmem:[%s4 + $0x140] sm:$0xff] %v519
  %584 = vst [vmem:[%s4 + $0x148] sm:$0xff] %v520
  %585 = vst [vmem:[%s4 + $0x150] sm:$0xff] %v521
  %586 = vst [vmem:[%s4 + $0x158] sm:$0xff] %v522
  %587 = vst [vmem:[%s4 + $0x160] sm:$0xff] %v523
  %588 = vst [vmem:[%s4 + $0x168] sm:$0xff] %v524
  %589 = vst [vmem:[%s4 + $0x170] sm:$0xff] %v525
  %590 = vst [vmem:[%s4 + $0x178] sm:$0xff] %v526
  %591 = vst [vmem:[%s4 + $0x180] sm:$0xff] %v527
  %592 = vst [vmem:[%s4 + $0x188] sm:$0xff] %v528
  %593 = vst [vmem:[%s4 + $0x190] sm:$0xff] %v529
  %594 = vst [vmem:[%s4 + $0x198] sm:$0xff] %v530
  %595 = vst [vmem:[%s4 + $0x1a0] sm:$0xff] %v531
  %596 = vst [vmem:[%s4 + $0x1a8] sm:$0xff] %v532
  %597 = vst [vmem:[%s4 + $0x1b0] sm:$0xff] %v533
  %598 = vst [vmem:[%s4 + $0x1b8] sm:$0xff] %v534
  %599 = vst [vmem:[%s4 + $0x1c0] sm:$0xff] %v535
  %600 = vst [vmem:[%s4 + $0x1c8] sm:$0xff] %v536
  %601 = vst [vmem:[%s4 + $0x1d0] sm:$0xff] %v537
  %602 = vst [vmem:[%s4 + $0x1d8] sm:$0xff] %v538
  %603 = vst [vmem:[%s4 + $0x1e0] sm:$0xff] %v539
  %604 = vst [vmem:[%s4 + $0x1e8] sm:$0xff] %v540
  %605 = vst [vmem:[%s4 + $0x1f0] sm:$0xff] %v541
  %606 = vst [vmem:[%s4 + $0x1f8] sm:$0xff] %v542
  // Predicated region
  $region18: #{resblock_bottle.7} parent=0 // pred_check
    _
  $region19: #{resblock_bottle.7} parent=0 // pred_check_branch
    %608 = sbr.rel (0) target = $region21
  $region20: #{resblock_bottle.7} parent=0 // pred_region
    _
  $region21: #{resblock_bottle.7} parent=0 // pred_fallthru
    _
  // Predicated region
  $region22: #{resblock_bottle.7} parent=0 // pred_check
    _
  $region23: #{resblock_bottle.7} parent=0 // pred_check_branch
    %610 = sbr.rel (0) target = $region25
  $region24: #{resblock_bottle.7} parent=0 // pred_region
    _
  $region25: #{resblock_bottle.7} parent=0 // pred_fallthru
    _

// kernel: resblock_bottle.6
$region0: #{resblock_bottle.6}
  #allocation0 [shape = 'u32[]', space=smem, size = 0x4, offset = 0x4, fixed_abs, tag = 'smem constant byte address 0x4 - core index']
  #allocation1 [shape = 'u32[144,128]{1,0:T(1,128)}', space=vmem, size = 0x12000, scoped, tag = 'internal scratch']
  %s0 = inlined_call_operand.vmem [shape: bf16[512,128], index: 0, kind: input, shape index: {}]
  %s1 = inlined_call_operand.vmem [shape: bf16[128,128], index: 1, kind: input, shape index: {}]
  %s2 = inlined_call_operand.vmem [shape: f32[1,128], index: 2, kind: input, shape index: {}]
  %s3 = inlined_call_operand.vmem [shape: f32[1,128], index: 3, kind: input, shape index: {}]
  %s4 = inlined_call_operand.vmem [shape: bf16[512,128], index: 4, kind: output, shape index: {0}]
  %s5 = inlined_call_operand.vmem [shape: f32[1,2,128], index: 5, kind: output, shape index: {1}]
  %6 = xla_tuple %s4, %s5
  %s7 = sld [smem:[#allocation0]]
  $region34: #{resblock_bottle.6} parent=0
    _
  %s9 = ssub.s32 1, %s7
  %s10 = scalar_select 0, %s9, %s7
  // Predicated region
  $region2: #{resblock_bottle.6} parent=0 // pred_check
    _
  $region3: #{resblock_bottle.6} parent=0 // pred_check_branch
    %12 = sbr.rel (0) target = $region5
  $region4: #{resblock_bottle.6} parent=0 // pred_region
    _
  $region5: #{resblock_bottle.6} parent=0 // pred_fallthru
    _
  // Predicated region
  $region6: #{resblock_bottle.6} parent=0 // pred_check
    _
  $region7: #{resblock_bottle.6} parent=0 // pred_check_branch
    %14 = sbr.rel (0) target = $region9
  $region8: #{resblock_bottle.6} parent=0 // pred_region
    _
  $region9: #{resblock_bottle.6} parent=0 // pred_fallthru
    _
  // Predicated region
  $region10: #{resblock_bottle.6} parent=0 // pred_check
    _
  $region11: #{resblock_bottle.6} parent=0 // pred_check_branch
    %16 = sbr.rel (0) target = $region13
  $region12: #{resblock_bottle.6} parent=0 // pred_region
    _
  $region13: #{resblock_bottle.6} parent=0 // pred_fallthru
    _
  // Predicated region
  $region14: #{resblock_bottle.6} parent=0 // pred_check
    _
  $region15: #{resblock_bottle.6} parent=0 // pred_check_branch
    %18 = sbr.rel (0) target = $region17
  $region16: #{resblock_bottle.6} parent=0 // pred_region
    _
  $region17: #{resblock_bottle.6} parent=0 // pred_fallthru
    _
  %v20 = vld [vmem:[%s0] sm:$0xf]
  %v21 = vld [vmem:[%s0 + $0x4] sm:$0xf]
  %v22 = vld [vmem:[%s0 + $0x8] sm:$0xf]
  %v23 = vld [vmem:[%s0 + $0xc] sm:$0xf]
  %v24 = vld [vmem:[%s0 + $0x10] sm:$0xf]
  %v25 = vld [vmem:[%s0 + $0x14] sm:$0xf]
  %v26 = vld [vmem:[%s0 + $0x18] sm:$0xf]
  %v27 = vld [vmem:[%s0 + $0x1c] sm:$0xf]
  %v28 = vld [vmem:[%s0 + $0x20] sm:$0xf]
  %v29 = vld [vmem:[%s0 + $0x24] sm:$0xf]
  %v30 = vld [vmem:[%s0 + $0x28] sm:$0xf]
  %v31 = vld [vmem:[%s0 + $0x2c] sm:$0xf]
  %v32 = vld [vmem:[%s0 + $0x30] sm:$0xf]
  %v33 = vld [vmem:[%s0 + $0x34] sm:$0xf]
  %v34 = vld [vmem:[%s0 + $0x38] sm:$0xf]
  %v35 = vld [vmem:[%s0 + $0x3c] sm:$0xf]
  %v36 = vld [vmem:[%s0 + $0x40] sm:$0xf]
  %v37 = vld [vmem:[%s0 + $0x44] sm:$0xf]
  %v38 = vld [vmem:[%s0 + $0x48] sm:$0xf]
  %v39 = vld [vmem:[%s0 + $0x4c] sm:$0xf]
  %v40 = vld [vmem:[%s0 + $0x50] sm:$0xf]
  %v41 = vld [vmem:[%s0 + $0x54] sm:$0xf]
  %v42 = vld [vmem:[%s0 + $0x58] sm:$0xf]
  %v43 = vld [vmem:[%s0 + $0x5c] sm:$0xf]
  %v44 = vld [vmem:[%s0 + $0x60] sm:$0xf]
  %v45 = vld [vmem:[%s0 + $0x64] sm:$0xf]
  %v46 = vld [vmem:[%s0 + $0x68] sm:$0xf]
  %v47 = vld [vmem:[%s0 + $0x6c] sm:$0xf]
  %v48 = vld [vmem:[%s0 + $0x70] sm:$0xf]
  %v49 = vld [vmem:[%s0 + $0x74] sm:$0xf]
  %v50 = vld [vmem:[%s0 + $0x78] sm:$0xf]
  %v51 = vld [vmem:[%s0 + $0x7c] sm:$0xf]
  %v52 = vld [vmem:[%s0 + $0x80] sm:$0xf]
  %v53 = vld [vmem:[%s0 + $0x84] sm:$0xf]
  %v54 = vld [vmem:[%s0 + $0x88] sm:$0xf]
  %v55 = vld [vmem:[%s0 + $0x8c] sm:$0xf]
  %v56 = vld [vmem:[%s0 + $0x90] sm:$0xf]
  %v57 = vld [vmem:[%s0 + $0x94] sm:$0xf]
  %v58 = vld [vmem:[%s0 + $0x98] sm:$0xf]
  %v59 = vld [vmem:[%s0 + $0x9c] sm:$0xf]
  %v60 = vld [vmem:[%s0 + $0xa0] sm:$0xf]
  %v61 = vld [vmem:[%s0 + $0xa4] sm:$0xf]
  %v62 = vld [vmem:[%s0 + $0xa8] sm:$0xf]
  %v63 = vld [vmem:[%s0 + $0xac] sm:$0xf]
  %v64 = vld [vmem:[%s0 + $0xb0] sm:$0xf]
  %v65 = vld [vmem:[%s0 + $0xb4] sm:$0xf]
  %v66 = vld [vmem:[%s0 + $0xb8] sm:$0xf]
  %v67 = vld [vmem:[%s0 + $0xbc] sm:$0xf]
  %v68 = vld [vmem:[%s0 + $0xc0] sm:$0xf]
  %v69 = vld [vmem:[%s0 + $0xc4] sm:$0xf]
  %v70 = vld [vmem:[%s0 + $0xc8] sm:$0xf]
  %v71 = vld [vmem:[%s0 + $0xcc] sm:$0xf]
  %v72 = vld [vmem:[%s0 + $0xd0] sm:$0xf]
  %v73 = vld [vmem:[%s0 + $0xd4] sm:$0xf]
  %v74 = vld [vmem:[%s0 + $0xd8] sm:$0xf]
  %v75 = vld [vmem:[%s0 + $0xdc] sm:$0xf]
  %v76 = vld [vmem:[%s0 + $0xe0] sm:$0xf]
  %v77 = vld [vmem:[%s0 + $0xe4] sm:$0xf]
  %v78 = vld [vmem:[%s0 + $0xe8] sm:$0xf]
  %v79 = vld [vmem:[%s0 + $0xec] sm:$0xf]
  %v80 = vld [vmem:[%s0 + $0xf0] sm:$0xf]
  %v81 = vld [vmem:[%s0 + $0xf4] sm:$0xf]
  %v82 = vld [vmem:[%s0 + $0xf8] sm:$0xf]
  %v83 = vld [vmem:[%s0 + $0xfc] sm:$0xf]
  %v84 = vunpack.c.l.bf16 %v20
  %v85 = vunpack.c.l.bf16 %v21
  %v86 = vunpack.c.l.bf16 %v22
  %v87 = vunpack.c.l.bf16 %v23
  %v88 = vunpack.c.l.bf16 %v24
  %v89 = vunpack.c.l.bf16 %v25
  %v90 = vunpack.c.l.bf16 %v26
  %v91 = vunpack.c.l.bf16 %v27
  %v92 = vunpack.c.l.bf16 %v28
  %v93 = vunpack.c.l.bf16 %v29
  %v94 = vunpack.c.l.bf16 %v30
  %v95 = vunpack.c.l.bf16 %v31
  %v96 = vunpack.c.l.bf16 %v32
  %v97 = vunpack.c.l.bf16 %v33
  %v98 = vunpack.c.l.bf16 %v34
  %v99 = vunpack.c.l.bf16 %v35
  %v100 = vunpack.c.l.bf16 %v36
  %v101 = vunpack.c.l.bf16 %v37
  %v102 = vunpack.c.l.bf16 %v38
  %v103 = vunpack.c.l.bf16 %v39
  %v104 = vunpack.c.l.bf16 %v40
  %v105 = vunpack.c.l.bf16 %v41
  %v106 = vunpack.c.l.bf16 %v42
  %v107 = vunpack.c.l.bf16 %v43
  %v108 = vunpack.c.l.bf16 %v44
  %v109 = vunpack.c.l.bf16 %v45
  %v110 = vunpack.c.l.bf16 %v46
  %v111 = vunpack.c.l.bf16 %v47
  %v112 = vunpack.c.l.bf16 %v48
  %v113 = vunpack.c.l.bf16 %v49
  %v114 = vunpack.c.l.bf16 %v50
  %v115 = vunpack.c.l.bf16 %v51
  %v116 = vunpack.c.l.bf16 %v52
  %v117 = vunpack.c.l.bf16 %v53
  %v118 = vunpack.c.l.bf16 %v54
  %v119 = vunpack.c.l.bf16 %v55
  %v120 = vunpack.c.l.bf16 %v56
  %v121 = vunpack.c.l.bf16 %v57
  %v122 = vunpack.c.l.bf16 %v58
  %v123 = vunpack.c.l.bf16 %v59
  %v124 = vunpack.c.l.bf16 %v60
  %v125 = vunpack.c.l.bf16 %v61
  %v126 = vunpack.c.l.bf16 %v62
  %v127 = vunpack.c.l.bf16 %v63
  %v128 = vunpack.c.l.bf16 %v64
  %v129 = vunpack.c.l.bf16 %v65
  %v130 = vunpack.c.l.bf16 %v66
  %v131 = vunpack.c.l.bf16 %v67
  %v132 = vunpack.c.l.bf16 %v68
  %v133 = vunpack.c.l.bf16 %v69
  %v134 = vunpack.c.l.bf16 %v70
  %v135 = vunpack.c.l.bf16 %v71
  %v136 = vunpack.c.l.bf16 %v72
  %v137 = vunpack.c.l.bf16 %v73
  %v138 = vunpack.c.l.bf16 %v74
  %v139 = vunpack.c.l.bf16 %v75
  %v140 = vunpack.c.l.bf16 %v76
  %v141 = vunpack.c.l.bf16 %v77
  %v142 = vunpack.c.l.bf16 %v78
  %v143 = vunpack.c.l.bf16 %v79
  %v144 = vunpack.c.l.bf16 %v80
  %v145 = vunpack.c.l.bf16 %v81
  %v146 = vunpack.c.l.bf16 %v82
  %v147 = vunpack.c.l.bf16 %v83
  %v148 = vld [vmem:[%s2] sm:$0x1]
  %v150 = vlaneseq
  %v151 = vshrl.u32 %v150, 7
  %v152 = vsub.s32 0, %v151
  %v153 = vrot.slane %v148, %v152
  %v155 = vmul.f32 %v84, %v153
  %v156 = vmul.f32 %v85, %v153
  %v157 = vmul.f32 %v86, %v153
  %v158 = vmul.f32 %v87, %v153
  %v159 = vmul.f32 %v88, %v153
  %v160 = vmul.f32 %v89, %v153
  %v161 = vmul.f32 %v90, %v153
  %v162 = vmul.f32 %v91, %v153
  %v163 = vmul.f32 %v92, %v153
  %v164 = vmul.f32 %v93, %v153
  %v165 = vmul.f32 %v94, %v153
  %v166 = vmul.f32 %v95, %v153
  %v167 = vmul.f32 %v96, %v153
  %v168 = vmul.f32 %v97, %v153
  %v169 = vmul.f32 %v98, %v153
  %v170 = vmul.f32 %v99, %v153
  %v171 = vmul.f32 %v100, %v153
  %v172 = vmul.f32 %v101, %v153
  %v173 = vmul.f32 %v102, %v153
  %v174 = vmul.f32 %v103, %v153
  %v175 = vmul.f32 %v104, %v153
  %v176 = vmul.f32 %v105, %v153
  %v177 = vmul.f32 %v106, %v153
  %v178 = vmul.f32 %v107, %v153
  %v179 = vmul.f32 %v108, %v153
  %v180 = vmul.f32 %v109, %v153
  %v181 = vmul.f32 %v110, %v153
  %v182 = vmul.f32 %v111, %v153
  %v183 = vmul.f32 %v112, %v153
  %v184 = vmul.f32 %v113, %v153
  %v185 = vmul.f32 %v114, %v153
  %v186 = vmul.f32 %v115, %v153
  %v187 = vmul.f32 %v116, %v153
  %v188 = vmul.f32 %v117, %v153
  %v189 = vmul.f32 %v118, %v153
  %v190 = vmul.f32 %v119, %v153
  %v191 = vmul.f32 %v120, %v153
  %v192 = vmul.f32 %v121, %v153
  %v193 = vmul.f32 %v122, %v153
  %v194 = vmul.f32 %v123, %v153
  %v195 = vmul.f32 %v124, %v153
  %v196 = vmul.f32 %v125, %v153
  %v197 = vmul.f32 %v126, %v153
  %v198 = vmul.f32 %v127, %v153
  %v199 = vmul.f32 %v128, %v153
  %v200 = vmul.f32 %v129, %v153
  %v201 = vmul.f32 %v130, %v153
  %v202 = vmul.f32 %v131, %v153
  %v203 = vmul.f32 %v132, %v153
  %v204 = vmul.f32 %v133, %v153
  %v205 = vmul.f32 %v134, %v153
  %v206 = vmul.f32 %v135, %v153
  %v207 = vmul.f32 %v136, %v153
  %v208 = vmul.f32 %v137, %v153
  %v209 = vmul.f32 %v138, %v153
  %v210 = vmul.f32 %v139, %v153
  %v211 = vmul.f32 %v140, %v153
  %v212 = vmul.f32 %v141, %v153
  %v213 = vmul.f32 %v142, %v153
  %v214 = vmul.f32 %v143, %v153
  %v215 = vmul.f32 %v144, %v153
  %v216 = vmul.f32 %v145, %v153
  %v217 = vmul.f32 %v146, %v153
  %v218 = vmul.f32 %v147, %v153
  %v219 = vld [vmem:[%s3] sm:$0x1]
  %v221 = vlaneseq
  %v222 = vshrl.u32 %v221, 7
  %v223 = vsub.s32 0, %v222
  %v224 = vrot.slane %v219, %v223
  %v226 = vadd.f32 %v155, %v224
  %v227 = vadd.f32 %v156, %v224
  %v228 = vadd.f32 %v157, %v224
  %v229 = vadd.f32 %v158, %v224
  %v230 = vadd.f32 %v159, %v224
  %v231 = vadd.f32 %v160, %v224
  %v232 = vadd.f32 %v161, %v224
  %v233 = vadd.f32 %v162, %v224
  %v234 = vadd.f32 %v163, %v224
  %v235 = vadd.f32 %v164, %v224
  %v236 = vadd.f32 %v165, %v224
  %v237 = vadd.f32 %v166, %v224
  %v238 = vadd.f32 %v167, %v224
  %v239 = vadd.f32 %v168, %v224
  %v240 = vadd.f32 %v169, %v224
  %v241 = vadd.f32 %v170, %v224
  %v242 = vadd.f32 %v171, %v224
  %v243 = vadd.f32 %v172, %v224
  %v244 = vadd.f32 %v173, %v224
  %v245 = vadd.f32 %v174, %v224
  %v246 = vadd.f32 %v175, %v224
  %v247 = vadd.f32 %v176, %v224
  %v248 = vadd.f32 %v177, %v224
  %v249 = vadd.f32 %v178, %v224
  %v250 = vadd.f32 %v179, %v224
  %v251 = vadd.f32 %v180, %v224
  %v252 = vadd.f32 %v181, %v224
  %v253 = vadd.f32 %v182, %v224
  %v254 = vadd.f32 %v183, %v224
  %v255 = vadd.f32 %v184, %v224
  %v256 = vadd.f32 %v185, %v224
  %v257 = vadd.f32 %v186, %v224
  %v258 = vadd.f32 %v187, %v224
  %v259 = vadd.f32 %v188, %v224
  %v260 = vadd.f32 %v189, %v224
  %v261 = vadd.f32 %v190, %v224
  %v262 = vadd.f32 %v191, %v224
  %v263 = vadd.f32 %v192, %v224
  %v264 = vadd.f32 %v193, %v224
  %v265 = vadd.f32 %v194, %v224
  %v266 = vadd.f32 %v195, %v224
  %v267 = vadd.f32 %v196, %v224
  %v268 = vadd.f32 %v197, %v224
  %v269 = vadd.f32 %v198, %v224
  %v270 = vadd.f32 %v199, %v224
  %v271 = vadd.f32 %v200, %v224
  %v272 = vadd.f32 %v201, %v224
  %v273 = vadd.f32 %v202, %v224
  %v274 = vadd.f32 %v203, %v224
  %v275 = vadd.f32 %v204, %v224
  %v276 = vadd.f32 %v205, %v224
  %v277 = vadd.f32 %v206, %v224
  %v278 = vadd.f32 %v207, %v224
  %v279 = vadd.f32 %v208, %v224
  %v280 = vadd.f32 %v209, %v224
  %v281 = vadd.f32 %v210, %v224
  %v282 = vadd.f32 %v211, %v224
  %v283 = vadd.f32 %v212, %v224
  %v284 = vadd.f32 %v213, %v224
  %v285 = vadd.f32 %v214, %v224
  %v286 = vadd.f32 %v215, %v224
  %v287 = vadd.f32 %v216, %v224
  %v288 = vadd.f32 %v217, %v224
  %v289 = vadd.f32 %v218, %v224
  %v290 = vmax.f32 %v226, 0.0
  %v291 = vmax.f32 %v227, 0.0
  %v292 = vmax.f32 %v228, 0.0
  %v293 = vmax.f32 %v229, 0.0
  %v294 = vmax.f32 %v230, 0.0
  %v295 = vmax.f32 %v231, 0.0
  %v296 = vmax.f32 %v232, 0.0
  %v297 = vmax.f32 %v233, 0.0
  %v298 = vmax.f32 %v234, 0.0
  %v299 = vmax.f32 %v235, 0.0
  %v300 = vmax.f32 %v236, 0.0
  %v301 = vmax.f32 %v237, 0.0
  %v302 = vmax.f32 %v238, 0.0
  %v303 = vmax.f32 %v239, 0.0
  %v304 = vmax.f32 %v240, 0.0
  %v305 = vmax.f32 %v241, 0.0
  %v306 = vmax.f32 %v242, 0.0
  %v307 = vmax.f32 %v243, 0.0
  %v308 = vmax.f32 %v244, 0.0
  %v309 = vmax.f32 %v245, 0.0
  %v310 = vmax.f32 %v246, 0.0
  %v311 = vmax.f32 %v247, 0.0
  %v312 = vmax.f32 %v248, 0.0
  %v313 = vmax.f32 %v249, 0.0
  %v314 = vmax.f32 %v250, 0.0
  %v315 = vmax.f32 %v251, 0.0
  %v316 = vmax.f32 %v252, 0.0
  %v317 = vmax.f32 %v253, 0.0
  %v318 = vmax.f32 %v254, 0.0
  %v319 = vmax.f32 %v255, 0.0
  %v320 = vmax.f32 %v256, 0.0
  %v321 = vmax.f32 %v257, 0.0
  %v322 = vmax.f32 %v258, 0.0
  %v323 = vmax.f32 %v259, 0.0
  %v324 = vmax.f32 %v260, 0.0
  %v325 = vmax.f32 %v261, 0.0
  %v326 = vmax.f32 %v262, 0.0
  %v327 = vmax.f32 %v263, 0.0
  %v328 = vmax.f32 %v264, 0.0
  %v329 = vmax.f32 %v265, 0.0
  %v330 = vmax.f32 %v266, 0.0
  %v331 = vmax.f32 %v267, 0.0
  %v332 = vmax.f32 %v268, 0.0
  %v333 = vmax.f32 %v269, 0.0
  %v334 = vmax.f32 %v270, 0.0
  %v335 = vmax.f32 %v271, 0.0
  %v336 = vmax.f32 %v272, 0.0
  %v337 = vmax.f32 %v273, 0.0
  %v338 = vmax.f32 %v274, 0.0
  %v339 = vmax.f32 %v275, 0.0
  %v340 = vmax.f32 %v276, 0.0
  %v341 = vmax.f32 %v277, 0.0
  %v342 = vmax.f32 %v278, 0.0
  %v343 = vmax.f32 %v279, 0.0
  %v344 = vmax.f32 %v280, 0.0
  %v345 = vmax.f32 %v281, 0.0
  %v346 = vmax.f32 %v282, 0.0
  %v347 = vmax.f32 %v283, 0.0
  %v348 = vmax.f32 %v284, 0.0
  %v349 = vmax.f32 %v285, 0.0
  %v350 = vmax.f32 %v286, 0.0
  %v351 = vmax.f32 %v287, 0.0
  %v352 = vmax.f32 %v288, 0.0
  %v353 = vmax.f32 %v289, 0.0
  %v354 = vpack.c.bf16 %v291, %v290
  %v355 = vpack.c.bf16 %v293, %v292
  %v356 = vpack.c.bf16 %v295, %v294
  %v357 = vpack.c.bf16 %v297, %v296
  %v358 = vpack.c.bf16 %v299, %v298
  %v359 = vpack.c.bf16 %v301, %v300
  %v360 = vpack.c.bf16 %v303, %v302
  %v361 = vpack.c.bf16 %v305, %v304
  %v362 = vpack.c.bf16 %v307, %v306
  %v363 = vpack.c.bf16 %v309, %v308
  %v364 = vpack.c.bf16 %v311, %v310
  %v365 = vpack.c.bf16 %v313, %v312
  %v366 = vpack.c.bf16 %v315, %v314
  %v367 = vpack.c.bf16 %v317, %v316
  %v368 = vpack.c.bf16 %v319, %v318
  %v369 = vpack.c.bf16 %v321, %v320
  %v370 = vpack.c.bf16 %v323, %v322
  %v371 = vpack.c.bf16 %v325, %v324
  %v372 = vpack.c.bf16 %v327, %v326
  %v373 = vpack.c.bf16 %v329, %v328
  %v374 = vpack.c.bf16 %v331, %v330
  %v375 = vpack.c.bf16 %v333, %v332
  %v376 = vpack.c.bf16 %v335, %v334
  %v377 = vpack.c.bf16 %v337, %v336
  %v378 = vpack.c.bf16 %v339, %v338
  %v379 = vpack.c.bf16 %v341, %v340
  %v380 = vpack.c.bf16 %v343, %v342
  %v381 = vpack.c.bf16 %v345, %v344
  %v382 = vpack.c.bf16 %v347, %v346
  %v383 = vpack.c.bf16 %v349, %v348
  %v384 = vpack.c.bf16 %v351, %v350
  %v385 = vpack.c.bf16 %v353, %v352
  %v386 = vld [vmem:[%s1] sm:$0xf]
  %v387 = vld [vmem:[%s1 + $0x4] sm:$0xf]
  %v388 = vld [vmem:[%s1 + $0x8] sm:$0xf]
  %v389 = vld [vmem:[%s1 + $0xc] sm:$0xf]
  %v390 = vld [vmem:[%s1 + $0x10] sm:$0xf]
  %v391 = vld [vmem:[%s1 + $0x14] sm:$0xf]
  %v392 = vld [vmem:[%s1 + $0x18] sm:$0xf]
  %v393 = vld [vmem:[%s1 + $0x1c] sm:$0xf]
  %v394 = vld [vmem:[%s1 + $0x20] sm:$0xf]
  %v395 = vld [vmem:[%s1 + $0x24] sm:$0xf]
  %v396 = vld [vmem:[%s1 + $0x28] sm:$0xf]
  %v397 = vld [vmem:[%s1 + $0x2c] sm:$0xf]
  %v398 = vld [vmem:[%s1 + $0x30] sm:$0xf]
  %v399 = vld [vmem:[%s1 + $0x34] sm:$0xf]
  %v400 = vld [vmem:[%s1 + $0x38] sm:$0xf]
  %v401 = vld [vmem:[%s1 + $0x3c] sm:$0xf]
  %v418 = vunpack.c.l.b16 %v386
  %v419 = vunpack.c.l.b16 %v387
  %v420 = vunpack.c.l.b16 %v388
  %v421 = vunpack.c.l.b16 %v389
  %v422 = vunpack.c.l.b16 %v390
  %v423 = vunpack.c.l.b16 %v391
  %v424 = vunpack.c.l.b16 %v392
  %v425 = vunpack.c.l.b16 %v393
  %v426 = vunpack.c.l.b16 %v394
  %v427 = vunpack.c.l.b16 %v395
  %v428 = vunpack.c.l.b16 %v396
  %v429 = vunpack.c.l.b16 %v397
  %v430 = vunpack.c.l.b16 %v398
  %v431 = vunpack.c.l.b16 %v399
  %v432 = vunpack.c.l.b16 %v400
  %v433 = vunpack.c.l.b16 %v401
  %v434 = vpack.c.b16 %v419, %v418
  %v435 = vpack.c.b16 %v421, %v420
  %v436 = vpack.c.b16 %v423, %v422
  %v437 = vpack.c.b16 %v425, %v424
  %v438 = vpack.c.b16 %v427, %v426
  %v439 = vpack.c.b16 %v429, %v428
  %v440 = vpack.c.b16 %v431, %v430
  %v441 = vpack.c.b16 %v433, %v432
  %450 = vmatprep.subr.bf16.mxu0 0
  %451 = vmatpush1.bf16.msra.mxu0 %v434
  %452 = vmatprep.subr.bf16.mxu0 0
  %453 = vmatpush1.bf16.msra.mxu0 %v435
  %454 = vmatprep.subr.bf16.mxu0 0
  %455 = vmatpush1.bf16.msra.mxu0 %v436
  %456 = vmatprep.subr.bf16.mxu0 0
  %457 = vmatpush1.bf16.msra.mxu0 %v437
  %458 = vmatprep.subr.bf16.mxu0 0
  %459 = vmatpush1.bf16.msra.mxu0 %v438
  %460 = vmatprep.subr.bf16.mxu0 0
  %461 = vmatpush1.bf16.msra.mxu0 %v439
  %462 = vmatprep.subr.bf16.mxu0 0
  %463 = vmatpush1.bf16.msra.mxu0 %v440
  %464 = vmatprep.subr.bf16.mxu0 0
  %465 = vmatpush1.bf16.msra.mxu0 %v441
  %466 = vmatprep.subr.bf16.mxu0 0
  %467 = vmatpush1.bf16.msra.mxu0 0
  %468 = vmatprep.subr.bf16.mxu0 0
  %469 = vmatpush1.bf16.msra.mxu0 0
  %470 = vmatprep.subr.bf16.mxu0 0
  %471 = vmatpush1.bf16.msra.mxu0 0
  %472 = vmatprep.subr.bf16.mxu0 0
  %473 = vmatpush1.bf16.msra.mxu0 0
  %474 = vmatprep.subr.bf16.mxu0 0
  %475 = vmatpush1.bf16.msra.mxu0 0
  %476 = vmatprep.subr.bf16.mxu0 0
  %477 = vmatpush1.bf16.msra.mxu0 0
  %478 = vmatprep.subr.bf16.mxu0 0
  %479 = vmatpush1.bf16.msra.mxu0 0
  %480 = vmatprep.subr.bf16.mxu0 0
  %481 = vmatpush1.bf16.msra.mxu0 0
  %482 = vmatprep.mubr.bf16.mxu0 0
  %483 = vmatmul.mubr.bf16.gmra.mrb[0].mxu0 %v354
  %v484 = vpop.f32.mrb[0].mxu0
  %v485 = vadd.f32 0.0, %v484
  %v486 = vpop.f32.mrb[0].mxu0
  %v487 = vpop.f32.mrb[0].mxu0
  %v488 = vadd.f32 0.0, %v487
  %v489 = vpop.f32.mrb[0].mxu0
  %490 = vmatprep.mubr.bf16.mxu0 0
  %491 = vmatmul.mubr.bf16.gmra.mrb[0].mxu0 %v355
  %v492 = vpop.f32.mrb[0].mxu0
  %v493 = vadd.f32 0.0, %v492
  %v494 = vpop.f32.mrb[0].mxu0
  %v495 = vpop.f32.mrb[0].mxu0
  %v496 = vadd.f32 0.0, %v495
  %v497 = vpop.f32.mrb[0].mxu0
  %498 = vmatprep.mubr.bf16.mxu0 0
  %499 = vmatmul.mubr.bf16.gmra.mrb[0].mxu0 %v356
  %v500 = vpop.f32.mrb[0].mxu0
  %v501 = vadd.f32 0.0, %v500
  %v502 = vpop.f32.mrb[0].mxu0
  %v503 = vpop.f32.mrb[0].mxu0
  %v504 = vadd.f32 0.0, %v503
  %v505 = vpop.f32.mrb[0].mxu0
  %506 = vmatprep.mubr.bf16.mxu0 0
  %507 = vmatmul.mubr.bf16.gmra.mrb[0].mxu0 %v357
  %v508 = vpop.f32.mrb[0].mxu0
  %v509 = vadd.f32 0.0, %v508
  %v510 = vpop.f32.mrb[0].mxu0
  %v511 = vpop.f32.mrb[0].mxu0
  %v512 = vadd.f32 0.0, %v511
  %v513 = vpop.f32.mrb[0].mxu0
  %514 = vmatprep.mubr.bf16.mxu0 0
  %515 = vmatmul.mubr.bf16.gmra.mrb[0].mxu0 %v358
  %v516 = vpop.f32.mrb[0].mxu0
  %v517 = vadd.f32 0.0, %v516
  %v518 = vpop.f32.mrb[0].mxu0
  %v519 = vpop.f32.mrb[0].mxu0
  %v520 = vadd.f32 0.0, %v519
  %v521 = vpop.f32.mrb[0].mxu0
  %522 = vmatprep.mubr.bf16.mxu0 0
  %523 = vmatmul.mubr.bf16.gmra.mrb[0].mxu0 %v359
  %v524 = vpop.f32.mrb[0].mxu0
  %v525 = vadd.f32 0.0, %v524
  %v526 = vpop.f32.mrb[0].mxu0
  %v527 = vpop.f32.mrb[0].mxu0
  %v528 = vadd.f32 0.0, %v527
  %v529 = vpop.f32.mrb[0].mxu0
  %530 = vmatprep.mubr.bf16.mxu0 0
  %531 = vmatmul.mubr.bf16.gmra.mrb[0].mxu0 %v360
  %v532 = vpop.f32.mrb[0].mxu0
  %v533 = vadd.f32 0.0, %v532
  %v534 = vpop.f32.mrb[0].mxu0
  %v535 = vpop.f32.mrb[0].mxu0
  %v536 = vadd.f32 0.0, %v535
  %v537 = vpop.f32.mrb[0].mxu0
  %538 = vmatprep.mubr.bf16.mxu0 0
  %539 = vmatmul.mubr.bf16.gmra.mrb[0].mxu0 %v361
  %v540 = vpop.f32.mrb[0].mxu0
  %v541 = vadd.f32 0.0, %v540
  %v542 = vpop.f32.mrb[0].mxu0
  %v543 = vpop.f32.mrb[0].mxu0
  %v544 = vadd.f32 0.0, %v543
  %v545 = vpop.f32.mrb[0].mxu0
  %546 = vmatprep.mubr.bf16.mxu0 0
  %547 = vmatmul.mubr.bf16.gmra.mrb[0].mxu0 %v362
  %v548 = vpop.f32.mrb[0].mxu0
  %v549 = vadd.f32 0.0, %v548
  %v550 = vpop.f32.mrb[0].mxu0
  %v551 = vpop.f32.mrb[0].mxu0
  %v552 = vadd.f32 0.0, %v551
  %v553 = vpop.f32.mrb[0].mxu0
  %554 = vmatprep.mubr.bf16.mxu0 0
  %555 = vmatmul.mubr.bf16.gmra.mrb[0].mxu0 %v363
  %v556 = vpop.f32.mrb[0].mxu0
  %v557 = vadd.f32 0.0, %v556
  %v558 = vpop.f32.mrb[0].mxu0
  %v559 = vpop.f32.mrb[0].mxu0
  %v560 = vadd.f32 0.0, %v559
  %v561 = vpop.f32.mrb[0].mxu0
  %562 = vmatprep.mubr.bf16.mxu0 0
  %563 = vmatmul.mubr.bf16.gmra.mrb[0].mxu0 %v364
  %v564 = vpop.f32.mrb[0].mxu0
  %v565 = vadd.f32 0.0, %v564
  %v566 = vpop.f32.mrb[0].mxu0
  %v567 = vpop.f32.mrb[0].mxu0
  %v568 = vadd.f32 0.0, %v567
  %v569 = vpop.f32.mrb[0].mxu0
  %570 = vmatprep.mubr.bf16.mxu0 0
  %571 = vmatmul.mubr.bf16.gmra.mrb[0].mxu0 %v365
  %v572 = vpop.f32.mrb[0].mxu0
  %v573 = vadd.f32 0.0, %v572
  %v574 = vpop.f32.mrb[0].mxu0
  %v575 = vpop.f32.mrb[0].mxu0
  %v576 = vadd.f32 0.0, %v575
  %v577 = vpop.f32.mrb[0].mxu0
  %578 = vmatprep.mubr.bf16.mxu0 0
  %579 = vmatmul.mubr.bf16.gmra.mrb[0].mxu0 %v366
  %v580 = vpop.f32.mrb[0].mxu0
  %v581 = vadd.f32 0.0, %v580
  %v582 = vpop.f32.mrb[0].mxu0
  %v583 = vpop.f32.mrb[0].mxu0
  %v584 = vadd.f32 0.0, %v583
  %v585 = vpop.f32.mrb[0].mxu0
  %586 = vmatprep.mubr.bf16.mxu0 0
  %587 = vmatmul.mubr.bf16.gmra.mrb[0].mxu0 %v367
  %v588 = vpop.f32.mrb[0].mxu0
  %v589 = vadd.f32 0.0, %v588
  %v590 = vpop.f32.mrb[0].mxu0
  %v591 = vpop.f32.mrb[0].mxu0
  %v592 = vadd.f32 0.0, %v591
  %v593 = vpop.f32.mrb[0].mxu0
  %594 = vmatprep.mubr.bf16.mxu0 0
  %595 = vmatmul.mubr.bf16.gmra.mrb[0].mxu0 %v368
  %v596 = vpop.f32.mrb[0].mxu0
  %v597 = vadd.f32 0.0, %v596
  %v598 = vpop.f32.mrb[0].mxu0
  %v599 = vpop.f32.mrb[0].mxu0
  %v600 = vadd.f32 0.0, %v599
  %v601 = vpop.f32.mrb[0].mxu0
  %602 = vmatprep.mubr.bf16.mxu0 0
  %603 = vmatmul.mubr.bf16.gmra.mrb[0].mxu0 %v369
  %v604 = vpop.f32.mrb[0].mxu0
  %v605 = vadd.f32 0.0, %v604
  %v606 = vpop.f32.mrb[0].mxu0
  %v607 = vpop.f32.mrb[0].mxu0
  %v608 = vadd.f32 0.0, %v607
  %v609 = vpop.f32.mrb[0].mxu0
  %610 = vmatprep.mubr.bf16.mxu0 0
  %611 = vmatmul.mubr.bf16.gmra.mrb[0].mxu0 %v370
  %v612 = vpop.f32.mrb[0].mxu0
  %v613 = vadd.f32 0.0, %v612
  %v614 = vpop.f32.mrb[0].mxu0
  %v615 = vpop.f32.mrb[0].mxu0
  %v616 = vadd.f32 0.0, %v615
  %v617 = vpop.f32.mrb[0].mxu0
  %618 = vmatprep.mubr.bf16.mxu0 0
  %619 = vmatmul.mubr.bf16.gmra.mrb[0].mxu0 %v371
  %v620 = vpop.f32.mrb[0].mxu0
  %v621 = vadd.f32 0.0, %v620
  %v622 = vpop.f32.mrb[0].mxu0
  %v623 = vpop.f32.mrb[0].mxu0
  %v624 = vadd.f32 0.0, %v623
  %v625 = vpop.f32.mrb[0].mxu0
  %626 = vmatprep.mubr.bf16.mxu0 0
  %627 = vmatmul.mubr.bf16.gmra.mrb[0].mxu0 %v372
  %v628 = vpop.f32.mrb[0].mxu0
  %v629 = vadd.f32 0.0, %v628
  %v630 = vpop.f32.mrb[0].mxu0
  %v631 = vpop.f32.mrb[0].mxu0
  %v632 = vadd.f32 0.0, %v631
  %v633 = vpop.f32.mrb[0].mxu0
  %634 = vmatprep.mubr.bf16.mxu0 0
  %635 = vmatmul.mubr.bf16.gmra.mrb[0].mxu0 %v373
  %v636 = vpop.f32.mrb[0].mxu0
  %v637 = vadd.f32 0.0, %v636
  %v638 = vpop.f32.mrb[0].mxu0
  %v639 = vpop.f32.mrb[0].mxu0
  %v640 = vadd.f32 0.0, %v639
  %v641 = vpop.f32.mrb[0].mxu0
  %642 = vmatprep.mubr.bf16.mxu0 0
  %643 = vmatmul.mubr.bf16.gmra.mrb[0].mxu0 %v374
  %v644 = vpop.f32.mrb[0].mxu0
  %v645 = vadd.f32 0.0, %v644
  %v646 = vpop.f32.mrb[0].mxu0
  %v647 = vpop.f32.mrb[0].mxu0
  %v648 = vadd.f32 0.0, %v647
  %v649 = vpop.f32.mrb[0].mxu0
  %650 = vmatprep.mubr.bf16.mxu0 0
  %651 = vmatmul.mubr.bf16.gmra.mrb[0].mxu0 %v375
  %v652 = vpop.f32.mrb[0].mxu0
  %v653 = vadd.f32 0.0, %v652
  %v654 = vpop.f32.mrb[0].mxu0
  %v655 = vpop.f32.mrb[0].mxu0
  %v656 = vadd.f32 0.0, %v655
  %v657 = vpop.f32.mrb[0].mxu0
  %658 = vmatprep.mubr.bf16.mxu0 0
  %659 = vmatmul.mubr.bf16.gmra.mrb[0].mxu0 %v376
  %v660 = vpop.f32.mrb[0].mxu0
  %v661 = vadd.f32 0.0, %v660
  %v662 = vpop.f32.mrb[0].mxu0
  %v663 = vpop.f32.mrb[0].mxu0
  %v664 = vadd.f32 0.0, %v663
  %v665 = vpop.f32.mrb[0].mxu0
  %666 = vmatprep.mubr.bf16.mxu0 0
  %667 = vmatmul.mubr.bf16.gmra.mrb[0].mxu0 %v377
  %v668 = vpop.f32.mrb[0].mxu0
  %v669 = vadd.f32 0.0, %v668
  %v670 = vpop.f32.mrb[0].mxu0
  %v671 = vpop.f32.mrb[0].mxu0
  %v672 = vadd.f32 0.0, %v671
  %v673 = vpop.f32.mrb[0].mxu0
  %674 = vmatprep.mubr.bf16.mxu0 0
  %675 = vmatmul.mubr.bf16.gmra.mrb[0].mxu0 %v378
  %v676 = vpop.f32.mrb[0].mxu0
  %v677 = vadd.f32 0.0, %v676
  %v678 = vpop.f32.mrb[0].mxu0
  %v679 = vpop.f32.mrb[0].mxu0
  %v680 = vadd.f32 0.0, %v679
  %v681 = vpop.f32.mrb[0].mxu0
  %682 = vmatprep.mubr.bf16.mxu0 0
  %683 = vmatmul.mubr.bf16.gmra.mrb[0].mxu0 %v379
  %v684 = vpop.f32.mrb[0].mxu0
  %v685 = vadd.f32 0.0, %v684
  %v686 = vpop.f32.mrb[0].mxu0
  %v687 = vpop.f32.mrb[0].mxu0
  %v688 = vadd.f32 0.0, %v687
  %v689 = vpop.f32.mrb[0].mxu0
  %690 = vmatprep.mubr.bf16.mxu0 0
  %691 = vmatmul.mubr.bf16.gmra.mrb[0].mxu0 %v380
  %v692 = vpop.f32.mrb[0].mxu0
  %v693 = vadd.f32 0.0, %v692
  %v694 = vpop.f32.mrb[0].mxu0
  %v695 = vpop.f32.mrb[0].mxu0
  %v696 = vadd.f32 0.0, %v695
  %v697 = vpop.f32.mrb[0].mxu0
  %698 = vmatprep.mubr.bf16.mxu0 0
  %699 = vmatmul.mubr.bf16.gmra.mrb[0].mxu0 %v381
  %v700 = vpop.f32.mrb[0].mxu0
  %v701 = vadd.f32 0.0, %v700
  %v702 = vpop.f32.mrb[0].mxu0
  %v703 = vpop.f32.mrb[0].mxu0
  %v704 = vadd.f32 0.0, %v703
  %v705 = vpop.f32.mrb[0].mxu0
  %706 = vmatprep.mubr.bf16.mxu0 0
  %707 = vmatmul.mubr.bf16.gmra.mrb[0].mxu0 %v382
  %v708 = vpop.f32.mrb[0].mxu0
  %v709 = vadd.f32 0.0, %v708
  %v710 = vpop.f32.mrb[0].mxu0
  %v711 = vpop.f32.mrb[0].mxu0
  %v712 = vadd.f32 0.0, %v711
  %v713 = vpop.f32.mrb[0].mxu0
  %714 = vmatprep.mubr.bf16.mxu0 0
  %715 = vmatmul.mubr.bf16.gmra.mrb[0].mxu0 %v383
  %v716 = vpop.f32.mrb[0].mxu0
  %v717 = vadd.f32 0.0, %v716
  %v718 = vpop.f32.mrb[0].mxu0
  %v719 = vpop.f32.mrb[0].mxu0
  %v720 = vadd.f32 0.0, %v719
  %v721 = vpop.f32.mrb[0].mxu0
  %722 = vmatprep.mubr.bf16.mxu0 0
  %723 = vmatmul.mubr.bf16.gmra.mrb[0].mxu0 %v384
  %v724 = vpop.f32.mrb[0].mxu0
  %v725 = vadd.f32 0.0, %v724
  %v726 = vpop.f32.mrb[0].mxu0
  %v727 = vpop.f32.mrb[0].mxu0
  %v728 = vadd.f32 0.0, %v727
  %v729 = vpop.f32.mrb[0].mxu0
  %730 = vmatprep.mubr.bf16.mxu0 0
  %731 = vmatmul.mubr.bf16.gmra.mrb[0].mxu0 %v385
  %v732 = vpop.f32.mrb[0].mxu0
  %v733 = vadd.f32 0.0, %v732
  %v734 = vpop.f32.mrb[0].mxu0
  %v735 = vpop.f32.mrb[0].mxu0
  %v736 = vadd.f32 0.0, %v735
  %v737 = vpop.f32.mrb[0].mxu0
  %738 = vdwg.mxu0
  %v739 = vpack.c.bf16 %v488, %v485
  %v740 = vpack.c.bf16 %v496, %v493
  %v741 = vpack.c.bf16 %v504, %v501
  %v742 = vpack.c.bf16 %v512, %v509
  %v743 = vpack.c.bf16 %v520, %v517
  %v744 = vpack.c.bf16 %v528, %v525
  %v745 = vpack.c.bf16 %v536, %v533
  %v746 = vpack.c.bf16 %v544, %v541
  %v747 = vpack.c.bf16 %v552, %v549
  %v748 = vpack.c.bf16 %v560, %v557
  %v749 = vpack.c.bf16 %v568, %v565
  %v750 = vpack.c.bf16 %v576, %v573
  %v751 = vpack.c.bf16 %v584, %v581
  %v752 = vpack.c.bf16 %v592, %v589
  %v753 = vpack.c.bf16 %v600, %v597
  %v754 = vpack.c.bf16 %v608, %v605
  %v755 = vpack.c.bf16 %v616, %v613
  %v756 = vpack.c.bf16 %v624, %v621
  %v757 = vpack.c.bf16 %v632, %v629
  %v758 = vpack.c.bf16 %v640, %v637
  %v759 = vpack.c.bf16 %v648, %v645
  %v760 = vpack.c.bf16 %v656, %v653
  %v761 = vpack.c.bf16 %v664, %v661
  %v762 = vpack.c.bf16 %v672, %v669
  %v763 = vpack.c.bf16 %v680, %v677
  %v764 = vpack.c.bf16 %v688, %v685
  %v765 = vpack.c.bf16 %v696, %v693
  %v766 = vpack.c.bf16 %v704, %v701
  %v767 = vpack.c.bf16 %v712, %v709
  %v768 = vpack.c.bf16 %v720, %v717
  %v769 = vpack.c.bf16 %v728, %v725
  %v770 = vpack.c.bf16 %v736, %v733
  %v803 = vunpack.c.l.b16 %v739
  %v804 = vunpack.c.h.b16 %v739
  %v805 = vunpack.c.l.b16 %v740
  %v806 = vunpack.c.h.b16 %v740
  %v807 = vunpack.c.l.b16 %v741
  %v808 = vunpack.c.h.b16 %v741
  %v809 = vunpack.c.l.b16 %v742
  %v810 = vunpack.c.h.b16 %v742
  %v811 = vunpack.c.l.b16 %v743
  %v812 = vunpack.c.h.b16 %v743
  %v813 = vunpack.c.l.b16 %v744
  %v814 = vunpack.c.h.b16 %v744
  %v815 = vunpack.c.l.b16 %v745
  %v816 = vunpack.c.h.b16 %v745
  %v817 = vunpack.c.l.b16 %v746
  %v818 = vunpack.c.h.b16 %v746
  %v819 = vunpack.c.l.b16 %v747
  %v820 = vunpack.c.h.b16 %v747
  %v821 = vunpack.c.l.b16 %v748
  %v822 = vunpack.c.h.b16 %v748
  %v823 = vunpack.c.l.b16 %v749
  %v824 = vunpack.c.h.b16 %v749
  %v825 = vunpack.c.l.b16 %v750
  %v826 = vunpack.c.h.b16 %v750
  %v827 = vunpack.c.l.b16 %v751
  %v828 = vunpack.c.h.b16 %v751
  %v829 = vunpack.c.l.b16 %v752
  %v830 = vunpack.c.h.b16 %v752
  %v831 = vunpack.c.l.b16 %v753
  %v832 = vunpack.c.h.b16 %v753
  %v833 = vunpack.c.l.b16 %v754
  %v834 = vunpack.c.h.b16 %v754
  %v835 = vunpack.c.l.b16 %v755
  %v836 = vunpack.c.h.b16 %v755
  %v837 = vunpack.c.l.b16 %v756
  %v838 = vunpack.c.h.b16 %v756
  %v839 = vunpack.c.l.b16 %v757
  %v840 = vunpack.c.h.b16 %v757
  %v841 = vunpack.c.l.b16 %v758
  %v842 = vunpack.c.h.b16 %v758
  %v843 = vunpack.c.l.b16 %v759
  %v844 = vunpack.c.h.b16 %v759
  %v845 = vunpack.c.l.b16 %v760
  %v846 = vunpack.c.h.b16 %v760
  %v847 = vunpack.c.l.b16 %v761
  %v848 = vunpack.c.h.b16 %v761
  %v849 = vunpack.c.l.b16 %v762
  %v850 = vunpack.c.h.b16 %v762
  %v851 = vunpack.c.l.b16 %v763
  %v852 = vunpack.c.h.b16 %v763
  %v853 = vunpack.c.l.b16 %v764
  %v854 = vunpack.c.h.b16 %v764
  %v855 = vunpack.c.l.b16 %v765
  %v856 = vunpack.c.h.b16 %v765
  %v857 = vunpack.c.l.b16 %v766
  %v858 = vunpack.c.h.b16 %v766
  %v859 = vunpack.c.l.b16 %v767
  %v860 = vunpack.c.h.b16 %v767
  %v861 = vunpack.c.l.b16 %v768
  %v862 = vunpack.c.h.b16 %v768
  %v863 = vunpack.c.l.b16 %v769
  %v864 = vunpack.c.h.b16 %v769
  %v865 = vunpack.c.l.b16 %v770
  %v866 = vunpack.c.h.b16 %v770
  %v867 = vpack.c.b16 %v803, %v803
  %v868 = vpack.c.b16 %v804, %v804
  %v869 = vpack.c.b16 %v805, %v805
  %v870 = vpack.c.b16 %v806, %v806
  %v871 = vpack.c.b16 %v807, %v807
  %v872 = vpack.c.b16 %v808, %v808
  %v873 = vpack.c.b16 %v809, %v809
  %v874 = vpack.c.b16 %v810, %v810
  %v875 = vpack.c.b16 %v811, %v811
  %v876 = vpack.c.b16 %v812, %v812
  %v877 = vpack.c.b16 %v813, %v813
  %v878 = vpack.c.b16 %v814, %v814
  %v879 = vpack.c.b16 %v815, %v815
  %v880 = vpack.c.b16 %v816, %v816
  %v881 = vpack.c.b16 %v817, %v817
  %v882 = vpack.c.b16 %v818, %v818
  %v883 = vpack.c.b16 %v819, %v819
  %v884 = vpack.c.b16 %v820, %v820
  %v885 = vpack.c.b16 %v821, %v821
  %v886 = vpack.c.b16 %v822, %v822
  %v887 = vpack.c.b16 %v823, %v823
  %v888 = vpack.c.b16 %v824, %v824
  %v889 = vpack.c.b16 %v825, %v825
  %v890 = vpack.c.b16 %v826, %v826
  %v891 = vpack.c.b16 %v827, %v827
  %v892 = vpack.c.b16 %v828, %v828
  %v893 = vpack.c.b16 %v829, %v829
  %v894 = vpack.c.b16 %v830, %v830
  %v895 = vpack.c.b16 %v831, %v831
  %v896 = vpack.c.b16 %v832, %v832
  %v897 = vpack.c.b16 %v833, %v833
  %v898 = vpack.c.b16 %v834, %v834
  %v899 = vpack.c.b16 %v835, %v835
  %v900 = vpack.c.b16 %v836, %v836
  %v901 = vpack.c.b16 %v837, %v837
  %v902 = vpack.c.b16 %v838, %v838
  %v903 = vpack.c.b16 %v839, %v839
  %v904 = vpack.c.b16 %v840, %v840
  %v905 = vpack.c.b16 %v841, %v841
  %v906 = vpack.c.b16 %v842, %v842
  %v907 = vpack.c.b16 %v843, %v843
  %v908 = vpack.c.b16 %v844, %v844
  %v909 = vpack.c.b16 %v845, %v845
  %v910 = vpack.c.b16 %v846, %v846
  %v911 = vpack.c.b16 %v847, %v847
  %v912 = vpack.c.b16 %v848, %v848
  %v913 = vpack.c.b16 %v849, %v849
  %v914 = vpack.c.b16 %v850, %v850
  %v915 = vpack.c.b16 %v851, %v851
  %v916 = vpack.c.b16 %v852, %v852
  %v917 = vpack.c.b16 %v853, %v853
  %v918 = vpack.c.b16 %v854, %v854
  %v919 = vpack.c.b16 %v855, %v855
  %v920 = vpack.c.b16 %v856, %v856
  %v921 = vpack.c.b16 %v857, %v857
  %v922 = vpack.c.b16 %v858, %v858
  %v923 = vpack.c.b16 %v859, %v859
  %v924 = vpack.c.b16 %v860, %v860
  %v925 = vpack.c.b16 %v861, %v861
  %v926 = vpack.c.b16 %v862, %v862
  %v927 = vpack.c.b16 %v863, %v863
  %v928 = vpack.c.b16 %v864, %v864
  %v929 = vpack.c.b16 %v865, %v865
  %v930 = vpack.c.b16 %v866, %v866
  %995 = vst [vmem:[%s4] sm:$0xf] %v867
  %996 = vst [vmem:[%s4 + $0x4] sm:$0xf] %v868
  %997 = vst [vmem:[%s4 + $0x8] sm:$0xf] %v869
  %998 = vst [vmem:[%s4 + $0xc] sm:$0xf] %v870
  %999 = vst [vmem:[%s4 + $0x10] sm:$0xf] %v871
  %1000 = vst [vmem:[%s4 + $0x14] sm:$0xf] %v872
  %1001 = vst [vmem:[%s4 + $0x18] sm:$0xf] %v873
  %1002 = vst [vmem:[%s4 + $0x1c] sm:$0xf] %v874
  %1003 = vst [vmem:[%s4 + $0x20] sm:$0xf] %v875
  %1004 = vst [vmem:[%s4 + $0x24] sm:$0xf] %v876
  %1005 = vst [vmem:[%s4 + $0x28] sm:$0xf] %v877
  %1006 = vst [vmem:[%s4 + $0x2c] sm:$0xf] %v878
  %1007 = vst [vmem:[%s4 + $0x30] sm:$0xf] %v879
  %1008 = vst [vmem:[%s4 + $0x34] sm:$0xf] %v880
  %1009 = vst [vmem:[%s4 + $0x38] sm:$0xf] %v881
  %1010 = vst [vmem:[%s4 + $0x3c] sm:$0xf] %v882
  %1011 = vst [vmem:[%s4 + $0x40] sm:$0xf] %v883
  %1012 = vst [vmem:[%s4 + $0x44] sm:$0xf] %v884
  %1013 = vst [vmem:[%s4 + $0x48] sm:$0xf] %v885
  %1014 = vst [vmem:[%s4 + $0x4c] sm:$0xf] %v886
  %1015 = vst [vmem:[%s4 + $0x50] sm:$0xf] %v887
  %1016 = vst [vmem:[%s4 + $0x54] sm:$0xf] %v888
  %1017 = vst [vmem:[%s4 + $0x58] sm:$0xf] %v889
  %1018 = vst [vmem:[%s4 + $0x5c] sm:$0xf] %v890
  %1019 = vst [vmem:[%s4 + $0x60] sm:$0xf] %v891
  %1020 = vst [vmem:[%s4 + $0x64] sm:$0xf] %v892
  %1021 = vst [vmem:[%s4 + $0x68] sm:$0xf] %v893
  %1022 = vst [vmem:[%s4 + $0x6c] sm:$0xf] %v894
  %1023 = vst [vmem:[%s4 + $0x70] sm:$0xf] %v895
  %1024 = vst [vmem:[%s4 + $0x74] sm:$0xf] %v896
  %1025 = vst [vmem:[%s4 + $0x78] sm:$0xf] %v897
  %1026 = vst [vmem:[%s4 + $0x7c] sm:$0xf] %v898
  %1027 = vst [vmem:[%s4 + $0x80] sm:$0xf] %v899
  %1028 = vst [vmem:[%s4 + $0x84] sm:$0xf] %v900
  %1029 = vst [vmem:[%s4 + $0x88] sm:$0xf] %v901
  %1030 = vst [vmem:[%s4 + $0x8c] sm:$0xf] %v902
  %1031 = vst [vmem:[%s4 + $0x90] sm:$0xf] %v903
  %1032 = vst [vmem:[%s4 + $0x94] sm:$0xf] %v904
  %1033 = vst [vmem:[%s4 + $0x98] sm:$0xf] %v905
  %1034 = vst [vmem:[%s4 + $0x9c] sm:$0xf] %v906
  %1035 = vst [vmem:[%s4 + $0xa0] sm:$0xf] %v907
  %1036 = vst [vmem:[%s4 + $0xa4] sm:$0xf] %v908
  %1037 = vst [vmem:[%s4 + $0xa8] sm:$0xf] %v909
  %1038 = vst [vmem:[%s4 + $0xac] sm:$0xf] %v910
  %1039 = vst [vmem:[%s4 + $0xb0] sm:$0xf] %v911
  %1040 = vst [vmem:[%s4 + $0xb4] sm:$0xf] %v912
  %1041 = vst [vmem:[%s4 + $0xb8] sm:$0xf] %v913
  %1042 = vst [vmem:[%s4 + $0xbc] sm:$0xf] %v914
  %1043 = vst [vmem:[%s4 + $0xc0] sm:$0xf] %v915
  %1044 = vst [vmem:[%s4 + $0xc4] sm:$0xf] %v916
  %1045 = vst [vmem:[%s4 + $0xc8] sm:$0xf] %v917
  %1046 = vst [vmem:[%s4 + $0xcc] sm:$0xf] %v918
  %1047 = vst [vmem:[%s4 + $0xd0] sm:$0xf] %v919
  %1048 = vst [vmem:[%s4 + $0xd4] sm:$0xf] %v920
  %1049 = vst [vmem:[%s4 + $0xd8] sm:$0xf] %v921
  %1050 = vst [vmem:[%s4 + $0xdc] sm:$0xf] %v922
  %1051 = vst [vmem:[%s4 + $0xe0] sm:$0xf] %v923
  %1052 = vst [vmem:[%s4 + $0xe4] sm:$0xf] %v924
  %1053 = vst [vmem:[%s4 + $0xe8] sm:$0xf] %v925
  %1054 = vst [vmem:[%s4 + $0xec] sm:$0xf] %v926
  %1055 = vst [vmem:[%s4 + $0xf0] sm:$0xf] %v927
  %1056 = vst [vmem:[%s4 + $0xf4] sm:$0xf] %v928
  %1057 = vst [vmem:[%s4 + $0xf8] sm:$0xf] %v929
  %1058 = vst [vmem:[%s4 + $0xfc] sm:$0xf] %v930
  %v1059 = vadd.f32 %v485, %v488
  %v1060 = vadd.f32 %v1059, %v493
  %v1061 = vadd.f32 %v1060, %v496
  %v1062 = vadd.f32 %v1061, %v501
  %v1063 = vadd.f32 %v1062, %v504
  %v1064 = vadd.f32 %v1063, %v509
  %v1065 = vadd.f32 %v1064, %v512
  %v1066 = vadd.f32 %v1065, %v517
  %v1067 = vadd.f32 %v1066, %v520
  %v1068 = vadd.f32 %v1067, %v525
  %v1069 = vadd.f32 %v1068, %v528
  %v1070 = vadd.f32 %v1069, %v533
  %v1071 = vadd.f32 %v1070, %v536
  %v1072 = vadd.f32 %v1071, %v541
  %v1073 = vadd.f32 %v1072, %v544
  %v1074 = vadd.f32 %v1073, %v549
  %v1075 = vadd.f32 %v1074, %v552
  %v1076 = vadd.f32 %v1075, %v557
  %v1077 = vadd.f32 %v1076, %v560
  %v1078 = vadd.f32 %v1077, %v565
  %v1079 = vadd.f32 %v1078, %v568
  %v1080 = vadd.f32 %v1079, %v573
  %v1081 = vadd.f32 %v1080, %v576
  %v1082 = vadd.f32 %v1081, %v581
  %v1083 = vadd.f32 %v1082, %v584
  %v1084 = vadd.f32 %v1083, %v589
  %v1085 = vadd.f32 %v1084, %v592
  %v1086 = vadd.f32 %v1085, %v597
  %v1087 = vadd.f32 %v1086, %v600
  %v1088 = vadd.f32 %v1087, %v605
  %v1089 = vadd.f32 %v1088, %v608
  %v1090 = vadd.f32 %v1089, %v613
  %v1091 = vadd.f32 %v1090, %v616
  %v1092 = vadd.f32 %v1091, %v621
  %v1093 = vadd.f32 %v1092, %v624
  %v1094 = vadd.f32 %v1093, %v629
  %v1095 = vadd.f32 %v1094, %v632
  %v1096 = vadd.f32 %v1095, %v637
  %v1097 = vadd.f32 %v1096, %v640
  %v1098 = vadd.f32 %v1097, %v645
  %v1099 = vadd.f32 %v1098, %v648
  %v1100 = vadd.f32 %v1099, %v653
  %v1101 = vadd.f32 %v1100, %v656
  %v1102 = vadd.f32 %v1101, %v661
  %v1103 = vadd.f32 %v1102, %v664
  %v1104 = vadd.f32 %v1103, %v669
  %v1105 = vadd.f32 %v1104, %v672
  %v1106 = vadd.f32 %v1105, %v677
  %v1107 = vadd.f32 %v1106, %v680
  %v1108 = vadd.f32 %v1107, %v685
  %v1109 = vadd.f32 %v1108, %v688
  %v1110 = vadd.f32 %v1109, %v693
  %v1111 = vadd.f32 %v1110, %v696
  %v1112 = vadd.f32 %v1111, %v701
  %v1113 = vadd.f32 %v1112, %v704
  %v1114 = vadd.f32 %v1113, %v709
  %v1115 = vadd.f32 %v1114, %v712
  %v1116 = vadd.f32 %v1115, %v717
  %v1117 = vadd.f32 %v1116, %v720
  %v1118 = vadd.f32 %v1117, %v725
  %v1119 = vadd.f32 %v1118, %v728
  %v1120 = vadd.f32 %v1119, %v733
  %v1121 = vadd.f32 %v1120, %v736
  %v1122 = vrot.slane %v1121, 4
  %v1123 = vadd.f32 %v1121, %v1122
  %v1124 = vrot.slane %v1123, 2
  %v1125 = vadd.f32 %v1123, %v1124
  %v1126 = vrot.slane %v1125, 1
  %v1127 = vadd.f32 %v1125, %v1126
  %v1128 = vmul.f32 %v485, %v485
  %v1129 = vmul.f32 %v488, %v488
  %v1130 = vmul.f32 %v493, %v493
  %v1131 = vmul.f32 %v496, %v496
  %v1132 = vmul.f32 %v501, %v501
  %v1133 = vmul.f32 %v504, %v504
  %v1134 = vmul.f32 %v509, %v509
  %v1135 = vmul.f32 %v512, %v512
  %v1136 = vmul.f32 %v517, %v517
  %v1137 = vmul.f32 %v520, %v520
  %v1138 = vmul.f32 %v525, %v525
  %v1139 = vmul.f32 %v528, %v528
  %v1140 = vmul.f32 %v533, %v533
  %v1141 = vmul.f32 %v536, %v536
  %v1142 = vmul.f32 %v541, %v541
  %v1143 = vmul.f32 %v544, %v544
  %v1144 = vmul.f32 %v549, %v549
  %v1145 = vmul.f32 %v552, %v552
  %v1146 = vmul.f32 %v557, %v557
  %v1147 = vmul.f32 %v560, %v560
  %v1148 = vmul.f32 %v565, %v565
  %v1149 = vmul.f32 %v568, %v568
  %v1150 = vmul.f32 %v573, %v573
  %v1151 = vmul.f32 %v576, %v576
  %v1152 = vmul.f32 %v581, %v581
  %v1153 = vmul.f32 %v584, %v584
  %v1154 = vmul.f32 %v589, %v589
  %v1155 = vmul.f32 %v592, %v592
  %v1156 = vmul.f32 %v597, %v597
  %v1157 = vmul.f32 %v600, %v600
  %v1158 = vmul.f32 %v605, %v605
  %v1159 = vmul.f32 %v608, %v608
  %v1160 = vmul.f32 %v613, %v613
  %v1161 = vmul.f32 %v616, %v616
  %v1162 = vmul.f32 %v621, %v621
  %v1163 = vmul.f32 %v624, %v624
  %v1164 = vmul.f32 %v629, %v629
  %v1165 = vmul.f32 %v632, %v632
  %v1166 = vmul.f32 %v637, %v637
  %v1167 = vmul.f32 %v640, %v640
  %v1168 = vmul.f32 %v645, %v645
  %v1169 = vmul.f32 %v648, %v648
  %v1170 = vmul.f32 %v653, %v653
  %v1171 = vmul.f32 %v656, %v656
  %v1172 = vmul.f32 %v661, %v661
  %v1173 = vmul.f32 %v664, %v664
  %v1174 = vmul.f32 %v669, %v669
  %v1175 = vmul.f32 %v672, %v672
  %v1176 = vmul.f32 %v677, %v677
  %v1177 = vmul.f32 %v680, %v680
  %v1178 = vmul.f32 %v685, %v685
  %v1179 = vmul.f32 %v688, %v688
  %v1180 = vmul.f32 %v693, %v693
  %v1181 = vmul.f32 %v696, %v696
  %v1182 = vmul.f32 %v701, %v701
  %v1183 = vmul.f32 %v704, %v704
  %v1184 = vmul.f32 %v709, %v709
  %v1185 = vmul.f32 %v712, %v712
  %v1186 = vmul.f32 %v717, %v717
  %v1187 = vmul.f32 %v720, %v720
  %v1188 = vmul.f32 %v725, %v725
  %v1189 = vmul.f32 %v728, %v728
  %v1190 = vmul.f32 %v733, %v733
  %v1191 = vmul.f32 %v736, %v736
  %v1192 = vadd.f32 %v1128, %v1129
  %v1193 = vadd.f32 %v1192, %v1130
  %v1194 = vadd.f32 %v1193, %v1131
  %v1195 = vadd.f32 %v1194, %v1132
  %v1196 = vadd.f32 %v1195, %v1133
  %v1197 = vadd.f32 %v1196, %v1134
  %v1198 = vadd.f32 %v1197, %v1135
  %v1199 = vadd.f32 %v1198, %v1136
  %v1200 = vadd.f32 %v1199, %v1137
  %v1201 = vadd.f32 %v1200, %v1138
  %v1202 = vadd.f32 %v1201, %v1139
  %v1203 = vadd.f32 %v1202, %v1140
  %v1204 = vadd.f32 %v1203, %v1141
  %v1205 = vadd.f32 %v1204, %v1142
  %v1206 = vadd.f32 %v1205, %v1143
  %v1207 = vadd.f32 %v1206, %v1144
  %v1208 = vadd.f32 %v1207, %v1145
  %v1209 = vadd.f32 %v1208, %v1146
  %v1210 = vadd.f32 %v1209, %v1147
  %v1211 = vadd.f32 %v1210, %v1148
  %v1212 = vadd.f32 %v1211, %v1149
  %v1213 = vadd.f32 %v1212, %v1150
  %v1214 = vadd.f32 %v1213, %v1151
  %v1215 = vadd.f32 %v1214, %v1152
  %v1216 = vadd.f32 %v1215, %v1153
  %v1217 = vadd.f32 %v1216, %v1154
  %v1218 = vadd.f32 %v1217, %v1155
  %v1219 = vadd.f32 %v1218, %v1156
  %v1220 = vadd.f32 %v1219, %v1157
  %v1221 = vadd.f32 %v1220, %v1158
  %v1222 = vadd.f32 %v1221, %v1159
  %v1223 = vadd.f32 %v1222, %v1160
  %v1224 = vadd.f32 %v1223, %v1161
  %v1225 = vadd.f32 %v1224, %v1162
  %v1226 = vadd.f32 %v1225, %v1163
  %v1227 = vadd.f32 %v1226, %v1164
  %v1228 = vadd.f32 %v1227, %v1165
  %v1229 = vadd.f32 %v1228, %v1166
  %v1230 = vadd.f32 %v1229, %v1167
  %v1231 = vadd.f32 %v1230, %v1168
  %v1232 = vadd.f32 %v1231, %v1169
  %v1233 = vadd.f32 %v1232, %v1170
  %v1234 = vadd.f32 %v1233, %v1171
  %v1235 = vadd.f32 %v1234, %v1172
  %v1236 = vadd.f32 %v1235, %v1173
  %v1237 = vadd.f32 %v1236, %v1174
  %v1238 = vadd.f32 %v1237, %v1175
  %v1239 = vadd.f32 %v1238, %v1176
  %v1240 = vadd.f32 %v1239, %v1177
  %v1241 = vadd.f32 %v1240, %v1178
  %v1242 = vadd.f32 %v1241, %v1179
  %v1243 = vadd.f32 %v1242, %v1180
  %v1244 = vadd.f32 %v1243, %v1181
  %v1245 = vadd.f32 %v1244, %v1182
  %v1246 = vadd.f32 %v1245, %v1183
  %v1247 = vadd.f32 %v1246, %v1184
  %v1248 = vadd.f32 %v1247, %v1185
  %v1249 = vadd.f32 %v1248, %v1186
  %v1250 = vadd.f32 %v1249, %v1187
  %v1251 = vadd.f32 %v1250, %v1188
  %v1252 = vadd.f32 %v1251, %v1189
  %v1253 = vadd.f32 %v1252, %v1190
  %v1254 = vadd.f32 %v1253, %v1191
  %v1255 = vrot.slane %v1254, 4
  %v1256 = vadd.f32 %v1254, %v1255
  %v1257 = vrot.slane %v1256, 2
  %v1258 = vadd.f32 %v1256, %v1257
  %v1259 = vrot.slane %v1258, 1
  %v1260 = vadd.f32 %v1258, %v1259
  %vm1261 = vcmask 1040384
  %v1262 = vsel %vm1261, %v1127, %v1260
  %1263 = vst [vmem:[%s5] sm:$0x3] %v1262
  // Predicated region
  $region18: #{resblock_bottle.6} parent=0 // pred_check
    _
  $region19: #{resblock_bottle.6} parent=0 // pred_check_branch
    %1265 = sbr.rel (0) target = $region21
  $region20: #{resblock_bottle.6} parent=0 // pred_region
    _
  $region21: #{resblock_bottle.6} parent=0 // pred_fallthru
    _
  // Predicated region
  $region22: #{resblock_bottle.6} parent=0 // pred_check
    _
  $region23: #{resblock_bottle.6} parent=0 // pred_check_branch
    %1267 = sbr.rel (0) target = $region25
  $region24: #{resblock_bottle.6} parent=0 // pred_region
    _
  $region25: #{resblock_bottle.6} parent=0 // pred_fallthru
    _
  // Predicated region
  $region26: #{resblock_bottle.6} parent=0 // pred_check
    _
  $region27: #{resblock_bottle.6} parent=0 // pred_check_branch
    %1269 = sbr.rel (0) target = $region29
  $region28: #{resblock_bottle.6} parent=0 // pred_region
    _
  $region29: #{resblock_bottle.6} parent=0 // pred_fallthru
    _
  // Predicated region
  $region30: #{resblock_bottle.6} parent=0 // pred_check
    _
  $region31: #{resblock_bottle.6} parent=0 // pred_check_branch
    %1271 = sbr.rel (0) target = $region33
  $region32: #{resblock_bottle.6} parent=0 // pred_region
    _
  $region33: #{resblock_bottle.6} parent=0 // pred_fallthru
    _

// kernel: resblock_bottle.4
$region0: #{resblock_bottle.4}
  #allocation0 [shape = 'u32[]', space=smem, size = 0x4, offset = 0x4, fixed_abs, tag = 'smem constant byte address 0x4 - core index']
  #allocation1 [shape = 'u32[144,128]{1,0:T(1,128)}', space=vmem, size = 0x12000, scoped, tag = 'internal scratch']
  %s0 = inlined_call_operand.vmem [shape: bf16[512,128], index: 0, kind: input, shape index: {}]
  %s1 = inlined_call_operand.vmem [shape: bf16[128,128], index: 1, kind: input, shape index: {}]
  %s2 = inlined_call_operand.vmem [shape: bf16[128,128], index: 2, kind: input, shape index: {}]
  %s3 = inlined_call_operand.vmem [shape: f32[1,128], index: 3, kind: input, shape index: {}]
  %s4 = inlined_call_operand.vmem [shape: bf16[512,128], index: 4, kind: output, shape index: {0}]
  %s5 = inlined_call_operand.vmem [shape: bf16[512,128], index: 5, kind: output, shape index: {1}]
  %s6 = inlined_call_operand.vmem [shape: f32[1,2,128], index: 6, kind: output, shape index: {2}]
  %7 = xla_tuple %s4, %s5, %s6
  %s8 = sld [smem:[#allocation0]]
  $region42: #{resblock_bottle.4} parent=0
    _
  %s10 = ssub.s32 1, %s8
  %s11 = scalar_select 0, %s10, %s8
  // Predicated region
  $region2: #{resblock_bottle.4} parent=0 // pred_check
    _
  $region3: #{resblock_bottle.4} parent=0 // pred_check_branch
    %13 = sbr.rel (0) target = $region5
  $region4: #{resblock_bottle.4} parent=0 // pred_region
    _
  $region5: #{resblock_bottle.4} parent=0 // pred_fallthru
    _
  // Predicated region
  $region6: #{resblock_bottle.4} parent=0 // pred_check
    _
  $region7: #{resblock_bottle.4} parent=0 // pred_check_branch
    %15 = sbr.rel (0) target = $region9
  $region8: #{resblock_bottle.4} parent=0 // pred_region
    _
  $region9: #{resblock_bottle.4} parent=0 // pred_fallthru
    _
  // Predicated region
  $region10: #{resblock_bottle.4} parent=0 // pred_check
    _
  $region11: #{resblock_bottle.4} parent=0 // pred_check_branch
    %17 = sbr.rel (0) target = $region13
  $region12: #{resblock_bottle.4} parent=0 // pred_region
    _
  $region13: #{resblock_bottle.4} parent=0 // pred_fallthru
    _
  // Predicated region
  $region14: #{resblock_bottle.4} parent=0 // pred_check
    _
  $region15: #{resblock_bottle.4} parent=0 // pred_check_branch
    %19 = sbr.rel (0) target = $region17
  $region16: #{resblock_bottle.4} parent=0 // pred_region
    _
  $region17: #{resblock_bottle.4} parent=0 // pred_fallthru
    _
  %v21 = vld [vmem:[%s0] sm:$0xf]
  %v22 = vld [vmem:[%s0 + $0x4] sm:$0xf]
  %v23 = vld [vmem:[%s0 + $0x8] sm:$0xf]
  %v24 = vld [vmem:[%s0 + $0xc] sm:$0xf]
  %v25 = vld [vmem:[%s0 + $0x10] sm:$0xf]
  %v26 = vld [vmem:[%s0 + $0x14] sm:$0xf]
  %v27 = vld [vmem:[%s0 + $0x18] sm:$0xf]
  %v28 = vld [vmem:[%s0 + $0x1c] sm:$0xf]
  %v29 = vld [vmem:[%s0 + $0x20] sm:$0xf]
  %v30 = vld [vmem:[%s0 + $0x24] sm:$0xf]
  %v31 = vld [vmem:[%s0 + $0x28] sm:$0xf]
  %v32 = vld [vmem:[%s0 + $0x2c] sm:$0xf]
  %v33 = vld [vmem:[%s0 + $0x30] sm:$0xf]
  %v34 = vld [vmem:[%s0 + $0x34] sm:$0xf]
  %v35 = vld [vmem:[%s0 + $0x38] sm:$0xf]
  %v36 = vld [vmem:[%s0 + $0x3c] sm:$0xf]
  %v37 = vld [vmem:[%s0 + $0x40] sm:$0xf]
  %v38 = vld [vmem:[%s0 + $0x44] sm:$0xf]
  %v39 = vld [vmem:[%s0 + $0x48] sm:$0xf]
  %v40 = vld [vmem:[%s0 + $0x4c] sm:$0xf]
  %v41 = vld [vmem:[%s0 + $0x50] sm:$0xf]
  %v42 = vld [vmem:[%s0 + $0x54] sm:$0xf]
  %v43 = vld [vmem:[%s0 + $0x58] sm:$0xf]
  %v44 = vld [vmem:[%s0 + $0x5c] sm:$0xf]
  %v45 = vld [vmem:[%s0 + $0x60] sm:$0xf]
  %v46 = vld [vmem:[%s0 + $0x64] sm:$0xf]
  %v47 = vld [vmem:[%s0 + $0x68] sm:$0xf]
  %v48 = vld [vmem:[%s0 + $0x6c] sm:$0xf]
  %v49 = vld [vmem:[%s0 + $0x70] sm:$0xf]
  %v50 = vld [vmem:[%s0 + $0x74] sm:$0xf]
  %v51 = vld [vmem:[%s0 + $0x78] sm:$0xf]
  %v52 = vld [vmem:[%s0 + $0x7c] sm:$0xf]
  %v53 = vld [vmem:[%s0 + $0x80] sm:$0xf]
  %v54 = vld [vmem:[%s0 + $0x84] sm:$0xf]
  %v55 = vld [vmem:[%s0 + $0x88] sm:$0xf]
  %v56 = vld [vmem:[%s0 + $0x8c] sm:$0xf]
  %v57 = vld [vmem:[%s0 + $0x90] sm:$0xf]
  %v58 = vld [vmem:[%s0 + $0x94] sm:$0xf]
  %v59 = vld [vmem:[%s0 + $0x98] sm:$0xf]
  %v60 = vld [vmem:[%s0 + $0x9c] sm:$0xf]
  %v61 = vld [vmem:[%s0 + $0xa0] sm:$0xf]
  %v62 = vld [vmem:[%s0 + $0xa4] sm:$0xf]
  %v63 = vld [vmem:[%s0 + $0xa8] sm:$0xf]
  %v64 = vld [vmem:[%s0 + $0xac] sm:$0xf]
  %v65 = vld [vmem:[%s0 + $0xb0] sm:$0xf]
  %v66 = vld [vmem:[%s0 + $0xb4] sm:$0xf]
  %v67 = vld [vmem:[%s0 + $0xb8] sm:$0xf]
  %v68 = vld [vmem:[%s0 + $0xbc] sm:$0xf]
  %v69 = vld [vmem:[%s0 + $0xc0] sm:$0xf]
  %v70 = vld [vmem:[%s0 + $0xc4] sm:$0xf]
  %v71 = vld [vmem:[%s0 + $0xc8] sm:$0xf]
  %v72 = vld [vmem:[%s0 + $0xcc] sm:$0xf]
  %v73 = vld [vmem:[%s0 + $0xd0] sm:$0xf]
  %v74 = vld [vmem:[%s0 + $0xd4] sm:$0xf]
  %v75 = vld [vmem:[%s0 + $0xd8] sm:$0xf]
  %v76 = vld [vmem:[%s0 + $0xdc] sm:$0xf]
  %v77 = vld [vmem:[%s0 + $0xe0] sm:$0xf]
  %v78 = vld [vmem:[%s0 + $0xe4] sm:$0xf]
  %v79 = vld [vmem:[%s0 + $0xe8] sm:$0xf]
  %v80 = vld [vmem:[%s0 + $0xec] sm:$0xf]
  %v81 = vld [vmem:[%s0 + $0xf0] sm:$0xf]
  %v82 = vld [vmem:[%s0 + $0xf4] sm:$0xf]
  %v83 = vld [vmem:[%s0 + $0xf8] sm:$0xf]
  %v84 = vld [vmem:[%s0 + $0xfc] sm:$0xf]
  %v85 = vld [vmem:[%s1] sm:$0xf]
  %v86 = vld [vmem:[%s1 + $0x4] sm:$0xf]
  %v87 = vld [vmem:[%s1 + $0x8] sm:$0xf]
  %v88 = vld [vmem:[%s1 + $0xc] sm:$0xf]
  %v89 = vld [vmem:[%s1 + $0x10] sm:$0xf]
  %v90 = vld [vmem:[%s1 + $0x14] sm:$0xf]
  %v91 = vld [vmem:[%s1 + $0x18] sm:$0xf]
  %v92 = vld [vmem:[%s1 + $0x1c] sm:$0xf]
  %v93 = vld [vmem:[%s1 + $0x20] sm:$0xf]
  %v94 = vld [vmem:[%s1 + $0x24] sm:$0xf]
  %v95 = vld [vmem:[%s1 + $0x28] sm:$0xf]
  %v96 = vld [vmem:[%s1 + $0x2c] sm:$0xf]
  %v97 = vld [vmem:[%s1 + $0x30] sm:$0xf]
  %v98 = vld [vmem:[%s1 + $0x34] sm:$0xf]
  %v99 = vld [vmem:[%s1 + $0x38] sm:$0xf]
  %v100 = vld [vmem:[%s1 + $0x3c] sm:$0xf]
  %v165 = vunpack.c.l.b16 %v21
  %v166 = vunpack.c.l.b16 %v22
  %v167 = vunpack.c.l.b16 %v23
  %v168 = vunpack.c.l.b16 %v24
  %v169 = vunpack.c.l.b16 %v25
  %v170 = vunpack.c.l.b16 %v26
  %v171 = vunpack.c.l.b16 %v27
  %v172 = vunpack.c.l.b16 %v28
  %v173 = vunpack.c.l.b16 %v29
  %v174 = vunpack.c.l.b16 %v30
  %v175 = vunpack.c.l.b16 %v31
  %v176 = vunpack.c.l.b16 %v32
  %v177 = vunpack.c.l.b16 %v33
  %v178 = vunpack.c.l.b16 %v34
  %v179 = vunpack.c.l.b16 %v35
  %v180 = vunpack.c.l.b16 %v36
  %v181 = vunpack.c.l.b16 %v37
  %v182 = vunpack.c.l.b16 %v38
  %v183 = vunpack.c.l.b16 %v39
  %v184 = vunpack.c.l.b16 %v40
  %v185 = vunpack.c.l.b16 %v41
  %v186 = vunpack.c.l.b16 %v42
  %v187 = vunpack.c.l.b16 %v43
  %v188 = vunpack.c.l.b16 %v44
  %v189 = vunpack.c.l.b16 %v45
  %v190 = vunpack.c.l.b16 %v46
  %v191 = vunpack.c.l.b16 %v47
  %v192 = vunpack.c.l.b16 %v48
  %v193 = vunpack.c.l.b16 %v49
  %v194 = vunpack.c.l.b16 %v50
  %v195 = vunpack.c.l.b16 %v51
  %v196 = vunpack.c.l.b16 %v52
  %v197 = vunpack.c.l.b16 %v53
  %v198 = vunpack.c.l.b16 %v54
  %v199 = vunpack.c.l.b16 %v55
  %v200 = vunpack.c.l.b16 %v56
  %v201 = vunpack.c.l.b16 %v57
  %v202 = vunpack.c.l.b16 %v58
  %v203 = vunpack.c.l.b16 %v59
  %v204 = vunpack.c.l.b16 %v60
  %v205 = vunpack.c.l.b16 %v61
  %v206 = vunpack.c.l.b16 %v62
  %v207 = vunpack.c.l.b16 %v63
  %v208 = vunpack.c.l.b16 %v64
  %v209 = vunpack.c.l.b16 %v65
  %v210 = vunpack.c.l.b16 %v66
  %v211 = vunpack.c.l.b16 %v67
  %v212 = vunpack.c.l.b16 %v68
  %v213 = vunpack.c.l.b16 %v69
  %v214 = vunpack.c.l.b16 %v70
  %v215 = vunpack.c.l.b16 %v71
  %v216 = vunpack.c.l.b16 %v72
  %v217 = vunpack.c.l.b16 %v73
  %v218 = vunpack.c.l.b16 %v74
  %v219 = vunpack.c.l.b16 %v75
  %v220 = vunpack.c.l.b16 %v76
  %v221 = vunpack.c.l.b16 %v77
  %v222 = vunpack.c.l.b16 %v78
  %v223 = vunpack.c.l.b16 %v79
  %v224 = vunpack.c.l.b16 %v80
  %v225 = vunpack.c.l.b16 %v81
  %v226 = vunpack.c.l.b16 %v82
  %v227 = vunpack.c.l.b16 %v83
  %v228 = vunpack.c.l.b16 %v84
  %v229 = vpack.c.b16 %v166, %v165
  %v230 = vpack.c.b16 %v168, %v167
  %v231 = vpack.c.b16 %v170, %v169
  %v232 = vpack.c.b16 %v172, %v171
  %v233 = vpack.c.b16 %v174, %v173
  %v234 = vpack.c.b16 %v176, %v175
  %v235 = vpack.c.b16 %v178, %v177
  %v236 = vpack.c.b16 %v180, %v179
  %v237 = vpack.c.b16 %v182, %v181
  %v238 = vpack.c.b16 %v184, %v183
  %v239 = vpack.c.b16 %v186, %v185
  %v240 = vpack.c.b16 %v188, %v187
  %v241 = vpack.c.b16 %v190, %v189
  %v242 = vpack.c.b16 %v192, %v191
  %v243 = vpack.c.b16 %v194, %v193
  %v244 = vpack.c.b16 %v196, %v195
  %v245 = vpack.c.b16 %v198, %v197
  %v246 = vpack.c.b16 %v200, %v199
  %v247 = vpack.c.b16 %v202, %v201
  %v248 = vpack.c.b16 %v204, %v203
  %v249 = vpack.c.b16 %v206, %v205
  %v250 = vpack.c.b16 %v208, %v207
  %v251 = vpack.c.b16 %v210, %v209
  %v252 = vpack.c.b16 %v212, %v211
  %v253 = vpack.c.b16 %v214, %v213
  %v254 = vpack.c.b16 %v216, %v215
  %v255 = vpack.c.b16 %v218, %v217
  %v256 = vpack.c.b16 %v220, %v219
  %v257 = vpack.c.b16 %v222, %v221
  %v258 = vpack.c.b16 %v224, %v223
  %v259 = vpack.c.b16 %v226, %v225
  %v260 = vpack.c.b16 %v228, %v227
  %v309 = vunpack.c.l.b16 %v85
  %v310 = vunpack.c.l.b16 %v86
  %v311 = vunpack.c.l.b16 %v87
  %v312 = vunpack.c.l.b16 %v88
  %v313 = vunpack.c.l.b16 %v89
  %v314 = vunpack.c.l.b16 %v90
  %v315 = vunpack.c.l.b16 %v91
  %v316 = vunpack.c.l.b16 %v92
  %v317 = vunpack.c.l.b16 %v93
  %v318 = vunpack.c.l.b16 %v94
  %v319 = vunpack.c.l.b16 %v95
  %v320 = vunpack.c.l.b16 %v96
  %v321 = vunpack.c.l.b16 %v97
  %v322 = vunpack.c.l.b16 %v98
  %v323 = vunpack.c.l.b16 %v99
  %v324 = vunpack.c.l.b16 %v100
  %v325 = vpack.c.b16 %v310, %v309
  %v326 = vpack.c.b16 %v312, %v311
  %v327 = vpack.c.b16 %v314, %v313
  %v328 = vpack.c.b16 %v316, %v315
  %v329 = vpack.c.b16 %v318, %v317
  %v330 = vpack.c.b16 %v320, %v319
  %v331 = vpack.c.b16 %v322, %v321
  %v332 = vpack.c.b16 %v324, %v323
  %341 = vmatprep.subr.bf16.mxu0 0
  %342 = vmatpush1.bf16.msra.mxu0 %v325
  %343 = vmatprep.subr.bf16.mxu0 0
  %344 = vmatpush1.bf16.msra.mxu0 %v326
  %345 = vmatprep.subr.bf16.mxu0 0
  %346 = vmatpush1.bf16.msra.mxu0 %v327
  %347 = vmatprep.subr.bf16.mxu0 0
  %348 = vmatpush1.bf16.msra.mxu0 %v328
  %349 = vmatprep.subr.bf16.mxu0 0
  %350 = vmatpush1.bf16.msra.mxu0 %v329
  %351 = vmatprep.subr.bf16.mxu0 0
  %352 = vmatpush1.bf16.msra.mxu0 %v330
  %353 = vmatprep.subr.bf16.mxu0 0
  %354 = vmatpush1.bf16.msra.mxu0 %v331
  %355 = vmatprep.subr.bf16.mxu0 0
  %356 = vmatpush1.bf16.msra.mxu0 %v332
  %357 = vmatprep.subr.bf16.mxu0 0
  %358 = vmatpush1.bf16.msra.mxu0 0
  %359 = vmatprep.subr.bf16.mxu0 0
  %360 = vmatpush1.bf16.msra.mxu0 0
  %361 = vmatprep.subr.bf16.mxu0 0
  %362 = vmatpush1.bf16.msra.mxu0 0
  %363 = vmatprep.subr.bf16.mxu0 0
  %364 = vmatpush1.bf16.msra.mxu0 0
  %365 = vmatprep.subr.bf16.mxu0 0
  %366 = vmatpush1.bf16.msra.mxu0 0
  %367 = vmatprep.subr.bf16.mxu0 0
  %368 = vmatpush1.bf16.msra.mxu0 0
  %369 = vmatprep.subr.bf16.mxu0 0
  %370 = vmatpush1.bf16.msra.mxu0 0
  %371 = vmatprep.subr.bf16.mxu0 0
  %372 = vmatpush1.bf16.msra.mxu0 0
  %373 = vmatprep.mubr.bf16.mxu0 0
  %374 = vmatmul.mubr.bf16.gmra.mrb[0].mxu0 %v229
  %v375 = vpop.f32.mrb[0].mxu0
  %v376 = vadd.f32 0.0, %v375
  %v377 = vpop.f32.mrb[0].mxu0
  %v378 = vpop.f32.mrb[0].mxu0
  %v379 = vadd.f32 0.0, %v378
  %v380 = vpop.f32.mrb[0].mxu0
  %381 = vmatprep.mubr.bf16.mxu0 0
  %382 = vmatmul.mubr.bf16.gmra.mrb[0].mxu0 %v230
  %v383 = vpop.f32.mrb[0].mxu0
  %v384 = vadd.f32 0.0, %v383
  %v385 = vpop.f32.mrb[0].mxu0
  %v386 = vpop.f32.mrb[0].mxu0
  %v387 = vadd.f32 0.0, %v386
  %v388 = vpop.f32.mrb[0].mxu0
  %389 = vmatprep.mubr.bf16.mxu0 0
  %390 = vmatmul.mubr.bf16.gmra.mrb[0].mxu0 %v231
  %v391 = vpop.f32.mrb[0].mxu0
  %v392 = vadd.f32 0.0, %v391
  %v393 = vpop.f32.mrb[0].mxu0
  %v394 = vpop.f32.mrb[0].mxu0
  %v395 = vadd.f32 0.0, %v394
  %v396 = vpop.f32.mrb[0].mxu0
  %397 = vmatprep.mubr.bf16.mxu0 0
  %398 = vmatmul.mubr.bf16.gmra.mrb[0].mxu0 %v232
  %v399 = vpop.f32.mrb[0].mxu0
  %v400 = vadd.f32 0.0, %v399
  %v401 = vpop.f32.mrb[0].mxu0
  %v402 = vpop.f32.mrb[0].mxu0
  %v403 = vadd.f32 0.0, %v402
  %v404 = vpop.f32.mrb[0].mxu0
  %405 = vmatprep.mubr.bf16.mxu0 0
  %406 = vmatmul.mubr.bf16.gmra.mrb[0].mxu0 %v233
  %v407 = vpop.f32.mrb[0].mxu0
  %v408 = vadd.f32 0.0, %v407
  %v409 = vpop.f32.mrb[0].mxu0
  %v410 = vpop.f32.mrb[0].mxu0
  %v411 = vadd.f32 0.0, %v410
  %v412 = vpop.f32.mrb[0].mxu0
  %413 = vmatprep.mubr.bf16.mxu0 0
  %414 = vmatmul.mubr.bf16.gmra.mrb[0].mxu0 %v234
  %v415 = vpop.f32.mrb[0].mxu0
  %v416 = vadd.f32 0.0, %v415
  %v417 = vpop.f32.mrb[0].mxu0
  %v418 = vpop.f32.mrb[0].mxu0
  %v419 = vadd.f32 0.0, %v418
  %v420 = vpop.f32.mrb[0].mxu0
  %421 = vmatprep.mubr.bf16.mxu0 0
  %422 = vmatmul.mubr.bf16.gmra.mrb[0].mxu0 %v235
  %v423 = vpop.f32.mrb[0].mxu0
  %v424 = vadd.f32 0.0, %v423
  %v425 = vpop.f32.mrb[0].mxu0
  %v426 = vpop.f32.mrb[0].mxu0
  %v427 = vadd.f32 0.0, %v426
  %v428 = vpop.f32.mrb[0].mxu0
  %429 = vmatprep.mubr.bf16.mxu0 0
  %430 = vmatmul.mubr.bf16.gmra.mrb[0].mxu0 %v236
  %v431 = vpop.f32.mrb[0].mxu0
  %v432 = vadd.f32 0.0, %v431
  %v433 = vpop.f32.mrb[0].mxu0
  %v434 = vpop.f32.mrb[0].mxu0
  %v435 = vadd.f32 0.0, %v434
  %v436 = vpop.f32.mrb[0].mxu0
  %437 = vmatprep.mubr.bf16.mxu0 0
  %438 = vmatmul.mubr.bf16.gmra.mrb[0].mxu0 %v237
  %v439 = vpop.f32.mrb[0].mxu0
  %v440 = vadd.f32 0.0, %v439
  %v441 = vpop.f32.mrb[0].mxu0
  %v442 = vpop.f32.mrb[0].mxu0
  %v443 = vadd.f32 0.0, %v442
  %v444 = vpop.f32.mrb[0].mxu0
  %445 = vmatprep.mubr.bf16.mxu0 0
  %446 = vmatmul.mubr.bf16.gmra.mrb[0].mxu0 %v238
  %v447 = vpop.f32.mrb[0].mxu0
  %v448 = vadd.f32 0.0, %v447
  %v449 = vpop.f32.mrb[0].mxu0
  %v450 = vpop.f32.mrb[0].mxu0
  %v451 = vadd.f32 0.0, %v450
  %v452 = vpop.f32.mrb[0].mxu0
  %453 = vmatprep.mubr.bf16.mxu0 0
  %454 = vmatmul.mubr.bf16.gmra.mrb[0].mxu0 %v239
  %v455 = vpop.f32.mrb[0].mxu0
  %v456 = vadd.f32 0.0, %v455
  %v457 = vpop.f32.mrb[0].mxu0
  %v458 = vpop.f32.mrb[0].mxu0
  %v459 = vadd.f32 0.0, %v458
  %v460 = vpop.f32.mrb[0].mxu0
  %461 = vmatprep.mubr.bf16.mxu0 0
  %462 = vmatmul.mubr.bf16.gmra.mrb[0].mxu0 %v240
  %v463 = vpop.f32.mrb[0].mxu0
  %v464 = vadd.f32 0.0, %v463
  %v465 = vpop.f32.mrb[0].mxu0
  %v466 = vpop.f32.mrb[0].mxu0
  %v467 = vadd.f32 0.0, %v466
  %v468 = vpop.f32.mrb[0].mxu0
  %469 = vmatprep.mubr.bf16.mxu0 0
  %470 = vmatmul.mubr.bf16.gmra.mrb[0].mxu0 %v241
  %v471 = vpop.f32.mrb[0].mxu0
  %v472 = vadd.f32 0.0, %v471
  %v473 = vpop.f32.mrb[0].mxu0
  %v474 = vpop.f32.mrb[0].mxu0
  %v475 = vadd.f32 0.0, %v474
  %v476 = vpop.f32.mrb[0].mxu0
  %477 = vmatprep.mubr.bf16.mxu0 0
  %478 = vmatmul.mubr.bf16.gmra.mrb[0].mxu0 %v242
  %v479 = vpop.f32.mrb[0].mxu0
  %v480 = vadd.f32 0.0, %v479
  %v481 = vpop.f32.mrb[0].mxu0
  %v482 = vpop.f32.mrb[0].mxu0
  %v483 = vadd.f32 0.0, %v482
  %v484 = vpop.f32.mrb[0].mxu0
  %485 = vmatprep.mubr.bf16.mxu0 0
  %486 = vmatmul.mubr.bf16.gmra.mrb[0].mxu0 %v243
  %v487 = vpop.f32.mrb[0].mxu0
  %v488 = vadd.f32 0.0, %v487
  %v489 = vpop.f32.mrb[0].mxu0
  %v490 = vpop.f32.mrb[0].mxu0
  %v491 = vadd.f32 0.0, %v490
  %v492 = vpop.f32.mrb[0].mxu0
  %493 = vmatprep.mubr.bf16.mxu0 0
  %494 = vmatmul.mubr.bf16.gmra.mrb[0].mxu0 %v244
  %v495 = vpop.f32.mrb[0].mxu0
  %v496 = vadd.f32 0.0, %v495
  %v497 = vpop.f32.mrb[0].mxu0
  %v498 = vpop.f32.mrb[0].mxu0
  %v499 = vadd.f32 0.0, %v498
  %v500 = vpop.f32.mrb[0].mxu0
  %501 = vmatprep.mubr.bf16.mxu0 0
  %502 = vmatmul.mubr.bf16.gmra.mrb[0].mxu0 %v245
  %v503 = vpop.f32.mrb[0].mxu0
  %v504 = vadd.f32 0.0, %v503
  %v505 = vpop.f32.mrb[0].mxu0
  %v506 = vpop.f32.mrb[0].mxu0
  %v507 = vadd.f32 0.0, %v506
  %v508 = vpop.f32.mrb[0].mxu0
  %509 = vmatprep.mubr.bf16.mxu0 0
  %510 = vmatmul.mubr.bf16.gmra.mrb[0].mxu0 %v246
  %v511 = vpop.f32.mrb[0].mxu0
  %v512 = vadd.f32 0.0, %v511
  %v513 = vpop.f32.mrb[0].mxu0
  %v514 = vpop.f32.mrb[0].mxu0
  %v515 = vadd.f32 0.0, %v514
  %v516 = vpop.f32.mrb[0].mxu0
  %517 = vmatprep.mubr.bf16.mxu0 0
  %518 = vmatmul.mubr.bf16.gmra.mrb[0].mxu0 %v247
  %v519 = vpop.f32.mrb[0].mxu0
  %v520 = vadd.f32 0.0, %v519
  %v521 = vpop.f32.mrb[0].mxu0
  %v522 = vpop.f32.mrb[0].mxu0
  %v523 = vadd.f32 0.0, %v522
  %v524 = vpop.f32.mrb[0].mxu0
  %525 = vmatprep.mubr.bf16.mxu0 0
  %526 = vmatmul.mubr.bf16.gmra.mrb[0].mxu0 %v248
  %v527 = vpop.f32.mrb[0].mxu0
  %v528 = vadd.f32 0.0, %v527
  %v529 = vpop.f32.mrb[0].mxu0
  %v530 = vpop.f32.mrb[0].mxu0
  %v531 = vadd.f32 0.0, %v530
  %v532 = vpop.f32.mrb[0].mxu0
  %533 = vmatprep.mubr.bf16.mxu0 0
  %534 = vmatmul.mubr.bf16.gmra.mrb[0].mxu0 %v249
  %v535 = vpop.f32.mrb[0].mxu0
  %v536 = vadd.f32 0.0, %v535
  %v537 = vpop.f32.mrb[0].mxu0
  %v538 = vpop.f32.mrb[0].mxu0
  %v539 = vadd.f32 0.0, %v538
  %v540 = vpop.f32.mrb[0].mxu0
  %541 = vmatprep.mubr.bf16.mxu0 0
  %542 = vmatmul.mubr.bf16.gmra.mrb[0].mxu0 %v250
  %v543 = vpop.f32.mrb[0].mxu0
  %v544 = vadd.f32 0.0, %v543
  %v545 = vpop.f32.mrb[0].mxu0
  %v546 = vpop.f32.mrb[0].mxu0
  %v547 = vadd.f32 0.0, %v546
  %v548 = vpop.f32.mrb[0].mxu0
  %549 = vmatprep.mubr.bf16.mxu0 0
  %550 = vmatmul.mubr.bf16.gmra.mrb[0].mxu0 %v251
  %v551 = vpop.f32.mrb[0].mxu0
  %v552 = vadd.f32 0.0, %v551
  %v553 = vpop.f32.mrb[0].mxu0
  %v554 = vpop.f32.mrb[0].mxu0
  %v555 = vadd.f32 0.0, %v554
  %v556 = vpop.f32.mrb[0].mxu0
  %557 = vmatprep.mubr.bf16.mxu0 0
  %558 = vmatmul.mubr.bf16.gmra.mrb[0].mxu0 %v252
  %v559 = vpop.f32.mrb[0].mxu0
  %v560 = vadd.f32 0.0, %v559
  %v561 = vpop.f32.mrb[0].mxu0
  %v562 = vpop.f32.mrb[0].mxu0
  %v563 = vadd.f32 0.0, %v562
  %v564 = vpop.f32.mrb[0].mxu0
  %565 = vmatprep.mubr.bf16.mxu0 0
  %566 = vmatmul.mubr.bf16.gmra.mrb[0].mxu0 %v253
  %v567 = vpop.f32.mrb[0].mxu0
  %v568 = vadd.f32 0.0, %v567
  %v569 = vpop.f32.mrb[0].mxu0
  %v570 = vpop.f32.mrb[0].mxu0
  %v571 = vadd.f32 0.0, %v570
  %v572 = vpop.f32.mrb[0].mxu0
  %573 = vmatprep.mubr.bf16.mxu0 0
  %574 = vmatmul.mubr.bf16.gmra.mrb[0].mxu0 %v254
  %v575 = vpop.f32.mrb[0].mxu0
  %v576 = vadd.f32 0.0, %v575
  %v577 = vpop.f32.mrb[0].mxu0
  %v578 = vpop.f32.mrb[0].mxu0
  %v579 = vadd.f32 0.0, %v578
  %v580 = vpop.f32.mrb[0].mxu0
  %581 = vmatprep.mubr.bf16.mxu0 0
  %582 = vmatmul.mubr.bf16.gmra.mrb[0].mxu0 %v255
  %v583 = vpop.f32.mrb[0].mxu0
  %v584 = vadd.f32 0.0, %v583
  %v585 = vpop.f32.mrb[0].mxu0
  %v586 = vpop.f32.mrb[0].mxu0
  %v587 = vadd.f32 0.0, %v586
  %v588 = vpop.f32.mrb[0].mxu0
  %589 = vmatprep.mubr.bf16.mxu0 0
  %590 = vmatmul.mubr.bf16.gmra.mrb[0].mxu0 %v256
  %v591 = vpop.f32.mrb[0].mxu0
  %v592 = vadd.f32 0.0, %v591
  %v593 = vpop.f32.mrb[0].mxu0
  %v594 = vpop.f32.mrb[0].mxu0
  %v595 = vadd.f32 0.0, %v594
  %v596 = vpop.f32.mrb[0].mxu0
  %597 = vmatprep.mubr.bf16.mxu0 0
  %598 = vmatmul.mubr.bf16.gmra.mrb[0].mxu0 %v257
  %v599 = vpop.f32.mrb[0].mxu0
  %v600 = vadd.f32 0.0, %v599
  %v601 = vpop.f32.mrb[0].mxu0
  %v602 = vpop.f32.mrb[0].mxu0
  %v603 = vadd.f32 0.0, %v602
  %v604 = vpop.f32.mrb[0].mxu0
  %605 = vmatprep.mubr.bf16.mxu0 0
  %606 = vmatmul.mubr.bf16.gmra.mrb[0].mxu0 %v258
  %v607 = vpop.f32.mrb[0].mxu0
  %v608 = vadd.f32 0.0, %v607
  %v609 = vpop.f32.mrb[0].mxu0
  %v610 = vpop.f32.mrb[0].mxu0
  %v611 = vadd.f32 0.0, %v610
  %v612 = vpop.f32.mrb[0].mxu0
  %613 = vmatprep.mubr.bf16.mxu0 0
  %614 = vmatmul.mubr.bf16.gmra.mrb[0].mxu0 %v259
  %v615 = vpop.f32.mrb[0].mxu0
  %v616 = vadd.f32 0.0, %v615
  %v617 = vpop.f32.mrb[0].mxu0
  %v618 = vpop.f32.mrb[0].mxu0
  %v619 = vadd.f32 0.0, %v618
  %v620 = vpop.f32.mrb[0].mxu0
  %621 = vmatprep.mubr.bf16.mxu0 0
  %622 = vmatmul.mubr.bf16.gmra.mrb[0].mxu0 %v260
  %v623 = vpop.f32.mrb[0].mxu0
  %v624 = vadd.f32 0.0, %v623
  %v625 = vpop.f32.mrb[0].mxu0
  %v626 = vpop.f32.mrb[0].mxu0
  %v627 = vadd.f32 0.0, %v626
  %v628 = vpop.f32.mrb[0].mxu0
  %629 = vdwg.mxu0
  %v630 = vpack.c.bf16 %v379, %v376
  %v631 = vpack.c.bf16 %v387, %v384
  %v632 = vpack.c.bf16 %v395, %v392
  %v633 = vpack.c.bf16 %v403, %v400
  %v634 = vpack.c.bf16 %v411, %v408
  %v635 = vpack.c.bf16 %v419, %v416
  %v636 = vpack.c.bf16 %v427, %v424
  %v637 = vpack.c.bf16 %v435, %v432
  %v638 = vpack.c.bf16 %v443, %v440
  %v639 = vpack.c.bf16 %v451, %v448
  %v640 = vpack.c.bf16 %v459, %v456
  %v641 = vpack.c.bf16 %v467, %v464
  %v642 = vpack.c.bf16 %v475, %v472
  %v643 = vpack.c.bf16 %v483, %v480
  %v644 = vpack.c.bf16 %v491, %v488
  %v645 = vpack.c.bf16 %v499, %v496
  %v646 = vpack.c.bf16 %v507, %v504
  %v647 = vpack.c.bf16 %v515, %v512
  %v648 = vpack.c.bf16 %v523, %v520
  %v649 = vpack.c.bf16 %v531, %v528
  %v650 = vpack.c.bf16 %v539, %v536
  %v651 = vpack.c.bf16 %v547, %v544
  %v652 = vpack.c.bf16 %v555, %v552
  %v653 = vpack.c.bf16 %v563, %v560
  %v654 = vpack.c.bf16 %v571, %v568
  %v655 = vpack.c.bf16 %v579, %v576
  %v656 = vpack.c.bf16 %v587, %v584
  %v657 = vpack.c.bf16 %v595, %v592
  %v658 = vpack.c.bf16 %v603, %v600
  %v659 = vpack.c.bf16 %v611, %v608
  %v660 = vpack.c.bf16 %v619, %v616
  %v661 = vpack.c.bf16 %v627, %v624
  %v694 = vunpack.c.l.b16 %v630
  %v695 = vunpack.c.h.b16 %v630
  %v696 = vunpack.c.l.b16 %v631
  %v697 = vunpack.c.h.b16 %v631
  %v698 = vunpack.c.l.b16 %v632
  %v699 = vunpack.c.h.b16 %v632
  %v700 = vunpack.c.l.b16 %v633
  %v701 = vunpack.c.h.b16 %v633
  %v702 = vunpack.c.l.b16 %v634
  %v703 = vunpack.c.h.b16 %v634
  %v704 = vunpack.c.l.b16 %v635
  %v705 = vunpack.c.h.b16 %v635
  %v706 = vunpack.c.l.b16 %v636
  %v707 = vunpack.c.h.b16 %v636
  %v708 = vunpack.c.l.b16 %v637
  %v709 = vunpack.c.h.b16 %v637
  %v710 = vunpack.c.l.b16 %v638
  %v711 = vunpack.c.h.b16 %v638
  %v712 = vunpack.c.l.b16 %v639
  %v713 = vunpack.c.h.b16 %v639
  %v714 = vunpack.c.l.b16 %v640
  %v715 = vunpack.c.h.b16 %v640
  %v716 = vunpack.c.l.b16 %v641
  %v717 = vunpack.c.h.b16 %v641
  %v718 = vunpack.c.l.b16 %v642
  %v719 = vunpack.c.h.b16 %v642
  %v720 = vunpack.c.l.b16 %v643
  %v721 = vunpack.c.h.b16 %v643
  %v722 = vunpack.c.l.b16 %v644
  %v723 = vunpack.c.h.b16 %v644
  %v724 = vunpack.c.l.b16 %v645
  %v725 = vunpack.c.h.b16 %v645
  %v726 = vunpack.c.l.b16 %v646
  %v727 = vunpack.c.h.b16 %v646
  %v728 = vunpack.c.l.b16 %v647
  %v729 = vunpack.c.h.b16 %v647
  %v730 = vunpack.c.l.b16 %v648
  %v731 = vunpack.c.h.b16 %v648
  %v732 = vunpack.c.l.b16 %v649
  %v733 = vunpack.c.h.b16 %v649
  %v734 = vunpack.c.l.b16 %v650
  %v735 = vunpack.c.h.b16 %v650
  %v736 = vunpack.c.l.b16 %v651
  %v737 = vunpack.c.h.b16 %v651
  %v738 = vunpack.c.l.b16 %v652
  %v739 = vunpack.c.h.b16 %v652
  %v740 = vunpack.c.l.b16 %v653
  %v741 = vunpack.c.h.b16 %v653
  %v742 = vunpack.c.l.b16 %v654
  %v743 = vunpack.c.h.b16 %v654
  %v744 = vunpack.c.l.b16 %v655
  %v745 = vunpack.c.h.b16 %v655
  %v746 = vunpack.c.l.b16 %v656
  %v747 = vunpack.c.h.b16 %v656
  %v748 = vunpack.c.l.b16 %v657
  %v749 = vunpack.c.h.b16 %v657
  %v750 = vunpack.c.l.b16 %v658
  %v751 = vunpack.c.h.b16 %v658
  %v752 = vunpack.c.l.b16 %v659
  %v753 = vunpack.c.h.b16 %v659
  %v754 = vunpack.c.l.b16 %v660
  %v755 = vunpack.c.h.b16 %v660
  %v756 = vunpack.c.l.b16 %v661
  %v757 = vunpack.c.h.b16 %v661
  %v758 = vpack.c.b16 %v694, %v694
  %v759 = vpack.c.b16 %v695, %v695
  %v760 = vpack.c.b16 %v696, %v696
  %v761 = vpack.c.b16 %v697, %v697
  %v762 = vpack.c.b16 %v698, %v698
  %v763 = vpack.c.b16 %v699, %v699
  %v764 = vpack.c.b16 %v700, %v700
  %v765 = vpack.c.b16 %v701, %v701
  %v766 = vpack.c.b16 %v702, %v702
  %v767 = vpack.c.b16 %v703, %v703
  %v768 = vpack.c.b16 %v704, %v704
  %v769 = vpack.c.b16 %v705, %v705
  %v770 = vpack.c.b16 %v706, %v706
  %v771 = vpack.c.b16 %v707, %v707
  %v772 = vpack.c.b16 %v708, %v708
  %v773 = vpack.c.b16 %v709, %v709
  %v774 = vpack.c.b16 %v710, %v710
  %v775 = vpack.c.b16 %v711, %v711
  %v776 = vpack.c.b16 %v712, %v712
  %v777 = vpack.c.b16 %v713, %v713
  %v778 = vpack.c.b16 %v714, %v714
  %v779 = vpack.c.b16 %v715, %v715
  %v780 = vpack.c.b16 %v716, %v716
  %v781 = vpack.c.b16 %v717, %v717
  %v782 = vpack.c.b16 %v718, %v718
  %v783 = vpack.c.b16 %v719, %v719
  %v784 = vpack.c.b16 %v720, %v720
  %v785 = vpack.c.b16 %v721, %v721
  %v786 = vpack.c.b16 %v722, %v722
  %v787 = vpack.c.b16 %v723, %v723
  %v788 = vpack.c.b16 %v724, %v724
  %v789 = vpack.c.b16 %v725, %v725
  %v790 = vpack.c.b16 %v726, %v726
  %v791 = vpack.c.b16 %v727, %v727
  %v792 = vpack.c.b16 %v728, %v728
  %v793 = vpack.c.b16 %v729, %v729
  %v794 = vpack.c.b16 %v730, %v730
  %v795 = vpack.c.b16 %v731, %v731
  %v796 = vpack.c.b16 %v732, %v732
  %v797 = vpack.c.b16 %v733, %v733
  %v798 = vpack.c.b16 %v734, %v734
  %v799 = vpack.c.b16 %v735, %v735
  %v800 = vpack.c.b16 %v736, %v736
  %v801 = vpack.c.b16 %v737, %v737
  %v802 = vpack.c.b16 %v738, %v738
  %v803 = vpack.c.b16 %v739, %v739
  %v804 = vpack.c.b16 %v740, %v740
  %v805 = vpack.c.b16 %v741, %v741
  %v806 = vpack.c.b16 %v742, %v742
  %v807 = vpack.c.b16 %v743, %v743
  %v808 = vpack.c.b16 %v744, %v744
  %v809 = vpack.c.b16 %v745, %v745
  %v810 = vpack.c.b16 %v746, %v746
  %v811 = vpack.c.b16 %v747, %v747
  %v812 = vpack.c.b16 %v748, %v748
  %v813 = vpack.c.b16 %v749, %v749
  %v814 = vpack.c.b16 %v750, %v750
  %v815 = vpack.c.b16 %v751, %v751
  %v816 = vpack.c.b16 %v752, %v752
  %v817 = vpack.c.b16 %v753, %v753
  %v818 = vpack.c.b16 %v754, %v754
  %v819 = vpack.c.b16 %v755, %v755
  %v820 = vpack.c.b16 %v756, %v756
  %v821 = vpack.c.b16 %v757, %v757
  %886 = vst [vmem:[%s4] sm:$0xf] %v758
  %887 = vst [vmem:[%s4 + $0x4] sm:$0xf] %v759
  %888 = vst [vmem:[%s4 + $0x8] sm:$0xf] %v760
  %889 = vst [vmem:[%s4 + $0xc] sm:$0xf] %v761
  %890 = vst [vmem:[%s4 + $0x10] sm:$0xf] %v762
  %891 = vst [vmem:[%s4 + $0x14] sm:$0xf] %v763
  %892 = vst [vmem:[%s4 + $0x18] sm:$0xf] %v764
  %893 = vst [vmem:[%s4 + $0x1c] sm:$0xf] %v765
  %894 = vst [vmem:[%s4 + $0x20] sm:$0xf] %v766
  %895 = vst [vmem:[%s4 + $0x24] sm:$0xf] %v767
  %896 = vst [vmem:[%s4 + $0x28] sm:$0xf] %v768
  %897 = vst [vmem:[%s4 + $0x2c] sm:$0xf] %v769
  %898 = vst [vmem:[%s4 + $0x30] sm:$0xf] %v770
  %899 = vst [vmem:[%s4 + $0x34] sm:$0xf] %v771
  %900 = vst [vmem:[%s4 + $0x38] sm:$0xf] %v772
  %901 = vst [vmem:[%s4 + $0x3c] sm:$0xf] %v773
  %902 = vst [vmem:[%s4 + $0x40] sm:$0xf] %v774
  %903 = vst [vmem:[%s4 + $0x44] sm:$0xf] %v775
  %904 = vst [vmem:[%s4 + $0x48] sm:$0xf] %v776
  %905 = vst [vmem:[%s4 + $0x4c] sm:$0xf] %v777
  %906 = vst [vmem:[%s4 + $0x50] sm:$0xf] %v778
  %907 = vst [vmem:[%s4 + $0x54] sm:$0xf] %v779
  %908 = vst [vmem:[%s4 + $0x58] sm:$0xf] %v780
  %909 = vst [vmem:[%s4 + $0x5c] sm:$0xf] %v781
  %910 = vst [vmem:[%s4 + $0x60] sm:$0xf] %v782
  %911 = vst [vmem:[%s4 + $0x64] sm:$0xf] %v783
  %912 = vst [vmem:[%s4 + $0x68] sm:$0xf] %v784
  %913 = vst [vmem:[%s4 + $0x6c] sm:$0xf] %v785
  %914 = vst [vmem:[%s4 + $0x70] sm:$0xf] %v786
  %915 = vst [vmem:[%s4 + $0x74] sm:$0xf] %v787
  %916 = vst [vmem:[%s4 + $0x78] sm:$0xf] %v788
  %917 = vst [vmem:[%s4 + $0x7c] sm:$0xf] %v789
  %918 = vst [vmem:[%s4 + $0x80] sm:$0xf] %v790
  %919 = vst [vmem:[%s4 + $0x84] sm:$0xf] %v791
  %920 = vst [vmem:[%s4 + $0x88] sm:$0xf] %v792
  %921 = vst [vmem:[%s4 + $0x8c] sm:$0xf] %v793
  %922 = vst [vmem:[%s4 + $0x90] sm:$0xf] %v794
  %923 = vst [vmem:[%s4 + $0x94] sm:$0xf] %v795
  %924 = vst [vmem:[%s4 + $0x98] sm:$0xf] %v796
  %925 = vst [vmem:[%s4 + $0x9c] sm:$0xf] %v797
  %926 = vst [vmem:[%s4 + $0xa0] sm:$0xf] %v798
  %927 = vst [vmem:[%s4 + $0xa4] sm:$0xf] %v799
  %928 = vst [vmem:[%s4 + $0xa8] sm:$0xf] %v800
  %929 = vst [vmem:[%s4 + $0xac] sm:$0xf] %v801
  %930 = vst [vmem:[%s4 + $0xb0] sm:$0xf] %v802
  %931 = vst [vmem:[%s4 + $0xb4] sm:$0xf] %v803
  %932 = vst [vmem:[%s4 + $0xb8] sm:$0xf] %v804
  %933 = vst [vmem:[%s4 + $0xbc] sm:$0xf] %v805
  %934 = vst [vmem:[%s4 + $0xc0] sm:$0xf] %v806
  %935 = vst [vmem:[%s4 + $0xc4] sm:$0xf] %v807
  %936 = vst [vmem:[%s4 + $0xc8] sm:$0xf] %v808
  %937 = vst [vmem:[%s4 + $0xcc] sm:$0xf] %v809
  %938 = vst [vmem:[%s4 + $0xd0] sm:$0xf] %v810
  %939 = vst [vmem:[%s4 + $0xd4] sm:$0xf] %v811
  %940 = vst [vmem:[%s4 + $0xd8] sm:$0xf] %v812
  %941 = vst [vmem:[%s4 + $0xdc] sm:$0xf] %v813
  %942 = vst [vmem:[%s4 + $0xe0] sm:$0xf] %v814
  %943 = vst [vmem:[%s4 + $0xe4] sm:$0xf] %v815
  %944 = vst [vmem:[%s4 + $0xe8] sm:$0xf] %v816
  %945 = vst [vmem:[%s4 + $0xec] sm:$0xf] %v817
  %946 = vst [vmem:[%s4 + $0xf0] sm:$0xf] %v818
  %947 = vst [vmem:[%s4 + $0xf4] sm:$0xf] %v819
  %948 = vst [vmem:[%s4 + $0xf8] sm:$0xf] %v820
  %949 = vst [vmem:[%s4 + $0xfc] sm:$0xf] %v821
  %v950 = vld [vmem:[%s2] sm:$0xf]
  %v951 = vld [vmem:[%s2 + $0x4] sm:$0xf]
  %v952 = vld [vmem:[%s2 + $0x8] sm:$0xf]
  %v953 = vld [vmem:[%s2 + $0xc] sm:$0xf]
  %v954 = vld [vmem:[%s2 + $0x10] sm:$0xf]
  %v955 = vld [vmem:[%s2 + $0x14] sm:$0xf]
  %v956 = vld [vmem:[%s2 + $0x18] sm:$0xf]
  %v957 = vld [vmem:[%s2 + $0x1c] sm:$0xf]
  %v958 = vld [vmem:[%s2 + $0x20] sm:$0xf]
  %v959 = vld [vmem:[%s2 + $0x24] sm:$0xf]
  %v960 = vld [vmem:[%s2 + $0x28] sm:$0xf]
  %v961 = vld [vmem:[%s2 + $0x2c] sm:$0xf]
  %v962 = vld [vmem:[%s2 + $0x30] sm:$0xf]
  %v963 = vld [vmem:[%s2 + $0x34] sm:$0xf]
  %v964 = vld [vmem:[%s2 + $0x38] sm:$0xf]
  %v965 = vld [vmem:[%s2 + $0x3c] sm:$0xf]
  %v966 = vld [vmem:[%s3] sm:$0x1]
  %v968 = vlaneseq
  %v969 = vshrl.u32 %v968, 7
  %v970 = vsub.s32 0, %v969
  %v971 = vrot.slane %v966, %v970
  %v989 = vunpack.c.l.b16 %v950
  %v990 = vunpack.c.l.b16 %v951
  %v991 = vunpack.c.l.b16 %v952
  %v992 = vunpack.c.l.b16 %v953
  %v993 = vunpack.c.l.b16 %v954
  %v994 = vunpack.c.l.b16 %v955
  %v995 = vunpack.c.l.b16 %v956
  %v996 = vunpack.c.l.b16 %v957
  %v997 = vunpack.c.l.b16 %v958
  %v998 = vunpack.c.l.b16 %v959
  %v999 = vunpack.c.l.b16 %v960
  %v1000 = vunpack.c.l.b16 %v961
  %v1001 = vunpack.c.l.b16 %v962
  %v1002 = vunpack.c.l.b16 %v963
  %v1003 = vunpack.c.l.b16 %v964
  %v1004 = vunpack.c.l.b16 %v965
  %v1005 = vpack.c.b16 %v990, %v989
  %v1006 = vpack.c.b16 %v992, %v991
  %v1007 = vpack.c.b16 %v994, %v993
  %v1008 = vpack.c.b16 %v996, %v995
  %v1009 = vpack.c.b16 %v998, %v997
  %v1010 = vpack.c.b16 %v1000, %v999
  %v1011 = vpack.c.b16 %v1002, %v1001
  %v1012 = vpack.c.b16 %v1004, %v1003
  %1021 = vmatprep.subr.bf16.mxu0 0
  %1022 = vmatpush1.bf16.msra.mxu0 %v1005
  %1023 = vmatprep.subr.bf16.mxu0 0
  %1024 = vmatpush1.bf16.msra.mxu0 %v1006
  %1025 = vmatprep.subr.bf16.mxu0 0
  %1026 = vmatpush1.bf16.msra.mxu0 %v1007
  %1027 = vmatprep.subr.bf16.mxu0 0
  %1028 = vmatpush1.bf16.msra.mxu0 %v1008
  %1029 = vmatprep.subr.bf16.mxu0 0
  %1030 = vmatpush1.bf16.msra.mxu0 %v1009
  %1031 = vmatprep.subr.bf16.mxu0 0
  %1032 = vmatpush1.bf16.msra.mxu0 %v1010
  %1033 = vmatprep.subr.bf16.mxu0 0
  %1034 = vmatpush1.bf16.msra.mxu0 %v1011
  %1035 = vmatprep.subr.bf16.mxu0 0
  %1036 = vmatpush1.bf16.msra.mxu0 %v1012
  %1037 = vmatprep.subr.bf16.mxu0 0
  %1038 = vmatpush1.bf16.msra.mxu0 0
  %1039 = vmatprep.subr.bf16.mxu0 0
  %1040 = vmatpush1.bf16.msra.mxu0 0
  %1041 = vmatprep.subr.bf16.mxu0 0
  %1042 = vmatpush1.bf16.msra.mxu0 0
  %1043 = vmatprep.subr.bf16.mxu0 0
  %1044 = vmatpush1.bf16.msra.mxu0 0
  %1045 = vmatprep.subr.bf16.mxu0 0
  %1046 = vmatpush1.bf16.msra.mxu0 0
  %1047 = vmatprep.subr.bf16.mxu0 0
  %1048 = vmatpush1.bf16.msra.mxu0 0
  %1049 = vmatprep.subr.bf16.mxu0 0
  %1050 = vmatpush1.bf16.msra.mxu0 0
  %1051 = vmatprep.subr.bf16.mxu0 0
  %1052 = vmatpush1.bf16.msra.mxu0 0
  %1053 = vmatprep.mubr.bf16.mxu0 0
  %1054 = vmatmul.mubr.bf16.gmra.mrb[0].mxu0 %v229
  %v1055 = vpop.f32.mrb[0].mxu0
  %v1056 = vadd.f32 %v971, %v1055
  %v1057 = vpop.f32.mrb[0].mxu0
  %v1058 = vpop.f32.mrb[0].mxu0
  %v1059 = vadd.f32 %v971, %v1058
  %v1060 = vpop.f32.mrb[0].mxu0
  %1061 = vmatprep.mubr.bf16.mxu0 0
  %1062 = vmatmul.mubr.bf16.gmra.mrb[0].mxu0 %v230
  %v1063 = vpop.f32.mrb[0].mxu0
  %v1064 = vadd.f32 %v971, %v1063
  %v1065 = vpop.f32.mrb[0].mxu0
  %v1066 = vpop.f32.mrb[0].mxu0
  %v1067 = vadd.f32 %v971, %v1066
  %v1068 = vpop.f32.mrb[0].mxu0
  %1069 = vmatprep.mubr.bf16.mxu0 0
  %1070 = vmatmul.mubr.bf16.gmra.mrb[0].mxu0 %v231
  %v1071 = vpop.f32.mrb[0].mxu0
  %v1072 = vadd.f32 %v971, %v1071
  %v1073 = vpop.f32.mrb[0].mxu0
  %v1074 = vpop.f32.mrb[0].mxu0
  %v1075 = vadd.f32 %v971, %v1074
  %v1076 = vpop.f32.mrb[0].mxu0
  %1077 = vmatprep.mubr.bf16.mxu0 0
  %1078 = vmatmul.mubr.bf16.gmra.mrb[0].mxu0 %v232
  %v1079 = vpop.f32.mrb[0].mxu0
  %v1080 = vadd.f32 %v971, %v1079
  %v1081 = vpop.f32.mrb[0].mxu0
  %v1082 = vpop.f32.mrb[0].mxu0
  %v1083 = vadd.f32 %v971, %v1082
  %v1084 = vpop.f32.mrb[0].mxu0
  %1085 = vmatprep.mubr.bf16.mxu0 0
  %1086 = vmatmul.mubr.bf16.gmra.mrb[0].mxu0 %v233
  %v1087 = vpop.f32.mrb[0].mxu0
  %v1088 = vadd.f32 %v971, %v1087
  %v1089 = vpop.f32.mrb[0].mxu0
  %v1090 = vpop.f32.mrb[0].mxu0
  %v1091 = vadd.f32 %v971, %v1090
  %v1092 = vpop.f32.mrb[0].mxu0
  %1093 = vmatprep.mubr.bf16.mxu0 0
  %1094 = vmatmul.mubr.bf16.gmra.mrb[0].mxu0 %v234
  %v1095 = vpop.f32.mrb[0].mxu0
  %v1096 = vadd.f32 %v971, %v1095
  %v1097 = vpop.f32.mrb[0].mxu0
  %v1098 = vpop.f32.mrb[0].mxu0
  %v1099 = vadd.f32 %v971, %v1098
  %v1100 = vpop.f32.mrb[0].mxu0
  %1101 = vmatprep.mubr.bf16.mxu0 0
  %1102 = vmatmul.mubr.bf16.gmra.mrb[0].mxu0 %v235
  %v1103 = vpop.f32.mrb[0].mxu0
  %v1104 = vadd.f32 %v971, %v1103
  %v1105 = vpop.f32.mrb[0].mxu0
  %v1106 = vpop.f32.mrb[0].mxu0
  %v1107 = vadd.f32 %v971, %v1106
  %v1108 = vpop.f32.mrb[0].mxu0
  %1109 = vmatprep.mubr.bf16.mxu0 0
  %1110 = vmatmul.mubr.bf16.gmra.mrb[0].mxu0 %v236
  %v1111 = vpop.f32.mrb[0].mxu0
  %v1112 = vadd.f32 %v971, %v1111
  %v1113 = vpop.f32.mrb[0].mxu0
  %v1114 = vpop.f32.mrb[0].mxu0
  %v1115 = vadd.f32 %v971, %v1114
  %v1116 = vpop.f32.mrb[0].mxu0
  %1117 = vmatprep.mubr.bf16.mxu0 0
  %1118 = vmatmul.mubr.bf16.gmra.mrb[0].mxu0 %v237
  %v1119 = vpop.f32.mrb[0].mxu0
  %v1120 = vadd.f32 %v971, %v1119
  %v1121 = vpop.f32.mrb[0].mxu0
  %v1122 = vpop.f32.mrb[0].mxu0
  %v1123 = vadd.f32 %v971, %v1122
  %v1124 = vpop.f32.mrb[0].mxu0
  %1125 = vmatprep.mubr.bf16.mxu0 0
  %1126 = vmatmul.mubr.bf16.gmra.mrb[0].mxu0 %v238
  %v1127 = vpop.f32.mrb[0].mxu0
  %v1128 = vadd.f32 %v971, %v1127
  %v1129 = vpop.f32.mrb[0].mxu0
  %v1130 = vpop.f32.mrb[0].mxu0
  %v1131 = vadd.f32 %v971, %v1130
  %v1132 = vpop.f32.mrb[0].mxu0
  %1133 = vmatprep.mubr.bf16.mxu0 0
  %1134 = vmatmul.mubr.bf16.gmra.mrb[0].mxu0 %v239
  %v1135 = vpop.f32.mrb[0].mxu0
  %v1136 = vadd.f32 %v971, %v1135
  %v1137 = vpop.f32.mrb[0].mxu0
  %v1138 = vpop.f32.mrb[0].mxu0
  %v1139 = vadd.f32 %v971, %v1138
  %v1140 = vpop.f32.mrb[0].mxu0
  %1141 = vmatprep.mubr.bf16.mxu0 0
  %1142 = vmatmul.mubr.bf16.gmra.mrb[0].mxu0 %v240
  %v1143 = vpop.f32.mrb[0].mxu0
  %v1144 = vadd.f32 %v971, %v1143
  %v1145 = vpop.f32.mrb[0].mxu0
  %v1146 = vpop.f32.mrb[0].mxu0
  %v1147 = vadd.f32 %v971, %v1146
  %v1148 = vpop.f32.mrb[0].mxu0
  %1149 = vmatprep.mubr.bf16.mxu0 0
  %1150 = vmatmul.mubr.bf16.gmra.mrb[0].mxu0 %v241
  %v1151 = vpop.f32.mrb[0].mxu0
  %v1152 = vadd.f32 %v971, %v1151
  %v1153 = vpop.f32.mrb[0].mxu0
  %v1154 = vpop.f32.mrb[0].mxu0
  %v1155 = vadd.f32 %v971, %v1154
  %v1156 = vpop.f32.mrb[0].mxu0
  %1157 = vmatprep.mubr.bf16.mxu0 0
  %1158 = vmatmul.mubr.bf16.gmra.mrb[0].mxu0 %v242
  %v1159 = vpop.f32.mrb[0].mxu0
  %v1160 = vadd.f32 %v971, %v1159
  %v1161 = vpop.f32.mrb[0].mxu0
  %v1162 = vpop.f32.mrb[0].mxu0
  %v1163 = vadd.f32 %v971, %v1162
  %v1164 = vpop.f32.mrb[0].mxu0
  %1165 = vmatprep.mubr.bf16.mxu0 0
  %1166 = vmatmul.mubr.bf16.gmra.mrb[0].mxu0 %v243
  %v1167 = vpop.f32.mrb[0].mxu0
  %v1168 = vadd.f32 %v971, %v1167
  %v1169 = vpop.f32.mrb[0].mxu0
  %v1170 = vpop.f32.mrb[0].mxu0
  %v1171 = vadd.f32 %v971, %v1170
  %v1172 = vpop.f32.mrb[0].mxu0
  %1173 = vmatprep.mubr.bf16.mxu0 0
  %1174 = vmatmul.mubr.bf16.gmra.mrb[0].mxu0 %v244
  %v1175 = vpop.f32.mrb[0].mxu0
  %v1176 = vadd.f32 %v971, %v1175
  %v1177 = vpop.f32.mrb[0].mxu0
  %v1178 = vpop.f32.mrb[0].mxu0
  %v1179 = vadd.f32 %v971, %v1178
  %v1180 = vpop.f32.mrb[0].mxu0
  %1181 = vmatprep.mubr.bf16.mxu0 0
  %1182 = vmatmul.mubr.bf16.gmra.mrb[0].mxu0 %v245
  %v1183 = vpop.f32.mrb[0].mxu0
  %v1184 = vadd.f32 %v971, %v1183
  %v1185 = vpop.f32.mrb[0].mxu0
  %v1186 = vpop.f32.mrb[0].mxu0
  %v1187 = vadd.f32 %v971, %v1186
  %v1188 = vpop.f32.mrb[0].mxu0
  %1189 = vmatprep.mubr.bf16.mxu0 0
  %1190 = vmatmul.mubr.bf16.gmra.mrb[0].mxu0 %v246
  %v1191 = vpop.f32.mrb[0].mxu0
  %v1192 = vadd.f32 %v971, %v1191
  %v1193 = vpop.f32.mrb[0].mxu0
  %v1194 = vpop.f32.mrb[0].mxu0
  %v1195 = vadd.f32 %v971, %v1194
  %v1196 = vpop.f32.mrb[0].mxu0
  %1197 = vmatprep.mubr.bf16.mxu0 0
  %1198 = vmatmul.mubr.bf16.gmra.mrb[0].mxu0 %v247
  %v1199 = vpop.f32.mrb[0].mxu0
  %v1200 = vadd.f32 %v971, %v1199
  %v1201 = vpop.f32.mrb[0].mxu0
  %v1202 = vpop.f32.mrb[0].mxu0
  %v1203 = vadd.f32 %v971, %v1202
  %v1204 = vpop.f32.mrb[0].mxu0
  %1205 = vmatprep.mubr.bf16.mxu0 0
  %1206 = vmatmul.mubr.bf16.gmra.mrb[0].mxu0 %v248
  %v1207 = vpop.f32.mrb[0].mxu0
  %v1208 = vadd.f32 %v971, %v1207
  %v1209 = vpop.f32.mrb[0].mxu0
  %v1210 = vpop.f32.mrb[0].mxu0
  %v1211 = vadd.f32 %v971, %v1210
  %v1212 = vpop.f32.mrb[0].mxu0
  %1213 = vmatprep.mubr.bf16.mxu0 0
  %1214 = vmatmul.mubr.bf16.gmra.mrb[0].mxu0 %v249
  %v1215 = vpop.f32.mrb[0].mxu0
  %v1216 = vadd.f32 %v971, %v1215
  %v1217 = vpop.f32.mrb[0].mxu0
  %v1218 = vpop.f32.mrb[0].mxu0
  %v1219 = vadd.f32 %v971, %v1218
  %v1220 = vpop.f32.mrb[0].mxu0
  %1221 = vmatprep.mubr.bf16.mxu0 0
  %1222 = vmatmul.mubr.bf16.gmra.mrb[0].mxu0 %v250
  %v1223 = vpop.f32.mrb[0].mxu0
  %v1224 = vadd.f32 %v971, %v1223
  %v1225 = vpop.f32.mrb[0].mxu0
  %v1226 = vpop.f32.mrb[0].mxu0
  %v1227 = vadd.f32 %v971, %v1226
  %v1228 = vpop.f32.mrb[0].mxu0
  %1229 = vmatprep.mubr.bf16.mxu0 0
  %1230 = vmatmul.mubr.bf16.gmra.mrb[0].mxu0 %v251
  %v1231 = vpop.f32.mrb[0].mxu0
  %v1232 = vadd.f32 %v971, %v1231
  %v1233 = vpop.f32.mrb[0].mxu0
  %v1234 = vpop.f32.mrb[0].mxu0
  %v1235 = vadd.f32 %v971, %v1234
  %v1236 = vpop.f32.mrb[0].mxu0
  %1237 = vmatprep.mubr.bf16.mxu0 0
  %1238 = vmatmul.mubr.bf16.gmra.mrb[0].mxu0 %v252
  %v1239 = vpop.f32.mrb[0].mxu0
  %v1240 = vadd.f32 %v971, %v1239
  %v1241 = vpop.f32.mrb[0].mxu0
  %v1242 = vpop.f32.mrb[0].mxu0
  %v1243 = vadd.f32 %v971, %v1242
  %v1244 = vpop.f32.mrb[0].mxu0
  %1245 = vmatprep.mubr.bf16.mxu0 0
  %1246 = vmatmul.mubr.bf16.gmra.mrb[0].mxu0 %v253
  %v1247 = vpop.f32.mrb[0].mxu0
  %v1248 = vadd.f32 %v971, %v1247
  %v1249 = vpop.f32.mrb[0].mxu0
  %v1250 = vpop.f32.mrb[0].mxu0
  %v1251 = vadd.f32 %v971, %v1250
  %v1252 = vpop.f32.mrb[0].mxu0
  %1253 = vmatprep.mubr.bf16.mxu0 0
  %1254 = vmatmul.mubr.bf16.gmra.mrb[0].mxu0 %v254
  %v1255 = vpop.f32.mrb[0].mxu0
  %v1256 = vadd.f32 %v971, %v1255
  %v1257 = vpop.f32.mrb[0].mxu0
  %v1258 = vpop.f32.mrb[0].mxu0
  %v1259 = vadd.f32 %v971, %v1258
  %v1260 = vpop.f32.mrb[0].mxu0
  %1261 = vmatprep.mubr.bf16.mxu0 0
  %1262 = vmatmul.mubr.bf16.gmra.mrb[0].mxu0 %v255
  %v1263 = vpop.f32.mrb[0].mxu0
  %v1264 = vadd.f32 %v971, %v1263
  %v1265 = vpop.f32.mrb[0].mxu0
  %v1266 = vpop.f32.mrb[0].mxu0
  %v1267 = vadd.f32 %v971, %v1266
  %v1268 = vpop.f32.mrb[0].mxu0
  %1269 = vmatprep.mubr.bf16.mxu0 0
  %1270 = vmatmul.mubr.bf16.gmra.mrb[0].mxu0 %v256
  %v1271 = vpop.f32.mrb[0].mxu0
  %v1272 = vadd.f32 %v971, %v1271
  %v1273 = vpop.f32.mrb[0].mxu0
  %v1274 = vpop.f32.mrb[0].mxu0
  %v1275 = vadd.f32 %v971, %v1274
  %v1276 = vpop.f32.mrb[0].mxu0
  %1277 = vmatprep.mubr.bf16.mxu0 0
  %1278 = vmatmul.mubr.bf16.gmra.mrb[0].mxu0 %v257
  %v1279 = vpop.f32.mrb[0].mxu0
  %v1280 = vadd.f32 %v971, %v1279
  %v1281 = vpop.f32.mrb[0].mxu0
  %v1282 = vpop.f32.mrb[0].mxu0
  %v1283 = vadd.f32 %v971, %v1282
  %v1284 = vpop.f32.mrb[0].mxu0
  %1285 = vmatprep.mubr.bf16.mxu0 0
  %1286 = vmatmul.mubr.bf16.gmra.mrb[0].mxu0 %v258
  %v1287 = vpop.f32.mrb[0].mxu0
  %v1288 = vadd.f32 %v971, %v1287
  %v1289 = vpop.f32.mrb[0].mxu0
  %v1290 = vpop.f32.mrb[0].mxu0
  %v1291 = vadd.f32 %v971, %v1290
  %v1292 = vpop.f32.mrb[0].mxu0
  %1293 = vmatprep.mubr.bf16.mxu0 0
  %1294 = vmatmul.mubr.bf16.gmra.mrb[0].mxu0 %v259
  %v1295 = vpop.f32.mrb[0].mxu0
  %v1296 = vadd.f32 %v971, %v1295
  %v1297 = vpop.f32.mrb[0].mxu0
  %v1298 = vpop.f32.mrb[0].mxu0
  %v1299 = vadd.f32 %v971, %v1298
  %v1300 = vpop.f32.mrb[0].mxu0
  %1301 = vmatprep.mubr.bf16.mxu0 0
  %1302 = vmatmul.mubr.bf16.gmra.mrb[0].mxu0 %v260
  %v1303 = vpop.f32.mrb[0].mxu0
  %v1304 = vadd.f32 %v971, %v1303
  %v1305 = vpop.f32.mrb[0].mxu0
  %v1306 = vpop.f32.mrb[0].mxu0
  %v1307 = vadd.f32 %v971, %v1306
  %v1308 = vpop.f32.mrb[0].mxu0
  %1309 = vdwg.mxu0
  %v1310 = vpack.c.bf16 %v1059, %v1056
  %v1311 = vpack.c.bf16 %v1067, %v1064
  %v1312 = vpack.c.bf16 %v1075, %v1072
  %v1313 = vpack.c.bf16 %v1083, %v1080
  %v1314 = vpack.c.bf16 %v1091, %v1088
  %v1315 = vpack.c.bf16 %v1099, %v1096
  %v1316 = vpack.c.bf16 %v1107, %v1104
  %v1317 = vpack.c.bf16 %v1115, %v1112
  %v1318 = vpack.c.bf16 %v1123, %v1120
  %v1319 = vpack.c.bf16 %v1131, %v1128
  %v1320 = vpack.c.bf16 %v1139, %v1136
  %v1321 = vpack.c.bf16 %v1147, %v1144
  %v1322 = vpack.c.bf16 %v1155, %v1152
  %v1323 = vpack.c.bf16 %v1163, %v1160
  %v1324 = vpack.c.bf16 %v1171, %v1168
  %v1325 = vpack.c.bf16 %v1179, %v1176
  %v1326 = vpack.c.bf16 %v1187, %v1184
  %v1327 = vpack.c.bf16 %v1195, %v1192
  %v1328 = vpack.c.bf16 %v1203, %v1200
  %v1329 = vpack.c.bf16 %v1211, %v1208
  %v1330 = vpack.c.bf16 %v1219, %v1216
  %v1331 = vpack.c.bf16 %v1227, %v1224
  %v1332 = vpack.c.bf16 %v1235, %v1232
  %v1333 = vpack.c.bf16 %v1243, %v1240
  %v1334 = vpack.c.bf16 %v1251, %v1248
  %v1335 = vpack.c.bf16 %v1259, %v1256
  %v1336 = vpack.c.bf16 %v1267, %v1264
  %v1337 = vpack.c.bf16 %v1275, %v1272
  %v1338 = vpack.c.bf16 %v1283, %v1280
  %v1339 = vpack.c.bf16 %v1291, %v1288
  %v1340 = vpack.c.bf16 %v1299, %v1296
  %v1341 = vpack.c.bf16 %v1307, %v1304
  %v1374 = vunpack.c.l.b16 %v1310
  %v1375 = vunpack.c.h.b16 %v1310
  %v1376 = vunpack.c.l.b16 %v1311
  %v1377 = vunpack.c.h.b16 %v1311
  %v1378 = vunpack.c.l.b16 %v1312
  %v1379 = vunpack.c.h.b16 %v1312
  %v1380 = vunpack.c.l.b16 %v1313
  %v1381 = vunpack.c.h.b16 %v1313
  %v1382 = vunpack.c.l.b16 %v1314
  %v1383 = vunpack.c.h.b16 %v1314
  %v1384 = vunpack.c.l.b16 %v1315
  %v1385 = vunpack.c.h.b16 %v1315
  %v1386 = vunpack.c.l.b16 %v1316
  %v1387 = vunpack.c.h.b16 %v1316
  %v1388 = vunpack.c.l.b16 %v1317
  %v1389 = vunpack.c.h.b16 %v1317
  %v1390 = vunpack.c.l.b16 %v1318
  %v1391 = vunpack.c.h.b16 %v1318
  %v1392 = vunpack.c.l.b16 %v1319
  %v1393 = vunpack.c.h.b16 %v1319
  %v1394 = vunpack.c.l.b16 %v1320
  %v1395 = vunpack.c.h.b16 %v1320
  %v1396 = vunpack.c.l.b16 %v1321
  %v1397 = vunpack.c.h.b16 %v1321
  %v1398 = vunpack.c.l.b16 %v1322
  %v1399 = vunpack.c.h.b16 %v1322
  %v1400 = vunpack.c.l.b16 %v1323
  %v1401 = vunpack.c.h.b16 %v1323
  %v1402 = vunpack.c.l.b16 %v1324
  %v1403 = vunpack.c.h.b16 %v1324
  %v1404 = vunpack.c.l.b16 %v1325
  %v1405 = vunpack.c.h.b16 %v1325
  %v1406 = vunpack.c.l.b16 %v1326
  %v1407 = vunpack.c.h.b16 %v1326
  %v1408 = vunpack.c.l.b16 %v1327
  %v1409 = vunpack.c.h.b16 %v1327
  %v1410 = vunpack.c.l.b16 %v1328
  %v1411 = vunpack.c.h.b16 %v1328
  %v1412 = vunpack.c.l.b16 %v1329
  %v1413 = vunpack.c.h.b16 %v1329
  %v1414 = vunpack.c.l.b16 %v1330
  %v1415 = vunpack.c.h.b16 %v1330
  %v1416 = vunpack.c.l.b16 %v1331
  %v1417 = vunpack.c.h.b16 %v1331
  %v1418 = vunpack.c.l.b16 %v1332
  %v1419 = vunpack.c.h.b16 %v1332
  %v1420 = vunpack.c.l.b16 %v1333
  %v1421 = vunpack.c.h.b16 %v1333
  %v1422 = vunpack.c.l.b16 %v1334
  %v1423 = vunpack.c.h.b16 %v1334
  %v1424 = vunpack.c.l.b16 %v1335
  %v1425 = vunpack.c.h.b16 %v1335
  %v1426 = vunpack.c.l.b16 %v1336
  %v1427 = vunpack.c.h.b16 %v1336
  %v1428 = vunpack.c.l.b16 %v1337
  %v1429 = vunpack.c.h.b16 %v1337
  %v1430 = vunpack.c.l.b16 %v1338
  %v1431 = vunpack.c.h.b16 %v1338
  %v1432 = vunpack.c.l.b16 %v1339
  %v1433 = vunpack.c.h.b16 %v1339
  %v1434 = vunpack.c.l.b16 %v1340
  %v1435 = vunpack.c.h.b16 %v1340
  %v1436 = vunpack.c.l.b16 %v1341
  %v1437 = vunpack.c.h.b16 %v1341
  %v1438 = vpack.c.b16 %v1374, %v1374
  %v1439 = vpack.c.b16 %v1375, %v1375
  %v1440 = vpack.c.b16 %v1376, %v1376
  %v1441 = vpack.c.b16 %v1377, %v1377
  %v1442 = vpack.c.b16 %v1378, %v1378
  %v1443 = vpack.c.b16 %v1379, %v1379
  %v1444 = vpack.c.b16 %v1380, %v1380
  %v1445 = vpack.c.b16 %v1381, %v1381
  %v1446 = vpack.c.b16 %v1382, %v1382
  %v1447 = vpack.c.b16 %v1383, %v1383
  %v1448 = vpack.c.b16 %v1384, %v1384
  %v1449 = vpack.c.b16 %v1385, %v1385
  %v1450 = vpack.c.b16 %v1386, %v1386
  %v1451 = vpack.c.b16 %v1387, %v1387
  %v1452 = vpack.c.b16 %v1388, %v1388
  %v1453 = vpack.c.b16 %v1389, %v1389
  %v1454 = vpack.c.b16 %v1390, %v1390
  %v1455 = vpack.c.b16 %v1391, %v1391
  %v1456 = vpack.c.b16 %v1392, %v1392
  %v1457 = vpack.c.b16 %v1393, %v1393
  %v1458 = vpack.c.b16 %v1394, %v1394
  %v1459 = vpack.c.b16 %v1395, %v1395
  %v1460 = vpack.c.b16 %v1396, %v1396
  %v1461 = vpack.c.b16 %v1397, %v1397
  %v1462 = vpack.c.b16 %v1398, %v1398
  %v1463 = vpack.c.b16 %v1399, %v1399
  %v1464 = vpack.c.b16 %v1400, %v1400
  %v1465 = vpack.c.b16 %v1401, %v1401
  %v1466 = vpack.c.b16 %v1402, %v1402
  %v1467 = vpack.c.b16 %v1403, %v1403
  %v1468 = vpack.c.b16 %v1404, %v1404
  %v1469 = vpack.c.b16 %v1405, %v1405
  %v1470 = vpack.c.b16 %v1406, %v1406
  %v1471 = vpack.c.b16 %v1407, %v1407
  %v1472 = vpack.c.b16 %v1408, %v1408
  %v1473 = vpack.c.b16 %v1409, %v1409
  %v1474 = vpack.c.b16 %v1410, %v1410
  %v1475 = vpack.c.b16 %v1411, %v1411
  %v1476 = vpack.c.b16 %v1412, %v1412
  %v1477 = vpack.c.b16 %v1413, %v1413
  %v1478 = vpack.c.b16 %v1414, %v1414
  %v1479 = vpack.c.b16 %v1415, %v1415
  %v1480 = vpack.c.b16 %v1416, %v1416
  %v1481 = vpack.c.b16 %v1417, %v1417
  %v1482 = vpack.c.b16 %v1418, %v1418
  %v1483 = vpack.c.b16 %v1419, %v1419
  %v1484 = vpack.c.b16 %v1420, %v1420
  %v1485 = vpack.c.b16 %v1421, %v1421
  %v1486 = vpack.c.b16 %v1422, %v1422
  %v1487 = vpack.c.b16 %v1423, %v1423
  %v1488 = vpack.c.b16 %v1424, %v1424
  %v1489 = vpack.c.b16 %v1425, %v1425
  %v1490 = vpack.c.b16 %v1426, %v1426
  %v1491 = vpack.c.b16 %v1427, %v1427
  %v1492 = vpack.c.b16 %v1428, %v1428
  %v1493 = vpack.c.b16 %v1429, %v1429
  %v1494 = vpack.c.b16 %v1430, %v1430
  %v1495 = vpack.c.b16 %v1431, %v1431
  %v1496 = vpack.c.b16 %v1432, %v1432
  %v1497 = vpack.c.b16 %v1433, %v1433
  %v1498 = vpack.c.b16 %v1434, %v1434
  %v1499 = vpack.c.b16 %v1435, %v1435
  %v1500 = vpack.c.b16 %v1436, %v1436
  %v1501 = vpack.c.b16 %v1437, %v1437
  %1566 = vst [vmem:[%s5] sm:$0xf] %v1438
  %1567 = vst [vmem:[%s5 + $0x4] sm:$0xf] %v1439
  %1568 = vst [vmem:[%s5 + $0x8] sm:$0xf] %v1440
  %1569 = vst [vmem:[%s5 + $0xc] sm:$0xf] %v1441
  %1570 = vst [vmem:[%s5 + $0x10] sm:$0xf] %v1442
  %1571 = vst [vmem:[%s5 + $0x14] sm:$0xf] %v1443
  %1572 = vst [vmem:[%s5 + $0x18] sm:$0xf] %v1444
  %1573 = vst [vmem:[%s5 + $0x1c] sm:$0xf] %v1445
  %1574 = vst [vmem:[%s5 + $0x20] sm:$0xf] %v1446
  %1575 = vst [vmem:[%s5 + $0x24] sm:$0xf] %v1447
  %1576 = vst [vmem:[%s5 + $0x28] sm:$0xf] %v1448
  %1577 = vst [vmem:[%s5 + $0x2c] sm:$0xf] %v1449
  %1578 = vst [vmem:[%s5 + $0x30] sm:$0xf] %v1450
  %1579 = vst [vmem:[%s5 + $0x34] sm:$0xf] %v1451
  %1580 = vst [vmem:[%s5 + $0x38] sm:$0xf] %v1452
  %1581 = vst [vmem:[%s5 + $0x3c] sm:$0xf] %v1453
  %1582 = vst [vmem:[%s5 + $0x40] sm:$0xf] %v1454
  %1583 = vst [vmem:[%s5 + $0x44] sm:$0xf] %v1455
  %1584 = vst [vmem:[%s5 + $0x48] sm:$0xf] %v1456
  %1585 = vst [vmem:[%s5 + $0x4c] sm:$0xf] %v1457
  %1586 = vst [vmem:[%s5 + $0x50] sm:$0xf] %v1458
  %1587 = vst [vmem:[%s5 + $0x54] sm:$0xf] %v1459
  %1588 = vst [vmem:[%s5 + $0x58] sm:$0xf] %v1460
  %1589 = vst [vmem:[%s5 + $0x5c] sm:$0xf] %v1461
  %1590 = vst [vmem:[%s5 + $0x60] sm:$0xf] %v1462
  %1591 = vst [vmem:[%s5 + $0x64] sm:$0xf] %v1463
  %1592 = vst [vmem:[%s5 + $0x68] sm:$0xf] %v1464
  %1593 = vst [vmem:[%s5 + $0x6c] sm:$0xf] %v1465
  %1594 = vst [vmem:[%s5 + $0x70] sm:$0xf] %v1466
  %1595 = vst [vmem:[%s5 + $0x74] sm:$0xf] %v1467
  %1596 = vst [vmem:[%s5 + $0x78] sm:$0xf] %v1468
  %1597 = vst [vmem:[%s5 + $0x7c] sm:$0xf] %v1469
  %1598 = vst [vmem:[%s5 + $0x80] sm:$0xf] %v1470
  %1599 = vst [vmem:[%s5 + $0x84] sm:$0xf] %v1471
  %1600 = vst [vmem:[%s5 + $0x88] sm:$0xf] %v1472
  %1601 = vst [vmem:[%s5 + $0x8c] sm:$0xf] %v1473
  %1602 = vst [vmem:[%s5 + $0x90] sm:$0xf] %v1474
  %1603 = vst [vmem:[%s5 + $0x94] sm:$0xf] %v1475
  %1604 = vst [vmem:[%s5 + $0x98] sm:$0xf] %v1476
  %1605 = vst [vmem:[%s5 + $0x9c] sm:$0xf] %v1477
  %1606 = vst [vmem:[%s5 + $0xa0] sm:$0xf] %v1478
  %1607 = vst [vmem:[%s5 + $0xa4] sm:$0xf] %v1479
  %1608 = vst [vmem:[%s5 + $0xa8] sm:$0xf] %v1480
  %1609 = vst [vmem:[%s5 + $0xac] sm:$0xf] %v1481
  %1610 = vst [vmem:[%s5 + $0xb0] sm:$0xf] %v1482
  %1611 = vst [vmem:[%s5 + $0xb4] sm:$0xf] %v1483
  %1612 = vst [vmem:[%s5 + $0xb8] sm:$0xf] %v1484
  %1613 = vst [vmem:[%s5 + $0xbc] sm:$0xf] %v1485
  %1614 = vst [vmem:[%s5 + $0xc0] sm:$0xf] %v1486
  %1615 = vst [vmem:[%s5 + $0xc4] sm:$0xf] %v1487
  %1616 = vst [vmem:[%s5 + $0xc8] sm:$0xf] %v1488
  %1617 = vst [vmem:[%s5 + $0xcc] sm:$0xf] %v1489
  %1618 = vst [vmem:[%s5 + $0xd0] sm:$0xf] %v1490
  %1619 = vst [vmem:[%s5 + $0xd4] sm:$0xf] %v1491
  %1620 = vst [vmem:[%s5 + $0xd8] sm:$0xf] %v1492
  %1621 = vst [vmem:[%s5 + $0xdc] sm:$0xf] %v1493
  %1622 = vst [vmem:[%s5 + $0xe0] sm:$0xf] %v1494
  %1623 = vst [vmem:[%s5 + $0xe4] sm:$0xf] %v1495
  %1624 = vst [vmem:[%s5 + $0xe8] sm:$0xf] %v1496
  %1625 = vst [vmem:[%s5 + $0xec] sm:$0xf] %v1497
  %1626 = vst [vmem:[%s5 + $0xf0] sm:$0xf] %v1498
  %1627 = vst [vmem:[%s5 + $0xf4] sm:$0xf] %v1499
  %1628 = vst [vmem:[%s5 + $0xf8] sm:$0xf] %v1500
  %1629 = vst [vmem:[%s5 + $0xfc] sm:$0xf] %v1501
  %v1630 = vadd.f32 %v376, %v379
  %v1631 = vadd.f32 %v1630, %v384
  %v1632 = vadd.f32 %v1631, %v387
  %v1633 = vadd.f32 %v1632, %v392
  %v1634 = vadd.f32 %v1633, %v395
  %v1635 = vadd.f32 %v1634, %v400
  %v1636 = vadd.f32 %v1635, %v403
  %v1637 = vadd.f32 %v1636, %v408
  %v1638 = vadd.f32 %v1637, %v411
  %v1639 = vadd.f32 %v1638, %v416
  %v1640 = vadd.f32 %v1639, %v419
  %v1641 = vadd.f32 %v1640, %v424
  %v1642 = vadd.f32 %v1641, %v427
  %v1643 = vadd.f32 %v1642, %v432
  %v1644 = vadd.f32 %v1643, %v435
  %v1645 = vadd.f32 %v1644, %v440
  %v1646 = vadd.f32 %v1645, %v443
  %v1647 = vadd.f32 %v1646, %v448
  %v1648 = vadd.f32 %v1647, %v451
  %v1649 = vadd.f32 %v1648, %v456
  %v1650 = vadd.f32 %v1649, %v459
  %v1651 = vadd.f32 %v1650, %v464
  %v1652 = vadd.f32 %v1651, %v467
  %v1653 = vadd.f32 %v1652, %v472
  %v1654 = vadd.f32 %v1653, %v475
  %v1655 = vadd.f32 %v1654, %v480
  %v1656 = vadd.f32 %v1655, %v483
  %v1657 = vadd.f32 %v1656, %v488
  %v1658 = vadd.f32 %v1657, %v491
  %v1659 = vadd.f32 %v1658, %v496
  %v1660 = vadd.f32 %v1659, %v499
  %v1661 = vadd.f32 %v1660, %v504
  %v1662 = vadd.f32 %v1661, %v507
  %v1663 = vadd.f32 %v1662, %v512
  %v1664 = vadd.f32 %v1663, %v515
  %v1665 = vadd.f32 %v1664, %v520
  %v1666 = vadd.f32 %v1665, %v523
  %v1667 = vadd.f32 %v1666, %v528
  %v1668 = vadd.f32 %v1667, %v531
  %v1669 = vadd.f32 %v1668, %v536
  %v1670 = vadd.f32 %v1669, %v539
  %v1671 = vadd.f32 %v1670, %v544
  %v1672 = vadd.f32 %v1671, %v547
  %v1673 = vadd.f32 %v1672, %v552
  %v1674 = vadd.f32 %v1673, %v555
  %v1675 = vadd.f32 %v1674, %v560
  %v1676 = vadd.f32 %v1675, %v563
  %v1677 = vadd.f32 %v1676, %v568
  %v1678 = vadd.f32 %v1677, %v571
  %v1679 = vadd.f32 %v1678, %v576
  %v1680 = vadd.f32 %v1679, %v579
  %v1681 = vadd.f32 %v1680, %v584
  %v1682 = vadd.f32 %v1681, %v587
  %v1683 = vadd.f32 %v1682, %v592
  %v1684 = vadd.f32 %v1683, %v595
  %v1685 = vadd.f32 %v1684, %v600
  %v1686 = vadd.f32 %v1685, %v603
  %v1687 = vadd.f32 %v1686, %v608
  %v1688 = vadd.f32 %v1687, %v611
  %v1689 = vadd.f32 %v1688, %v616
  %v1690 = vadd.f32 %v1689, %v619
  %v1691 = vadd.f32 %v1690, %v624
  %v1692 = vadd.f32 %v1691, %v627
  %v1693 = vrot.slane %v1692, 4
  %v1694 = vadd.f32 %v1692, %v1693
  %v1695 = vrot.slane %v1694, 2
  %v1696 = vadd.f32 %v1694, %v1695
  %v1697 = vrot.slane %v1696, 1
  %v1698 = vadd.f32 %v1696, %v1697
  %v1699 = vmul.f32 %v376, %v376
  %v1700 = vmul.f32 %v379, %v379
  %v1701 = vmul.f32 %v384, %v384
  %v1702 = vmul.f32 %v387, %v387
  %v1703 = vmul.f32 %v392, %v392
  %v1704 = vmul.f32 %v395, %v395
  %v1705 = vmul.f32 %v400, %v400
  %v1706 = vmul.f32 %v403, %v403
  %v1707 = vmul.f32 %v408, %v408
  %v1708 = vmul.f32 %v411, %v411
  %v1709 = vmul.f32 %v416, %v416
  %v1710 = vmul.f32 %v419, %v419
  %v1711 = vmul.f32 %v424, %v424
  %v1712 = vmul.f32 %v427, %v427
  %v1713 = vmul.f32 %v432, %v432
  %v1714 = vmul.f32 %v435, %v435
  %v1715 = vmul.f32 %v440, %v440
  %v1716 = vmul.f32 %v443, %v443
  %v1717 = vmul.f32 %v448, %v448
  %v1718 = vmul.f32 %v451, %v451
  %v1719 = vmul.f32 %v456, %v456
  %v1720 = vmul.f32 %v459, %v459
  %v1721 = vmul.f32 %v464, %v464
  %v1722 = vmul.f32 %v467, %v467
  %v1723 = vmul.f32 %v472, %v472
  %v1724 = vmul.f32 %v475, %v475
  %v1725 = vmul.f32 %v480, %v480
  %v1726 = vmul.f32 %v483, %v483
  %v1727 = vmul.f32 %v488, %v488
  %v1728 = vmul.f32 %v491, %v491
  %v1729 = vmul.f32 %v496, %v496
  %v1730 = vmul.f32 %v499, %v499
  %v1731 = vmul.f32 %v504, %v504
  %v1732 = vmul.f32 %v507, %v507
  %v1733 = vmul.f32 %v512, %v512
  %v1734 = vmul.f32 %v515, %v515
  %v1735 = vmul.f32 %v520, %v520
  %v1736 = vmul.f32 %v523, %v523
  %v1737 = vmul.f32 %v528, %v528
  %v1738 = vmul.f32 %v531, %v531
  %v1739 = vmul.f32 %v536, %v536
  %v1740 = vmul.f32 %v539, %v539
  %v1741 = vmul.f32 %v544, %v544
  %v1742 = vmul.f32 %v547, %v547
  %v1743 = vmul.f32 %v552, %v552
  %v1744 = vmul.f32 %v555, %v555
  %v1745 = vmul.f32 %v560, %v560
  %v1746 = vmul.f32 %v563, %v563
  %v1747 = vmul.f32 %v568, %v568
  %v1748 = vmul.f32 %v571, %v571
  %v1749 = vmul.f32 %v576, %v576
  %v1750 = vmul.f32 %v579, %v579
  %v1751 = vmul.f32 %v584, %v584
  %v1752 = vmul.f32 %v587, %v587
  %v1753 = vmul.f32 %v592, %v592
  %v1754 = vmul.f32 %v595, %v595
  %v1755 = vmul.f32 %v600, %v600
  %v1756 = vmul.f32 %v603, %v603
  %v1757 = vmul.f32 %v608, %v608
  %v1758 = vmul.f32 %v611, %v611
  %v1759 = vmul.f32 %v616, %v616
  %v1760 = vmul.f32 %v619, %v619
  %v1761 = vmul.f32 %v624, %v624
  %v1762 = vmul.f32 %v627, %v627
  %v1763 = vadd.f32 %v1699, %v1700
  %v1764 = vadd.f32 %v1763, %v1701
  %v1765 = vadd.f32 %v1764, %v1702
  %v1766 = vadd.f32 %v1765, %v1703
  %v1767 = vadd.f32 %v1766, %v1704
  %v1768 = vadd.f32 %v1767, %v1705
  %v1769 = vadd.f32 %v1768, %v1706
  %v1770 = vadd.f32 %v1769, %v1707
  %v1771 = vadd.f32 %v1770, %v1708
  %v1772 = vadd.f32 %v1771, %v1709
  %v1773 = vadd.f32 %v1772, %v1710
  %v1774 = vadd.f32 %v1773, %v1711
  %v1775 = vadd.f32 %v1774, %v1712
  %v1776 = vadd.f32 %v1775, %v1713
  %v1777 = vadd.f32 %v1776, %v1714
  %v1778 = vadd.f32 %v1777, %v1715
  %v1779 = vadd.f32 %v1778, %v1716
  %v1780 = vadd.f32 %v1779, %v1717
  %v1781 = vadd.f32 %v1780, %v1718
  %v1782 = vadd.f32 %v1781, %v1719
  %v1783 = vadd.f32 %v1782, %v1720
  %v1784 = vadd.f32 %v1783, %v1721
  %v1785 = vadd.f32 %v1784, %v1722
  %v1786 = vadd.f32 %v1785, %v1723
  %v1787 = vadd.f32 %v1786, %v1724
  %v1788 = vadd.f32 %v1787, %v1725
  %v1789 = vadd.f32 %v1788, %v1726
  %v1790 = vadd.f32 %v1789, %v1727
  %v1791 = vadd.f32 %v1790, %v1728
  %v1792 = vadd.f32 %v1791, %v1729
  %v1793 = vadd.f32 %v1792, %v1730
  %v1794 = vadd.f32 %v1793, %v1731
  %v1795 = vadd.f32 %v1794, %v1732
  %v1796 = vadd.f32 %v1795, %v1733
  %v1797 = vadd.f32 %v1796, %v1734
  %v1798 = vadd.f32 %v1797, %v1735
  %v1799 = vadd.f32 %v1798, %v1736
  %v1800 = vadd.f32 %v1799, %v1737
  %v1801 = vadd.f32 %v1800, %v1738
  %v1802 = vadd.f32 %v1801, %v1739
  %v1803 = vadd.f32 %v1802, %v1740
  %v1804 = vadd.f32 %v1803, %v1741
  %v1805 = vadd.f32 %v1804, %v1742
  %v1806 = vadd.f32 %v1805, %v1743
  %v1807 = vadd.f32 %v1806, %v1744
  %v1808 = vadd.f32 %v1807, %v1745
  %v1809 = vadd.f32 %v1808, %v1746
  %v1810 = vadd.f32 %v1809, %v1747
  %v1811 = vadd.f32 %v1810, %v1748
  %v1812 = vadd.f32 %v1811, %v1749
  %v1813 = vadd.f32 %v1812, %v1750
  %v1814 = vadd.f32 %v1813, %v1751
  %v1815 = vadd.f32 %v1814, %v1752
  %v1816 = vadd.f32 %v1815, %v1753
  %v1817 = vadd.f32 %v1816, %v1754
  %v1818 = vadd.f32 %v1817, %v1755
  %v1819 = vadd.f32 %v1818, %v1756
  %v1820 = vadd.f32 %v1819, %v1757
  %v1821 = vadd.f32 %v1820, %v1758
  %v1822 = vadd.f32 %v1821, %v1759
  %v1823 = vadd.f32 %v1822, %v1760
  %v1824 = vadd.f32 %v1823, %v1761
  %v1825 = vadd.f32 %v1824, %v1762
  %v1826 = vrot.slane %v1825, 4
  %v1827 = vadd.f32 %v1825, %v1826
  %v1828 = vrot.slane %v1827, 2
  %v1829 = vadd.f32 %v1827, %v1828
  %v1830 = vrot.slane %v1829, 1
  %v1831 = vadd.f32 %v1829, %v1830
  %vm1832 = vcmask 1040384
  %v1833 = vsel %vm1832, %v1698, %v1831
  %1834 = vst [vmem:[%s6] sm:$0x3] %v1833
  // Predicated region
  $region18: #{resblock_bottle.4} parent=0 // pred_check
    _
  $region19: #{resblock_bottle.4} parent=0 // pred_check_branch
    %1836 = sbr.rel (0) target = $region21
  $region20: #{resblock_bottle.4} parent=0 // pred_region
    _
  $region21: #{resblock_bottle.4} parent=0 // pred_fallthru
    _
  // Predicated region
  $region22: #{resblock_bottle.4} parent=0 // pred_check
    _
  $region23: #{resblock_bottle.4} parent=0 // pred_check_branch
    %1838 = sbr.rel (0) target = $region25
  $region24: #{resblock_bottle.4} parent=0 // pred_region
    _
  $region25: #{resblock_bottle.4} parent=0 // pred_fallthru
    _
  // Predicated region
  $region26: #{resblock_bottle.4} parent=0 // pred_check
    _
  $region27: #{resblock_bottle.4} parent=0 // pred_check_branch
    %1840 = sbr.rel (0) target = $region29
  $region28: #{resblock_bottle.4} parent=0 // pred_region
    _
  $region29: #{resblock_bottle.4} parent=0 // pred_fallthru
    _
  // Predicated region
  $region30: #{resblock_bottle.4} parent=0 // pred_check
    _
  $region31: #{resblock_bottle.4} parent=0 // pred_check_branch
    %1842 = sbr.rel (0) target = $region33
  $region32: #{resblock_bottle.4} parent=0 // pred_region
    _
  $region33: #{resblock_bottle.4} parent=0 // pred_fallthru
    _
  // Predicated region
  $region34: #{resblock_bottle.4} parent=0 // pred_check
    _
  $region35: #{resblock_bottle.4} parent=0 // pred_check_branch
    %1844 = sbr.rel (0) target = $region37
  $region36: #{resblock_bottle.4} parent=0 // pred_region
    _
  $region37: #{resblock_bottle.4} parent=0 // pred_fallthru
    _
  // Predicated region
  $region38: #{resblock_bottle.4} parent=0 // pred_check
    _
  $region39: #{resblock_bottle.4} parent=0 // pred_check_branch
    %1846 = sbr.rel (0) target = $region41
  $region40: #{resblock_bottle.4} parent=0 // pred_region
    _
  $region41: #{resblock_bottle.4} parent=0 // pred_fallthru
    _

// kernel: resblock_bottle.5
$region0: #{resblock_bottle.5}
  #allocation0 [shape = 'u32[]', space=smem, size = 0x4, offset = 0x4, fixed_abs, tag = 'smem constant byte address 0x4 - core index']
  #allocation1 [shape = 'u32[144,128]{1,0:T(1,128)}', space=vmem, size = 0x12000, scoped, tag = 'internal scratch']
  #allocation2 [shape = 'bf16[18,16,384]{2,1,0:T(16,128)(2,1)}', space=vmem, size = 0x36000, scoped, tag = 'scratch operand']
  %s0 = inlined_call_operand.vmem [shape: bf16[2,256,128], index: 0, kind: input, shape index: {}]
  %s1 = inlined_call_operand.vmem [shape: bf16[3,384,128], index: 1, kind: input, shape index: {}]
  %s2 = inlined_call_operand.vmem [shape: f32[1,128], index: 2, kind: input, shape index: {}]
  %s3 = inlined_call_operand.vmem [shape: f32[1,128], index: 3, kind: input, shape index: {}]
  %s4 = inlined_call_operand.vmem [shape: bf16[2,256,128], index: 4, kind: output, shape index: {0}]
  %s5 = inlined_call_operand.vmem [shape: f32[2,2,128], index: 5, kind: output, shape index: {1}]
  %6 = xla_tuple %s4, %s5
  %s7 = sld [smem:[#allocation0]]
  $region57: #{resblock_bottle.5} parent=0
    _
  %s9 = ssub.s32 1, %s7
  %s10 = scalar_select 0, %s9, %s7
  loop: start=0, step=1, limit=4
  $region2: #{resblock_bottle.5} parent=0 // loop_pre_header
    _
  $region3: #{resblock_bottle.5} parent=0 // loop_header
    %s12 = sphi 0, %s16
    %p13 = scmp.ge.s32.totalorder %s12, 4
    %s22 = sphi 0, %s24
    %s25 = sphi 0, %s22
    %s26 = sphi 0, %s25
    %s42 = sphi 0, %s26
    %s46 = sphi 0, %s46
    %s48 = sphi 0, %s46
    %s49 = sphi 0, %s48
    %s63 = sphi 0, %s49
    %s67 = sphi 0, %s67
    %s69 = sphi 0, %s67
    %s70 = sphi 0, %s69
    %s84 = sphi 0, %s70
    %s88 = sphi 0, %s88
    %s90 = sphi 0, %s88
    %s91 = sphi 0, %s90
    %s105 = sphi 0, %s91
    %s111 = sphi 0, %s113
    %s114 = sphi 0, %s111
    %s115 = sphi 0, %s114
    %s131 = sphi 0, %s115
    %s137 = sphi 0, %s139
    %s140 = sphi 0, %s137
    %s141 = sphi 0, %s140
    %s157 = sphi 0, %s141
  $region4: #{resblock_bottle.5} parent=0 // loop_header_branch
    %15 = sbr.rel (%p13) target = $region8
  $region5: #{resblock_bottle.5} parent=0 // loop_body
    %s17 = ssub.s32 %s12, 1
    %s18 = ssub.s32 %s12, 2
    %s19 = sadd.s32 %s12, 1
    %s20 = ssub.s32 %s12, %s19
    %p21 = scmp.eq.s32.totalorder %s20, 0
    %s23 = sadd.s32 %s22, 1
    %s24 = scalar_select %p21, %s22, %s23
    %p27 = pneg %p21
    %p28 = scmp.eq.s32.totalorder %s12, 1
    %p29 = por %p27, %p28
    %p30 = scmp.ne.s32.totalorder %s22, %s25
    %p31 = scmp.eq.s32.totalorder %s12, 0
    %p32 = por %p30, %p31
    %p33 = scmp.ne.s32.totalorder %s22, %s25
    %p34 = scmp.eq.s32.totalorder %s17, 1
    %p35 = por %p33, %p34
    %p36 = scmp.ne.s32.totalorder %s25, %s26
    %p37 = scmp.eq.s32.totalorder %s17, 0
    %p38 = por %p36, %p37
    %p39 = scmp.ne.s32.totalorder %s25, %s26
    %p40 = scmp.eq.s32.totalorder %s18, 1
    %p41 = por %p39, %p40
    %p43 = scmp.ne.s32.totalorder %s26, %s42
    %p44 = scmp.eq.s32.totalorder %s18, 0
    %p45 = por %p43, %p44
    %s47 = sadd.s32 %s46, 1
    %p50 = scmp.eq.s32.totalorder %s12, 1
    %p51 = scmp.ne.s32.totalorder %s46, %s48
    %p52 = scmp.eq.s32.totalorder %s12, 0
    %p53 = por %p51, %p52
    %p54 = scmp.ne.s32.totalorder %s46, %s48
    %p55 = scmp.eq.s32.totalorder %s17, 1
    %p56 = por %p54, %p55
    %p57 = scmp.ne.s32.totalorder %s48, %s49
    %p58 = scmp.eq.s32.totalorder %s17, 0
    %p59 = por %p57, %p58
    %p60 = scmp.ne.s32.totalorder %s48, %s49
    %p61 = scmp.eq.s32.totalorder %s18, 1
    %p62 = por %p60, %p61
    %p64 = scmp.ne.s32.totalorder %s49, %s63
    %p65 = scmp.eq.s32.totalorder %s18, 0
    %p66 = por %p64, %p65
    %s68 = sadd.s32 %s67, 1
    %p71 = scmp.eq.s32.totalorder %s12, 1
    %p72 = scmp.ne.s32.totalorder %s67, %s69
    %p73 = scmp.eq.s32.totalorder %s12, 0
    %p74 = por %p72, %p73
    %p75 = scmp.ne.s32.totalorder %s67, %s69
    %p76 = scmp.eq.s32.totalorder %s17, 1
    %p77 = por %p75, %p76
    %p78 = scmp.ne.s32.totalorder %s69, %s70
    %p79 = scmp.eq.s32.totalorder %s17, 0
    %p80 = por %p78, %p79
    %p81 = scmp.ne.s32.totalorder %s69, %s70
    %p82 = scmp.eq.s32.totalorder %s18, 1
    %p83 = por %p81, %p82
    %p85 = scmp.ne.s32.totalorder %s70, %s84
    %p86 = scmp.eq.s32.totalorder %s18, 0
    %p87 = por %p85, %p86
    %s89 = sadd.s32 %s88, 1
    %p92 = scmp.eq.s32.totalorder %s12, 1
    %p93 = scmp.ne.s32.totalorder %s88, %s90
    %p94 = scmp.eq.s32.totalorder %s12, 0
    %p95 = por %p93, %p94
    %p96 = scmp.ne.s32.totalorder %s88, %s90
    %p97 = scmp.eq.s32.totalorder %s17, 1
    %p98 = por %p96, %p97
    %p99 = scmp.ne.s32.totalorder %s90, %s91
    %p100 = scmp.eq.s32.totalorder %s17, 0
    %p101 = por %p99, %p100
    %p102 = scmp.ne.s32.totalorder %s90, %s91
    %p103 = scmp.eq.s32.totalorder %s18, 1
    %p104 = por %p102, %p103
    %p106 = scmp.ne.s32.totalorder %s91, %s105
    %p107 = scmp.eq.s32.totalorder %s18, 0
    %p108 = por %p106, %p107
    %s109 = ssub.s32 %s12, %s19
    %p110 = scmp.eq.s32.totalorder %s109, 0
    %s112 = sadd.s32 %s111, 1
    %s113 = scalar_select %p110, %s111, %s112
    %p116 = pneg %p110
    %p117 = scmp.eq.s32.totalorder %s12, 1
    %p118 = por %p116, %p117
    %p119 = scmp.ne.s32.totalorder %s111, %s114
    %p120 = scmp.eq.s32.totalorder %s12, 0
    %p121 = por %p119, %p120
    %p122 = scmp.ne.s32.totalorder %s111, %s114
    %p123 = scmp.eq.s32.totalorder %s17, 1
    %p124 = por %p122, %p123
    %p125 = scmp.ne.s32.totalorder %s114, %s115
    %p126 = scmp.eq.s32.totalorder %s17, 0
    %p127 = por %p125, %p126
    %p128 = scmp.ne.s32.totalorder %s114, %s115
    %p129 = scmp.eq.s32.totalorder %s18, 1
    %p130 = por %p128, %p129
    %p132 = scmp.ne.s32.totalorder %s115, %s131
    %p133 = scmp.eq.s32.totalorder %s18, 0
    %p134 = por %p132, %p133
    %s135 = ssub.s32 %s12, %s19
    %p136 = scmp.eq.s32.totalorder %s135, 0
    %s138 = sadd.s32 %s137, 1
    %s139 = scalar_select %p136, %s137, %s138
    %p142 = pneg %p136
    %p143 = scmp.eq.s32.totalorder %s12, 1
    %p144 = por %p142, %p143
    %p145 = scmp.ne.s32.totalorder %s137, %s140
    %p146 = scmp.eq.s32.totalorder %s12, 0
    %p147 = por %p145, %p146
    %p148 = scmp.ne.s32.totalorder %s137, %s140
    %p149 = scmp.eq.s32.totalorder %s17, 1
    %p150 = por %p148, %p149
    %p151 = scmp.ne.s32.totalorder %s140, %s141
    %p152 = scmp.eq.s32.totalorder %s17, 0
    %p153 = por %p151, %p152
    %p154 = scmp.ne.s32.totalorder %s140, %s141
    %p155 = scmp.eq.s32.totalorder %s18, 1
    %p156 = por %p154, %p155
    %p158 = scmp.ne.s32.totalorder %s141, %s157
    %p159 = scmp.eq.s32.totalorder %s18, 0
    %p160 = por %p158, %p159
    %p161 = scmp.le.s32.totalorder 1, %s12
    %p162 = scmp.lt.s32.totalorder %s12, 3
    %p163 = pnand %p161, %p162
    %p164 = pneg %p163
    // Predicated region
    $region9: #{resblock_bottle.5} parent=5 // pred_check
      _
    $region10: #{resblock_bottle.5} parent=5 // pred_check_branch
      %166 = sbr.rel (%p163) target = $region12
    $region11: #{resblock_bottle.5} parent=5 // pred_region
      %s167 = ssub.s32 %s12, 1
      // Predicated region
      $region13: #{resblock_bottle.5} parent=11 // pred_check
        %p168 = pneg %p59
      $region14: #{resblock_bottle.5} parent=11 // pred_check_branch
        %170 = sbr.rel (%p168) target = $region16
      $region15: #{resblock_bottle.5} parent=11 // pred_region
        _
      $region16: #{resblock_bottle.5} parent=11 // pred_fallthru
        _
      // Predicated region
      $region17: #{resblock_bottle.5} parent=11 // pred_check
        %p171 = pneg %p80
      $region18: #{resblock_bottle.5} parent=11 // pred_check_branch
        %173 = sbr.rel (%p171) target = $region20
      $region19: #{resblock_bottle.5} parent=11 // pred_region
        _
      $region20: #{resblock_bottle.5} parent=11 // pred_fallthru
        _
      // Predicated region
      $region21: #{resblock_bottle.5} parent=11 // pred_check
        %p174 = pneg %p101
      $region22: #{resblock_bottle.5} parent=11 // pred_check_branch
        %176 = sbr.rel (%p174) target = $region24
      $region23: #{resblock_bottle.5} parent=11 // pred_region
        _
      $region24: #{resblock_bottle.5} parent=11 // pred_fallthru
        _
    $region12: #{resblock_bottle.5} parent=5 // pred_fallthru
      _
    %p177 = scmp.lt.s32.totalorder %s12, 2
    // Predicated region
    $region25: #{resblock_bottle.5} parent=5 // pred_check
      %p178 = pneg %p177
    $region26: #{resblock_bottle.5} parent=5 // pred_check_branch
      %180 = sbr.rel (%p178) target = $region28
    $region27: #{resblock_bottle.5} parent=5 // pred_region
      // Predicated region
      $region29: #{resblock_bottle.5} parent=27 // pred_check
        %p181 = pneg %p32
      $region30: #{resblock_bottle.5} parent=27 // pred_check_branch
        %183 = sbr.rel (%p181) target = $region32
      $region31: #{resblock_bottle.5} parent=27 // pred_region
        %p184 = scmp.lt.s32.totalorder %s12, 1
        %s185 = scalar_select %p184, %s12, 1
        %s186 = smul.addr %s185, 32
        %s187 = smul.addr %s186, 4
        %s188 = scalar_lea.vmem %s0, %s187
      $region32: #{resblock_bottle.5} parent=27 // pred_fallthru
        _
    $region28: #{resblock_bottle.5} parent=5 // pred_fallthru
      _
    %p189 = scmp.le.s32.totalorder 1, %s12
    %p190 = scmp.lt.s32.totalorder %s12, 3
    %p191 = pnand %p189, %p190
    %p192 = pneg %p191
    // Predicated region
    $region33: #{resblock_bottle.5} parent=5 // pred_check
      _
    $region34: #{resblock_bottle.5} parent=5 // pred_check_branch
      %194 = sbr.rel (%p191) target = $region36
    $region35: #{resblock_bottle.5} parent=5 // pred_region
      %s195 = ssub.s32 %s12, 1
      %p196 = scmp.lt.s32.totalorder %s17, 1
      %s197 = scalar_select %p196, %s17, 1
      %s198 = smul.addr %s197, 32
      %s199 = smul.addr %s198, 4
      %s200 = scalar_lea.vmem %s0, %s199
      %p201 = pneg %p38
      %p202 = pneg %p35
      %p203 = pneg %p59
      %p204 = pneg %p56
      %p205 = pneg %p80
      %p206 = pneg %p77
      %p207 = pneg %p101
      %p208 = pneg %p98
      %p209 = pneg %p127
      %p210 = pneg %p124
      %p211 = scmp.lt.s32.totalorder %s17, 1
      %s212 = scalar_select %p211, %s17, 1
      %s213 = smul.addr %s212, 32
      %s214 = smul.addr %s213, 4
      %s215 = scalar_lea.vmem %s4, %s214
      %p216 = pneg %p153
      %p217 = pneg %p150
      %p218 = scmp.lt.s32.totalorder %s17, 1
      %s219 = scalar_select %p218, %s17, 1
      %s220 = smul.addr %s219, 2
      %s221 = scalar_lea.vmem %s5, %s220
      %p222 = scmp.lt.s32.totalorder %s17, 1
      %s223 = scalar_select %p222, %s17, 1
      %s224 = smul.addr %s223, 32
      %s225 = smul.addr %s224, 4
      %s226 = scalar_lea.vmem %s0, %s225
      %p227 = scmp.lt.s32.totalorder %s17, 1
      %s228 = scalar_select %p227, %s17, 1
      %s229 = smul.addr %s228, 32
      %s230 = smul.addr %s229, 4
      %s231 = scalar_lea.vmem %s4, %s230
      %p232 = scmp.lt.s32.totalorder %s17, 1
      %s233 = scalar_select %p232, %s17, 1
      %s234 = smul.addr %s233, 2
      %s235 = scalar_lea.vmem %s5, %s234
      %v237 = vld [vmem:[%s226] sm:$0xf]
      %v238 = vld [vmem:[%s226 + $0x4] sm:$0xf]
      %v239 = vld [vmem:[%s226 + $0x8] sm:$0xf]
      %v240 = vld [vmem:[%s226 + $0xc] sm:$0xf]
      %v241 = vld [vmem:[%s226 + $0x10] sm:$0xf]
      %v242 = vld [vmem:[%s226 + $0x14] sm:$0xf]
      %v243 = vld [vmem:[%s226 + $0x18] sm:$0xf]
      %v244 = vld [vmem:[%s226 + $0x1c] sm:$0xf]
      %v245 = vld [vmem:[%s226 + $0x20] sm:$0xf]
      %v246 = vld [vmem:[%s226 + $0x24] sm:$0xf]
      %v247 = vld [vmem:[%s226 + $0x28] sm:$0xf]
      %v248 = vld [vmem:[%s226 + $0x2c] sm:$0xf]
      %v249 = vld [vmem:[%s226 + $0x30] sm:$0xf]
      %v250 = vld [vmem:[%s226 + $0x34] sm:$0xf]
      %v251 = vld [vmem:[%s226 + $0x38] sm:$0xf]
      %v252 = vld [vmem:[%s226 + $0x3c] sm:$0xf]
      %v253 = vld [vmem:[%s226 + $0x40] sm:$0xf]
      %v254 = vld [vmem:[%s226 + $0x44] sm:$0xf]
      %v255 = vld [vmem:[%s226 + $0x48] sm:$0xf]
      %v256 = vld [vmem:[%s226 + $0x4c] sm:$0xf]
      %v257 = vld [vmem:[%s226 + $0x50] sm:$0xf]
      %v258 = vld [vmem:[%s226 + $0x54] sm:$0xf]
      %v259 = vld [vmem:[%s226 + $0x58] sm:$0xf]
      %v260 = vld [vmem:[%s226 + $0x5c] sm:$0xf]
      %v261 = vld [vmem:[%s226 + $0x60] sm:$0xf]
      %v262 = vld [vmem:[%s226 + $0x64] sm:$0xf]
      %v263 = vld [vmem:[%s226 + $0x68] sm:$0xf]
      %v264 = vld [vmem:[%s226 + $0x6c] sm:$0xf]
      %v265 = vld [vmem:[%s226 + $0x70] sm:$0xf]
      %v266 = vld [vmem:[%s226 + $0x74] sm:$0xf]
      %v267 = vld [vmem:[%s226 + $0x78] sm:$0xf]
      %v268 = vld [vmem:[%s226 + $0x7c] sm:$0xf]
      %v269 = vunpack.c.l.bf16 %v237
      %v270 = vunpack.c.l.bf16 %v238
      %v271 = vunpack.c.l.bf16 %v239
      %v272 = vunpack.c.l.bf16 %v240
      %v273 = vunpack.c.l.bf16 %v241
      %v274 = vunpack.c.l.bf16 %v242
      %v275 = vunpack.c.l.bf16 %v243
      %v276 = vunpack.c.l.bf16 %v244
      %v277 = vunpack.c.l.bf16 %v245
      %v278 = vunpack.c.l.bf16 %v246
      %v279 = vunpack.c.l.bf16 %v247
      %v280 = vunpack.c.l.bf16 %v248
      %v281 = vunpack.c.l.bf16 %v249
      %v282 = vunpack.c.l.bf16 %v250
      %v283 = vunpack.c.l.bf16 %v251
      %v284 = vunpack.c.l.bf16 %v252
      %v285 = vunpack.c.l.bf16 %v253
      %v286 = vunpack.c.l.bf16 %v254
      %v287 = vunpack.c.l.bf16 %v255
      %v288 = vunpack.c.l.bf16 %v256
      %v289 = vunpack.c.l.bf16 %v257
      %v290 = vunpack.c.l.bf16 %v258
      %v291 = vunpack.c.l.bf16 %v259
      %v292 = vunpack.c.l.bf16 %v260
      %v293 = vunpack.c.l.bf16 %v261
      %v294 = vunpack.c.l.bf16 %v262
      %v295 = vunpack.c.l.bf16 %v263
      %v296 = vunpack.c.l.bf16 %v264
      %v297 = vunpack.c.l.bf16 %v265
      %v298 = vunpack.c.l.bf16 %v266
      %v299 = vunpack.c.l.bf16 %v267
      %v300 = vunpack.c.l.bf16 %v268
      %v301 = vld [vmem:[%s2] sm:$0x1]
      %v303 = vlaneseq
      %v304 = vshrl.u32 %v303, 7
      %v305 = vsub.s32 0, %v304
      %v306 = vrot.slane %v301, %v305
      %v308 = vmul.f32 %v269, %v306
      %v309 = vmul.f32 %v270, %v306
      %v310 = vmul.f32 %v271, %v306
      %v311 = vmul.f32 %v272, %v306
      %v312 = vmul.f32 %v273, %v306
      %v313 = vmul.f32 %v274, %v306
      %v314 = vmul.f32 %v275, %v306
      %v315 = vmul.f32 %v276, %v306
      %v316 = vmul.f32 %v277, %v306
      %v317 = vmul.f32 %v278, %v306
      %v318 = vmul.f32 %v279, %v306
      %v319 = vmul.f32 %v280, %v306
      %v320 = vmul.f32 %v281, %v306
      %v321 = vmul.f32 %v282, %v306
      %v322 = vmul.f32 %v283, %v306
      %v323 = vmul.f32 %v284, %v306
      %v324 = vmul.f32 %v285, %v306
      %v325 = vmul.f32 %v286, %v306
      %v326 = vmul.f32 %v287, %v306
      %v327 = vmul.f32 %v288, %v306
      %v328 = vmul.f32 %v289, %v306
      %v329 = vmul.f32 %v290, %v306
      %v330 = vmul.f32 %v291, %v306
      %v331 = vmul.f32 %v292, %v306
      %v332 = vmul.f32 %v293, %v306
      %v333 = vmul.f32 %v294, %v306
      %v334 = vmul.f32 %v295, %v306
      %v335 = vmul.f32 %v296, %v306
      %v336 = vmul.f32 %v297, %v306
      %v337 = vmul.f32 %v298, %v306
      %v338 = vmul.f32 %v299, %v306
      %v339 = vmul.f32 %v300, %v306
      %v340 = vld [vmem:[%s3] sm:$0x1]
      %v342 = vlaneseq
      %v343 = vshrl.u32 %v342, 7
      %v344 = vsub.s32 0, %v343
      %v345 = vrot.slane %v340, %v344
      %v347 = vadd.f32 %v308, %v345
      %v348 = vadd.f32 %v309, %v345
      %v349 = vadd.f32 %v310, %v345
      %v350 = vadd.f32 %v311, %v345
      %v351 = vadd.f32 %v312, %v345
      %v352 = vadd.f32 %v313, %v345
      %v353 = vadd.f32 %v314, %v345
      %v354 = vadd.f32 %v315, %v345
      %v355 = vadd.f32 %v316, %v345
      %v356 = vadd.f32 %v317, %v345
      %v357 = vadd.f32 %v318, %v345
      %v358 = vadd.f32 %v319, %v345
      %v359 = vadd.f32 %v320, %v345
      %v360 = vadd.f32 %v321, %v345
      %v361 = vadd.f32 %v322, %v345
      %v362 = vadd.f32 %v323, %v345
      %v363 = vadd.f32 %v324, %v345
      %v364 = vadd.f32 %v325, %v345
      %v365 = vadd.f32 %v326, %v345
      %v366 = vadd.f32 %v327, %v345
      %v367 = vadd.f32 %v328, %v345
      %v368 = vadd.f32 %v329, %v345
      %v369 = vadd.f32 %v330, %v345
      %v370 = vadd.f32 %v331, %v345
      %v371 = vadd.f32 %v332, %v345
      %v372 = vadd.f32 %v333, %v345
      %v373 = vadd.f32 %v334, %v345
      %v374 = vadd.f32 %v335, %v345
      %v375 = vadd.f32 %v336, %v345
      %v376 = vadd.f32 %v337, %v345
      %v377 = vadd.f32 %v338, %v345
      %v378 = vadd.f32 %v339, %v345
      %v379 = vmax.f32 %v347, 0.0
      %v380 = vmax.f32 %v348, 0.0
      %v381 = vmax.f32 %v349, 0.0
      %v382 = vmax.f32 %v350, 0.0
      %v383 = vmax.f32 %v351, 0.0
      %v384 = vmax.f32 %v352, 0.0
      %v385 = vmax.f32 %v353, 0.0
      %v386 = vmax.f32 %v354, 0.0
      %v387 = vmax.f32 %v355, 0.0
      %v388 = vmax.f32 %v356, 0.0
      %v389 = vmax.f32 %v357, 0.0
      %v390 = vmax.f32 %v358, 0.0
      %v391 = vmax.f32 %v359, 0.0
      %v392 = vmax.f32 %v360, 0.0
      %v393 = vmax.f32 %v361, 0.0
      %v394 = vmax.f32 %v362, 0.0
      %v395 = vmax.f32 %v363, 0.0
      %v396 = vmax.f32 %v364, 0.0
      %v397 = vmax.f32 %v365, 0.0
      %v398 = vmax.f32 %v366, 0.0
      %v399 = vmax.f32 %v367, 0.0
      %v400 = vmax.f32 %v368, 0.0
      %v401 = vmax.f32 %v369, 0.0
      %v402 = vmax.f32 %v370, 0.0
      %v403 = vmax.f32 %v371, 0.0
      %v404 = vmax.f32 %v372, 0.0
      %v405 = vmax.f32 %v373, 0.0
      %v406 = vmax.f32 %v374, 0.0
      %v407 = vmax.f32 %v375, 0.0
      %v408 = vmax.f32 %v376, 0.0
      %v409 = vmax.f32 %v377, 0.0
      %v410 = vmax.f32 %v378, 0.0
      %v411 = vpack.c.bf16 %v380, %v379
      %v412 = vpack.c.bf16 %v382, %v381
      %v413 = vpack.c.bf16 %v384, %v383
      %v414 = vpack.c.bf16 %v386, %v385
      %v415 = vpack.c.bf16 %v388, %v387
      %v416 = vpack.c.bf16 %v390, %v389
      %v417 = vpack.c.bf16 %v392, %v391
      %v418 = vpack.c.bf16 %v394, %v393
      %v419 = vpack.c.bf16 %v396, %v395
      %v420 = vpack.c.bf16 %v398, %v397
      %v421 = vpack.c.bf16 %v400, %v399
      %v422 = vpack.c.bf16 %v402, %v401
      %v423 = vpack.c.bf16 %v404, %v403
      %v424 = vpack.c.bf16 %v406, %v405
      %v425 = vpack.c.bf16 %v408, %v407
      %v426 = vpack.c.bf16 %v410, %v409
      %v428 = vshrl.u32 %v411, 16
      %v430 = vrot.slane %v428, 7
      %v431 = vshll.u32 %v411, 16
      %v433 = vor.u32 %v430, %v431
      %v435 = vshrl.u32 %v412, 16
      %v437 = vrot.slane %v435, 7
      %v438 = vshll.u32 %v412, 16
      %v440 = vor.u32 %v437, %v438
      %v442 = vshrl.u32 %v413, 16
      %v444 = vrot.slane %v442, 7
      %v445 = vshll.u32 %v413, 16
      %v447 = vor.u32 %v444, %v445
      %v449 = vshrl.u32 %v414, 16
      %v451 = vrot.slane %v449, 7
      %v452 = vshll.u32 %v414, 16
      %v454 = vor.u32 %v451, %v452
      %v456 = vshrl.u32 %v415, 16
      %v458 = vrot.slane %v456, 7
      %v459 = vshll.u32 %v415, 16
      %v461 = vor.u32 %v458, %v459
      %v463 = vshrl.u32 %v416, 16
      %v465 = vrot.slane %v463, 7
      %v466 = vshll.u32 %v416, 16
      %v468 = vor.u32 %v465, %v466
      %v470 = vshrl.u32 %v417, 16
      %v472 = vrot.slane %v470, 7
      %v473 = vshll.u32 %v417, 16
      %v475 = vor.u32 %v472, %v473
      %v477 = vshrl.u32 %v418, 16
      %v479 = vrot.slane %v477, 7
      %v480 = vshll.u32 %v418, 16
      %v482 = vor.u32 %v479, %v480
      %v484 = vshrl.u32 %v419, 16
      %v486 = vrot.slane %v484, 7
      %v487 = vshll.u32 %v419, 16
      %v489 = vor.u32 %v486, %v487
      %v491 = vshrl.u32 %v420, 16
      %v493 = vrot.slane %v491, 7
      %v494 = vshll.u32 %v420, 16
      %v496 = vor.u32 %v493, %v494
      %v498 = vshrl.u32 %v421, 16
      %v500 = vrot.slane %v498, 7
      %v501 = vshll.u32 %v421, 16
      %v503 = vor.u32 %v500, %v501
      %v505 = vshrl.u32 %v422, 16
      %v507 = vrot.slane %v505, 7
      %v508 = vshll.u32 %v422, 16
      %v510 = vor.u32 %v507, %v508
      %v512 = vshrl.u32 %v423, 16
      %v514 = vrot.slane %v512, 7
      %v515 = vshll.u32 %v423, 16
      %v517 = vor.u32 %v514, %v515
      %v519 = vshrl.u32 %v424, 16
      %v521 = vrot.slane %v519, 7
      %v522 = vshll.u32 %v424, 16
      %v524 = vor.u32 %v521, %v522
      %v526 = vshrl.u32 %v425, 16
      %v528 = vrot.slane %v526, 7
      %v529 = vshll.u32 %v425, 16
      %v531 = vor.u32 %v528, %v529
      %v533 = vshrl.u32 %v426, 16
      %v535 = vrot.slane %v533, 7
      %v536 = vshll.u32 %v426, 16
      %v538 = vor.u32 %v535, %v536
      %vm555 = vcmask 1040384
      %vm556 = vsmask.f32 256
      %vm557 = vmand %vm555, %vm556
      %v558 = vsel %vm557, 0, %v433
      %v559 = vsel %vm557, 0, %v440
      %v560 = vsel %vm557, 0, %v447
      %v561 = vsel %vm557, 0, %v454
      %v562 = vsel %vm557, 0, %v461
      %v563 = vsel %vm557, 0, %v468
      %v564 = vsel %vm557, 0, %v475
      %v565 = vsel %vm557, 0, %v482
      %v566 = vsel %vm557, 0, %v489
      %v567 = vsel %vm557, 0, %v496
      %v568 = vsel %vm557, 0, %v503
      %v569 = vsel %vm557, 0, %v510
      %v570 = vsel %vm557, 0, %v517
      %v571 = vsel %vm557, 0, %v524
      %v572 = vsel %vm557, 0, %v531
      %v573 = vsel %vm557, 0, %v538
      %s574 = scalar_lea.vmem [#allocation2], 24
      %575 = vst [vmem:[%s574] sm:$0xff] %v558
      %576 = vst [vmem:[%s574 + $0x18] sm:$0xff] %v559
      %577 = vst [vmem:[%s574 + $0x30] sm:$0xff] %v560
      %578 = vst [vmem:[%s574 + $0x48] sm:$0xff] %v561
      %579 = vst [vmem:[%s574 + $0x60] sm:$0xff] %v562
      %580 = vst [vmem:[%s574 + $0x78] sm:$0xff] %v563
      %581 = vst [vmem:[%s574 + $0x90] sm:$0xff] %v564
      %582 = vst [vmem:[%s574 + $0xa8] sm:$0xff] %v565
      %583 = vst [vmem:[%s574 + $0xc0] sm:$0xff] %v566
      %584 = vst [vmem:[%s574 + $0xd8] sm:$0xff] %v567
      %585 = vst [vmem:[%s574 + $0xf0] sm:$0xff] %v568
      %586 = vst [vmem:[%s574 + $0x108] sm:$0xff] %v569
      %587 = vst [vmem:[%s574 + $0x120] sm:$0xff] %v570
      %588 = vst [vmem:[%s574 + $0x138] sm:$0xff] %v571
      %589 = vst [vmem:[%s574 + $0x150] sm:$0xff] %v572
      %590 = vst [vmem:[%s574 + $0x168] sm:$0xff] %v573
      %591 = vst [vmem:[%s574 + $0x8] sm:$0xff] %v411
      %592 = vst [vmem:[%s574 + $0x20] sm:$0xff] %v412
      %593 = vst [vmem:[%s574 + $0x38] sm:$0xff] %v413
      %594 = vst [vmem:[%s574 + $0x50] sm:$0xff] %v414
      %595 = vst [vmem:[%s574 + $0x68] sm:$0xff] %v415
      %596 = vst [vmem:[%s574 + $0x80] sm:$0xff] %v416
      %597 = vst [vmem:[%s574 + $0x98] sm:$0xff] %v417
      %598 = vst [vmem:[%s574 + $0xb0] sm:$0xff] %v418
      %599 = vst [vmem:[%s574 + $0xc8] sm:$0xff] %v419
      %600 = vst [vmem:[%s574 + $0xe0] sm:$0xff] %v420
      %601 = vst [vmem:[%s574 + $0xf8] sm:$0xff] %v421
      %602 = vst [vmem:[%s574 + $0x110] sm:$0xff] %v422
      %603 = vst [vmem:[%s574 + $0x128] sm:$0xff] %v423
      %604 = vst [vmem:[%s574 + $0x140] sm:$0xff] %v424
      %605 = vst [vmem:[%s574 + $0x158] sm:$0xff] %v425
      %606 = vst [vmem:[%s574 + $0x170] sm:$0xff] %v426
      %v607 = vrot.slane %v431, 1
      %v608 = vor.u32 %v428, %v607
      %v609 = vrot.slane %v438, 1
      %v610 = vor.u32 %v435, %v609
      %v611 = vrot.slane %v445, 1
      %v612 = vor.u32 %v442, %v611
      %v613 = vrot.slane %v452, 1
      %v614 = vor.u32 %v449, %v613
      %v615 = vrot.slane %v459, 1
      %v616 = vor.u32 %v456, %v615
      %v617 = vrot.slane %v466, 1
      %v618 = vor.u32 %v463, %v617
      %v619 = vrot.slane %v473, 1
      %v620 = vor.u32 %v470, %v619
      %v621 = vrot.slane %v480, 1
      %v622 = vor.u32 %v477, %v621
      %v623 = vrot.slane %v487, 1
      %v624 = vor.u32 %v484, %v623
      %v625 = vrot.slane %v494, 1
      %v626 = vor.u32 %v491, %v625
      %v627 = vrot.slane %v501, 1
      %v628 = vor.u32 %v498, %v627
      %v629 = vrot.slane %v508, 1
      %v630 = vor.u32 %v505, %v629
      %v631 = vrot.slane %v515, 1
      %v632 = vor.u32 %v512, %v631
      %v633 = vrot.slane %v522, 1
      %v634 = vor.u32 %v519, %v633
      %v635 = vrot.slane %v529, 1
      %v636 = vor.u32 %v526, %v635
      %v637 = vrot.slane %v536, 1
      %v638 = vor.u32 %v533, %v637
      %vm655 = vcmask 1047552
      %vm656 = vsmask.f32 7424
      %vm657 = vmand %vm655, %vm656
      %v658 = vsel %vm657, %v608, 0
      %v659 = vsel %vm657, %v610, 0
      %v660 = vsel %vm657, %v612, 0
      %v661 = vsel %vm657, %v614, 0
      %v662 = vsel %vm657, %v616, 0
      %v663 = vsel %vm657, %v618, 0
      %v664 = vsel %vm657, %v620, 0
      %v665 = vsel %vm657, %v622, 0
      %v666 = vsel %vm657, %v624, 0
      %v667 = vsel %vm657, %v626, 0
      %v668 = vsel %vm657, %v628, 0
      %v669 = vsel %vm657, %v630, 0
      %v670 = vsel %vm657, %v632, 0
      %v671 = vsel %vm657, %v634, 0
      %v672 = vsel %vm657, %v636, 0
      %v673 = vsel %vm657, %v638, 0
      %674 = vst [vmem:[%s574 + $0x10] sm:$0xff] %v658
      %675 = vst [vmem:[%s574 + $0x28] sm:$0xff] %v659
      %676 = vst [vmem:[%s574 + $0x40] sm:$0xff] %v660
      %677 = vst [vmem:[%s574 + $0x58] sm:$0xff] %v661
      %678 = vst [vmem:[%s574 + $0x70] sm:$0xff] %v662
      %679 = vst [vmem:[%s574 + $0x88] sm:$0xff] %v663
      %680 = vst [vmem:[%s574 + $0xa0] sm:$0xff] %v664
      %681 = vst [vmem:[%s574 + $0xb8] sm:$0xff] %v665
      %682 = vst [vmem:[%s574 + $0xd0] sm:$0xff] %v666
      %683 = vst [vmem:[%s574 + $0xe8] sm:$0xff] %v667
      %684 = vst [vmem:[%s574 + $0x100] sm:$0xff] %v668
      %685 = vst [vmem:[%s574 + $0x118] sm:$0xff] %v669
      %686 = vst [vmem:[%s574 + $0x130] sm:$0xff] %v670
      %687 = vst [vmem:[%s574 + $0x148] sm:$0xff] %v671
      %688 = vst [vmem:[%s574 + $0x160] sm:$0xff] %v672
      %689 = vst [vmem:[%s574 + $0x178] sm:$0xff] %v673
      %690 = vst [vmem:[#allocation2] sm:$0xff] 0
      %691 = vst [vmem:[#allocation2 + $0x8] sm:$0xff] 0
      %692 = vst [vmem:[#allocation2 + $0x10] sm:$0xff] 0
      %s693 = scalar_lea.vmem [#allocation2], 408
      %694 = vst [vmem:[%s693] sm:$0xff] 0
      %695 = vst [vmem:[%s693 + $0x8] sm:$0xff] 0
      %696 = vst [vmem:[%s693 + $0x10] sm:$0xff] 0
      %v697 = vld [vmem:[#allocation2] sm:$0xff]
      %v698 = vld [vmem:[#allocation2 + $0x8] sm:$0xff]
      %v699 = vld [vmem:[#allocation2 + $0x10] sm:$0xff]
      %v700 = vld [vmem:[#allocation2 + $0x18] sm:$0xff]
      %v701 = vld [vmem:[#allocation2 + $0x20] sm:$0xff]
      %v702 = vld [vmem:[#allocation2 + $0x28] sm:$0xff]
      %v703 = vld [vmem:[#allocation2 + $0x30] sm:$0xff]
      %v704 = vld [vmem:[#allocation2 + $0x38] sm:$0xff]
      %v705 = vld [vmem:[#allocation2 + $0x40] sm:$0xff]
      %v706 = vld [vmem:[#allocation2 + $0x48] sm:$0xff]
      %v707 = vld [vmem:[#allocation2 + $0x50] sm:$0xff]
      %v708 = vld [vmem:[#allocation2 + $0x58] sm:$0xff]
      %v709 = vld [vmem:[#allocation2 + $0x60] sm:$0xff]
      %v710 = vld [vmem:[#allocation2 + $0x68] sm:$0xff]
      %v711 = vld [vmem:[#allocation2 + $0x70] sm:$0xff]
      %v712 = vld [vmem:[#allocation2 + $0x78] sm:$0xff]
      %v713 = vld [vmem:[#allocation2 + $0x80] sm:$0xff]
      %v714 = vld [vmem:[#allocation2 + $0x88] sm:$0xff]
      %v715 = vld [vmem:[#allocation2 + $0x90] sm:$0xff]
      %v716 = vld [vmem:[#allocation2 + $0x98] sm:$0xff]
      %v717 = vld [vmem:[#allocation2 + $0xa0] sm:$0xff]
      %v718 = vld [vmem:[#allocation2 + $0xa8] sm:$0xff]
      %v719 = vld [vmem:[#allocation2 + $0xb0] sm:$0xff]
      %v720 = vld [vmem:[#allocation2 + $0xb8] sm:$0xff]
      %v721 = vld [vmem:[#allocation2 + $0xc0] sm:$0xff]
      %v722 = vld [vmem:[#allocation2 + $0xc8] sm:$0xff]
      %v723 = vld [vmem:[#allocation2 + $0xd0] sm:$0xff]
      %v724 = vld [vmem:[#allocation2 + $0xd8] sm:$0xff]
      %v725 = vld [vmem:[#allocation2 + $0xe0] sm:$0xff]
      %v726 = vld [vmem:[#allocation2 + $0xe8] sm:$0xff]
      %v727 = vld [vmem:[#allocation2 + $0xf0] sm:$0xff]
      %v728 = vld [vmem:[#allocation2 + $0xf8] sm:$0xff]
      %v729 = vld [vmem:[#allocation2 + $0x100] sm:$0xff]
      %v730 = vld [vmem:[#allocation2 + $0x108] sm:$0xff]
      %v731 = vld [vmem:[#allocation2 + $0x110] sm:$0xff]
      %v732 = vld [vmem:[#allocation2 + $0x118] sm:$0xff]
      %v733 = vld [vmem:[#allocation2 + $0x120] sm:$0xff]
      %v734 = vld [vmem:[#allocation2 + $0x128] sm:$0xff]
      %v735 = vld [vmem:[#allocation2 + $0x130] sm:$0xff]
      %v736 = vld [vmem:[#allocation2 + $0x138] sm:$0xff]
      %v737 = vld [vmem:[#allocation2 + $0x140] sm:$0xff]
      %v738 = vld [vmem:[#allocation2 + $0x148] sm:$0xff]
      %v739 = vld [vmem:[#allocation2 + $0x150] sm:$0xff]
      %v740 = vld [vmem:[#allocation2 + $0x158] sm:$0xff]
      %v741 = vld [vmem:[#allocation2 + $0x160] sm:$0xff]
      %v742 = vld [vmem:[#allocation2 + $0x168] sm:$0xff]
      %v743 = vld [vmem:[#allocation2 + $0x170] sm:$0xff]
      %v744 = vld [vmem:[#allocation2 + $0x178] sm:$0xff]
      %v745 = vld [vmem:[%s1] sm:$0xf]
      %v746 = vld [vmem:[%s1 + $0x4] sm:$0xf]
      %v747 = vld [vmem:[%s1 + $0x8] sm:$0xf]
      %v748 = vld [vmem:[%s1 + $0xc] sm:$0xf]
      %v749 = vld [vmem:[%s1 + $0x10] sm:$0xf]
      %v750 = vld [vmem:[%s1 + $0x14] sm:$0xf]
      %v751 = vld [vmem:[%s1 + $0x18] sm:$0xf]
      %v752 = vld [vmem:[%s1 + $0x1c] sm:$0xf]
      %v753 = vld [vmem:[%s1 + $0x20] sm:$0xf]
      %v754 = vld [vmem:[%s1 + $0x24] sm:$0xf]
      %v755 = vld [vmem:[%s1 + $0x28] sm:$0xf]
      %v756 = vld [vmem:[%s1 + $0x2c] sm:$0xf]
      %v757 = vld [vmem:[%s1 + $0x30] sm:$0xf]
      %v758 = vld [vmem:[%s1 + $0x34] sm:$0xf]
      %v759 = vld [vmem:[%s1 + $0x38] sm:$0xf]
      %v760 = vld [vmem:[%s1 + $0x3c] sm:$0xf]
      %v761 = vld [vmem:[%s1 + $0x40] sm:$0xf]
      %v762 = vld [vmem:[%s1 + $0x44] sm:$0xf]
      %v763 = vld [vmem:[%s1 + $0x48] sm:$0xf]
      %v764 = vld [vmem:[%s1 + $0x4c] sm:$0xf]
      %v765 = vld [vmem:[%s1 + $0x50] sm:$0xf]
      %v766 = vld [vmem:[%s1 + $0x54] sm:$0xf]
      %v767 = vld [vmem:[%s1 + $0x58] sm:$0xf]
      %v768 = vld [vmem:[%s1 + $0x5c] sm:$0xf]
      %v769 = vld [vmem:[%s1 + $0x60] sm:$0xf]
      %v770 = vld [vmem:[%s1 + $0x64] sm:$0xf]
      %v771 = vld [vmem:[%s1 + $0x68] sm:$0xf]
      %v772 = vld [vmem:[%s1 + $0x6c] sm:$0xf]
      %v773 = vld [vmem:[%s1 + $0x70] sm:$0xf]
      %v774 = vld [vmem:[%s1 + $0x74] sm:$0xf]
      %v775 = vld [vmem:[%s1 + $0x78] sm:$0xf]
      %v776 = vld [vmem:[%s1 + $0x7c] sm:$0xf]
      %v777 = vld [vmem:[%s1 + $0x80] sm:$0xf]
      %v778 = vld [vmem:[%s1 + $0x84] sm:$0xf]
      %v779 = vld [vmem:[%s1 + $0x88] sm:$0xf]
      %v780 = vld [vmem:[%s1 + $0x8c] sm:$0xf]
      %v781 = vld [vmem:[%s1 + $0x90] sm:$0xf]
      %v782 = vld [vmem:[%s1 + $0x94] sm:$0xf]
      %v783 = vld [vmem:[%s1 + $0x98] sm:$0xf]
      %v784 = vld [vmem:[%s1 + $0x9c] sm:$0xf]
      %v785 = vld [vmem:[%s1 + $0xa0] sm:$0xf]
      %v786 = vld [vmem:[%s1 + $0xa4] sm:$0xf]
      %v787 = vld [vmem:[%s1 + $0xa8] sm:$0xf]
      %v788 = vld [vmem:[%s1 + $0xac] sm:$0xf]
      %v789 = vld [vmem:[%s1 + $0xb0] sm:$0xf]
      %v790 = vld [vmem:[%s1 + $0xb4] sm:$0xf]
      %v791 = vld [vmem:[%s1 + $0xb8] sm:$0xf]
      %v792 = vld [vmem:[%s1 + $0xbc] sm:$0xf]
      %v793 = vld [vmem:[%s574] sm:$0xff]
      %v794 = vld [vmem:[%s574 + $0x8] sm:$0xff]
      %v795 = vld [vmem:[%s574 + $0x10] sm:$0xff]
      %v796 = vld [vmem:[%s574 + $0x18] sm:$0xff]
      %v797 = vld [vmem:[%s574 + $0x20] sm:$0xff]
      %v798 = vld [vmem:[%s574 + $0x28] sm:$0xff]
      %v799 = vld [vmem:[%s574 + $0x30] sm:$0xff]
      %v800 = vld [vmem:[%s574 + $0x38] sm:$0xff]
      %v801 = vld [vmem:[%s574 + $0x40] sm:$0xff]
      %v802 = vld [vmem:[%s574 + $0x48] sm:$0xff]
      %v803 = vld [vmem:[%s574 + $0x50] sm:$0xff]
      %v804 = vld [vmem:[%s574 + $0x58] sm:$0xff]
      %v805 = vld [vmem:[%s574 + $0x60] sm:$0xff]
      %v806 = vld [vmem:[%s574 + $0x68] sm:$0xff]
      %v807 = vld [vmem:[%s574 + $0x70] sm:$0xff]
      %v808 = vld [vmem:[%s574 + $0x78] sm:$0xff]
      %v809 = vld [vmem:[%s574 + $0x80] sm:$0xff]
      %v810 = vld [vmem:[%s574 + $0x88] sm:$0xff]
      %v811 = vld [vmem:[%s574 + $0x90] sm:$0xff]
      %v812 = vld [vmem:[%s574 + $0x98] sm:$0xff]
      %v813 = vld [vmem:[%s574 + $0xa0] sm:$0xff]
      %v814 = vld [vmem:[%s574 + $0xa8] sm:$0xff]
      %v815 = vld [vmem:[%s574 + $0xb0] sm:$0xff]
      %v816 = vld [vmem:[%s574 + $0xb8] sm:$0xff]
      %v817 = vld [vmem:[%s574 + $0xc0] sm:$0xff]
      %v818 = vld [vmem:[%s574 + $0xc8] sm:$0xff]
      %v819 = vld [vmem:[%s574 + $0xd0] sm:$0xff]
      %v820 = vld [vmem:[%s574 + $0xd8] sm:$0xff]
      %v821 = vld [vmem:[%s574 + $0xe0] sm:$0xff]
      %v822 = vld [vmem:[%s574 + $0xe8] sm:$0xff]
      %v823 = vld [vmem:[%s574 + $0xf0] sm:$0xff]
      %v824 = vld [vmem:[%s574 + $0xf8] sm:$0xff]
      %v825 = vld [vmem:[%s574 + $0x100] sm:$0xff]
      %v826 = vld [vmem:[%s574 + $0x108] sm:$0xff]
      %v827 = vld [vmem:[%s574 + $0x110] sm:$0xff]
      %v828 = vld [vmem:[%s574 + $0x118] sm:$0xff]
      %v829 = vld [vmem:[%s574 + $0x120] sm:$0xff]
      %v830 = vld [vmem:[%s574 + $0x128] sm:$0xff]
      %v831 = vld [vmem:[%s574 + $0x130] sm:$0xff]
      %v832 = vld [vmem:[%s574 + $0x138] sm:$0xff]
      %v833 = vld [vmem:[%s574 + $0x140] sm:$0xff]
      %v834 = vld [vmem:[%s574 + $0x148] sm:$0xff]
      %v835 = vld [vmem:[%s574 + $0x150] sm:$0xff]
      %v836 = vld [vmem:[%s574 + $0x158] sm:$0xff]
      %v837 = vld [vmem:[%s574 + $0x160] sm:$0xff]
      %v838 = vld [vmem:[%s574 + $0x168] sm:$0xff]
      %v839 = vld [vmem:[%s574 + $0x170] sm:$0xff]
      %v840 = vld [vmem:[%s574 + $0x178] sm:$0xff]
      %s841 = scalar_lea.vmem %s1, 192
      %v842 = vld [vmem:[%s841] sm:$0xf]
      %v843 = vld [vmem:[%s841 + $0x4] sm:$0xf]
      %v844 = vld [vmem:[%s841 + $0x8] sm:$0xf]
      %v845 = vld [vmem:[%s841 + $0xc] sm:$0xf]
      %v846 = vld [vmem:[%s841 + $0x10] sm:$0xf]
      %v847 = vld [vmem:[%s841 + $0x14] sm:$0xf]
      %v848 = vld [vmem:[%s841 + $0x18] sm:$0xf]
      %v849 = vld [vmem:[%s841 + $0x1c] sm:$0xf]
      %v850 = vld [vmem:[%s841 + $0x20] sm:$0xf]
      %v851 = vld [vmem:[%s841 + $0x24] sm:$0xf]
      %v852 = vld [vmem:[%s841 + $0x28] sm:$0xf]
      %v853 = vld [vmem:[%s841 + $0x2c] sm:$0xf]
      %v854 = vld [vmem:[%s841 + $0x30] sm:$0xf]
      %v855 = vld [vmem:[%s841 + $0x34] sm:$0xf]
      %v856 = vld [vmem:[%s841 + $0x38] sm:$0xf]
      %v857 = vld [vmem:[%s841 + $0x3c] sm:$0xf]
      %v858 = vld [vmem:[%s841 + $0x40] sm:$0xf]
      %v859 = vld [vmem:[%s841 + $0x44] sm:$0xf]
      %v860 = vld [vmem:[%s841 + $0x48] sm:$0xf]
      %v861 = vld [vmem:[%s841 + $0x4c] sm:$0xf]
      %v862 = vld [vmem:[%s841 + $0x50] sm:$0xf]
      %v863 = vld [vmem:[%s841 + $0x54] sm:$0xf]
      %v864 = vld [vmem:[%s841 + $0x58] sm:$0xf]
      %v865 = vld [vmem:[%s841 + $0x5c] sm:$0xf]
      %v866 = vld [vmem:[%s841 + $0x60] sm:$0xf]
      %v867 = vld [vmem:[%s841 + $0x64] sm:$0xf]
      %v868 = vld [vmem:[%s841 + $0x68] sm:$0xf]
      %v869 = vld [vmem:[%s841 + $0x6c] sm:$0xf]
      %v870 = vld [vmem:[%s841 + $0x70] sm:$0xf]
      %v871 = vld [vmem:[%s841 + $0x74] sm:$0xf]
      %v872 = vld [vmem:[%s841 + $0x78] sm:$0xf]
      %v873 = vld [vmem:[%s841 + $0x7c] sm:$0xf]
      %v874 = vld [vmem:[%s841 + $0x80] sm:$0xf]
      %v875 = vld [vmem:[%s841 + $0x84] sm:$0xf]
      %v876 = vld [vmem:[%s841 + $0x88] sm:$0xf]
      %v877 = vld [vmem:[%s841 + $0x8c] sm:$0xf]
      %v878 = vld [vmem:[%s841 + $0x90] sm:$0xf]
      %v879 = vld [vmem:[%s841 + $0x94] sm:$0xf]
      %v880 = vld [vmem:[%s841 + $0x98] sm:$0xf]
      %v881 = vld [vmem:[%s841 + $0x9c] sm:$0xf]
      %v882 = vld [vmem:[%s841 + $0xa0] sm:$0xf]
      %v883 = vld [vmem:[%s841 + $0xa4] sm:$0xf]
      %v884 = vld [vmem:[%s841 + $0xa8] sm:$0xf]
      %v885 = vld [vmem:[%s841 + $0xac] sm:$0xf]
      %v886 = vld [vmem:[%s841 + $0xb0] sm:$0xf]
      %v887 = vld [vmem:[%s841 + $0xb4] sm:$0xf]
      %v888 = vld [vmem:[%s841 + $0xb8] sm:$0xf]
      %v889 = vld [vmem:[%s841 + $0xbc] sm:$0xf]
      %v938 = vunpack.c.l.b16 %v842
      %v939 = vunpack.c.l.b16 %v843
      %v940 = vunpack.c.l.b16 %v844
      %v941 = vunpack.c.l.b16 %v845
      %v942 = vunpack.c.l.b16 %v846
      %v943 = vunpack.c.l.b16 %v847
      %v944 = vunpack.c.l.b16 %v848
      %v945 = vunpack.c.l.b16 %v849
      %v946 = vunpack.c.l.b16 %v850
      %v947 = vunpack.c.l.b16 %v851
      %v948 = vunpack.c.l.b16 %v852
      %v949 = vunpack.c.l.b16 %v853
      %v950 = vunpack.c.l.b16 %v854
      %v951 = vunpack.c.l.b16 %v855
      %v952 = vunpack.c.l.b16 %v856
      %v953 = vunpack.c.l.b16 %v857
      %v954 = vunpack.c.l.b16 %v858
      %v955 = vunpack.c.l.b16 %v859
      %v956 = vunpack.c.l.b16 %v860
      %v957 = vunpack.c.l.b16 %v861
      %v958 = vunpack.c.l.b16 %v862
      %v959 = vunpack.c.l.b16 %v863
      %v960 = vunpack.c.l.b16 %v864
      %v961 = vunpack.c.l.b16 %v865
      %v962 = vunpack.c.l.b16 %v866
      %v963 = vunpack.c.l.b16 %v867
      %v964 = vunpack.c.l.b16 %v868
      %v965 = vunpack.c.l.b16 %v869
      %v966 = vunpack.c.l.b16 %v870
      %v967 = vunpack.c.l.b16 %v871
      %v968 = vunpack.c.l.b16 %v872
      %v969 = vunpack.c.l.b16 %v873
      %v970 = vunpack.c.l.b16 %v874
      %v971 = vunpack.c.l.b16 %v875
      %v972 = vunpack.c.l.b16 %v876
      %v973 = vunpack.c.l.b16 %v877
      %v974 = vunpack.c.l.b16 %v878
      %v975 = vunpack.c.l.b16 %v879
      %v976 = vunpack.c.l.b16 %v880
      %v977 = vunpack.c.l.b16 %v881
      %v978 = vunpack.c.l.b16 %v882
      %v979 = vunpack.c.l.b16 %v883
      %v980 = vunpack.c.l.b16 %v884
      %v981 = vunpack.c.l.b16 %v885
      %v982 = vunpack.c.l.b16 %v886
      %v983 = vunpack.c.l.b16 %v887
      %v984 = vunpack.c.l.b16 %v888
      %v985 = vunpack.c.l.b16 %v889
      %v986 = vpack.c.b16 %v939, %v938
      %v987 = vpack.c.b16 %v941, %v940
      %v988 = vpack.c.b16 %v943, %v942
      %v989 = vpack.c.b16 %v945, %v944
      %v990 = vpack.c.b16 %v947, %v946
      %v991 = vpack.c.b16 %v949, %v948
      %v992 = vpack.c.b16 %v951, %v950
      %v993 = vpack.c.b16 %v953, %v952
      %v994 = vpack.c.b16 %v955, %v954
      %v995 = vpack.c.b16 %v957, %v956
      %v996 = vpack.c.b16 %v959, %v958
      %v997 = vpack.c.b16 %v961, %v960
      %v998 = vpack.c.b16 %v963, %v962
      %v999 = vpack.c.b16 %v965, %v964
      %v1000 = vpack.c.b16 %v967, %v966
      %v1001 = vpack.c.b16 %v969, %v968
      %v1002 = vpack.c.b16 %v971, %v970
      %v1003 = vpack.c.b16 %v973, %v972
      %v1004 = vpack.c.b16 %v975, %v974
      %v1005 = vpack.c.b16 %v977, %v976
      %v1006 = vpack.c.b16 %v979, %v978
      %v1007 = vpack.c.b16 %v981, %v980
      %v1008 = vpack.c.b16 %v983, %v982
      %v1009 = vpack.c.b16 %v985, %v984
      %1034 = vmatprep.subr.bf16.mxu0 0
      %1035 = vmatpush1.bf16.msra.mxu0 %v986
      %1036 = vmatprep.subr.bf16.mxu0 0
      %1037 = vmatpush1.bf16.msra.mxu0 %v987
      %1038 = vmatprep.subr.bf16.mxu0 0
      %1039 = vmatpush1.bf16.msra.mxu0 %v988
      %1040 = vmatprep.subr.bf16.mxu0 0
      %1041 = vmatpush1.bf16.msra.mxu0 %v989
      %1042 = vmatprep.subr.bf16.mxu0 0
      %1043 = vmatpush1.bf16.msra.mxu0 %v990
      %1044 = vmatprep.subr.bf16.mxu0 0
      %1045 = vmatpush1.bf16.msra.mxu0 %v991
      %1046 = vmatprep.subr.bf16.mxu0 0
      %1047 = vmatpush1.bf16.msra.mxu0 %v992
      %1048 = vmatprep.subr.bf16.mxu0 0
      %1049 = vmatpush1.bf16.msra.mxu0 %v993
      %1050 = vmatprep.subr.bf16.mxu0 0
      %1051 = vmatpush1.bf16.msra.mxu0 %v994
      %1052 = vmatprep.subr.bf16.mxu0 0
      %1053 = vmatpush1.bf16.msra.mxu0 %v995
      %1054 = vmatprep.subr.bf16.mxu0 0
      %1055 = vmatpush1.bf16.msra.mxu0 %v996
      %1056 = vmatprep.subr.bf16.mxu0 0
      %1057 = vmatpush1.bf16.msra.mxu0 %v997
      %1058 = vmatprep.subr.bf16.mxu0 0
      %1059 = vmatpush1.bf16.msra.mxu0 %v998
      %1060 = vmatprep.subr.bf16.mxu0 0
      %1061 = vmatpush1.bf16.msra.mxu0 %v999
      %1062 = vmatprep.subr.bf16.mxu0 0
      %1063 = vmatpush1.bf16.msra.mxu0 %v1000
      %1064 = vmatprep.subr.bf16.mxu0 0
      %1065 = vmatpush1.bf16.msra.mxu0 %v1001
      %1066 = vmatprep.mubr.bf16.mxu0 %v794
      %1067 = vmatmul.mubr.bf16.gmra.mrb[0].mxu0 %v793
      %v1068 = vpop.f32.mrb[0].mxu0
      %v1069 = vadd.f32 0.0, %v1068
      %v1070 = vpop.f32.mrb[0].mxu0
      %v1071 = vpop.f32.mrb[0].mxu0
      %v1072 = vadd.f32 0.0, %v1071
      %v1073 = vpop.f32.mrb[0].mxu0
      %1074 = vmatprep.mubr.bf16.mxu0 %v797
      %1075 = vmatmul.mubr.bf16.gmra.mrb[0].mxu0 %v796
      %v1076 = vpop.f32.mrb[0].mxu0
      %v1077 = vadd.f32 0.0, %v1076
      %v1078 = vpop.f32.mrb[0].mxu0
      %v1079 = vpop.f32.mrb[0].mxu0
      %v1080 = vadd.f32 0.0, %v1079
      %v1081 = vpop.f32.mrb[0].mxu0
      %1082 = vmatprep.mubr.bf16.mxu0 %v800
      %1083 = vmatmul.mubr.bf16.gmra.mrb[0].mxu0 %v799
      %v1084 = vpop.f32.mrb[0].mxu0
      %v1085 = vadd.f32 0.0, %v1084
      %v1086 = vpop.f32.mrb[0].mxu0
      %v1087 = vpop.f32.mrb[0].mxu0
      %v1088 = vadd.f32 0.0, %v1087
      %v1089 = vpop.f32.mrb[0].mxu0
      %1090 = vmatprep.mubr.bf16.mxu0 %v803
      %1091 = vmatmul.mubr.bf16.gmra.mrb[0].mxu0 %v802
      %v1092 = vpop.f32.mrb[0].mxu0
      %v1093 = vadd.f32 0.0, %v1092
      %v1094 = vpop.f32.mrb[0].mxu0
      %v1095 = vpop.f32.mrb[0].mxu0
      %v1096 = vadd.f32 0.0, %v1095
      %v1097 = vpop.f32.mrb[0].mxu0
      %1098 = vmatprep.mubr.bf16.mxu0 %v806
      %1099 = vmatmul.mubr.bf16.gmra.mrb[0].mxu0 %v805
      %v1100 = vpop.f32.mrb[0].mxu0
      %v1101 = vadd.f32 0.0, %v1100
      %v1102 = vpop.f32.mrb[0].mxu0
      %v1103 = vpop.f32.mrb[0].mxu0
      %v1104 = vadd.f32 0.0, %v1103
      %v1105 = vpop.f32.mrb[0].mxu0
      %1106 = vmatprep.mubr.bf16.mxu0 %v809
      %1107 = vmatmul.mubr.bf16.gmra.mrb[0].mxu0 %v808
      %v1108 = vpop.f32.mrb[0].mxu0
      %v1109 = vadd.f32 0.0, %v1108
      %v1110 = vpop.f32.mrb[0].mxu0
      %v1111 = vpop.f32.mrb[0].mxu0
      %v1112 = vadd.f32 0.0, %v1111
      %v1113 = vpop.f32.mrb[0].mxu0
      %1114 = vmatprep.mubr.bf16.mxu0 %v812
      %1115 = vmatmul.mubr.bf16.gmra.mrb[0].mxu0 %v811
      %v1116 = vpop.f32.mrb[0].mxu0
      %v1117 = vadd.f32 0.0, %v1116
      %v1118 = vpop.f32.mrb[0].mxu0
      %v1119 = vpop.f32.mrb[0].mxu0
      %v1120 = vadd.f32 0.0, %v1119
      %v1121 = vpop.f32.mrb[0].mxu0
      %1122 = vmatprep.mubr.bf16.mxu0 %v815
      %1123 = vmatmul.mubr.bf16.gmra.mrb[0].mxu0 %v814
      %v1124 = vpop.f32.mrb[0].mxu0
      %v1125 = vadd.f32 0.0, %v1124
      %v1126 = vpop.f32.mrb[0].mxu0
      %v1127 = vpop.f32.mrb[0].mxu0
      %v1128 = vadd.f32 0.0, %v1127
      %v1129 = vpop.f32.mrb[0].mxu0
      %1130 = vmatprep.mubr.bf16.mxu0 %v818
      %1131 = vmatmul.mubr.bf16.gmra.mrb[0].mxu0 %v817
      %v1132 = vpop.f32.mrb[0].mxu0
      %v1133 = vadd.f32 0.0, %v1132
      %v1134 = vpop.f32.mrb[0].mxu0
      %v1135 = vpop.f32.mrb[0].mxu0
      %v1136 = vadd.f32 0.0, %v1135
      %v1137 = vpop.f32.mrb[0].mxu0
      %1138 = vmatprep.mubr.bf16.mxu0 %v821
      %1139 = vmatmul.mubr.bf16.gmra.mrb[0].mxu0 %v820
      %v1140 = vpop.f32.mrb[0].mxu0
      %v1141 = vadd.f32 0.0, %v1140
      %v1142 = vpop.f32.mrb[0].mxu0
      %v1143 = vpop.f32.mrb[0].mxu0
      %v1144 = vadd.f32 0.0, %v1143
      %v1145 = vpop.f32.mrb[0].mxu0
      %1146 = vmatprep.mubr.bf16.mxu0 %v824
      %1147 = vmatmul.mubr.bf16.gmra.mrb[0].mxu0 %v823
      %v1148 = vpop.f32.mrb[0].mxu0
      %v1149 = vadd.f32 0.0, %v1148
      %v1150 = vpop.f32.mrb[0].mxu0
      %v1151 = vpop.f32.mrb[0].mxu0
      %v1152 = vadd.f32 0.0, %v1151
      %v1153 = vpop.f32.mrb[0].mxu0
      %1154 = vmatprep.mubr.bf16.mxu0 %v827
      %1155 = vmatmul.mubr.bf16.gmra.mrb[0].mxu0 %v826
      %v1156 = vpop.f32.mrb[0].mxu0
      %v1157 = vadd.f32 0.0, %v1156
      %v1158 = vpop.f32.mrb[0].mxu0
      %v1159 = vpop.f32.mrb[0].mxu0
      %v1160 = vadd.f32 0.0, %v1159
      %v1161 = vpop.f32.mrb[0].mxu0
      %1162 = vmatprep.mubr.bf16.mxu0 %v830
      %1163 = vmatmul.mubr.bf16.gmra.mrb[0].mxu0 %v829
      %v1164 = vpop.f32.mrb[0].mxu0
      %v1165 = vadd.f32 0.0, %v1164
      %v1166 = vpop.f32.mrb[0].mxu0
      %v1167 = vpop.f32.mrb[0].mxu0
      %v1168 = vadd.f32 0.0, %v1167
      %v1169 = vpop.f32.mrb[0].mxu0
      %1170 = vmatprep.mubr.bf16.mxu0 %v833
      %1171 = vmatmul.mubr.bf16.gmra.mrb[0].mxu0 %v832
      %v1172 = vpop.f32.mrb[0].mxu0
      %v1173 = vadd.f32 0.0, %v1172
      %v1174 = vpop.f32.mrb[0].mxu0
      %v1175 = vpop.f32.mrb[0].mxu0
      %v1176 = vadd.f32 0.0, %v1175
      %v1177 = vpop.f32.mrb[0].mxu0
      %1178 = vmatprep.mubr.bf16.mxu0 %v836
      %1179 = vmatmul.mubr.bf16.gmra.mrb[0].mxu0 %v835
      %v1180 = vpop.f32.mrb[0].mxu0
      %v1181 = vadd.f32 0.0, %v1180
      %v1182 = vpop.f32.mrb[0].mxu0
      %v1183 = vpop.f32.mrb[0].mxu0
      %v1184 = vadd.f32 0.0, %v1183
      %v1185 = vpop.f32.mrb[0].mxu0
      %1186 = vmatprep.mubr.bf16.mxu0 %v839
      %1187 = vmatmul.mubr.bf16.gmra.mrb[0].mxu0 %v838
      %v1188 = vpop.f32.mrb[0].mxu0
      %v1189 = vadd.f32 0.0, %v1188
      %v1190 = vpop.f32.mrb[0].mxu0
      %v1191 = vpop.f32.mrb[0].mxu0
      %v1192 = vadd.f32 0.0, %v1191
      %v1193 = vpop.f32.mrb[0].mxu0
      %1194 = vdwg.mxu0
      %1195 = vmatprep.subr.bf16.mxu0 0
      %1196 = vmatpush1.bf16.msra.mxu0 %v1002
      %1197 = vmatprep.subr.bf16.mxu0 0
      %1198 = vmatpush1.bf16.msra.mxu0 %v1003
      %1199 = vmatprep.subr.bf16.mxu0 0
      %1200 = vmatpush1.bf16.msra.mxu0 %v1004
      %1201 = vmatprep.subr.bf16.mxu0 0
      %1202 = vmatpush1.bf16.msra.mxu0 %v1005
      %1203 = vmatprep.subr.bf16.mxu0 0
      %1204 = vmatpush1.bf16.msra.mxu0 %v1006
      %1205 = vmatprep.subr.bf16.mxu0 0
      %1206 = vmatpush1.bf16.msra.mxu0 %v1007
      %1207 = vmatprep.subr.bf16.mxu0 0
      %1208 = vmatpush1.bf16.msra.mxu0 %v1008
      %1209 = vmatprep.subr.bf16.mxu0 0
      %1210 = vmatpush1.bf16.msra.mxu0 %v1009
      %1211 = vmatprep.subr.bf16.mxu0 0
      %1212 = vmatpush1.bf16.msra.mxu0 0
      %1213 = vmatprep.subr.bf16.mxu0 0
      %1214 = vmatpush1.bf16.msra.mxu0 0
      %1215 = vmatprep.subr.bf16.mxu0 0
      %1216 = vmatpush1.bf16.msra.mxu0 0
      %1217 = vmatprep.subr.bf16.mxu0 0
      %1218 = vmatpush1.bf16.msra.mxu0 0
      %1219 = vmatprep.subr.bf16.mxu0 0
      %1220 = vmatpush1.bf16.msra.mxu0 0
      %1221 = vmatprep.subr.bf16.mxu0 0
      %1222 = vmatpush1.bf16.msra.mxu0 0
      %1223 = vmatprep.subr.bf16.mxu0 0
      %1224 = vmatpush1.bf16.msra.mxu0 0
      %1225 = vmatprep.subr.bf16.mxu0 0
      %1226 = vmatpush1.bf16.msra.mxu0 0
      %1227 = vmatprep.mubr.bf16.mxu0 0
      %1228 = vmatmul.mubr.bf16.gmra.mrb[0].mxu0 %v795
      %v1229 = vpop.f32.mrb[0].mxu0
      %v1230 = vadd.f32 %v1069, %v1229
      %v1231 = vpop.f32.mrb[0].mxu0
      %v1232 = vpop.f32.mrb[0].mxu0
      %v1233 = vadd.f32 %v1072, %v1232
      %v1234 = vpop.f32.mrb[0].mxu0
      %1235 = vmatprep.mubr.bf16.mxu0 0
      %1236 = vmatmul.mubr.bf16.gmra.mrb[0].mxu0 %v798
      %v1237 = vpop.f32.mrb[0].mxu0
      %v1238 = vadd.f32 %v1077, %v1237
      %v1239 = vpop.f32.mrb[0].mxu0
      %v1240 = vpop.f32.mrb[0].mxu0
      %v1241 = vadd.f32 %v1080, %v1240
      %v1242 = vpop.f32.mrb[0].mxu0
      %1243 = vmatprep.mubr.bf16.mxu0 0
      %1244 = vmatmul.mubr.bf16.gmra.mrb[0].mxu0 %v801
      %v1245 = vpop.f32.mrb[0].mxu0
      %v1246 = vadd.f32 %v1085, %v1245
      %v1247 = vpop.f32.mrb[0].mxu0
      %v1248 = vpop.f32.mrb[0].mxu0
      %v1249 = vadd.f32 %v1088, %v1248
      %v1250 = vpop.f32.mrb[0].mxu0
      %1251 = vmatprep.mubr.bf16.mxu0 0
      %1252 = vmatmul.mubr.bf16.gmra.mrb[0].mxu0 %v804
      %v1253 = vpop.f32.mrb[0].mxu0
      %v1254 = vadd.f32 %v1093, %v1253
      %v1255 = vpop.f32.mrb[0].mxu0
      %v1256 = vpop.f32.mrb[0].mxu0
      %v1257 = vadd.f32 %v1096, %v1256
      %v1258 = vpop.f32.mrb[0].mxu0
      %1259 = vmatprep.mubr.bf16.mxu0 0
      %1260 = vmatmul.mubr.bf16.gmra.mrb[0].mxu0 %v807
      %v1261 = vpop.f32.mrb[0].mxu0
      %v1262 = vadd.f32 %v1101, %v1261
      %v1263 = vpop.f32.mrb[0].mxu0
      %v1264 = vpop.f32.mrb[0].mxu0
      %v1265 = vadd.f32 %v1104, %v1264
      %v1266 = vpop.f32.mrb[0].mxu0
      %1267 = vmatprep.mubr.bf16.mxu0 0
      %1268 = vmatmul.mubr.bf16.gmra.mrb[0].mxu0 %v810
      %v1269 = vpop.f32.mrb[0].mxu0
      %v1270 = vadd.f32 %v1109, %v1269
      %v1271 = vpop.f32.mrb[0].mxu0
      %v1272 = vpop.f32.mrb[0].mxu0
      %v1273 = vadd.f32 %v1112, %v1272
      %v1274 = vpop.f32.mrb[0].mxu0
      %1275 = vmatprep.mubr.bf16.mxu0 0
      %1276 = vmatmul.mubr.bf16.gmra.mrb[0].mxu0 %v813
      %v1277 = vpop.f32.mrb[0].mxu0
      %v1278 = vadd.f32 %v1117, %v1277
      %v1279 = vpop.f32.mrb[0].mxu0
      %v1280 = vpop.f32.mrb[0].mxu0
      %v1281 = vadd.f32 %v1120, %v1280
      %v1282 = vpop.f32.mrb[0].mxu0
      %1283 = vmatprep.mubr.bf16.mxu0 0
      %1284 = vmatmul.mubr.bf16.gmra.mrb[0].mxu0 %v816
      %v1285 = vpop.f32.mrb[0].mxu0
      %v1286 = vadd.f32 %v1125, %v1285
      %v1287 = vpop.f32.mrb[0].mxu0
      %v1288 = vpop.f32.mrb[0].mxu0
      %v1289 = vadd.f32 %v1128, %v1288
      %v1290 = vpop.f32.mrb[0].mxu0
      %1291 = vmatprep.mubr.bf16.mxu0 0
      %1292 = vmatmul.mubr.bf16.gmra.mrb[0].mxu0 %v819
      %v1293 = vpop.f32.mrb[0].mxu0
      %v1294 = vadd.f32 %v1133, %v1293
      %v1295 = vpop.f32.mrb[0].mxu0
      %v1296 = vpop.f32.mrb[0].mxu0
      %v1297 = vadd.f32 %v1136, %v1296
      %v1298 = vpop.f32.mrb[0].mxu0
      %1299 = vmatprep.mubr.bf16.mxu0 0
      %1300 = vmatmul.mubr.bf16.gmra.mrb[0].mxu0 %v822
      %v1301 = vpop.f32.mrb[0].mxu0
      %v1302 = vadd.f32 %v1141, %v1301
      %v1303 = vpop.f32.mrb[0].mxu0
      %v1304 = vpop.f32.mrb[0].mxu0
      %v1305 = vadd.f32 %v1144, %v1304
      %v1306 = vpop.f32.mrb[0].mxu0
      %1307 = vmatprep.mubr.bf16.mxu0 0
      %1308 = vmatmul.mubr.bf16.gmra.mrb[0].mxu0 %v825
      %v1309 = vpop.f32.mrb[0].mxu0
      %v1310 = vadd.f32 %v1149, %v1309
      %v1311 = vpop.f32.mrb[0].mxu0
      %v1312 = vpop.f32.mrb[0].mxu0
      %v1313 = vadd.f32 %v1152, %v1312
      %v1314 = vpop.f32.mrb[0].mxu0
      %1315 = vmatprep.mubr.bf16.mxu0 0
      %1316 = vmatmul.mubr.bf16.gmra.mrb[0].mxu0 %v828
      %v1317 = vpop.f32.mrb[0].mxu0
      %v1318 = vadd.f32 %v1157, %v1317
      %v1319 = vpop.f32.mrb[0].mxu0
      %v1320 = vpop.f32.mrb[0].mxu0
      %v1321 = vadd.f32 %v1160, %v1320
      %v1322 = vpop.f32.mrb[0].mxu0
      %1323 = vmatprep.mubr.bf16.mxu0 0
      %1324 = vmatmul.mubr.bf16.gmra.mrb[0].mxu0 %v831
      %v1325 = vpop.f32.mrb[0].mxu0
      %v1326 = vadd.f32 %v1165, %v1325
      %v1327 = vpop.f32.mrb[0].mxu0
      %v1328 = vpop.f32.mrb[0].mxu0
      %v1329 = vadd.f32 %v1168, %v1328
      %v1330 = vpop.f32.mrb[0].mxu0
      %1331 = vmatprep.mubr.bf16.mxu0 0
      %1332 = vmatmul.mubr.bf16.gmra.mrb[0].mxu0 %v834
      %v1333 = vpop.f32.mrb[0].mxu0
      %v1334 = vadd.f32 %v1173, %v1333
      %v1335 = vpop.f32.mrb[0].mxu0
      %v1336 = vpop.f32.mrb[0].mxu0
      %v1337 = vadd.f32 %v1176, %v1336
      %v1338 = vpop.f32.mrb[0].mxu0
      %1339 = vmatprep.mubr.bf16.mxu0 0
      %1340 = vmatmul.mubr.bf16.gmra.mrb[0].mxu0 %v837
      %v1341 = vpop.f32.mrb[0].mxu0
      %v1342 = vadd.f32 %v1181, %v1341
      %v1343 = vpop.f32.mrb[0].mxu0
      %v1344 = vpop.f32.mrb[0].mxu0
      %v1345 = vadd.f32 %v1184, %v1344
      %v1346 = vpop.f32.mrb[0].mxu0
      %1347 = vmatprep.mubr.bf16.mxu0 0
      %1348 = vmatmul.mubr.bf16.gmra.mrb[0].mxu0 %v840
      %v1349 = vpop.f32.mrb[0].mxu0
      %v1350 = vadd.f32 %v1189, %v1349
      %v1351 = vpop.f32.mrb[0].mxu0
      %v1352 = vpop.f32.mrb[0].mxu0
      %v1353 = vadd.f32 %v1192, %v1352
      %v1354 = vpop.f32.mrb[0].mxu0
      %1355 = vdwg.mxu0
      %v1404 = vunpack.c.l.b16 %v745
      %v1405 = vunpack.c.l.b16 %v746
      %v1406 = vunpack.c.l.b16 %v747
      %v1407 = vunpack.c.l.b16 %v748
      %v1408 = vunpack.c.l.b16 %v749
      %v1409 = vunpack.c.l.b16 %v750
      %v1410 = vunpack.c.l.b16 %v751
      %v1411 = vunpack.c.l.b16 %v752
      %v1412 = vunpack.c.l.b16 %v753
      %v1413 = vunpack.c.l.b16 %v754
      %v1414 = vunpack.c.l.b16 %v755
      %v1415 = vunpack.c.l.b16 %v756
      %v1416 = vunpack.c.l.b16 %v757
      %v1417 = vunpack.c.l.b16 %v758
      %v1418 = vunpack.c.l.b16 %v759
      %v1419 = vunpack.c.l.b16 %v760
      %v1420 = vunpack.c.l.b16 %v761
      %v1421 = vunpack.c.l.b16 %v762
      %v1422 = vunpack.c.l.b16 %v763
      %v1423 = vunpack.c.l.b16 %v764
      %v1424 = vunpack.c.l.b16 %v765
      %v1425 = vunpack.c.l.b16 %v766
      %v1426 = vunpack.c.l.b16 %v767
      %v1427 = vunpack.c.l.b16 %v768
      %v1428 = vunpack.c.l.b16 %v769
      %v1429 = vunpack.c.l.b16 %v770
      %v1430 = vunpack.c.l.b16 %v771
      %v1431 = vunpack.c.l.b16 %v772
      %v1432 = vunpack.c.l.b16 %v773
      %v1433 = vunpack.c.l.b16 %v774
      %v1434 = vunpack.c.l.b16 %v775
      %v1435 = vunpack.c.l.b16 %v776
      %v1436 = vunpack.c.l.b16 %v777
      %v1437 = vunpack.c.l.b16 %v778
      %v1438 = vunpack.c.l.b16 %v779
      %v1439 = vunpack.c.l.b16 %v780
      %v1440 = vunpack.c.l.b16 %v781
      %v1441 = vunpack.c.l.b16 %v782
      %v1442 = vunpack.c.l.b16 %v783
      %v1443 = vunpack.c.l.b16 %v784
      %v1444 = vunpack.c.l.b16 %v785
      %v1445 = vunpack.c.l.b16 %v786
      %v1446 = vunpack.c.l.b16 %v787
      %v1447 = vunpack.c.l.b16 %v788
      %v1448 = vunpack.c.l.b16 %v789
      %v1449 = vunpack.c.l.b16 %v790
      %v1450 = vunpack.c.l.b16 %v791
      %v1451 = vunpack.c.l.b16 %v792
      %v1452 = vpack.c.b16 %v1405, %v1404
      %v1453 = vpack.c.b16 %v1407, %v1406
      %v1454 = vpack.c.b16 %v1409, %v1408
      %v1455 = vpack.c.b16 %v1411, %v1410
      %v1456 = vpack.c.b16 %v1413, %v1412
      %v1457 = vpack.c.b16 %v1415, %v1414
      %v1458 = vpack.c.b16 %v1417, %v1416
      %v1459 = vpack.c.b16 %v1419, %v1418
      %v1460 = vpack.c.b16 %v1421, %v1420
      %v1461 = vpack.c.b16 %v1423, %v1422
      %v1462 = vpack.c.b16 %v1425, %v1424
      %v1463 = vpack.c.b16 %v1427, %v1426
      %v1464 = vpack.c.b16 %v1429, %v1428
      %v1465 = vpack.c.b16 %v1431, %v1430
      %v1466 = vpack.c.b16 %v1433, %v1432
      %v1467 = vpack.c.b16 %v1435, %v1434
      %v1468 = vpack.c.b16 %v1437, %v1436
      %v1469 = vpack.c.b16 %v1439, %v1438
      %v1470 = vpack.c.b16 %v1441, %v1440
      %v1471 = vpack.c.b16 %v1443, %v1442
      %v1472 = vpack.c.b16 %v1445, %v1444
      %v1473 = vpack.c.b16 %v1447, %v1446
      %v1474 = vpack.c.b16 %v1449, %v1448
      %v1475 = vpack.c.b16 %v1451, %v1450
      %1500 = vmatprep.subr.bf16.mxu0 0
      %1501 = vmatpush1.bf16.msra.mxu0 %v1452
      %1502 = vmatprep.subr.bf16.mxu0 0
      %1503 = vmatpush1.bf16.msra.mxu0 %v1453
      %1504 = vmatprep.subr.bf16.mxu0 0
      %1505 = vmatpush1.bf16.msra.mxu0 %v1454
      %1506 = vmatprep.subr.bf16.mxu0 0
      %1507 = vmatpush1.bf16.msra.mxu0 %v1455
      %1508 = vmatprep.subr.bf16.mxu0 0
      %1509 = vmatpush1.bf16.msra.mxu0 %v1456
      %1510 = vmatprep.subr.bf16.mxu0 0
      %1511 = vmatpush1.bf16.msra.mxu0 %v1457
      %1512 = vmatprep.subr.bf16.mxu0 0
      %1513 = vmatpush1.bf16.msra.mxu0 %v1458
      %1514 = vmatprep.subr.bf16.mxu0 0
      %1515 = vmatpush1.bf16.msra.mxu0 %v1459
      %1516 = vmatprep.subr.bf16.mxu0 0
      %1517 = vmatpush1.bf16.msra.mxu0 %v1460
      %1518 = vmatprep.subr.bf16.mxu0 0
      %1519 = vmatpush1.bf16.msra.mxu0 %v1461
      %1520 = vmatprep.subr.bf16.mxu0 0
      %1521 = vmatpush1.bf16.msra.mxu0 %v1462
      %1522 = vmatprep.subr.bf16.mxu0 0
      %1523 = vmatpush1.bf16.msra.mxu0 %v1463
      %1524 = vmatprep.subr.bf16.mxu0 0
      %1525 = vmatpush1.bf16.msra.mxu0 %v1464
      %1526 = vmatprep.subr.bf16.mxu0 0
      %1527 = vmatpush1.bf16.msra.mxu0 %v1465
      %1528 = vmatprep.subr.bf16.mxu0 0
      %1529 = vmatpush1.bf16.msra.mxu0 %v1466
      %1530 = vmatprep.subr.bf16.mxu0 0
      %1531 = vmatpush1.bf16.msra.mxu0 %v1467
      %1532 = vmatprep.mubr.bf16.mxu0 %v698
      %1533 = vmatmul.mubr.bf16.gmra.mrb[0].mxu0 %v697
      %v1534 = vpop.f32.mrb[0].mxu0
      %v1535 = vadd.f32 %v1230, %v1534
      %v1536 = vpop.f32.mrb[0].mxu0
      %v1537 = vpop.f32.mrb[0].mxu0
      %v1538 = vadd.f32 %v1233, %v1537
      %v1539 = vpop.f32.mrb[0].mxu0
      %1540 = vmatprep.mubr.bf16.mxu0 %v701
      %1541 = vmatmul.mubr.bf16.gmra.mrb[0].mxu0 %v700
      %v1542 = vpop.f32.mrb[0].mxu0
      %v1543 = vadd.f32 %v1238, %v1542
      %v1544 = vpop.f32.mrb[0].mxu0
      %v1545 = vpop.f32.mrb[0].mxu0
      %v1546 = vadd.f32 %v1241, %v1545
      %v1547 = vpop.f32.mrb[0].mxu0
      %1548 = vmatprep.mubr.bf16.mxu0 %v704
      %1549 = vmatmul.mubr.bf16.gmra.mrb[0].mxu0 %v703
      %v1550 = vpop.f32.mrb[0].mxu0
      %v1551 = vadd.f32 %v1246, %v1550
      %v1552 = vpop.f32.mrb[0].mxu0
      %v1553 = vpop.f32.mrb[0].mxu0
      %v1554 = vadd.f32 %v1249, %v1553
      %v1555 = vpop.f32.mrb[0].mxu0
      %1556 = vmatprep.mubr.bf16.mxu0 %v707
      %1557 = vmatmul.mubr.bf16.gmra.mrb[0].mxu0 %v706
      %v1558 = vpop.f32.mrb[0].mxu0
      %v1559 = vadd.f32 %v1254, %v1558
      %v1560 = vpop.f32.mrb[0].mxu0
      %v1561 = vpop.f32.mrb[0].mxu0
      %v1562 = vadd.f32 %v1257, %v1561
      %v1563 = vpop.f32.mrb[0].mxu0
      %1564 = vmatprep.mubr.bf16.mxu0 %v710
      %1565 = vmatmul.mubr.bf16.gmra.mrb[0].mxu0 %v709
      %v1566 = vpop.f32.mrb[0].mxu0
      %v1567 = vadd.f32 %v1262, %v1566
      %v1568 = vpop.f32.mrb[0].mxu0
      %v1569 = vpop.f32.mrb[0].mxu0
      %v1570 = vadd.f32 %v1265, %v1569
      %v1571 = vpop.f32.mrb[0].mxu0
      %1572 = vmatprep.mubr.bf16.mxu0 %v713
      %1573 = vmatmul.mubr.bf16.gmra.mrb[0].mxu0 %v712
      %v1574 = vpop.f32.mrb[0].mxu0
      %v1575 = vadd.f32 %v1270, %v1574
      %v1576 = vpop.f32.mrb[0].mxu0
      %v1577 = vpop.f32.mrb[0].mxu0
      %v1578 = vadd.f32 %v1273, %v1577
      %v1579 = vpop.f32.mrb[0].mxu0
      %1580 = vmatprep.mubr.bf16.mxu0 %v716
      %1581 = vmatmul.mubr.bf16.gmra.mrb[0].mxu0 %v715
      %v1582 = vpop.f32.mrb[0].mxu0
      %v1583 = vadd.f32 %v1278, %v1582
      %v1584 = vpop.f32.mrb[0].mxu0
      %v1585 = vpop.f32.mrb[0].mxu0
      %v1586 = vadd.f32 %v1281, %v1585
      %v1587 = vpop.f32.mrb[0].mxu0
      %1588 = vmatprep.mubr.bf16.mxu0 %v719
      %1589 = vmatmul.mubr.bf16.gmra.mrb[0].mxu0 %v718
      %v1590 = vpop.f32.mrb[0].mxu0
      %v1591 = vadd.f32 %v1286, %v1590
      %v1592 = vpop.f32.mrb[0].mxu0
      %v1593 = vpop.f32.mrb[0].mxu0
      %v1594 = vadd.f32 %v1289, %v1593
      %v1595 = vpop.f32.mrb[0].mxu0
      %1596 = vmatprep.mubr.bf16.mxu0 %v722
      %1597 = vmatmul.mubr.bf16.gmra.mrb[0].mxu0 %v721
      %v1598 = vpop.f32.mrb[0].mxu0
      %v1599 = vadd.f32 %v1294, %v1598
      %v1600 = vpop.f32.mrb[0].mxu0
      %v1601 = vpop.f32.mrb[0].mxu0
      %v1602 = vadd.f32 %v1297, %v1601
      %v1603 = vpop.f32.mrb[0].mxu0
      %1604 = vmatprep.mubr.bf16.mxu0 %v725
      %1605 = vmatmul.mubr.bf16.gmra.mrb[0].mxu0 %v724
      %v1606 = vpop.f32.mrb[0].mxu0
      %v1607 = vadd.f32 %v1302, %v1606
      %v1608 = vpop.f32.mrb[0].mxu0
      %v1609 = vpop.f32.mrb[0].mxu0
      %v1610 = vadd.f32 %v1305, %v1609
      %v1611 = vpop.f32.mrb[0].mxu0
      %1612 = vmatprep.mubr.bf16.mxu0 %v728
      %1613 = vmatmul.mubr.bf16.gmra.mrb[0].mxu0 %v727
      %v1614 = vpop.f32.mrb[0].mxu0
      %v1615 = vadd.f32 %v1310, %v1614
      %v1616 = vpop.f32.mrb[0].mxu0
      %v1617 = vpop.f32.mrb[0].mxu0
      %v1618 = vadd.f32 %v1313, %v1617
      %v1619 = vpop.f32.mrb[0].mxu0
      %1620 = vmatprep.mubr.bf16.mxu0 %v731
      %1621 = vmatmul.mubr.bf16.gmra.mrb[0].mxu0 %v730
      %v1622 = vpop.f32.mrb[0].mxu0
      %v1623 = vadd.f32 %v1318, %v1622
      %v1624 = vpop.f32.mrb[0].mxu0
      %v1625 = vpop.f32.mrb[0].mxu0
      %v1626 = vadd.f32 %v1321, %v1625
      %v1627 = vpop.f32.mrb[0].mxu0
      %1628 = vmatprep.mubr.bf16.mxu0 %v734
      %1629 = vmatmul.mubr.bf16.gmra.mrb[0].mxu0 %v733
      %v1630 = vpop.f32.mrb[0].mxu0
      %v1631 = vadd.f32 %v1326, %v1630
      %v1632 = vpop.f32.mrb[0].mxu0
      %v1633 = vpop.f32.mrb[0].mxu0
      %v1634 = vadd.f32 %v1329, %v1633
      %v1635 = vpop.f32.mrb[0].mxu0
      %1636 = vmatprep.mubr.bf16.mxu0 %v737
      %1637 = vmatmul.mubr.bf16.gmra.mrb[0].mxu0 %v736
      %v1638 = vpop.f32.mrb[0].mxu0
      %v1639 = vadd.f32 %v1334, %v1638
      %v1640 = vpop.f32.mrb[0].mxu0
      %v1641 = vpop.f32.mrb[0].mxu0
      %v1642 = vadd.f32 %v1337, %v1641
      %v1643 = vpop.f32.mrb[0].mxu0
      %1644 = vmatprep.mubr.bf16.mxu0 %v740
      %1645 = vmatmul.mubr.bf16.gmra.mrb[0].mxu0 %v739
      %v1646 = vpop.f32.mrb[0].mxu0
      %v1647 = vadd.f32 %v1342, %v1646
      %v1648 = vpop.f32.mrb[0].mxu0
      %v1649 = vpop.f32.mrb[0].mxu0
      %v1650 = vadd.f32 %v1345, %v1649
      %v1651 = vpop.f32.mrb[0].mxu0
      %1652 = vmatprep.mubr.bf16.mxu0 %v743
      %1653 = vmatmul.mubr.bf16.gmra.mrb[0].mxu0 %v742
      %v1654 = vpop.f32.mrb[0].mxu0
      %v1655 = vadd.f32 %v1350, %v1654
      %v1656 = vpop.f32.mrb[0].mxu0
      %v1657 = vpop.f32.mrb[0].mxu0
      %v1658 = vadd.f32 %v1353, %v1657
      %v1659 = vpop.f32.mrb[0].mxu0
      %1660 = vdwg.mxu0
      %1661 = vmatprep.subr.bf16.mxu0 0
      %1662 = vmatpush1.bf16.msra.mxu0 %v1468
      %1663 = vmatprep.subr.bf16.mxu0 0
      %1664 = vmatpush1.bf16.msra.mxu0 %v1469
      %1665 = vmatprep.subr.bf16.mxu0 0
      %1666 = vmatpush1.bf16.msra.mxu0 %v1470
      %1667 = vmatprep.subr.bf16.mxu0 0
      %1668 = vmatpush1.bf16.msra.mxu0 %v1471
      %1669 = vmatprep.subr.bf16.mxu0 0
      %1670 = vmatpush1.bf16.msra.mxu0 %v1472
      %1671 = vmatprep.subr.bf16.mxu0 0
      %1672 = vmatpush1.bf16.msra.mxu0 %v1473
      %1673 = vmatprep.subr.bf16.mxu0 0
      %1674 = vmatpush1.bf16.msra.mxu0 %v1474
      %1675 = vmatprep.subr.bf16.mxu0 0
      %1676 = vmatpush1.bf16.msra.mxu0 %v1475
      %1677 = vmatprep.subr.bf16.mxu0 0
      %1678 = vmatpush1.bf16.msra.mxu0 0
      %1679 = vmatprep.subr.bf16.mxu0 0
      %1680 = vmatpush1.bf16.msra.mxu0 0
      %1681 = vmatprep.subr.bf16.mxu0 0
      %1682 = vmatpush1.bf16.msra.mxu0 0
      %1683 = vmatprep.subr.bf16.mxu0 0
      %1684 = vmatpush1.bf16.msra.mxu0 0
      %1685 = vmatprep.subr.bf16.mxu0 0
      %1686 = vmatpush1.bf16.msra.mxu0 0
      %1687 = vmatprep.subr.bf16.mxu0 0
      %1688 = vmatpush1.bf16.msra.mxu0 0
      %1689 = vmatprep.subr.bf16.mxu0 0
      %1690 = vmatpush1.bf16.msra.mxu0 0
      %1691 = vmatprep.subr.bf16.mxu0 0
      %1692 = vmatpush1.bf16.msra.mxu0 0
      %1693 = vmatprep.mubr.bf16.mxu0 0
      %1694 = vmatmul.mubr.bf16.gmra.mrb[0].mxu0 %v699
      %v1695 = vpop.f32.mrb[0].mxu0
      %v1696 = vadd.f32 %v1535, %v1695
      %v1697 = vpop.f32.mrb[0].mxu0
      %v1698 = vpop.f32.mrb[0].mxu0
      %v1699 = vadd.f32 %v1538, %v1698
      %v1700 = vpop.f32.mrb[0].mxu0
      %1701 = vmatprep.mubr.bf16.mxu0 0
      %1702 = vmatmul.mubr.bf16.gmra.mrb[0].mxu0 %v702
      %v1703 = vpop.f32.mrb[0].mxu0
      %v1704 = vadd.f32 %v1543, %v1703
      %v1705 = vpop.f32.mrb[0].mxu0
      %v1706 = vpop.f32.mrb[0].mxu0
      %v1707 = vadd.f32 %v1546, %v1706
      %v1708 = vpop.f32.mrb[0].mxu0
      %1709 = vmatprep.mubr.bf16.mxu0 0
      %1710 = vmatmul.mubr.bf16.gmra.mrb[0].mxu0 %v705
      %v1711 = vpop.f32.mrb[0].mxu0
      %v1712 = vadd.f32 %v1551, %v1711
      %v1713 = vpop.f32.mrb[0].mxu0
      %v1714 = vpop.f32.mrb[0].mxu0
      %v1715 = vadd.f32 %v1554, %v1714
      %v1716 = vpop.f32.mrb[0].mxu0
      %1717 = vmatprep.mubr.bf16.mxu0 0
      %1718 = vmatmul.mubr.bf16.gmra.mrb[0].mxu0 %v708
      %v1719 = vpop.f32.mrb[0].mxu0
      %v1720 = vadd.f32 %v1559, %v1719
      %v1721 = vpop.f32.mrb[0].mxu0
      %v1722 = vpop.f32.mrb[0].mxu0
      %v1723 = vadd.f32 %v1562, %v1722
      %v1724 = vpop.f32.mrb[0].mxu0
      %1725 = vmatprep.mubr.bf16.mxu0 0
      %1726 = vmatmul.mubr.bf16.gmra.mrb[0].mxu0 %v711
      %v1727 = vpop.f32.mrb[0].mxu0
      %v1728 = vadd.f32 %v1567, %v1727
      %v1729 = vpop.f32.mrb[0].mxu0
      %v1730 = vpop.f32.mrb[0].mxu0
      %v1731 = vadd.f32 %v1570, %v1730
      %v1732 = vpop.f32.mrb[0].mxu0
      %1733 = vmatprep.mubr.bf16.mxu0 0
      %1734 = vmatmul.mubr.bf16.gmra.mrb[0].mxu0 %v714
      %v1735 = vpop.f32.mrb[0].mxu0
      %v1736 = vadd.f32 %v1575, %v1735
      %v1737 = vpop.f32.mrb[0].mxu0
      %v1738 = vpop.f32.mrb[0].mxu0
      %v1739 = vadd.f32 %v1578, %v1738
      %v1740 = vpop.f32.mrb[0].mxu0
      %1741 = vmatprep.mubr.bf16.mxu0 0
      %1742 = vmatmul.mubr.bf16.gmra.mrb[0].mxu0 %v717
      %v1743 = vpop.f32.mrb[0].mxu0
      %v1744 = vadd.f32 %v1583, %v1743
      %v1745 = vpop.f32.mrb[0].mxu0
      %v1746 = vpop.f32.mrb[0].mxu0
      %v1747 = vadd.f32 %v1586, %v1746
      %v1748 = vpop.f32.mrb[0].mxu0
      %1749 = vmatprep.mubr.bf16.mxu0 0
      %1750 = vmatmul.mubr.bf16.gmra.mrb[0].mxu0 %v720
      %v1751 = vpop.f32.mrb[0].mxu0
      %v1752 = vadd.f32 %v1591, %v1751
      %v1753 = vpop.f32.mrb[0].mxu0
      %v1754 = vpop.f32.mrb[0].mxu0
      %v1755 = vadd.f32 %v1594, %v1754
      %v1756 = vpop.f32.mrb[0].mxu0
      %1757 = vmatprep.mubr.bf16.mxu0 0
      %1758 = vmatmul.mubr.bf16.gmra.mrb[0].mxu0 %v723
      %v1759 = vpop.f32.mrb[0].mxu0
      %v1760 = vadd.f32 %v1599, %v1759
      %v1761 = vpop.f32.mrb[0].mxu0
      %v1762 = vpop.f32.mrb[0].mxu0
      %v1763 = vadd.f32 %v1602, %v1762
      %v1764 = vpop.f32.mrb[0].mxu0
      %1765 = vmatprep.mubr.bf16.mxu0 0
      %1766 = vmatmul.mubr.bf16.gmra.mrb[0].mxu0 %v726
      %v1767 = vpop.f32.mrb[0].mxu0
      %v1768 = vadd.f32 %v1607, %v1767
      %v1769 = vpop.f32.mrb[0].mxu0
      %v1770 = vpop.f32.mrb[0].mxu0
      %v1771 = vadd.f32 %v1610, %v1770
      %v1772 = vpop.f32.mrb[0].mxu0
      %1773 = vmatprep.mubr.bf16.mxu0 0
      %1774 = vmatmul.mubr.bf16.gmra.mrb[0].mxu0 %v729
      %v1775 = vpop.f32.mrb[0].mxu0
      %v1776 = vadd.f32 %v1615, %v1775
      %v1777 = vpop.f32.mrb[0].mxu0
      %v1778 = vpop.f32.mrb[0].mxu0
      %v1779 = vadd.f32 %v1618, %v1778
      %v1780 = vpop.f32.mrb[0].mxu0
      %1781 = vmatprep.mubr.bf16.mxu0 0
      %1782 = vmatmul.mubr.bf16.gmra.mrb[0].mxu0 %v732
      %v1783 = vpop.f32.mrb[0].mxu0
      %v1784 = vadd.f32 %v1623, %v1783
      %v1785 = vpop.f32.mrb[0].mxu0
      %v1786 = vpop.f32.mrb[0].mxu0
      %v1787 = vadd.f32 %v1626, %v1786
      %v1788 = vpop.f32.mrb[0].mxu0
      %1789 = vmatprep.mubr.bf16.mxu0 0
      %1790 = vmatmul.mubr.bf16.gmra.mrb[0].mxu0 %v735
      %v1791 = vpop.f32.mrb[0].mxu0
      %v1792 = vadd.f32 %v1631, %v1791
      %v1793 = vpop.f32.mrb[0].mxu0
      %v1794 = vpop.f32.mrb[0].mxu0
      %v1795 = vadd.f32 %v1634, %v1794
      %v1796 = vpop.f32.mrb[0].mxu0
      %1797 = vmatprep.mubr.bf16.mxu0 0
      %1798 = vmatmul.mubr.bf16.gmra.mrb[0].mxu0 %v738
      %v1799 = vpop.f32.mrb[0].mxu0
      %v1800 = vadd.f32 %v1639, %v1799
      %v1801 = vpop.f32.mrb[0].mxu0
      %v1802 = vpop.f32.mrb[0].mxu0
      %v1803 = vadd.f32 %v1642, %v1802
      %v1804 = vpop.f32.mrb[0].mxu0
      %1805 = vmatprep.mubr.bf16.mxu0 0
      %1806 = vmatmul.mubr.bf16.gmra.mrb[0].mxu0 %v741
      %v1807 = vpop.f32.mrb[0].mxu0
      %v1808 = vadd.f32 %v1647, %v1807
      %v1809 = vpop.f32.mrb[0].mxu0
      %v1810 = vpop.f32.mrb[0].mxu0
      %v1811 = vadd.f32 %v1650, %v1810
      %v1812 = vpop.f32.mrb[0].mxu0
      %1813 = vmatprep.mubr.bf16.mxu0 0
      %1814 = vmatmul.mubr.bf16.gmra.mrb[0].mxu0 %v744
      %v1815 = vpop.f32.mrb[0].mxu0
      %v1816 = vadd.f32 %v1655, %v1815
      %v1817 = vpop.f32.mrb[0].mxu0
      %v1818 = vpop.f32.mrb[0].mxu0
      %v1819 = vadd.f32 %v1658, %v1818
      %v1820 = vpop.f32.mrb[0].mxu0
      %1821 = vdwg.mxu0
      %s1822 = scalar_lea.vmem [#allocation2], 48
      %v1823 = vld [vmem:[%s1822] sm:$0xff]
      %v1824 = vld [vmem:[%s1822 + $0x8] sm:$0xff]
      %v1825 = vld [vmem:[%s1822 + $0x10] sm:$0xff]
      %v1826 = vld [vmem:[%s1822 + $0x18] sm:$0xff]
      %v1827 = vld [vmem:[%s1822 + $0x20] sm:$0xff]
      %v1828 = vld [vmem:[%s1822 + $0x28] sm:$0xff]
      %v1829 = vld [vmem:[%s1822 + $0x30] sm:$0xff]
      %v1830 = vld [vmem:[%s1822 + $0x38] sm:$0xff]
      %v1831 = vld [vmem:[%s1822 + $0x40] sm:$0xff]
      %v1832 = vld [vmem:[%s1822 + $0x48] sm:$0xff]
      %v1833 = vld [vmem:[%s1822 + $0x50] sm:$0xff]
      %v1834 = vld [vmem:[%s1822 + $0x58] sm:$0xff]
      %v1835 = vld [vmem:[%s1822 + $0x60] sm:$0xff]
      %v1836 = vld [vmem:[%s1822 + $0x68] sm:$0xff]
      %v1837 = vld [vmem:[%s1822 + $0x70] sm:$0xff]
      %v1838 = vld [vmem:[%s1822 + $0x78] sm:$0xff]
      %v1839 = vld [vmem:[%s1822 + $0x80] sm:$0xff]
      %v1840 = vld [vmem:[%s1822 + $0x88] sm:$0xff]
      %v1841 = vld [vmem:[%s1822 + $0x90] sm:$0xff]
      %v1842 = vld [vmem:[%s1822 + $0x98] sm:$0xff]
      %v1843 = vld [vmem:[%s1822 + $0xa0] sm:$0xff]
      %v1844 = vld [vmem:[%s1822 + $0xa8] sm:$0xff]
      %v1845 = vld [vmem:[%s1822 + $0xb0] sm:$0xff]
      %v1846 = vld [vmem:[%s1822 + $0xb8] sm:$0xff]
      %v1847 = vld [vmem:[%s1822 + $0xc0] sm:$0xff]
      %v1848 = vld [vmem:[%s1822 + $0xc8] sm:$0xff]
      %v1849 = vld [vmem:[%s1822 + $0xd0] sm:$0xff]
      %v1850 = vld [vmem:[%s1822 + $0xd8] sm:$0xff]
      %v1851 = vld [vmem:[%s1822 + $0xe0] sm:$0xff]
      %v1852 = vld [vmem:[%s1822 + $0xe8] sm:$0xff]
      %v1853 = vld [vmem:[%s1822 + $0xf0] sm:$0xff]
      %v1854 = vld [vmem:[%s1822 + $0xf8] sm:$0xff]
      %v1855 = vld [vmem:[%s1822 + $0x100] sm:$0xff]
      %v1856 = vld [vmem:[%s1822 + $0x108] sm:$0xff]
      %v1857 = vld [vmem:[%s1822 + $0x110] sm:$0xff]
      %v1858 = vld [vmem:[%s1822 + $0x118] sm:$0xff]
      %v1859 = vld [vmem:[%s1822 + $0x120] sm:$0xff]
      %v1860 = vld [vmem:[%s1822 + $0x128] sm:$0xff]
      %v1861 = vld [vmem:[%s1822 + $0x130] sm:$0xff]
      %v1862 = vld [vmem:[%s1822 + $0x138] sm:$0xff]
      %v1863 = vld [vmem:[%s1822 + $0x140] sm:$0xff]
      %v1864 = vld [vmem:[%s1822 + $0x148] sm:$0xff]
      %v1865 = vld [vmem:[%s1822 + $0x150] sm:$0xff]
      %v1866 = vld [vmem:[%s1822 + $0x158] sm:$0xff]
      %v1867 = vld [vmem:[%s1822 + $0x160] sm:$0xff]
      %v1868 = vld [vmem:[%s1822 + $0x168] sm:$0xff]
      %v1869 = vld [vmem:[%s1822 + $0x170] sm:$0xff]
      %v1870 = vld [vmem:[%s1822 + $0x178] sm:$0xff]
      %s1871 = scalar_lea.vmem %s1, 384
      %v1872 = vld [vmem:[%s1871] sm:$0xf]
      %v1873 = vld [vmem:[%s1871 + $0x4] sm:$0xf]
      %v1874 = vld [vmem:[%s1871 + $0x8] sm:$0xf]
      %v1875 = vld [vmem:[%s1871 + $0xc] sm:$0xf]
      %v1876 = vld [vmem:[%s1871 + $0x10] sm:$0xf]
      %v1877 = vld [vmem:[%s1871 + $0x14] sm:$0xf]
      %v1878 = vld [vmem:[%s1871 + $0x18] sm:$0xf]
      %v1879 = vld [vmem:[%s1871 + $0x1c] sm:$0xf]
      %v1880 = vld [vmem:[%s1871 + $0x20] sm:$0xf]
      %v1881 = vld [vmem:[%s1871 + $0x24] sm:$0xf]
      %v1882 = vld [vmem:[%s1871 + $0x28] sm:$0xf]
      %v1883 = vld [vmem:[%s1871 + $0x2c] sm:$0xf]
      %v1884 = vld [vmem:[%s1871 + $0x30] sm:$0xf]
      %v1885 = vld [vmem:[%s1871 + $0x34] sm:$0xf]
      %v1886 = vld [vmem:[%s1871 + $0x38] sm:$0xf]
      %v1887 = vld [vmem:[%s1871 + $0x3c] sm:$0xf]
      %v1888 = vld [vmem:[%s1871 + $0x40] sm:$0xf]
      %v1889 = vld [vmem:[%s1871 + $0x44] sm:$0xf]
      %v1890 = vld [vmem:[%s1871 + $0x48] sm:$0xf]
      %v1891 = vld [vmem:[%s1871 + $0x4c] sm:$0xf]
      %v1892 = vld [vmem:[%s1871 + $0x50] sm:$0xf]
      %v1893 = vld [vmem:[%s1871 + $0x54] sm:$0xf]
      %v1894 = vld [vmem:[%s1871 + $0x58] sm:$0xf]
      %v1895 = vld [vmem:[%s1871 + $0x5c] sm:$0xf]
      %v1896 = vld [vmem:[%s1871 + $0x60] sm:$0xf]
      %v1897 = vld [vmem:[%s1871 + $0x64] sm:$0xf]
      %v1898 = vld [vmem:[%s1871 + $0x68] sm:$0xf]
      %v1899 = vld [vmem:[%s1871 + $0x6c] sm:$0xf]
      %v1900 = vld [vmem:[%s1871 + $0x70] sm:$0xf]
      %v1901 = vld [vmem:[%s1871 + $0x74] sm:$0xf]
      %v1902 = vld [vmem:[%s1871 + $0x78] sm:$0xf]
      %v1903 = vld [vmem:[%s1871 + $0x7c] sm:$0xf]
      %v1904 = vld [vmem:[%s1871 + $0x80] sm:$0xf]
      %v1905 = vld [vmem:[%s1871 + $0x84] sm:$0xf]
      %v1906 = vld [vmem:[%s1871 + $0x88] sm:$0xf]
      %v1907 = vld [vmem:[%s1871 + $0x8c] sm:$0xf]
      %v1908 = vld [vmem:[%s1871 + $0x90] sm:$0xf]
      %v1909 = vld [vmem:[%s1871 + $0x94] sm:$0xf]
      %v1910 = vld [vmem:[%s1871 + $0x98] sm:$0xf]
      %v1911 = vld [vmem:[%s1871 + $0x9c] sm:$0xf]
      %v1912 = vld [vmem:[%s1871 + $0xa0] sm:$0xf]
      %v1913 = vld [vmem:[%s1871 + $0xa4] sm:$0xf]
      %v1914 = vld [vmem:[%s1871 + $0xa8] sm:$0xf]
      %v1915 = vld [vmem:[%s1871 + $0xac] sm:$0xf]
      %v1916 = vld [vmem:[%s1871 + $0xb0] sm:$0xf]
      %v1917 = vld [vmem:[%s1871 + $0xb4] sm:$0xf]
      %v1918 = vld [vmem:[%s1871 + $0xb8] sm:$0xf]
      %v1919 = vld [vmem:[%s1871 + $0xbc] sm:$0xf]
      %v1968 = vunpack.c.l.b16 %v1872
      %v1969 = vunpack.c.l.b16 %v1873
      %v1970 = vunpack.c.l.b16 %v1874
      %v1971 = vunpack.c.l.b16 %v1875
      %v1972 = vunpack.c.l.b16 %v1876
      %v1973 = vunpack.c.l.b16 %v1877
      %v1974 = vunpack.c.l.b16 %v1878
      %v1975 = vunpack.c.l.b16 %v1879
      %v1976 = vunpack.c.l.b16 %v1880
      %v1977 = vunpack.c.l.b16 %v1881
      %v1978 = vunpack.c.l.b16 %v1882
      %v1979 = vunpack.c.l.b16 %v1883
      %v1980 = vunpack.c.l.b16 %v1884
      %v1981 = vunpack.c.l.b16 %v1885
      %v1982 = vunpack.c.l.b16 %v1886
      %v1983 = vunpack.c.l.b16 %v1887
      %v1984 = vunpack.c.l.b16 %v1888
      %v1985 = vunpack.c.l.b16 %v1889
      %v1986 = vunpack.c.l.b16 %v1890
      %v1987 = vunpack.c.l.b16 %v1891
      %v1988 = vunpack.c.l.b16 %v1892
      %v1989 = vunpack.c.l.b16 %v1893
      %v1990 = vunpack.c.l.b16 %v1894
      %v1991 = vunpack.c.l.b16 %v1895
      %v1992 = vunpack.c.l.b16 %v1896
      %v1993 = vunpack.c.l.b16 %v1897
      %v1994 = vunpack.c.l.b16 %v1898
      %v1995 = vunpack.c.l.b16 %v1899
      %v1996 = vunpack.c.l.b16 %v1900
      %v1997 = vunpack.c.l.b16 %v1901
      %v1998 = vunpack.c.l.b16 %v1902
      %v1999 = vunpack.c.l.b16 %v1903
      %v2000 = vunpack.c.l.b16 %v1904
      %v2001 = vunpack.c.l.b16 %v1905
      %v2002 = vunpack.c.l.b16 %v1906
      %v2003 = vunpack.c.l.b16 %v1907
      %v2004 = vunpack.c.l.b16 %v1908
      %v2005 = vunpack.c.l.b16 %v1909
      %v2006 = vunpack.c.l.b16 %v1910
      %v2007 = vunpack.c.l.b16 %v1911
      %v2008 = vunpack.c.l.b16 %v1912
      %v2009 = vunpack.c.l.b16 %v1913
      %v2010 = vunpack.c.l.b16 %v1914
      %v2011 = vunpack.c.l.b16 %v1915
      %v2012 = vunpack.c.l.b16 %v1916
      %v2013 = vunpack.c.l.b16 %v1917
      %v2014 = vunpack.c.l.b16 %v1918
      %v2015 = vunpack.c.l.b16 %v1919
      %v2016 = vpack.c.b16 %v1969, %v1968
      %v2017 = vpack.c.b16 %v1971, %v1970
      %v2018 = vpack.c.b16 %v1973, %v1972
      %v2019 = vpack.c.b16 %v1975, %v1974
      %v2020 = vpack.c.b16 %v1977, %v1976
      %v2021 = vpack.c.b16 %v1979, %v1978
      %v2022 = vpack.c.b16 %v1981, %v1980
      %v2023 = vpack.c.b16 %v1983, %v1982
      %v2024 = vpack.c.b16 %v1985, %v1984
      %v2025 = vpack.c.b16 %v1987, %v1986
      %v2026 = vpack.c.b16 %v1989, %v1988
      %v2027 = vpack.c.b16 %v1991, %v1990
      %v2028 = vpack.c.b16 %v1993, %v1992
      %v2029 = vpack.c.b16 %v1995, %v1994
      %v2030 = vpack.c.b16 %v1997, %v1996
      %v2031 = vpack.c.b16 %v1999, %v1998
      %v2032 = vpack.c.b16 %v2001, %v2000
      %v2033 = vpack.c.b16 %v2003, %v2002
      %v2034 = vpack.c.b16 %v2005, %v2004
      %v2035 = vpack.c.b16 %v2007, %v2006
      %v2036 = vpack.c.b16 %v2009, %v2008
      %v2037 = vpack.c.b16 %v2011, %v2010
      %v2038 = vpack.c.b16 %v2013, %v2012
      %v2039 = vpack.c.b16 %v2015, %v2014
      %2064 = vmatprep.subr.bf16.mxu0 0
      %2065 = vmatpush1.bf16.msra.mxu0 %v2016
      %2066 = vmatprep.subr.bf16.mxu0 0
      %2067 = vmatpush1.bf16.msra.mxu0 %v2017
      %2068 = vmatprep.subr.bf16.mxu0 0
      %2069 = vmatpush1.bf16.msra.mxu0 %v2018
      %2070 = vmatprep.subr.bf16.mxu0 0
      %2071 = vmatpush1.bf16.msra.mxu0 %v2019
      %2072 = vmatprep.subr.bf16.mxu0 0
      %2073 = vmatpush1.bf16.msra.mxu0 %v2020
      %2074 = vmatprep.subr.bf16.mxu0 0
      %2075 = vmatpush1.bf16.msra.mxu0 %v2021
      %2076 = vmatprep.subr.bf16.mxu0 0
      %2077 = vmatpush1.bf16.msra.mxu0 %v2022
      %2078 = vmatprep.subr.bf16.mxu0 0
      %2079 = vmatpush1.bf16.msra.mxu0 %v2023
      %2080 = vmatprep.subr.bf16.mxu0 0
      %2081 = vmatpush1.bf16.msra.mxu0 %v2024
      %2082 = vmatprep.subr.bf16.mxu0 0
      %2083 = vmatpush1.bf16.msra.mxu0 %v2025
      %2084 = vmatprep.subr.bf16.mxu0 0
      %2085 = vmatpush1.bf16.msra.mxu0 %v2026
      %2086 = vmatprep.subr.bf16.mxu0 0
      %2087 = vmatpush1.bf16.msra.mxu0 %v2027
      %2088 = vmatprep.subr.bf16.mxu0 0
      %2089 = vmatpush1.bf16.msra.mxu0 %v2028
      %2090 = vmatprep.subr.bf16.mxu0 0
      %2091 = vmatpush1.bf16.msra.mxu0 %v2029
      %2092 = vmatprep.subr.bf16.mxu0 0
      %2093 = vmatpush1.bf16.msra.mxu0 %v2030
      %2094 = vmatprep.subr.bf16.mxu0 0
      %2095 = vmatpush1.bf16.msra.mxu0 %v2031
      %2096 = vmatprep.mubr.bf16.mxu0 %v1824
      %2097 = vmatmul.mubr.bf16.gmra.mrb[0].mxu0 %v1823
      %v2098 = vpop.f32.mrb[0].mxu0
      %v2099 = vadd.f32 0.0, %v2098
      %v2100 = vpop.f32.mrb[0].mxu0
      %v2101 = vpop.f32.mrb[0].mxu0
      %v2102 = vadd.f32 0.0, %v2101
      %v2103 = vpop.f32.mrb[0].mxu0
      %2104 = vmatprep.mubr.bf16.mxu0 %v1827
      %2105 = vmatmul.mubr.bf16.gmra.mrb[0].mxu0 %v1826
      %v2106 = vpop.f32.mrb[0].mxu0
      %v2107 = vadd.f32 0.0, %v2106
      %v2108 = vpop.f32.mrb[0].mxu0
      %v2109 = vpop.f32.mrb[0].mxu0
      %v2110 = vadd.f32 0.0, %v2109
      %v2111 = vpop.f32.mrb[0].mxu0
      %2112 = vmatprep.mubr.bf16.mxu0 %v1830
      %2113 = vmatmul.mubr.bf16.gmra.mrb[0].mxu0 %v1829
      %v2114 = vpop.f32.mrb[0].mxu0
      %v2115 = vadd.f32 0.0, %v2114
      %v2116 = vpop.f32.mrb[0].mxu0
      %v2117 = vpop.f32.mrb[0].mxu0
      %v2118 = vadd.f32 0.0, %v2117
      %v2119 = vpop.f32.mrb[0].mxu0
      %2120 = vmatprep.mubr.bf16.mxu0 %v1833
      %2121 = vmatmul.mubr.bf16.gmra.mrb[0].mxu0 %v1832
      %v2122 = vpop.f32.mrb[0].mxu0
      %v2123 = vadd.f32 0.0, %v2122
      %v2124 = vpop.f32.mrb[0].mxu0
      %v2125 = vpop.f32.mrb[0].mxu0
      %v2126 = vadd.f32 0.0, %v2125
      %v2127 = vpop.f32.mrb[0].mxu0
      %2128 = vmatprep.mubr.bf16.mxu0 %v1836
      %2129 = vmatmul.mubr.bf16.gmra.mrb[0].mxu0 %v1835
      %v2130 = vpop.f32.mrb[0].mxu0
      %v2131 = vadd.f32 0.0, %v2130
      %v2132 = vpop.f32.mrb[0].mxu0
      %v2133 = vpop.f32.mrb[0].mxu0
      %v2134 = vadd.f32 0.0, %v2133
      %v2135 = vpop.f32.mrb[0].mxu0
      %2136 = vmatprep.mubr.bf16.mxu0 %v1839
      %2137 = vmatmul.mubr.bf16.gmra.mrb[0].mxu0 %v1838
      %v2138 = vpop.f32.mrb[0].mxu0
      %v2139 = vadd.f32 0.0, %v2138
      %v2140 = vpop.f32.mrb[0].mxu0
      %v2141 = vpop.f32.mrb[0].mxu0
      %v2142 = vadd.f32 0.0, %v2141
      %v2143 = vpop.f32.mrb[0].mxu0
      %2144 = vmatprep.mubr.bf16.mxu0 %v1842
      %2145 = vmatmul.mubr.bf16.gmra.mrb[0].mxu0 %v1841
      %v2146 = vpop.f32.mrb[0].mxu0
      %v2147 = vadd.f32 0.0, %v2146
      %v2148 = vpop.f32.mrb[0].mxu0
      %v2149 = vpop.f32.mrb[0].mxu0
      %v2150 = vadd.f32 0.0, %v2149
      %v2151 = vpop.f32.mrb[0].mxu0
      %2152 = vmatprep.mubr.bf16.mxu0 %v1845
      %2153 = vmatmul.mubr.bf16.gmra.mrb[0].mxu0 %v1844
      %v2154 = vpop.f32.mrb[0].mxu0
      %v2155 = vadd.f32 0.0, %v2154
      %v2156 = vpop.f32.mrb[0].mxu0
      %v2157 = vpop.f32.mrb[0].mxu0
      %v2158 = vadd.f32 0.0, %v2157
      %v2159 = vpop.f32.mrb[0].mxu0
      %2160 = vmatprep.mubr.bf16.mxu0 %v1848
      %2161 = vmatmul.mubr.bf16.gmra.mrb[0].mxu0 %v1847
      %v2162 = vpop.f32.mrb[0].mxu0
      %v2163 = vadd.f32 0.0, %v2162
      %v2164 = vpop.f32.mrb[0].mxu0
      %v2165 = vpop.f32.mrb[0].mxu0
      %v2166 = vadd.f32 0.0, %v2165
      %v2167 = vpop.f32.mrb[0].mxu0
      %2168 = vmatprep.mubr.bf16.mxu0 %v1851
      %2169 = vmatmul.mubr.bf16.gmra.mrb[0].mxu0 %v1850
      %v2170 = vpop.f32.mrb[0].mxu0
      %v2171 = vadd.f32 0.0, %v2170
      %v2172 = vpop.f32.mrb[0].mxu0
      %v2173 = vpop.f32.mrb[0].mxu0
      %v2174 = vadd.f32 0.0, %v2173
      %v2175 = vpop.f32.mrb[0].mxu0
      %2176 = vmatprep.mubr.bf16.mxu0 %v1854
      %2177 = vmatmul.mubr.bf16.gmra.mrb[0].mxu0 %v1853
      %v2178 = vpop.f32.mrb[0].mxu0
      %v2179 = vadd.f32 0.0, %v2178
      %v2180 = vpop.f32.mrb[0].mxu0
      %v2181 = vpop.f32.mrb[0].mxu0
      %v2182 = vadd.f32 0.0, %v2181
      %v2183 = vpop.f32.mrb[0].mxu0
      %2184 = vmatprep.mubr.bf16.mxu0 %v1857
      %2185 = vmatmul.mubr.bf16.gmra.mrb[0].mxu0 %v1856
      %v2186 = vpop.f32.mrb[0].mxu0
      %v2187 = vadd.f32 0.0, %v2186
      %v2188 = vpop.f32.mrb[0].mxu0
      %v2189 = vpop.f32.mrb[0].mxu0
      %v2190 = vadd.f32 0.0, %v2189
      %v2191 = vpop.f32.mrb[0].mxu0
      %2192 = vmatprep.mubr.bf16.mxu0 %v1860
      %2193 = vmatmul.mubr.bf16.gmra.mrb[0].mxu0 %v1859
      %v2194 = vpop.f32.mrb[0].mxu0
      %v2195 = vadd.f32 0.0, %v2194
      %v2196 = vpop.f32.mrb[0].mxu0
      %v2197 = vpop.f32.mrb[0].mxu0
      %v2198 = vadd.f32 0.0, %v2197
      %v2199 = vpop.f32.mrb[0].mxu0
      %2200 = vmatprep.mubr.bf16.mxu0 %v1863
      %2201 = vmatmul.mubr.bf16.gmra.mrb[0].mxu0 %v1862
      %v2202 = vpop.f32.mrb[0].mxu0
      %v2203 = vadd.f32 0.0, %v2202
      %v2204 = vpop.f32.mrb[0].mxu0
      %v2205 = vpop.f32.mrb[0].mxu0
      %v2206 = vadd.f32 0.0, %v2205
      %v2207 = vpop.f32.mrb[0].mxu0
      %2208 = vmatprep.mubr.bf16.mxu0 %v1866
      %2209 = vmatmul.mubr.bf16.gmra.mrb[0].mxu0 %v1865
      %v2210 = vpop.f32.mrb[0].mxu0
      %v2211 = vadd.f32 0.0, %v2210
      %v2212 = vpop.f32.mrb[0].mxu0
      %v2213 = vpop.f32.mrb[0].mxu0
      %v2214 = vadd.f32 0.0, %v2213
      %v2215 = vpop.f32.mrb[0].mxu0
      %2216 = vmatprep.mubr.bf16.mxu0 %v1869
      %2217 = vmatmul.mubr.bf16.gmra.mrb[0].mxu0 %v1868
      %v2218 = vpop.f32.mrb[0].mxu0
      %v2219 = vadd.f32 0.0, %v2218
      %v2220 = vpop.f32.mrb[0].mxu0
      %v2221 = vpop.f32.mrb[0].mxu0
      %v2222 = vadd.f32 0.0, %v2221
      %v2223 = vpop.f32.mrb[0].mxu0
      %2224 = vdwg.mxu0
      %2225 = vmatprep.subr.bf16.mxu0 0
      %2226 = vmatpush1.bf16.msra.mxu0 %v2032
      %2227 = vmatprep.subr.bf16.mxu0 0
      %2228 = vmatpush1.bf16.msra.mxu0 %v2033
      %2229 = vmatprep.subr.bf16.mxu0 0
      %2230 = vmatpush1.bf16.msra.mxu0 %v2034
      %2231 = vmatprep.subr.bf16.mxu0 0
      %2232 = vmatpush1.bf16.msra.mxu0 %v2035
      %2233 = vmatprep.subr.bf16.mxu0 0
      %2234 = vmatpush1.bf16.msra.mxu0 %v2036
      %2235 = vmatprep.subr.bf16.mxu0 0
      %2236 = vmatpush1.bf16.msra.mxu0 %v2037
      %2237 = vmatprep.subr.bf16.mxu0 0
      %2238 = vmatpush1.bf16.msra.mxu0 %v2038
      %2239 = vmatprep.subr.bf16.mxu0 0
      %2240 = vmatpush1.bf16.msra.mxu0 %v2039
      %2241 = vmatprep.subr.bf16.mxu0 0
      %2242 = vmatpush1.bf16.msra.mxu0 0
      %2243 = vmatprep.subr.bf16.mxu0 0
      %2244 = vmatpush1.bf16.msra.mxu0 0
      %2245 = vmatprep.subr.bf16.mxu0 0
      %2246 = vmatpush1.bf16.msra.mxu0 0
      %2247 = vmatprep.subr.bf16.mxu0 0
      %2248 = vmatpush1.bf16.msra.mxu0 0
      %2249 = vmatprep.subr.bf16.mxu0 0
      %2250 = vmatpush1.bf16.msra.mxu0 0
      %2251 = vmatprep.subr.bf16.mxu0 0
      %2252 = vmatpush1.bf16.msra.mxu0 0
      %2253 = vmatprep.subr.bf16.mxu0 0
      %2254 = vmatpush1.bf16.msra.mxu0 0
      %2255 = vmatprep.subr.bf16.mxu0 0
      %2256 = vmatpush1.bf16.msra.mxu0 0
      %2257 = vmatprep.mubr.bf16.mxu0 0
      %2258 = vmatmul.mubr.bf16.gmra.mrb[0].mxu0 %v1825
      %v2259 = vpop.f32.mrb[0].mxu0
      %v2260 = vadd.f32 %v2099, %v2259
      %v2261 = vpop.f32.mrb[0].mxu0
      %v2262 = vpop.f32.mrb[0].mxu0
      %v2263 = vadd.f32 %v2102, %v2262
      %v2264 = vpop.f32.mrb[0].mxu0
      %2265 = vmatprep.mubr.bf16.mxu0 0
      %2266 = vmatmul.mubr.bf16.gmra.mrb[0].mxu0 %v1828
      %v2267 = vpop.f32.mrb[0].mxu0
      %v2268 = vadd.f32 %v2107, %v2267
      %v2269 = vpop.f32.mrb[0].mxu0
      %v2270 = vpop.f32.mrb[0].mxu0
      %v2271 = vadd.f32 %v2110, %v2270
      %v2272 = vpop.f32.mrb[0].mxu0
      %2273 = vmatprep.mubr.bf16.mxu0 0
      %2274 = vmatmul.mubr.bf16.gmra.mrb[0].mxu0 %v1831
      %v2275 = vpop.f32.mrb[0].mxu0
      %v2276 = vadd.f32 %v2115, %v2275
      %v2277 = vpop.f32.mrb[0].mxu0
      %v2278 = vpop.f32.mrb[0].mxu0
      %v2279 = vadd.f32 %v2118, %v2278
      %v2280 = vpop.f32.mrb[0].mxu0
      %2281 = vmatprep.mubr.bf16.mxu0 0
      %2282 = vmatmul.mubr.bf16.gmra.mrb[0].mxu0 %v1834
      %v2283 = vpop.f32.mrb[0].mxu0
      %v2284 = vadd.f32 %v2123, %v2283
      %v2285 = vpop.f32.mrb[0].mxu0
      %v2286 = vpop.f32.mrb[0].mxu0
      %v2287 = vadd.f32 %v2126, %v2286
      %v2288 = vpop.f32.mrb[0].mxu0
      %2289 = vmatprep.mubr.bf16.mxu0 0
      %2290 = vmatmul.mubr.bf16.gmra.mrb[0].mxu0 %v1837
      %v2291 = vpop.f32.mrb[0].mxu0
      %v2292 = vadd.f32 %v2131, %v2291
      %v2293 = vpop.f32.mrb[0].mxu0
      %v2294 = vpop.f32.mrb[0].mxu0
      %v2295 = vadd.f32 %v2134, %v2294
      %v2296 = vpop.f32.mrb[0].mxu0
      %2297 = vmatprep.mubr.bf16.mxu0 0
      %2298 = vmatmul.mubr.bf16.gmra.mrb[0].mxu0 %v1840
      %v2299 = vpop.f32.mrb[0].mxu0
      %v2300 = vadd.f32 %v2139, %v2299
      %v2301 = vpop.f32.mrb[0].mxu0
      %v2302 = vpop.f32.mrb[0].mxu0
      %v2303 = vadd.f32 %v2142, %v2302
      %v2304 = vpop.f32.mrb[0].mxu0
      %2305 = vmatprep.mubr.bf16.mxu0 0
      %2306 = vmatmul.mubr.bf16.gmra.mrb[0].mxu0 %v1843
      %v2307 = vpop.f32.mrb[0].mxu0
      %v2308 = vadd.f32 %v2147, %v2307
      %v2309 = vpop.f32.mrb[0].mxu0
      %v2310 = vpop.f32.mrb[0].mxu0
      %v2311 = vadd.f32 %v2150, %v2310
      %v2312 = vpop.f32.mrb[0].mxu0
      %2313 = vmatprep.mubr.bf16.mxu0 0
      %2314 = vmatmul.mubr.bf16.gmra.mrb[0].mxu0 %v1846
      %v2315 = vpop.f32.mrb[0].mxu0
      %v2316 = vadd.f32 %v2155, %v2315
      %v2317 = vpop.f32.mrb[0].mxu0
      %v2318 = vpop.f32.mrb[0].mxu0
      %v2319 = vadd.f32 %v2158, %v2318
      %v2320 = vpop.f32.mrb[0].mxu0
      %2321 = vmatprep.mubr.bf16.mxu0 0
      %2322 = vmatmul.mubr.bf16.gmra.mrb[0].mxu0 %v1849
      %v2323 = vpop.f32.mrb[0].mxu0
      %v2324 = vadd.f32 %v2163, %v2323
      %v2325 = vpop.f32.mrb[0].mxu0
      %v2326 = vpop.f32.mrb[0].mxu0
      %v2327 = vadd.f32 %v2166, %v2326
      %v2328 = vpop.f32.mrb[0].mxu0
      %2329 = vmatprep.mubr.bf16.mxu0 0
      %2330 = vmatmul.mubr.bf16.gmra.mrb[0].mxu0 %v1852
      %v2331 = vpop.f32.mrb[0].mxu0
      %v2332 = vadd.f32 %v2171, %v2331
      %v2333 = vpop.f32.mrb[0].mxu0
      %v2334 = vpop.f32.mrb[0].mxu0
      %v2335 = vadd.f32 %v2174, %v2334
      %v2336 = vpop.f32.mrb[0].mxu0
      %2337 = vmatprep.mubr.bf16.mxu0 0
      %2338 = vmatmul.mubr.bf16.gmra.mrb[0].mxu0 %v1855
      %v2339 = vpop.f32.mrb[0].mxu0
      %v2340 = vadd.f32 %v2179, %v2339
      %v2341 = vpop.f32.mrb[0].mxu0
      %v2342 = vpop.f32.mrb[0].mxu0
      %v2343 = vadd.f32 %v2182, %v2342
      %v2344 = vpop.f32.mrb[0].mxu0
      %2345 = vmatprep.mubr.bf16.mxu0 0
      %2346 = vmatmul.mubr.bf16.gmra.mrb[0].mxu0 %v1858
      %v2347 = vpop.f32.mrb[0].mxu0
      %v2348 = vadd.f32 %v2187, %v2347
      %v2349 = vpop.f32.mrb[0].mxu0
      %v2350 = vpop.f32.mrb[0].mxu0
      %v2351 = vadd.f32 %v2190, %v2350
      %v2352 = vpop.f32.mrb[0].mxu0
      %2353 = vmatprep.mubr.bf16.mxu0 0
      %2354 = vmatmul.mubr.bf16.gmra.mrb[0].mxu0 %v1861
      %v2355 = vpop.f32.mrb[0].mxu0
      %v2356 = vadd.f32 %v2195, %v2355
      %v2357 = vpop.f32.mrb[0].mxu0
      %v2358 = vpop.f32.mrb[0].mxu0
      %v2359 = vadd.f32 %v2198, %v2358
      %v2360 = vpop.f32.mrb[0].mxu0
      %2361 = vmatprep.mubr.bf16.mxu0 0
      %2362 = vmatmul.mubr.bf16.gmra.mrb[0].mxu0 %v1864
      %v2363 = vpop.f32.mrb[0].mxu0
      %v2364 = vadd.f32 %v2203, %v2363
      %v2365 = vpop.f32.mrb[0].mxu0
      %v2366 = vpop.f32.mrb[0].mxu0
      %v2367 = vadd.f32 %v2206, %v2366
      %v2368 = vpop.f32.mrb[0].mxu0
      %2369 = vmatprep.mubr.bf16.mxu0 0
      %2370 = vmatmul.mubr.bf16.gmra.mrb[0].mxu0 %v1867
      %v2371 = vpop.f32.mrb[0].mxu0
      %v2372 = vadd.f32 %v2211, %v2371
      %v2373 = vpop.f32.mrb[0].mxu0
      %v2374 = vpop.f32.mrb[0].mxu0
      %v2375 = vadd.f32 %v2214, %v2374
      %v2376 = vpop.f32.mrb[0].mxu0
      %2377 = vmatprep.mubr.bf16.mxu0 0
      %2378 = vmatmul.mubr.bf16.gmra.mrb[0].mxu0 %v1870
      %v2379 = vpop.f32.mrb[0].mxu0
      %v2380 = vadd.f32 %v2219, %v2379
      %v2381 = vpop.f32.mrb[0].mxu0
      %v2382 = vpop.f32.mrb[0].mxu0
      %v2383 = vadd.f32 %v2222, %v2382
      %v2384 = vpop.f32.mrb[0].mxu0
      %2385 = vdwg.mxu0
      %v2386 = vadd.f32 %v1696, %v2260
      %v2387 = vadd.f32 %v1699, %v2263
      %v2388 = vadd.f32 %v1704, %v2268
      %v2389 = vadd.f32 %v1707, %v2271
      %v2390 = vadd.f32 %v1712, %v2276
      %v2391 = vadd.f32 %v1715, %v2279
      %v2392 = vadd.f32 %v1720, %v2284
      %v2393 = vadd.f32 %v1723, %v2287
      %v2394 = vadd.f32 %v1728, %v2292
      %v2395 = vadd.f32 %v1731, %v2295
      %v2396 = vadd.f32 %v1736, %v2300
      %v2397 = vadd.f32 %v1739, %v2303
      %v2398 = vadd.f32 %v1744, %v2308
      %v2399 = vadd.f32 %v1747, %v2311
      %v2400 = vadd.f32 %v1752, %v2316
      %v2401 = vadd.f32 %v1755, %v2319
      %v2402 = vadd.f32 %v1760, %v2324
      %v2403 = vadd.f32 %v1763, %v2327
      %v2404 = vadd.f32 %v1768, %v2332
      %v2405 = vadd.f32 %v1771, %v2335
      %v2406 = vadd.f32 %v1776, %v2340
      %v2407 = vadd.f32 %v1779, %v2343
      %v2408 = vadd.f32 %v1784, %v2348
      %v2409 = vadd.f32 %v1787, %v2351
      %v2410 = vadd.f32 %v1792, %v2356
      %v2411 = vadd.f32 %v1795, %v2359
      %v2412 = vadd.f32 %v1800, %v2364
      %v2413 = vadd.f32 %v1803, %v2367
      %v2414 = vadd.f32 %v1808, %v2372
      %v2415 = vadd.f32 %v1811, %v2375
      %v2416 = vadd.f32 %v1816, %v2380
      %v2417 = vadd.f32 %v1819, %v2383
      %v2418 = vpack.c.bf16 %v2387, %v2386
      %v2419 = vpack.c.bf16 %v2389, %v2388
      %v2420 = vpack.c.bf16 %v2391, %v2390
      %v2421 = vpack.c.bf16 %v2393, %v2392
      %v2422 = vpack.c.bf16 %v2395, %v2394
      %v2423 = vpack.c.bf16 %v2397, %v2396
      %v2424 = vpack.c.bf16 %v2399, %v2398
      %v2425 = vpack.c.bf16 %v2401, %v2400
      %v2426 = vpack.c.bf16 %v2403, %v2402
      %v2427 = vpack.c.bf16 %v2405, %v2404
      %v2428 = vpack.c.bf16 %v2407, %v2406
      %v2429 = vpack.c.bf16 %v2409, %v2408
      %v2430 = vpack.c.bf16 %v2411, %v2410
      %v2431 = vpack.c.bf16 %v2413, %v2412
      %v2432 = vpack.c.bf16 %v2415, %v2414
      %v2433 = vpack.c.bf16 %v2417, %v2416
      %v2450 = vunpack.c.l.b16 %v2418
      %v2451 = vunpack.c.h.b16 %v2418
      %v2452 = vunpack.c.l.b16 %v2419
      %v2453 = vunpack.c.h.b16 %v2419
      %v2454 = vunpack.c.l.b16 %v2420
      %v2455 = vunpack.c.h.b16 %v2420
      %v2456 = vunpack.c.l.b16 %v2421
      %v2457 = vunpack.c.h.b16 %v2421
      %v2458 = vunpack.c.l.b16 %v2422
      %v2459 = vunpack.c.h.b16 %v2422
      %v2460 = vunpack.c.l.b16 %v2423
      %v2461 = vunpack.c.h.b16 %v2423
      %v2462 = vunpack.c.l.b16 %v2424
      %v2463 = vunpack.c.h.b16 %v2424
      %v2464 = vunpack.c.l.b16 %v2425
      %v2465 = vunpack.c.h.b16 %v2425
      %v2466 = vunpack.c.l.b16 %v2426
      %v2467 = vunpack.c.h.b16 %v2426
      %v2468 = vunpack.c.l.b16 %v2427
      %v2469 = vunpack.c.h.b16 %v2427
      %v2470 = vunpack.c.l.b16 %v2428
      %v2471 = vunpack.c.h.b16 %v2428
      %v2472 = vunpack.c.l.b16 %v2429
      %v2473 = vunpack.c.h.b16 %v2429
      %v2474 = vunpack.c.l.b16 %v2430
      %v2475 = vunpack.c.h.b16 %v2430
      %v2476 = vunpack.c.l.b16 %v2431
      %v2477 = vunpack.c.h.b16 %v2431
      %v2478 = vunpack.c.l.b16 %v2432
      %v2479 = vunpack.c.h.b16 %v2432
      %v2480 = vunpack.c.l.b16 %v2433
      %v2481 = vunpack.c.h.b16 %v2433
      %v2482 = vpack.c.b16 %v2450, %v2450
      %v2483 = vpack.c.b16 %v2451, %v2451
      %v2484 = vpack.c.b16 %v2452, %v2452
      %v2485 = vpack.c.b16 %v2453, %v2453
      %v2486 = vpack.c.b16 %v2454, %v2454
      %v2487 = vpack.c.b16 %v2455, %v2455
      %v2488 = vpack.c.b16 %v2456, %v2456
      %v2489 = vpack.c.b16 %v2457, %v2457
      %v2490 = vpack.c.b16 %v2458, %v2458
      %v2491 = vpack.c.b16 %v2459, %v2459
      %v2492 = vpack.c.b16 %v2460, %v2460
      %v2493 = vpack.c.b16 %v2461, %v2461
      %v2494 = vpack.c.b16 %v2462, %v2462
      %v2495 = vpack.c.b16 %v2463, %v2463
      %v2496 = vpack.c.b16 %v2464, %v2464
      %v2497 = vpack.c.b16 %v2465, %v2465
      %v2498 = vpack.c.b16 %v2466, %v2466
      %v2499 = vpack.c.b16 %v2467, %v2467
      %v2500 = vpack.c.b16 %v2468, %v2468
      %v2501 = vpack.c.b16 %v2469, %v2469
      %v2502 = vpack.c.b16 %v2470, %v2470
      %v2503 = vpack.c.b16 %v2471, %v2471
      %v2504 = vpack.c.b16 %v2472, %v2472
      %v2505 = vpack.c.b16 %v2473, %v2473
      %v2506 = vpack.c.b16 %v2474, %v2474
      %v2507 = vpack.c.b16 %v2475, %v2475
      %v2508 = vpack.c.b16 %v2476, %v2476
      %v2509 = vpack.c.b16 %v2477, %v2477
      %v2510 = vpack.c.b16 %v2478, %v2478
      %v2511 = vpack.c.b16 %v2479, %v2479
      %v2512 = vpack.c.b16 %v2480, %v2480
      %v2513 = vpack.c.b16 %v2481, %v2481
      %2546 = vst [vmem:[%s231] sm:$0xf] %v2482
      %2547 = vst [vmem:[%s231 + $0x4] sm:$0xf] %v2483
      %2548 = vst [vmem:[%s231 + $0x8] sm:$0xf] %v2484
      %2549 = vst [vmem:[%s231 + $0xc] sm:$0xf] %v2485
      %2550 = vst [vmem:[%s231 + $0x10] sm:$0xf] %v2486
      %2551 = vst [vmem:[%s231 + $0x14] sm:$0xf] %v2487
      %2552 = vst [vmem:[%s231 + $0x18] sm:$0xf] %v2488
      %2553 = vst [vmem:[%s231 + $0x1c] sm:$0xf] %v2489
      %2554 = vst [vmem:[%s231 + $0x20] sm:$0xf] %v2490
      %2555 = vst [vmem:[%s231 + $0x24] sm:$0xf] %v2491
      %2556 = vst [vmem:[%s231 + $0x28] sm:$0xf] %v2492
      %2557 = vst [vmem:[%s231 + $0x2c] sm:$0xf] %v2493
      %2558 = vst [vmem:[%s231 + $0x30] sm:$0xf] %v2494
      %2559 = vst [vmem:[%s231 + $0x34] sm:$0xf] %v2495
      %2560 = vst [vmem:[%s231 + $0x38] sm:$0xf] %v2496
      %2561 = vst [vmem:[%s231 + $0x3c] sm:$0xf] %v2497
      %2562 = vst [vmem:[%s231 + $0x40] sm:$0xf] %v2498
      %2563 = vst [vmem:[%s231 + $0x44] sm:$0xf] %v2499
      %2564 = vst [vmem:[%s231 + $0x48] sm:$0xf] %v2500
      %2565 = vst [vmem:[%s231 + $0x4c] sm:$0xf] %v2501
      %2566 = vst [vmem:[%s231 + $0x50] sm:$0xf] %v2502
      %2567 = vst [vmem:[%s231 + $0x54] sm:$0xf] %v2503
      %2568 = vst [vmem:[%s231 + $0x58] sm:$0xf] %v2504
      %2569 = vst [vmem:[%s231 + $0x5c] sm:$0xf] %v2505
      %2570 = vst [vmem:[%s231 + $0x60] sm:$0xf] %v2506
      %2571 = vst [vmem:[%s231 + $0x64] sm:$0xf] %v2507
      %2572 = vst [vmem:[%s231 + $0x68] sm:$0xf] %v2508
      %2573 = vst [vmem:[%s231 + $0x6c] sm:$0xf] %v2509
      %2574 = vst [vmem:[%s231 + $0x70] sm:$0xf] %v2510
      %2575 = vst [vmem:[%s231 + $0x74] sm:$0xf] %v2511
      %2576 = vst [vmem:[%s231 + $0x78] sm:$0xf] %v2512
      %2577 = vst [vmem:[%s231 + $0x7c] sm:$0xf] %v2513
      %v2578 = vadd.f32 %v2386, %v2387
      %v2579 = vadd.f32 %v2578, %v2388
      %v2580 = vadd.f32 %v2579, %v2389
      %v2581 = vadd.f32 %v2580, %v2390
      %v2582 = vadd.f32 %v2581, %v2391
      %v2583 = vadd.f32 %v2582, %v2392
      %v2584 = vadd.f32 %v2583, %v2393
      %v2585 = vadd.f32 %v2584, %v2394
      %v2586 = vadd.f32 %v2585, %v2395
      %v2587 = vadd.f32 %v2586, %v2396
      %v2588 = vadd.f32 %v2587, %v2397
      %v2589 = vadd.f32 %v2588, %v2398
      %v2590 = vadd.f32 %v2589, %v2399
      %v2591 = vadd.f32 %v2590, %v2400
      %v2592 = vadd.f32 %v2591, %v2401
      %v2593 = vadd.f32 %v2592, %v2402
      %v2594 = vadd.f32 %v2593, %v2403
      %v2595 = vadd.f32 %v2594, %v2404
      %v2596 = vadd.f32 %v2595, %v2405
      %v2597 = vadd.f32 %v2596, %v2406
      %v2598 = vadd.f32 %v2597, %v2407
      %v2599 = vadd.f32 %v2598, %v2408
      %v2600 = vadd.f32 %v2599, %v2409
      %v2601 = vadd.f32 %v2600, %v2410
      %v2602 = vadd.f32 %v2601, %v2411
      %v2603 = vadd.f32 %v2602, %v2412
      %v2604 = vadd.f32 %v2603, %v2413
      %v2605 = vadd.f32 %v2604, %v2414
      %v2606 = vadd.f32 %v2605, %v2415
      %v2607 = vadd.f32 %v2606, %v2416
      %v2608 = vadd.f32 %v2607, %v2417
      %v2609 = vrot.slane %v2608, 4
      %v2610 = vadd.f32 %v2608, %v2609
      %v2611 = vrot.slane %v2610, 2
      %v2612 = vadd.f32 %v2610, %v2611
      %v2613 = vrot.slane %v2612, 1
      %v2614 = vadd.f32 %v2612, %v2613
      %v2615 = vmul.f32 %v2386, %v2386
      %v2616 = vmul.f32 %v2387, %v2387
      %v2617 = vmul.f32 %v2388, %v2388
      %v2618 = vmul.f32 %v2389, %v2389
      %v2619 = vmul.f32 %v2390, %v2390
      %v2620 = vmul.f32 %v2391, %v2391
      %v2621 = vmul.f32 %v2392, %v2392
      %v2622 = vmul.f32 %v2393, %v2393
      %v2623 = vmul.f32 %v2394, %v2394
      %v2624 = vmul.f32 %v2395, %v2395
      %v2625 = vmul.f32 %v2396, %v2396
      %v2626 = vmul.f32 %v2397, %v2397
      %v2627 = vmul.f32 %v2398, %v2398
      %v2628 = vmul.f32 %v2399, %v2399
      %v2629 = vmul.f32 %v2400, %v2400
      %v2630 = vmul.f32 %v2401, %v2401
      %v2631 = vmul.f32 %v2402, %v2402
      %v2632 = vmul.f32 %v2403, %v2403
      %v2633 = vmul.f32 %v2404, %v2404
      %v2634 = vmul.f32 %v2405, %v2405
      %v2635 = vmul.f32 %v2406, %v2406
      %v2636 = vmul.f32 %v2407, %v2407
      %v2637 = vmul.f32 %v2408, %v2408
      %v2638 = vmul.f32 %v2409, %v2409
      %v2639 = vmul.f32 %v2410, %v2410
      %v2640 = vmul.f32 %v2411, %v2411
      %v2641 = vmul.f32 %v2412, %v2412
      %v2642 = vmul.f32 %v2413, %v2413
      %v2643 = vmul.f32 %v2414, %v2414
      %v2644 = vmul.f32 %v2415, %v2415
      %v2645 = vmul.f32 %v2416, %v2416
      %v2646 = vmul.f32 %v2417, %v2417
      %v2647 = vadd.f32 %v2615, %v2616
      %v2648 = vadd.f32 %v2647, %v2617
      %v2649 = vadd.f32 %v2648, %v2618
      %v2650 = vadd.f32 %v2649, %v2619
      %v2651 = vadd.f32 %v2650, %v2620
      %v2652 = vadd.f32 %v2651, %v2621
      %v2653 = vadd.f32 %v2652, %v2622
      %v2654 = vadd.f32 %v2653, %v2623
      %v2655 = vadd.f32 %v2654, %v2624
      %v2656 = vadd.f32 %v2655, %v2625
      %v2657 = vadd.f32 %v2656, %v2626
      %v2658 = vadd.f32 %v2657, %v2627
      %v2659 = vadd.f32 %v2658, %v2628
      %v2660 = vadd.f32 %v2659, %v2629
      %v2661 = vadd.f32 %v2660, %v2630
      %v2662 = vadd.f32 %v2661, %v2631
      %v2663 = vadd.f32 %v2662, %v2632
      %v2664 = vadd.f32 %v2663, %v2633
      %v2665 = vadd.f32 %v2664, %v2634
      %v2666 = vadd.f32 %v2665, %v2635
      %v2667 = vadd.f32 %v2666, %v2636
      %v2668 = vadd.f32 %v2667, %v2637
      %v2669 = vadd.f32 %v2668, %v2638
      %v2670 = vadd.f32 %v2669, %v2639
      %v2671 = vadd.f32 %v2670, %v2640
      %v2672 = vadd.f32 %v2671, %v2641
      %v2673 = vadd.f32 %v2672, %v2642
      %v2674 = vadd.f32 %v2673, %v2643
      %v2675 = vadd.f32 %v2674, %v2644
      %v2676 = vadd.f32 %v2675, %v2645
      %v2677 = vadd.f32 %v2676, %v2646
      %v2678 = vrot.slane %v2677, 4
      %v2679 = vadd.f32 %v2677, %v2678
      %v2680 = vrot.slane %v2679, 2
      %v2681 = vadd.f32 %v2679, %v2680
      %v2682 = vrot.slane %v2681, 1
      %v2683 = vadd.f32 %v2681, %v2682
      %vm2684 = vcmask 1040384
      %v2685 = vsel %vm2684, %v2614, %v2683
      %2686 = vst [vmem:[%s235] sm:$0x3] %v2685
      %p2687 = scmp.lt.s32.totalorder %s17, 1
      %s2688 = scalar_select %p2687, %s17, 1
      %s2689 = smul.addr %s2688, 32
      %s2690 = smul.addr %s2689, 4
      %s2691 = scalar_lea.vmem %s4, %s2690
      %p2692 = scmp.lt.s32.totalorder %s17, 1
      %s2693 = scalar_select %p2692, %s17, 1
      %s2694 = smul.addr %s2693, 2
      %s2695 = scalar_lea.vmem %s5, %s2694
      // Predicated region
      $region37: #{resblock_bottle.5} parent=35 // pred_check
        %p2696 = pneg %p124
      $region38: #{resblock_bottle.5} parent=35 // pred_check_branch
        %2698 = sbr.rel (%p2696) target = $region40
      $region39: #{resblock_bottle.5} parent=35 // pred_region
        _
      $region40: #{resblock_bottle.5} parent=35 // pred_fallthru
        _
      // Predicated region
      $region41: #{resblock_bottle.5} parent=35 // pred_check
        %p2699 = pneg %p150
      $region42: #{resblock_bottle.5} parent=35 // pred_check_branch
        %2701 = sbr.rel (%p2699) target = $region44
      $region43: #{resblock_bottle.5} parent=35 // pred_region
        _
      $region44: #{resblock_bottle.5} parent=35 // pred_fallthru
        _
    $region36: #{resblock_bottle.5} parent=5 // pred_fallthru
      _
    %p2702 = scmp.le.s32.totalorder 2, %s12
    // Predicated region
    $region45: #{resblock_bottle.5} parent=5 // pred_check
      %p2703 = pneg %p2702
    $region46: #{resblock_bottle.5} parent=5 // pred_check_branch
      %2705 = sbr.rel (%p2703) target = $region48
    $region47: #{resblock_bottle.5} parent=5 // pred_region
      %s2706 = ssub.s32 %s12, 2
      // Predicated region
      $region49: #{resblock_bottle.5} parent=47 // pred_check
        %p2707 = pneg %p130
      $region50: #{resblock_bottle.5} parent=47 // pred_check_branch
        %2709 = sbr.rel (%p2707) target = $region52
      $region51: #{resblock_bottle.5} parent=47 // pred_region
        %p2710 = scmp.lt.s32.totalorder %s18, 1
        %s2711 = scalar_select %p2710, %s18, 1
        %s2712 = smul.addr %s2711, 32
        %s2713 = smul.addr %s2712, 4
        %s2714 = scalar_lea.vmem %s4, %s2713
      $region52: #{resblock_bottle.5} parent=47 // pred_fallthru
        _
      // Predicated region
      $region53: #{resblock_bottle.5} parent=47 // pred_check
        %p2715 = pneg %p156
      $region54: #{resblock_bottle.5} parent=47 // pred_check_branch
        %2717 = sbr.rel (%p2715) target = $region56
      $region55: #{resblock_bottle.5} parent=47 // pred_region
        %p2718 = scmp.lt.s32.totalorder %s18, 1
        %s2719 = scalar_select %p2718, %s18, 1
        %s2720 = smul.addr %s2719, 2
        %s2721 = scalar_lea.vmem %s5, %s2720
      $region56: #{resblock_bottle.5} parent=47 // pred_fallthru
        _
    $region48: #{resblock_bottle.5} parent=5 // pred_fallthru
      _
  $region6: #{resblock_bottle.5} parent=0 // loop_footer
    %s16 = sadd.s32 1, %s12
  $region7: #{resblock_bottle.5} parent=0 // loop_footer_branch
    %11 = sbr.rel target = $region3
  $region8: #{resblock_bottle.5} parent=0 // loop_exit
    _

</llo_original>
